<compile_context>
chip_gen: v6e
topology: v6e:2x2x1
jax: 0.10.0
libtpu: 0.0.40
codegen_flags: <defaults>
</compile_context>

<pallas_src>
import jax
import jax.numpy as jnp
from jax import lax
from jax.experimental import pallas as pl
from jax.experimental.pallas import tpu as pltpu

NEG_INF = -1e30   # utils.NEG_INF
EPS = 1e-17       # utils.EPS
A_PAD = 128       # lane-padded action vocabulary / embedding-table rows
PACK = 128        # packed per-segment output row width (lane-dense)


def _vmem_spec():
    return pl.BlockSpec(memory_space=pltpu.MemorySpace.VMEM)


def _round_up(x, m):
    return ((x + m - 1) // m) * m


# --------------------------------------------------------------------------
# Single fused kernel: encoder pipeline over all segments + batched decoder.
# --------------------------------------------------------------------------
def compile_fused_kernel(
        # sequence inputs
        actions_ref, after_len_ref, last_b_ref,
        # encoder embedding + LSTM
        enc_embed_ref, ewih_ref, ewhh_ref, eb_ref,
        # head_b, head_z
        hbw1_ref, hbb1_ref, hbw2t_ref, hbb2_ref,
        hzw1_ref, hzb1_ref, hzw2_ref, hzb2_ref,
        # decoder init MLPs (decoder_1 / 1a / 1b)
        d1w_ref, d1b_ref, d1aw_ref, d1ab_ref, d1bw_ref, d1bb_ref,
        # decoder embedding + LSTM + action head (padded to A_PAD lanes)
        dec_embed_ref, dwih_ref, dwhh_ref, db_ref,
        dhw1_ref, dhb1_ref, dhw2_ref, dhb2_ref,
        # outputs
        enc_ref, packed_ref, rec_ref):
    f32 = jnp.float32
    S, B, _ = enc_ref.shape
    T = after_len_ref.shape[1]
    H = ewhh_ref.shape[0]
    H4 = 4 * H
    Z2 = hzw2_ref.shape[1]
    L = d1w_ref.shape[0]
    AP = dhw2_ref.shape[1]          # padded action dim (128)
    AEP = enc_embed_ref.shape[0]    # padded encoder embedding rows (128)
    N = S * B

    # -------- hoisted constants / weights used across segments --------
    after_len = after_len_ref[...]                                  # (B, T)
    last_b = last_b_ref[...]                                        # (B, T)
    lane_t = lax.broadcasted_iota(jnp.int32, (B, T), 1)

    lane4h_b = lax.broadcasted_iota(jnp.int32, (B, H4), 1)
    g_sel_b = (lane4h_b >= 2 * H) & (lane4h_b < 3 * H)              # tanh-gate lanes
    gate_scale_b = jnp.where(g_sel_b, 1.0, 0.5).astype(f32)         # sigmoid via tanh(x/2)

    ewhh = ewhh_ref[...]
    hb_w1 = hbw1_ref[...]
    hb_b1 = hbb1_ref[...]
    hb_w2t = hbw2t_ref[...]                                         # (1, H)
    hb_b2 = hbb2_ref[...]                                           # (1, 1)
    hz_w1 = hzw1_ref[...]
    hz_b1 = hzb1_ref[...]
    hz_w2 = hzw2_ref[...]
    hz_b2 = hzb2_ref[...]

    # -------- encoder input-side gate pre-activations for every (t, b) --------
    # xg[t*B + b] = onehot(actions[b, t]) @ (enc_embed @ Wih + b)  -- one MXU push,
    # mask/state independent, shared by all segments.
    acts_bt = actions_ref[...]                                      # (B, T) int32
    enc_tab = (jnp.dot(enc_embed_ref[...], ewih_ref[...],
                       preferred_element_type=f32) + eb_ref[...])   # (AEP, 4H)
    iota_ae = lax.broadcasted_iota(jnp.int32, (B, AEP), 1)
    oh_all = jnp.concatenate(
        [(iota_ae == acts_bt[:, t:t + 1]).astype(f32) for t in range(T)],
        axis=0)                                                     # (T*B, AEP), free stack
    xg_all = jnp.dot(oh_all, enc_tab, preferred_element_type=f32)   # (T*B, 4H)

    mask_bt = None                    # segment-0 mask == all ones -> skip the multiply
    log_cum_acc = jnp.zeros((B, T), f32)
    z_list = []

    for seg in range(S):
        # ----- masked LSTM encoder: 1 recurrent MXU push + 2 EUP pushes per step -----
        h = jnp.zeros((B, H), f32)
        c = jnp.zeros((B, H), f32)
        # T is small & static: the per-step outputs (1 vreg each) stay in registers.
        # TODO(synk): for large T spill these to a VMEM scratch and re-read instead.
        h_list = []
        for t in range(T):
            gates = xg_all[t * B:(t + 1) * B] + jnp.dot(
                h, ewhh, preferred_element_type=f32)                # (B, 4H)
            th = jnp.tanh(gates * gate_scale_b)
            acts_g = jnp.where(g_sel_b, th, 0.5 * th + 0.5)         # sigmoid on i/f/o lanes
            i_g = acts_g[:, 0:H]
            f_g = acts_g[:, H:2 * H]
            g_g = acts_g[:, 2 * H:3 * H]
            o_g = acts_g[:, 3 * H:4 * H]
            c = f_g * c + i_g * g_g
            h = o_g * jnp.tanh(c)
            if mask_bt is not None:
                m = mask_bt[:, t:t + 1]                             # (B, 1)
                h = h * m
                c = c * m
            h_list.append(h)
            enc_ref[seg, :, t * H:(t + 1) * H] = h                  # (S, B, T*H) layout

        # ----- boundaries -----
        if seg == S - 1:
            logits_bt = jnp.zeros((B, T), f32)
            sample_bt = last_b                                      # one_hot(lengths - 1)
            cum_step = None
        else:
            enc2d = jnp.concatenate(h_list, axis=0)                 # (T*B, H), free stack
            h1 = jnp.maximum(
                jnp.dot(enc2d, hb_w1, preferred_element_type=f32) + hb_b1, 0.0)
            # head_b output layer as VPU multiply + lane reduce (no 1-lane MXU push)
            logit_flat = jnp.sum(h1 * hb_w2t, axis=1, keepdims=True) + hb_b2  # (T*B, 1)
            # position 0 is forced to NEG_INF (reference: cat([neg_inf, logits[:,1:]]))
            logits_bt = jnp.full((B, T), NEG_INF, f32)
            for t in range(1, T):
                logits_bt = jnp.where(lane_t == t,
                                      logit_flat[t * B:(t + 1) * B], logits_bt)
            logits_bt = logits_bt + after_len
            # argmax -> one-hot (first-max tie break)
            maxv = jnp.max(logits_bt, axis=1, keepdims=True)
            cand = jnp.where(logits_bt == maxv, lane_t, T)
            idx = jnp.min(cand, axis=1, keepdims=True)              # (B, 1)
            sample_bt = (lane_t == idx).astype(f32)
            cum_step = (lane_t >= idx).astype(f32)                  # == cumsum(sample_bt)

        # ----- latents (masked readout + head_z), eval-mode gaussian: mu only -----
        readout = jnp.zeros((B, H), f32)
        for t in range(T - 1):
            readout = readout + h_list[t] * sample_bt[:, t + 1:t + 2]
        hzh = jnp.maximum(
            jnp.dot(readout, hz_w1, preferred_element_type=f32) + hz_b1, 0.0)
        logits_z = jnp.dot(hzh, hz_w2, preferred_element_type=f32) + hz_b2   # (B, Z2)
        z_list.append(logits_z[:, 0:L])

        # ----- mask for next segment: exp(sum_i log(cumsum(b_i) + EPS)) -----
        if seg + 1 < S:
            log_cum_acc = log_cum_acc + jnp.log(cum_step + EPS)
            mask_bt = jnp.exp(log_cum_acc)
            mask_out = mask_bt
        else:
            mask_out = jnp.zeros((B, T), f32)

        # ----- packed per-segment outputs: one (B, 128) VMEM row per segment -----
        packed_ref[seg, :, 0:T] = logits_bt
        packed_ref[seg, :, T:2 * T] = sample_bt
        packed_ref[seg, :, 2 * T:3 * T] = mask_out
        packed_ref[seg, :, 3 * T:3 * T + Z2] = logits_z
        if 3 * T + Z2 < PACK:
            packed_ref[seg, :, 3 * T + Z2:PACK] = jnp.zeros((B, PACK - 3 * T - Z2), f32)

    # ---------------- decoder: all segments batched on the sublane axis --------------
    z_all = jnp.concatenate(z_list, axis=0)                         # (N, L), free stack
    hid0 = jnp.maximum(
        jnp.dot(z_all, d1w_ref[...], preferred_element_type=f32) + d1b_ref[...], 0.0)
    dh = jnp.dot(hid0, d1aw_ref[...], preferred_element_type=f32) + d1ab_ref[...]
    dc = jnp.dot(dh, d1bw_ref[...], preferred_element_type=f32) + d1bb_ref[...]

    dwhh = dwhh_ref[...]
    dh_w1 = dhw1_ref[...]
    dh_b1 = dhb1_ref[...]
    dh_w2 = dhw2_ref[...]                                           # (H, AP), pads = 0
    dh_b2 = dhb2_ref[...]                                           # (1, AP), pads = NEG_INF

    # Fold the input-side LSTM matmul into the (padded) embedding table:
    #   current @ Wih + b == onehot @ (embed @ Wih + b)
    dec_tab = (jnp.dot(dec_embed_ref[...], dwih_ref[...],
                       preferred_element_type=f32) + db_ref[...])   # (AP, 4H)
    inp_gates = jnp.broadcast_to(dec_tab[0:1, :], (N, H4))          # <start> = action 0

    lane4h_n = lax.broadcasted_iota(jnp.int32, (N, H4), 1)
    g_sel_n = (lane4h_n >= 2 * H) & (lane4h_n < 3 * H)
    gate_scale_n = jnp.where(g_sel_n, 1.0, 0.5).astype(f32)
    iota_a = lax.broadcasted_iota(jnp.int32, (N, AP), 1)

    for t in range(T):
        gates = inp_gates + jnp.dot(dh, dwhh, preferred_element_type=f32)
        th = jnp.tanh(gates * gate_scale_n)
        acts_g = jnp.where(g_sel_n, th, 0.5 * th + 0.5)
        i_g = acts_g[:, 0:H]
        f_g = acts_g[:, H:2 * H]
        g_g = acts_g[:, 2 * H:3 * H]
        o_g = acts_g[:, 3 * H:4 * H]
        dc = f_g * dc + i_g * g_g
        dh = o_g * jnp.tanh(dc)

        hh = jnp.maximum(
            jnp.dot(dh, dh_w1, preferred_element_type=f32) + dh_b1, 0.0)
        out_action = jnp.dot(hh, dh_w2, preferred_element_type=f32) + dh_b2   # (N, AP)
        rec_ref[:, t * AP:(t + 1) * AP] = out_action                # 128-lane aligned store

        if t + 1 < T:
            # greedy feedback: one-hot(argmax) -> next input-side gate pre-activations
            maxv = jnp.max(out_action, axis=1, keepdims=True)
            cand = jnp.where(out_action == maxv, iota_a, AP)
            idx = jnp.min(cand, axis=1, keepdims=True)              # (N, 1)
            onehot = (iota_a == idx).astype(f32)                    # (N, AP)
            inp_gates = jnp.dot(onehot, dec_tab, preferred_element_type=f32)


# --------------------------------------------------------------------------
# Forward glue (matches CompILE.forward, eval mode, mode='action')
# --------------------------------------------------------------------------
def compile_forward(params, states, actions, lengths, *, num_segments, latent_dim):
    del states  # unused in mode='action'
    B, T = actions.shape
    H = params['enc_embed'].shape[1]
    A = params['dec_embed'].shape[0]
    Z2 = params['hz_w2'].shape[1]
    S = num_segments
    B_pad = _round_up(B, 8)
    assert 3 * T + Z2 <= PACK and A <= A_PAD
    lengths = lengths.astype(jnp.int32)

    # Tiny sequence-side preprocessing (int actions go straight into the kernel).
    actions_p = jnp.pad(actions.astype(jnp.int32), ((0, B_pad - B), (0, 0)))
    after_len = (jnp.arange(T)[None, :] > lengths[:, None]).astype(jnp.float32) * NEG_INF
    after_len = jnp.pad(after_len, ((0, B_pad - B), (0, 0)))                  # (B_pad, T)
    last_b = jax.nn.one_hot(lengths - 1, T, dtype=jnp.float32)
    last_b = jnp.pad(last_b, ((0, B_pad - B), (0, 0)))                        # (B_pad, T)

    # Weight-side padding / transposes (tiny, constant-size ops).
    enc_embed_p = jnp.pad(params['enc_embed'], ((0, A_PAD - A), (0, 0)))      # (128, H)
    dec_embed_p = jnp.pad(params['dec_embed'], ((0, A_PAD - A), (0, 0)))      # (128, H)
    hb_w2_t = jnp.transpose(params['hb_w2'])                                  # (1, H)
    dh_w2_p = jnp.pad(params['dh_w2'], ((0, 0), (0, A_PAD - A)))              # (H, 128)
    dh_b2_p = jnp.pad(params['dh_b2'], ((0, 0), (0, A_PAD - A)),
                      constant_values=NEG_INF)                                # (1, 128)

    enc_out, packed_out, rec_out = pl.pallas_call(
        compile_fused_kernel,
        out_shape=(
            jax.ShapeDtypeStruct((S, B_pad, T * H), jnp.float32),
            jax.ShapeDtypeStruct((S, B_pad, PACK), jnp.float32),
            jax.ShapeDtypeStruct((S * B_pad, T * A_PAD), jnp.float32),
        ),
        in_specs=[_vmem_spec() for _ in range(29)],
        out_specs=tuple(_vmem_spec() for _ in range(3)),
    )(actions_p, after_len, last_b,
      enc_embed_p, params['enc_lstm_wih'], params['enc_lstm_whh'], params['enc_lstm_b'],
      params['hb_w1'], params['hb_b1'], hb_w2_t, params['hb_b2'],
      params['hz_w1'], params['hz_b1'], params['hz_w2'], params['hz_b2'],
      params['d1_w'], params['d1_b'],
      params['d1a_w'], params['d1a_b'],
      params['d1b_w'], params['d1b_b'],
      dec_embed_p, params['dec_lstm_wih'], params['dec_lstm_whh'], params['dec_lstm_b'],
      params['dh_w1'], params['dh_b1'], dh_w2_p, dh_b2_p)

    # --- assemble reference-shaped outputs (reshapes + static slices only) ---
    recs_full = rec_out.reshape(S, B_pad, T, A_PAD)
    all_encs = [enc_out[s, :B].reshape(B, T, H) for s in range(S)]
    all_b = {'logits': [packed_out[s, :B, 0:T] for s in range(S - 1)] + [None],
             'samples': [packed_out[s, :B, T:2 * T] for s in range(S)]}
    all_masks = [packed_out[s, :B, 2 * T:3 * T] for s in range(S - 1)] + [None]
    all_z = {'logits': [packed_out[s, :B, 3 * T:3 * T + Z2] for s in range(S)],
             'samples': [packed_out[s, :B, 3 * T:3 * T + latent_dim] for s in range(S)]}
    all_recs = [(recs_full[s, :B, :, :A], None) for s in range(S)]            # action mode
    return all_encs, all_recs, all_masks, all_b, all_z


# --------------------------------------------------------------------------
# Deterministic parameter init (synthetic, shapes match nn.Module.__init__)
# --------------------------------------------------------------------------
def init_params(key, num_actions, hidden_dim, latent_dim):
    H = hidden_dim
    A = num_actions + 1
    ks = jax.random.split(key, 20)

    def lin(k, din, dout, scale=0.1):
        kw, kb = jax.random.split(k)
        return (jax.random.normal(kw, (din, dout), jnp.float32) * scale,
                jax.random.normal(kb, (1, dout), jnp.float32) * scale)

    p = {}
    p['enc_embed'] = jax.random.normal(ks[0], (A, H), jnp.float32) * 0.1
    p['dec_embed'] = jax.random.normal(ks[1], (A, H), jnp.float32) * 0.1
    p['enc_lstm_wih'] = jax.random.normal(ks[2], (H, 4 * H), jnp.float32) * 0.1
    p['enc_lstm_whh'] = jax.random.normal(ks[3], (H, 4 * H), jnp.float32) * 0.1
    p['enc_lstm_b'] = jax.random.normal(ks[4], (1, 4 * H), jnp.float32) * 0.1
    p['dec_lstm_wih'] = jax.random.normal(ks[5], (H, 4 * H), jnp.float32) * 0.1
    p['dec_lstm_whh'] = jax.random.normal(ks[6], (H, 4 * H), jnp.float32) * 0.1
    p['dec_lstm_b'] = jax.random.normal(ks[7], (1, 4 * H), jnp.float32) * 0.1
    p['hb_w1'], p['hb_b1'] = lin(ks[8], H, H)
    p['hb_w2'], p['hb_b2'] = lin(ks[9], H, 1)
    p['hz_w1'], p['hz_b1'] = lin(ks[10], H, H)
    p['hz_w2'], p['hz_b2'] = lin(ks[11], H, 2 * latent_dim)    # gaussian: latent_dim * 2
    p['d1_w'], p['d1_b'] = lin(ks[12], latent_dim, H)
    p['d1a_w'], p['d1a_b'] = lin(ks[13], H, H)
    p['d1b_w'], p['d1b_b'] = lin(ks[14], H, H)
    p['dh_w1'], p['dh_b1'] = lin(ks[15], H, H)
    p['dh_w2'], p['dh_b2'] = lin(ks[16], H, A)
    return p


if __name__ == "__main__":
    key = jax.random.PRNGKey(0)
    B, T = 4, 8
    state_dim, num_actions = 6, 5
    hidden_dim, latent_dim, num_segments = 32, 8, 3

    kp, ka, ks_, kl = jax.random.split(key, 4)
    params = init_params(kp, num_actions, hidden_dim, latent_dim)

    actions = jax.random.randint(ka, (B, T), 0, num_actions + 1)          # discrete actions
    states = jax.random.normal(ks_, (B, T, state_dim), jnp.float32)       # unused ('action')
    lengths = jax.random.randint(kl, (B,), 2, T + 1)

    @jax.jit
    def run(params, states, actions, lengths):
        return compile_forward(params, states, actions, lengths,
                               num_segments=num_segments, latent_dim=latent_dim)

    out = run(params, states, actions, lengths)
    out = jax.block_until_ready(out)
    print("KERNEL_OK")
</pallas_src>

<mosaic_0001>
module attributes {stable_mosaic.version = 11 : i64} {
  func.func @compile_fused_kernel(%arg0: memref<8x8xi32, #tpu.memory_space<vmem>>, %arg1: memref<8x8xf32, #tpu.memory_space<vmem>>, %arg2: memref<8x8xf32, #tpu.memory_space<vmem>>, %arg3: memref<128x32xf32, #tpu.memory_space<vmem>>, %arg4: memref<32x128xf32, #tpu.memory_space<vmem>>, %arg5: memref<32x128xf32, #tpu.memory_space<vmem>>, %arg6: memref<1x128xf32, #tpu.memory_space<vmem>>, %arg7: memref<32x32xf32, #tpu.memory_space<vmem>>, %arg8: memref<1x32xf32, #tpu.memory_space<vmem>>, %arg9: memref<1x32xf32, #tpu.memory_space<vmem>>, %arg10: memref<1x1xf32, #tpu.memory_space<vmem>>, %arg11: memref<32x32xf32, #tpu.memory_space<vmem>>, %arg12: memref<1x32xf32, #tpu.memory_space<vmem>>, %arg13: memref<32x16xf32, #tpu.memory_space<vmem>>, %arg14: memref<1x16xf32, #tpu.memory_space<vmem>>, %arg15: memref<8x32xf32, #tpu.memory_space<vmem>>, %arg16: memref<1x32xf32, #tpu.memory_space<vmem>>, %arg17: memref<32x32xf32, #tpu.memory_space<vmem>>, %arg18: memref<1x32xf32, #tpu.memory_space<vmem>>, %arg19: memref<32x32xf32, #tpu.memory_space<vmem>>, %arg20: memref<1x32xf32, #tpu.memory_space<vmem>>, %arg21: memref<128x32xf32, #tpu.memory_space<vmem>>, %arg22: memref<32x128xf32, #tpu.memory_space<vmem>>, %arg23: memref<32x128xf32, #tpu.memory_space<vmem>>, %arg24: memref<1x128xf32, #tpu.memory_space<vmem>>, %arg25: memref<32x32xf32, #tpu.memory_space<vmem>>, %arg26: memref<1x32xf32, #tpu.memory_space<vmem>>, %arg27: memref<32x128xf32, #tpu.memory_space<vmem>>, %arg28: memref<1x128xf32, #tpu.memory_space<vmem>>, %arg29: memref<3x8x256xf32, #tpu.memory_space<vmem>>, %arg30: memref<3x8x128xf32, #tpu.memory_space<vmem>>, %arg31: memref<24x1024xf32, #tpu.memory_space<vmem>>) attributes {dimension_semantics = [], scalar_prefetch = 0 : i64, scratch_operands = 0 : i64, tpu.core_type = #tpu.core_type<tc>} {
    %c0 = arith.constant 0 : index
    %c0_0 = arith.constant 0 : index
    %0 = vector.load %arg1[%c0, %c0_0] : memref<8x8xf32, #tpu.memory_space<vmem>>, vector<8x8xf32>
    %c0_1 = arith.constant 0 : index
    %c0_2 = arith.constant 0 : index
    %1 = vector.load %arg2[%c0_1, %c0_2] : memref<8x8xf32, #tpu.memory_space<vmem>>, vector<8x8xf32>
    %2 = tpu.iota {dimensions = array<i32: 1>} : vector<8x8xi32>
    %3 = tpu.iota {dimensions = array<i32: 1>} : vector<8x128xi32>
    %c64_i32 = arith.constant 64 : i32
    %4 = vector.broadcast %c64_i32 : i32 to vector<8x128xi32>
    %5 = arith.cmpi sge, %3, %4 : vector<8x128xi32>
    %c96_i32 = arith.constant 96 : i32
    %6 = vector.broadcast %c96_i32 : i32 to vector<8x128xi32>
    %7 = arith.cmpi slt, %3, %6 : vector<8x128xi32>
    %8 = arith.andi %5, %7 : vector<8x128xi1>
    %cst = arith.constant 1.000000e+00 : f32
    %cst_3 = arith.constant 5.000000e-01 : f32
    %9 = vector.broadcast %cst : f32 to vector<8x128xf32>
    %10 = vector.broadcast %cst_3 : f32 to vector<8x128xf32>
    %11 = arith.select %8, %9, %10 : vector<8x128xi1>, vector<8x128xf32>
    %c0_4 = arith.constant 0 : index
    %c0_5 = arith.constant 0 : index
    %12 = vector.load %arg5[%c0_4, %c0_5] : memref<32x128xf32, #tpu.memory_space<vmem>>, vector<32x128xf32>
    %c0_6 = arith.constant 0 : index
    %c0_7 = arith.constant 0 : index
    %13 = vector.load %arg7[%c0_6, %c0_7] : memref<32x32xf32, #tpu.memory_space<vmem>>, vector<32x32xf32>
    %c0_8 = arith.constant 0 : index
    %c0_9 = arith.constant 0 : index
    %14 = vector.load %arg8[%c0_8, %c0_9] : memref<1x32xf32, #tpu.memory_space<vmem>>, vector<1x32xf32>
    %c0_10 = arith.constant 0 : index
    %c0_11 = arith.constant 0 : index
    %15 = vector.load %arg9[%c0_10, %c0_11] : memref<1x32xf32, #tpu.memory_space<vmem>>, vector<1x32xf32>
    %c0_12 = arith.constant 0 : index
    %c0_13 = arith.constant 0 : index
    %16 = vector.load %arg10[%c0_12, %c0_13] : memref<1x1xf32, #tpu.memory_space<vmem>>, vector<1x1xf32>
    %c0_14 = arith.constant 0 : index
    %c0_15 = arith.constant 0 : index
    %17 = vector.load %arg11[%c0_14, %c0_15] : memref<32x32xf32, #tpu.memory_space<vmem>>, vector<32x32xf32>
    %c0_16 = arith.constant 0 : index
    %c0_17 = arith.constant 0 : index
    %18 = vector.load %arg12[%c0_16, %c0_17] : memref<1x32xf32, #tpu.memory_space<vmem>>, vector<1x32xf32>
    %c0_18 = arith.constant 0 : index
    %c0_19 = arith.constant 0 : index
    %19 = vector.load %arg13[%c0_18, %c0_19] : memref<32x16xf32, #tpu.memory_space<vmem>>, vector<32x16xf32>
    %c0_20 = arith.constant 0 : index
    %c0_21 = arith.constant 0 : index
    %20 = vector.load %arg14[%c0_20, %c0_21] : memref<1x16xf32, #tpu.memory_space<vmem>>, vector<1x16xf32>
    %c0_22 = arith.constant 0 : index
    %c0_23 = arith.constant 0 : index
    %21 = vector.load %arg0[%c0_22, %c0_23] : memref<8x8xi32, #tpu.memory_space<vmem>>, vector<8x8xi32>
    %c0_24 = arith.constant 0 : index
    %c0_25 = arith.constant 0 : index
    %22 = vector.load %arg3[%c0_24, %c0_25] : memref<128x32xf32, #tpu.memory_space<vmem>>, vector<128x32xf32>
    %c0_26 = arith.constant 0 : index
    %c0_27 = arith.constant 0 : index
    %23 = vector.load %arg4[%c0_26, %c0_27] : memref<32x128xf32, #tpu.memory_space<vmem>>, vector<32x128xf32>
    %cst_28 = arith.constant dense<0.000000e+00> : vector<128x128xf32>
    %24 = tpu.matmul %22, %23, %cst_28 {dimension_numbers = #tpu.dot_dimension_numbers<[1], [0], [0], [1], [0, 0, 1, 1], [], []>} : vector<128x32xf32>, vector<32x128xf32>, vector<128x128xf32> -> vector<128x128xf32>
    %c0_29 = arith.constant 0 : index
    %c0_30 = arith.constant 0 : index
    %25 = vector.load %arg6[%c0_29, %c0_30] : memref<1x128xf32, #tpu.memory_space<vmem>>, vector<1x128xf32>
    %26 = vector.broadcast %25 : vector<1x128xf32> to vector<128x128xf32>
    %27 = arith.addf %24, %26 : vector<128x128xf32>
    %28 = tpu.iota {dimensions = array<i32: 1>} : vector<8x128xi32>
    %29 = vector.extract_strided_slice %21 {offsets = [0, 0], sizes = [8, 1], strides = [1, 1]} : vector<8x8xi32> to vector<8x1xi32>
    %30 = vector.broadcast %29 : vector<8x1xi32> to vector<8x128xi32>
    %31 = arith.cmpi eq, %28, %30 : vector<8x128xi32>
    %32 = arith.extui %31 : vector<8x128xi1> to vector<8x128xi32>
    %33 = arith.sitofp %32 : vector<8x128xi32> to vector<8x128xf32>
    %34 = vector.extract_strided_slice %21 {offsets = [0, 1], sizes = [8, 1], strides = [1, 1]} : vector<8x8xi32> to vector<8x1xi32>
    %35 = vector.broadcast %34 : vector<8x1xi32> to vector<8x128xi32>
    %36 = arith.cmpi eq, %28, %35 : vector<8x128xi32>
    %37 = arith.extui %36 : vector<8x128xi1> to vector<8x128xi32>
    %38 = arith.sitofp %37 : vector<8x128xi32> to vector<8x128xf32>
    %39 = vector.extract_strided_slice %21 {offsets = [0, 2], sizes = [8, 1], strides = [1, 1]} : vector<8x8xi32> to vector<8x1xi32>
    %40 = vector.broadcast %39 : vector<8x1xi32> to vector<8x128xi32>
    %41 = arith.cmpi eq, %28, %40 : vector<8x128xi32>
    %42 = arith.extui %41 : vector<8x128xi1> to vector<8x128xi32>
    %43 = arith.sitofp %42 : vector<8x128xi32> to vector<8x128xf32>
    %44 = vector.extract_strided_slice %21 {offsets = [0, 3], sizes = [8, 1], strides = [1, 1]} : vector<8x8xi32> to vector<8x1xi32>
    %45 = vector.broadcast %44 : vector<8x1xi32> to vector<8x128xi32>
    %46 = arith.cmpi eq, %28, %45 : vector<8x128xi32>
    %47 = arith.extui %46 : vector<8x128xi1> to vector<8x128xi32>
    %48 = arith.sitofp %47 : vector<8x128xi32> to vector<8x128xf32>
    %49 = vector.extract_strided_slice %21 {offsets = [0, 4], sizes = [8, 1], strides = [1, 1]} : vector<8x8xi32> to vector<8x1xi32>
    %50 = vector.broadcast %49 : vector<8x1xi32> to vector<8x128xi32>
    %51 = arith.cmpi eq, %28, %50 : vector<8x128xi32>
    %52 = arith.extui %51 : vector<8x128xi1> to vector<8x128xi32>
    %53 = arith.sitofp %52 : vector<8x128xi32> to vector<8x128xf32>
    %54 = vector.extract_strided_slice %21 {offsets = [0, 5], sizes = [8, 1], strides = [1, 1]} : vector<8x8xi32> to vector<8x1xi32>
    %55 = vector.broadcast %54 : vector<8x1xi32> to vector<8x128xi32>
    %56 = arith.cmpi eq, %28, %55 : vector<8x128xi32>
    %57 = arith.extui %56 : vector<8x128xi1> to vector<8x128xi32>
    %58 = arith.sitofp %57 : vector<8x128xi32> to vector<8x128xf32>
    %59 = vector.extract_strided_slice %21 {offsets = [0, 6], sizes = [8, 1], strides = [1, 1]} : vector<8x8xi32> to vector<8x1xi32>
    %60 = vector.broadcast %59 : vector<8x1xi32> to vector<8x128xi32>
    %61 = arith.cmpi eq, %28, %60 : vector<8x128xi32>
    %62 = arith.extui %61 : vector<8x128xi1> to vector<8x128xi32>
    %63 = arith.sitofp %62 : vector<8x128xi32> to vector<8x128xf32>
    %64 = vector.extract_strided_slice %21 {offsets = [0, 7], sizes = [8, 1], strides = [1, 1]} : vector<8x8xi32> to vector<8x1xi32>
    %65 = vector.broadcast %64 : vector<8x1xi32> to vector<8x128xi32>
    %66 = arith.cmpi eq, %28, %65 : vector<8x128xi32>
    %67 = arith.extui %66 : vector<8x128xi1> to vector<8x128xi32>
    %68 = arith.sitofp %67 : vector<8x128xi32> to vector<8x128xf32>
    %69 = tpu.concatenate %33, %38, %43, %48, %53, %58, %63, %68 in 0 : vector<8x128xf32>, vector<8x128xf32>, vector<8x128xf32>, vector<8x128xf32>, vector<8x128xf32>, vector<8x128xf32>, vector<8x128xf32>, vector<8x128xf32> -> vector<64x128xf32>
    %cst_31 = arith.constant dense<0.000000e+00> : vector<64x128xf32>
    %70 = tpu.matmul %69, %27, %cst_31 {dimension_numbers = #tpu.dot_dimension_numbers<[1], [0], [0], [1], [0, 0, 1, 1], [], []>} : vector<64x128xf32>, vector<128x128xf32>, vector<64x128xf32> -> vector<64x128xf32>
    %cst_32 = arith.constant 0.000000e+00 : f32
    %71 = vector.broadcast %cst_32 : f32 to vector<8x8xf32>
    %cst_33 = arith.constant 0.000000e+00 : f32
    %72 = vector.broadcast %cst_33 : f32 to vector<8x32xf32>
    %cst_34 = arith.constant 0.000000e+00 : f32
    %73 = vector.broadcast %cst_34 : f32 to vector<8x32xf32>
    %74 = vector.extract_strided_slice %70 {offsets = [0, 0], sizes = [8, 128], strides = [1, 1]} : vector<64x128xf32> to vector<8x128xf32>
    %cst_35 = arith.constant dense<0.000000e+00> : vector<8x128xf32>
    %75 = tpu.matmul %72, %12, %cst_35 {dimension_numbers = #tpu.dot_dimension_numbers<[1], [0], [0], [1], [0, 0, 1, 1], [], []>} : vector<8x32xf32>, vector<32x128xf32>, vector<8x128xf32> -> vector<8x128xf32>
    %76 = arith.addf %74, %75 : vector<8x128xf32>
    %77 = arith.mulf %76, %11 : vector<8x128xf32>
    %78 = math.tanh %77 : vector<8x128xf32>
    %cst_36 = arith.constant 5.000000e-01 : f32
    %79 = vector.broadcast %cst_36 : f32 to vector<8x128xf32>
    %80 = arith.mulf %79, %78 : vector<8x128xf32>
    %cst_37 = arith.constant 5.000000e-01 : f32
    %81 = vector.broadcast %cst_37 : f32 to vector<8x128xf32>
    %82 = arith.addf %80, %81 : vector<8x128xf32>
    %83 = arith.select %8, %78, %82 : vector<8x128xi1>, vector<8x128xf32>
    %84 = vector.extract_strided_slice %83 {offsets = [0, 0], sizes = [8, 32], strides = [1, 1]} : vector<8x128xf32> to vector<8x32xf32>
    %85 = vector.extract_strided_slice %83 {offsets = [0, 32], sizes = [8, 32], strides = [1, 1]} : vector<8x128xf32> to vector<8x32xf32>
    %86 = vector.extract_strided_slice %83 {offsets = [0, 64], sizes = [8, 32], strides = [1, 1]} : vector<8x128xf32> to vector<8x32xf32>
    %87 = vector.extract_strided_slice %83 {offsets = [0, 96], sizes = [8, 32], strides = [1, 1]} : vector<8x128xf32> to vector<8x32xf32>
    %88 = arith.mulf %85, %73 : vector<8x32xf32>
    %89 = arith.mulf %84, %86 : vector<8x32xf32>
    %90 = arith.addf %88, %89 : vector<8x32xf32>
    %91 = math.tanh %90 : vector<8x32xf32>
    %92 = arith.mulf %87, %91 : vector<8x32xf32>
    %c0_38 = arith.constant 0 : index
    %c0_39 = arith.constant 0 : index
    %c0_40 = arith.constant 0 : index
    %93 = vector.load %arg29[%c0_38, %c0_39, %c0_40] : memref<3x8x256xf32, #tpu.memory_space<vmem>>, vector<1x8x32xf32>
    %94 = vector.shape_cast %93 : vector<1x8x32xf32> to vector<8x32xf32>
    %95 = vector.shape_cast %92 : vector<8x32xf32> to vector<1x8x32xf32>
    tpu.vector_store %arg29[%c0_38, %c0_39, %c0_40], %95 {strides = array<i32>} : memref<3x8x256xf32, #tpu.memory_space<vmem>>, vector<1x8x32xf32>,
    %96 = vector.extract_strided_slice %70 {offsets = [8, 0], sizes = [8, 128], strides = [1, 1]} : vector<64x128xf32> to vector<8x128xf32>
    %cst_41 = arith.constant dense<0.000000e+00> : vector<8x128xf32>
    %97 = tpu.matmul %92, %12, %cst_41 {dimension_numbers = #tpu.dot_dimension_numbers<[1], [0], [0], [1], [0, 0, 1, 1], [], []>} : vector<8x32xf32>, vector<32x128xf32>, vector<8x128xf32> -> vector<8x128xf32>
    %98 = arith.addf %96, %97 : vector<8x128xf32>
    %99 = arith.mulf %98, %11 : vector<8x128xf32>
    %100 = math.tanh %99 : vector<8x128xf32>
    %cst_42 = arith.constant 5.000000e-01 : f32
    %101 = vector.broadcast %cst_42 : f32 to vector<8x128xf32>
    %102 = arith.mulf %101, %100 : vector<8x128xf32>
    %cst_43 = arith.constant 5.000000e-01 : f32
    %103 = vector.broadcast %cst_43 : f32 to vector<8x128xf32>
    %104 = arith.addf %102, %103 : vector<8x128xf32>
    %105 = arith.select %8, %100, %104 : vector<8x128xi1>, vector<8x128xf32>
    %106 = vector.extract_strided_slice %105 {offsets = [0, 0], sizes = [8, 32], strides = [1, 1]} : vector<8x128xf32> to vector<8x32xf32>
    %107 = vector.extract_strided_slice %105 {offsets = [0, 32], sizes = [8, 32], strides = [1, 1]} : vector<8x128xf32> to vector<8x32xf32>
    %108 = vector.extract_strided_slice %105 {offsets = [0, 64], sizes = [8, 32], strides = [1, 1]} : vector<8x128xf32> to vector<8x32xf32>
    %109 = vector.extract_strided_slice %105 {offsets = [0, 96], sizes = [8, 32], strides = [1, 1]} : vector<8x128xf32> to vector<8x32xf32>
    %110 = arith.mulf %107, %90 : vector<8x32xf32>
    %111 = arith.mulf %106, %108 : vector<8x32xf32>
    %112 = arith.addf %110, %111 : vector<8x32xf32>
    %113 = math.tanh %112 : vector<8x32xf32>
    %114 = arith.mulf %109, %113 : vector<8x32xf32>
    %c0_44 = arith.constant 0 : index
    %c0_45 = arith.constant 0 : index
    %c32 = arith.constant 32 : index
    %115 = vector.load %arg29[%c0_44, %c0_45, %c32] : memref<3x8x256xf32, #tpu.memory_space<vmem>>, vector<1x8x32xf32>
    %116 = vector.shape_cast %115 : vector<1x8x32xf32> to vector<8x32xf32>
    %117 = vector.shape_cast %114 : vector<8x32xf32> to vector<1x8x32xf32>
    tpu.vector_store %arg29[%c0_44, %c0_45, %c32], %117 {strides = array<i32>} : memref<3x8x256xf32, #tpu.memory_space<vmem>>, vector<1x8x32xf32>,
    %118 = vector.extract_strided_slice %70 {offsets = [16, 0], sizes = [8, 128], strides = [1, 1]} : vector<64x128xf32> to vector<8x128xf32>
    %cst_46 = arith.constant dense<0.000000e+00> : vector<8x128xf32>
    %119 = tpu.matmul %114, %12, %cst_46 {dimension_numbers = #tpu.dot_dimension_numbers<[1], [0], [0], [1], [0, 0, 1, 1], [], []>} : vector<8x32xf32>, vector<32x128xf32>, vector<8x128xf32> -> vector<8x128xf32>
    %120 = arith.addf %118, %119 : vector<8x128xf32>
    %121 = arith.mulf %120, %11 : vector<8x128xf32>
    %122 = math.tanh %121 : vector<8x128xf32>
    %cst_47 = arith.constant 5.000000e-01 : f32
    %123 = vector.broadcast %cst_47 : f32 to vector<8x128xf32>
    %124 = arith.mulf %123, %122 : vector<8x128xf32>
    %cst_48 = arith.constant 5.000000e-01 : f32
    %125 = vector.broadcast %cst_48 : f32 to vector<8x128xf32>
    %126 = arith.addf %124, %125 : vector<8x128xf32>
    %127 = arith.select %8, %122, %126 : vector<8x128xi1>, vector<8x128xf32>
    %128 = vector.extract_strided_slice %127 {offsets = [0, 0], sizes = [8, 32], strides = [1, 1]} : vector<8x128xf32> to vector<8x32xf32>
    %129 = vector.extract_strided_slice %127 {offsets = [0, 32], sizes = [8, 32], strides = [1, 1]} : vector<8x128xf32> to vector<8x32xf32>
    %130 = vector.extract_strided_slice %127 {offsets = [0, 64], sizes = [8, 32], strides = [1, 1]} : vector<8x128xf32> to vector<8x32xf32>
    %131 = vector.extract_strided_slice %127 {offsets = [0, 96], sizes = [8, 32], strides = [1, 1]} : vector<8x128xf32> to vector<8x32xf32>
    %132 = arith.mulf %129, %112 : vector<8x32xf32>
    %133 = arith.mulf %128, %130 : vector<8x32xf32>
    %134 = arith.addf %132, %133 : vector<8x32xf32>
    %135 = math.tanh %134 : vector<8x32xf32>
    %136 = arith.mulf %131, %135 : vector<8x32xf32>
    %c0_49 = arith.constant 0 : index
    %c0_50 = arith.constant 0 : index
    %c64 = arith.constant 64 : index
    %137 = vector.load %arg29[%c0_49, %c0_50, %c64] : memref<3x8x256xf32, #tpu.memory_space<vmem>>, vector<1x8x32xf32>
    %138 = vector.shape_cast %137 : vector<1x8x32xf32> to vector<8x32xf32>
    %139 = vector.shape_cast %136 : vector<8x32xf32> to vector<1x8x32xf32>
    tpu.vector_store %arg29[%c0_49, %c0_50, %c64], %139 {strides = array<i32>} : memref<3x8x256xf32, #tpu.memory_space<vmem>>, vector<1x8x32xf32>,
    %140 = vector.extract_strided_slice %70 {offsets = [24, 0], sizes = [8, 128], strides = [1, 1]} : vector<64x128xf32> to vector<8x128xf32>
    %cst_51 = arith.constant dense<0.000000e+00> : vector<8x128xf32>
    %141 = tpu.matmul %136, %12, %cst_51 {dimension_numbers = #tpu.dot_dimension_numbers<[1], [0], [0], [1], [0, 0, 1, 1], [], []>} : vector<8x32xf32>, vector<32x128xf32>, vector<8x128xf32> -> vector<8x128xf32>
    %142 = arith.addf %140, %141 : vector<8x128xf32>
    %143 = arith.mulf %142, %11 : vector<8x128xf32>
    %144 = math.tanh %143 : vector<8x128xf32>
    %cst_52 = arith.constant 5.000000e-01 : f32
    %145 = vector.broadcast %cst_52 : f32 to vector<8x128xf32>
    %146 = arith.mulf %145, %144 : vector<8x128xf32>
    %cst_53 = arith.constant 5.000000e-01 : f32
    %147 = vector.broadcast %cst_53 : f32 to vector<8x128xf32>
    %148 = arith.addf %146, %147 : vector<8x128xf32>
    %149 = arith.select %8, %144, %148 : vector<8x128xi1>, vector<8x128xf32>
    %150 = vector.extract_strided_slice %149 {offsets = [0, 0], sizes = [8, 32], strides = [1, 1]} : vector<8x128xf32> to vector<8x32xf32>
    %151 = vector.extract_strided_slice %149 {offsets = [0, 32], sizes = [8, 32], strides = [1, 1]} : vector<8x128xf32> to vector<8x32xf32>
    %152 = vector.extract_strided_slice %149 {offsets = [0, 64], sizes = [8, 32], strides = [1, 1]} : vector<8x128xf32> to vector<8x32xf32>
    %153 = vector.extract_strided_slice %149 {offsets = [0, 96], sizes = [8, 32], strides = [1, 1]} : vector<8x128xf32> to vector<8x32xf32>
    %154 = arith.mulf %151, %134 : vector<8x32xf32>
    %155 = arith.mulf %150, %152 : vector<8x32xf32>
    %156 = arith.addf %154, %155 : vector<8x32xf32>
    %157 = math.tanh %156 : vector<8x32xf32>
    %158 = arith.mulf %153, %157 : vector<8x32xf32>
    %c0_54 = arith.constant 0 : index
    %c0_55 = arith.constant 0 : index
    %c96 = arith.constant 96 : index
    %159 = vector.load %arg29[%c0_54, %c0_55, %c96] : memref<3x8x256xf32, #tpu.memory_space<vmem>>, vector<1x8x32xf32>
    %160 = vector.shape_cast %159 : vector<1x8x32xf32> to vector<8x32xf32>
    %161 = vector.shape_cast %158 : vector<8x32xf32> to vector<1x8x32xf32>
    tpu.vector_store %arg29[%c0_54, %c0_55, %c96], %161 {strides = array<i32>} : memref<3x8x256xf32, #tpu.memory_space<vmem>>, vector<1x8x32xf32>,
    %162 = vector.extract_strided_slice %70 {offsets = [32, 0], sizes = [8, 128], strides = [1, 1]} : vector<64x128xf32> to vector<8x128xf32>
    %cst_56 = arith.constant dense<0.000000e+00> : vector<8x128xf32>
    %163 = tpu.matmul %158, %12, %cst_56 {dimension_numbers = #tpu.dot_dimension_numbers<[1], [0], [0], [1], [0, 0, 1, 1], [], []>} : vector<8x32xf32>, vector<32x128xf32>, vector<8x128xf32> -> vector<8x128xf32>
    %164 = arith.addf %162, %163 : vector<8x128xf32>
    %165 = arith.mulf %164, %11 : vector<8x128xf32>
    %166 = math.tanh %165 : vector<8x128xf32>
    %cst_57 = arith.constant 5.000000e-01 : f32
    %167 = vector.broadcast %cst_57 : f32 to vector<8x128xf32>
    %168 = arith.mulf %167, %166 : vector<8x128xf32>
    %cst_58 = arith.constant 5.000000e-01 : f32
    %169 = vector.broadcast %cst_58 : f32 to vector<8x128xf32>
    %170 = arith.addf %168, %169 : vector<8x128xf32>
    %171 = arith.select %8, %166, %170 : vector<8x128xi1>, vector<8x128xf32>
    %172 = vector.extract_strided_slice %171 {offsets = [0, 0], sizes = [8, 32], strides = [1, 1]} : vector<8x128xf32> to vector<8x32xf32>
    %173 = vector.extract_strided_slice %171 {offsets = [0, 32], sizes = [8, 32], strides = [1, 1]} : vector<8x128xf32> to vector<8x32xf32>
    %174 = vector.extract_strided_slice %171 {offsets = [0, 64], sizes = [8, 32], strides = [1, 1]} : vector<8x128xf32> to vector<8x32xf32>
    %175 = vector.extract_strided_slice %171 {offsets = [0, 96], sizes = [8, 32], strides = [1, 1]} : vector<8x128xf32> to vector<8x32xf32>
    %176 = arith.mulf %173, %156 : vector<8x32xf32>
    %177 = arith.mulf %172, %174 : vector<8x32xf32>
    %178 = arith.addf %176, %177 : vector<8x32xf32>
    %179 = math.tanh %178 : vector<8x32xf32>
    %180 = arith.mulf %175, %179 : vector<8x32xf32>
    %c0_59 = arith.constant 0 : index
    %c0_60 = arith.constant 0 : index
    %c128 = arith.constant 128 : index
    %181 = vector.load %arg29[%c0_59, %c0_60, %c128] : memref<3x8x256xf32, #tpu.memory_space<vmem>>, vector<1x8x32xf32>
    %182 = vector.shape_cast %181 : vector<1x8x32xf32> to vector<8x32xf32>
    %183 = vector.shape_cast %180 : vector<8x32xf32> to vector<1x8x32xf32>
    tpu.vector_store %arg29[%c0_59, %c0_60, %c128], %183 {strides = array<i32>} : memref<3x8x256xf32, #tpu.memory_space<vmem>>, vector<1x8x32xf32>,
    %184 = vector.extract_strided_slice %70 {offsets = [40, 0], sizes = [8, 128], strides = [1, 1]} : vector<64x128xf32> to vector<8x128xf32>
    %cst_61 = arith.constant dense<0.000000e+00> : vector<8x128xf32>
    %185 = tpu.matmul %180, %12, %cst_61 {dimension_numbers = #tpu.dot_dimension_numbers<[1], [0], [0], [1], [0, 0, 1, 1], [], []>} : vector<8x32xf32>, vector<32x128xf32>, vector<8x128xf32> -> vector<8x128xf32>
    %186 = arith.addf %184, %185 : vector<8x128xf32>
    %187 = arith.mulf %186, %11 : vector<8x128xf32>
    %188 = math.tanh %187 : vector<8x128xf32>
    %cst_62 = arith.constant 5.000000e-01 : f32
    %189 = vector.broadcast %cst_62 : f32 to vector<8x128xf32>
    %190 = arith.mulf %189, %188 : vector<8x128xf32>
    %cst_63 = arith.constant 5.000000e-01 : f32
    %191 = vector.broadcast %cst_63 : f32 to vector<8x128xf32>
    %192 = arith.addf %190, %191 : vector<8x128xf32>
    %193 = arith.select %8, %188, %192 : vector<8x128xi1>, vector<8x128xf32>
    %194 = vector.extract_strided_slice %193 {offsets = [0, 0], sizes = [8, 32], strides = [1, 1]} : vector<8x128xf32> to vector<8x32xf32>
    %195 = vector.extract_strided_slice %193 {offsets = [0, 32], sizes = [8, 32], strides = [1, 1]} : vector<8x128xf32> to vector<8x32xf32>
    %196 = vector.extract_strided_slice %193 {offsets = [0, 64], sizes = [8, 32], strides = [1, 1]} : vector<8x128xf32> to vector<8x32xf32>
    %197 = vector.extract_strided_slice %193 {offsets = [0, 96], sizes = [8, 32], strides = [1, 1]} : vector<8x128xf32> to vector<8x32xf32>
    %198 = arith.mulf %195, %178 : vector<8x32xf32>
    %199 = arith.mulf %194, %196 : vector<8x32xf32>
    %200 = arith.addf %198, %199 : vector<8x32xf32>
    %201 = math.tanh %200 : vector<8x32xf32>
    %202 = arith.mulf %197, %201 : vector<8x32xf32>
    %c0_64 = arith.constant 0 : index
    %c0_65 = arith.constant 0 : index
    %c160 = arith.constant 160 : index
    %203 = vector.load %arg29[%c0_64, %c0_65, %c160] : memref<3x8x256xf32, #tpu.memory_space<vmem>>, vector<1x8x32xf32>
    %204 = vector.shape_cast %203 : vector<1x8x32xf32> to vector<8x32xf32>
    %205 = vector.shape_cast %202 : vector<8x32xf32> to vector<1x8x32xf32>
    tpu.vector_store %arg29[%c0_64, %c0_65, %c160], %205 {strides = array<i32>} : memref<3x8x256xf32, #tpu.memory_space<vmem>>, vector<1x8x32xf32>,
    %206 = vector.extract_strided_slice %70 {offsets = [48, 0], sizes = [8, 128], strides = [1, 1]} : vector<64x128xf32> to vector<8x128xf32>
    %cst_66 = arith.constant dense<0.000000e+00> : vector<8x128xf32>
    %207 = tpu.matmul %202, %12, %cst_66 {dimension_numbers = #tpu.dot_dimension_numbers<[1], [0], [0], [1], [0, 0, 1, 1], [], []>} : vector<8x32xf32>, vector<32x128xf32>, vector<8x128xf32> -> vector<8x128xf32>
    %208 = arith.addf %206, %207 : vector<8x128xf32>
    %209 = arith.mulf %208, %11 : vector<8x128xf32>
    %210 = math.tanh %209 : vector<8x128xf32>
    %cst_67 = arith.constant 5.000000e-01 : f32
    %211 = vector.broadcast %cst_67 : f32 to vector<8x128xf32>
    %212 = arith.mulf %211, %210 : vector<8x128xf32>
    %cst_68 = arith.constant 5.000000e-01 : f32
    %213 = vector.broadcast %cst_68 : f32 to vector<8x128xf32>
    %214 = arith.addf %212, %213 : vector<8x128xf32>
    %215 = arith.select %8, %210, %214 : vector<8x128xi1>, vector<8x128xf32>
    %216 = vector.extract_strided_slice %215 {offsets = [0, 0], sizes = [8, 32], strides = [1, 1]} : vector<8x128xf32> to vector<8x32xf32>
    %217 = vector.extract_strided_slice %215 {offsets = [0, 32], sizes = [8, 32], strides = [1, 1]} : vector<8x128xf32> to vector<8x32xf32>
    %218 = vector.extract_strided_slice %215 {offsets = [0, 64], sizes = [8, 32], strides = [1, 1]} : vector<8x128xf32> to vector<8x32xf32>
    %219 = vector.extract_strided_slice %215 {offsets = [0, 96], sizes = [8, 32], strides = [1, 1]} : vector<8x128xf32> to vector<8x32xf32>
    %220 = arith.mulf %217, %200 : vector<8x32xf32>
    %221 = arith.mulf %216, %218 : vector<8x32xf32>
    %222 = arith.addf %220, %221 : vector<8x32xf32>
    %223 = math.tanh %222 : vector<8x32xf32>
    %224 = arith.mulf %219, %223 : vector<8x32xf32>
    %c0_69 = arith.constant 0 : index
    %c0_70 = arith.constant 0 : index
    %c192 = arith.constant 192 : index
    %225 = vector.load %arg29[%c0_69, %c0_70, %c192] : memref<3x8x256xf32, #tpu.memory_space<vmem>>, vector<1x8x32xf32>
    %226 = vector.shape_cast %225 : vector<1x8x32xf32> to vector<8x32xf32>
    %227 = vector.shape_cast %224 : vector<8x32xf32> to vector<1x8x32xf32>
    tpu.vector_store %arg29[%c0_69, %c0_70, %c192], %227 {strides = array<i32>} : memref<3x8x256xf32, #tpu.memory_space<vmem>>, vector<1x8x32xf32>,
    %228 = vector.extract_strided_slice %70 {offsets = [56, 0], sizes = [8, 128], strides = [1, 1]} : vector<64x128xf32> to vector<8x128xf32>
    %cst_71 = arith.constant dense<0.000000e+00> : vector<8x128xf32>
    %229 = tpu.matmul %224, %12, %cst_71 {dimension_numbers = #tpu.dot_dimension_numbers<[1], [0], [0], [1], [0, 0, 1, 1], [], []>} : vector<8x32xf32>, vector<32x128xf32>, vector<8x128xf32> -> vector<8x128xf32>
    %230 = arith.addf %228, %229 : vector<8x128xf32>
    %231 = arith.mulf %230, %11 : vector<8x128xf32>
    %232 = math.tanh %231 : vector<8x128xf32>
    %cst_72 = arith.constant 5.000000e-01 : f32
    %233 = vector.broadcast %cst_72 : f32 to vector<8x128xf32>
    %234 = arith.mulf %233, %232 : vector<8x128xf32>
    %cst_73 = arith.constant 5.000000e-01 : f32
    %235 = vector.broadcast %cst_73 : f32 to vector<8x128xf32>
    %236 = arith.addf %234, %235 : vector<8x128xf32>
    %237 = arith.select %8, %232, %236 : vector<8x128xi1>, vector<8x128xf32>
    %238 = vector.extract_strided_slice %237 {offsets = [0, 0], sizes = [8, 32], strides = [1, 1]} : vector<8x128xf32> to vector<8x32xf32>
    %239 = vector.extract_strided_slice %237 {offsets = [0, 32], sizes = [8, 32], strides = [1, 1]} : vector<8x128xf32> to vector<8x32xf32>
    %240 = vector.extract_strided_slice %237 {offsets = [0, 64], sizes = [8, 32], strides = [1, 1]} : vector<8x128xf32> to vector<8x32xf32>
    %241 = vector.extract_strided_slice %237 {offsets = [0, 96], sizes = [8, 32], strides = [1, 1]} : vector<8x128xf32> to vector<8x32xf32>
    %242 = arith.mulf %239, %222 : vector<8x32xf32>
    %243 = arith.mulf %238, %240 : vector<8x32xf32>
    %244 = arith.addf %242, %243 : vector<8x32xf32>
    %245 = math.tanh %244 : vector<8x32xf32>
    %246 = arith.mulf %241, %245 : vector<8x32xf32>
    %c0_74 = arith.constant 0 : index
    %c0_75 = arith.constant 0 : index
    %c224 = arith.constant 224 : index
    %247 = vector.load %arg29[%c0_74, %c0_75, %c224] : memref<3x8x256xf32, #tpu.memory_space<vmem>>, vector<1x8x32xf32>
    %248 = vector.shape_cast %247 : vector<1x8x32xf32> to vector<8x32xf32>
    %249 = vector.shape_cast %246 : vector<8x32xf32> to vector<1x8x32xf32>
    tpu.vector_store %arg29[%c0_74, %c0_75, %c224], %249 {strides = array<i32>} : memref<3x8x256xf32, #tpu.memory_space<vmem>>, vector<1x8x32xf32>,
    %250 = tpu.concatenate %92, %114, %136, %158, %180, %202, %224, %246 in 0 : vector<8x32xf32>, vector<8x32xf32>, vector<8x32xf32>, vector<8x32xf32>, vector<8x32xf32>, vector<8x32xf32>, vector<8x32xf32>, vector<8x32xf32> -> vector<64x32xf32>
    %cst_76 = arith.constant dense<0.000000e+00> : vector<64x32xf32>
    %251 = tpu.matmul %250, %13, %cst_76 {dimension_numbers = #tpu.dot_dimension_numbers<[1], [0], [0], [1], [0, 0, 1, 1], [], []>} : vector<64x32xf32>, vector<32x32xf32>, vector<64x32xf32> -> vector<64x32xf32>
    %252 = vector.broadcast %14 : vector<1x32xf32> to vector<64x32xf32>
    %253 = arith.addf %251, %252 : vector<64x32xf32>
    %cst_77 = arith.constant 0.000000e+00 : f32
    %254 = vector.broadcast %cst_77 : f32 to vector<64x32xf32>
    %255 = arith.maximumf %253, %254 : vector<64x32xf32>
    %256 = vector.broadcast %15 : vector<1x32xf32> to vector<64x32xf32>
    %257 = arith.mulf %255, %256 : vector<64x32xf32>
    %cst_78 = arith.constant dense<0.000000e+00> : vector<64xf32>
    %258 = vector.multi_reduction <add>, %257, %cst_78 [1] : vector<64x32xf32> to vector<64xf32>
    %259 = vector.shape_cast %258 : vector<64xf32> to vector<64x1xf32>
    %260 = vector.broadcast %16 : vector<1x1xf32> to vector<64x1xf32>
    %261 = arith.addf %259, %260 : vector<64x1xf32>
    %cst_79 = arith.constant -1.000000e+30 : f32
    %262 = vector.broadcast %cst_79 : f32 to vector<8x8xf32>
    %c1_i32 = arith.constant 1 : i32
    %263 = vector.broadcast %c1_i32 : i32 to vector<8x8xi32>
    %264 = arith.cmpi eq, %2, %263 : vector<8x8xi32>
    %265 = vector.extract_strided_slice %261 {offsets = [8, 0], sizes = [8, 1], strides = [1, 1]} : vector<64x1xf32> to vector<8x1xf32>
    %266 = vector.shape_cast %265 : vector<8x1xf32> to vector<8x1xf32>
    %267 = vector.broadcast %266 : vector<8x1xf32> to vector<8x8xf32>
    %268 = arith.select %264, %267, %262 : vector<8x8xi1>, vector<8x8xf32>
    %c2_i32 = arith.constant 2 : i32
    %269 = vector.broadcast %c2_i32 : i32 to vector<8x8xi32>
    %270 = arith.cmpi eq, %2, %269 : vector<8x8xi32>
    %271 = vector.extract_strided_slice %261 {offsets = [16, 0], sizes = [8, 1], strides = [1, 1]} : vector<64x1xf32> to vector<8x1xf32>
    %272 = vector.shape_cast %271 : vector<8x1xf32> to vector<8x1xf32>
    %273 = vector.broadcast %272 : vector<8x1xf32> to vector<8x8xf32>
    %274 = arith.select %270, %273, %268 : vector<8x8xi1>, vector<8x8xf32>
    %c3_i32 = arith.constant 3 : i32
    %275 = vector.broadcast %c3_i32 : i32 to vector<8x8xi32>
    %276 = arith.cmpi eq, %2, %275 : vector<8x8xi32>
    %277 = vector.extract_strided_slice %261 {offsets = [24, 0], sizes = [8, 1], strides = [1, 1]} : vector<64x1xf32> to vector<8x1xf32>
    %278 = vector.shape_cast %277 : vector<8x1xf32> to vector<8x1xf32>
    %279 = vector.broadcast %278 : vector<8x1xf32> to vector<8x8xf32>
    %280 = arith.select %276, %279, %274 : vector<8x8xi1>, vector<8x8xf32>
    %c4_i32 = arith.constant 4 : i32
    %281 = vector.broadcast %c4_i32 : i32 to vector<8x8xi32>
    %282 = arith.cmpi eq, %2, %281 : vector<8x8xi32>
    %283 = vector.extract_strided_slice %261 {offsets = [32, 0], sizes = [8, 1], strides = [1, 1]} : vector<64x1xf32> to vector<8x1xf32>
    %284 = vector.shape_cast %283 : vector<8x1xf32> to vector<8x1xf32>
    %285 = vector.broadcast %284 : vector<8x1xf32> to vector<8x8xf32>
    %286 = arith.select %282, %285, %280 : vector<8x8xi1>, vector<8x8xf32>
    %c5_i32 = arith.constant 5 : i32
    %287 = vector.broadcast %c5_i32 : i32 to vector<8x8xi32>
    %288 = arith.cmpi eq, %2, %287 : vector<8x8xi32>
    %289 = vector.extract_strided_slice %261 {offsets = [40, 0], sizes = [8, 1], strides = [1, 1]} : vector<64x1xf32> to vector<8x1xf32>
    %290 = vector.shape_cast %289 : vector<8x1xf32> to vector<8x1xf32>
    %291 = vector.broadcast %290 : vector<8x1xf32> to vector<8x8xf32>
    %292 = arith.select %288, %291, %286 : vector<8x8xi1>, vector<8x8xf32>
    %c6_i32 = arith.constant 6 : i32
    %293 = vector.broadcast %c6_i32 : i32 to vector<8x8xi32>
    %294 = arith.cmpi eq, %2, %293 : vector<8x8xi32>
    %295 = vector.extract_strided_slice %261 {offsets = [48, 0], sizes = [8, 1], strides = [1, 1]} : vector<64x1xf32> to vector<8x1xf32>
    %296 = vector.shape_cast %295 : vector<8x1xf32> to vector<8x1xf32>
    %297 = vector.broadcast %296 : vector<8x1xf32> to vector<8x8xf32>
    %298 = arith.select %294, %297, %292 : vector<8x8xi1>, vector<8x8xf32>
    %c7_i32 = arith.constant 7 : i32
    %299 = vector.broadcast %c7_i32 : i32 to vector<8x8xi32>
    %300 = arith.cmpi eq, %2, %299 : vector<8x8xi32>
    %301 = vector.extract_strided_slice %261 {offsets = [56, 0], sizes = [8, 1], strides = [1, 1]} : vector<64x1xf32> to vector<8x1xf32>
    %302 = vector.shape_cast %301 : vector<8x1xf32> to vector<8x1xf32>
    %303 = vector.broadcast %302 : vector<8x1xf32> to vector<8x8xf32>
    %304 = arith.select %300, %303, %298 : vector<8x8xi1>, vector<8x8xf32>
    %305 = arith.addf %304, %0 : vector<8x8xf32>
    %cst_80 = arith.constant dense<0xFF800000> : vector<8xf32>
    %306 = vector.multi_reduction <maximumf>, %305, %cst_80 [1] : vector<8x8xf32> to vector<8xf32>
    %307 = vector.shape_cast %306 : vector<8xf32> to vector<8x1xf32>
    %308 = vector.broadcast %307 : vector<8x1xf32> to vector<8x8xf32>
    %309 = arith.cmpf oeq, %305, %308 : vector<8x8xf32>
    %c8_i32 = arith.constant 8 : i32
    %310 = vector.broadcast %c8_i32 : i32 to vector<8x8xi32>
    %311 = arith.select %309, %2, %310 : vector<8x8xi1>, vector<8x8xi32>
    %cst_81 = arith.constant dense<2147483647> : vector<8xi32>
    %312 = vector.multi_reduction <minsi>, %311, %cst_81 [1] : vector<8x8xi32> to vector<8xi32>
    %313 = vector.shape_cast %312 : vector<8xi32> to vector<8x1xi32>
    %314 = vector.broadcast %313 : vector<8x1xi32> to vector<8x8xi32>
    %315 = arith.cmpi eq, %2, %314 : vector<8x8xi32>
    %316 = arith.extui %315 : vector<8x8xi1> to vector<8x8xi32>
    %317 = arith.sitofp %316 : vector<8x8xi32> to vector<8x8xf32>
    %318 = vector.broadcast %313 : vector<8x1xi32> to vector<8x8xi32>
    %319 = arith.cmpi sge, %2, %318 : vector<8x8xi32>
    %320 = arith.extui %319 : vector<8x8xi1> to vector<8x8xi32>
    %321 = arith.sitofp %320 : vector<8x8xi32> to vector<8x8xf32>
    %cst_82 = arith.constant 0.000000e+00 : f32
    %322 = vector.broadcast %cst_82 : f32 to vector<8x32xf32>
    %323 = vector.extract_strided_slice %317 {offsets = [0, 1], sizes = [8, 1], strides = [1, 1]} : vector<8x8xf32> to vector<8x1xf32>
    %324 = vector.broadcast %323 : vector<8x1xf32> to vector<8x32xf32>
    %325 = arith.mulf %92, %324 : vector<8x32xf32>
    %326 = arith.addf %322, %325 : vector<8x32xf32>
    %327 = vector.extract_strided_slice %317 {offsets = [0, 2], sizes = [8, 1], strides = [1, 1]} : vector<8x8xf32> to vector<8x1xf32>
    %328 = vector.broadcast %327 : vector<8x1xf32> to vector<8x32xf32>
    %329 = arith.mulf %114, %328 : vector<8x32xf32>
    %330 = arith.addf %326, %329 : vector<8x32xf32>
    %331 = vector.extract_strided_slice %317 {offsets = [0, 3], sizes = [8, 1], strides = [1, 1]} : vector<8x8xf32> to vector<8x1xf32>
    %332 = vector.broadcast %331 : vector<8x1xf32> to vector<8x32xf32>
    %333 = arith.mulf %136, %332 : vector<8x32xf32>
    %334 = arith.addf %330, %333 : vector<8x32xf32>
    %335 = vector.extract_strided_slice %317 {offsets = [0, 4], sizes = [8, 1], strides = [1, 1]} : vector<8x8xf32> to vector<8x1xf32>
    %336 = vector.broadcast %335 : vector<8x1xf32> to vector<8x32xf32>
    %337 = arith.mulf %158, %336 : vector<8x32xf32>
    %338 = arith.addf %334, %337 : vector<8x32xf32>
    %339 = vector.extract_strided_slice %317 {offsets = [0, 5], sizes = [8, 1], strides = [1, 1]} : vector<8x8xf32> to vector<8x1xf32>
    %340 = vector.broadcast %339 : vector<8x1xf32> to vector<8x32xf32>
    %341 = arith.mulf %180, %340 : vector<8x32xf32>
    %342 = arith.addf %338, %341 : vector<8x32xf32>
    %343 = vector.extract_strided_slice %317 {offsets = [0, 6], sizes = [8, 1], strides = [1, 1]} : vector<8x8xf32> to vector<8x1xf32>
    %344 = vector.broadcast %343 : vector<8x1xf32> to vector<8x32xf32>
    %345 = arith.mulf %202, %344 : vector<8x32xf32>
    %346 = arith.addf %342, %345 : vector<8x32xf32>
    %347 = vector.extract_strided_slice %317 {offsets = [0, 7], sizes = [8, 1], strides = [1, 1]} : vector<8x8xf32> to vector<8x1xf32>
    %348 = vector.broadcast %347 : vector<8x1xf32> to vector<8x32xf32>
    %349 = arith.mulf %224, %348 : vector<8x32xf32>
    %350 = arith.addf %346, %349 : vector<8x32xf32>
    %cst_83 = arith.constant dense<0.000000e+00> : vector<8x32xf32>
    %351 = tpu.matmul %350, %17, %cst_83 {dimension_numbers = #tpu.dot_dimension_numbers<[1], [0], [0], [1], [0, 0, 1, 1], [], []>} : vector<8x32xf32>, vector<32x32xf32>, vector<8x32xf32> -> vector<8x32xf32>
    %352 = vector.broadcast %18 : vector<1x32xf32> to vector<8x32xf32>
    %353 = arith.addf %351, %352 : vector<8x32xf32>
    %cst_84 = arith.constant 0.000000e+00 : f32
    %354 = vector.broadcast %cst_84 : f32 to vector<8x32xf32>
    %355 = arith.maximumf %353, %354 : vector<8x32xf32>
    %cst_85 = arith.constant dense<0.000000e+00> : vector<8x16xf32>
    %356 = tpu.matmul %355, %19, %cst_85 {dimension_numbers = #tpu.dot_dimension_numbers<[1], [0], [0], [1], [0, 0, 1, 1], [], []>} : vector<8x32xf32>, vector<32x16xf32>, vector<8x16xf32> -> vector<8x16xf32>
    %357 = vector.broadcast %20 : vector<1x16xf32> to vector<8x16xf32>
    %358 = arith.addf %356, %357 : vector<8x16xf32>
    %359 = vector.extract_strided_slice %358 {offsets = [0, 0], sizes = [8, 8], strides = [1, 1]} : vector<8x16xf32> to vector<8x8xf32>
    %cst_86 = arith.constant 1.000000e-17 : f32
    %360 = vector.broadcast %cst_86 : f32 to vector<8x8xf32>
    %361 = arith.addf %321, %360 : vector<8x8xf32>
    %362 = math.log %361 : vector<8x8xf32>
    %363 = arith.addf %71, %362 : vector<8x8xf32>
    %364 = math.exp %363 : vector<8x8xf32>
    %c0_87 = arith.constant 0 : index
    %c0_88 = arith.constant 0 : index
    %c0_89 = arith.constant 0 : index
    %365 = vector.load %arg30[%c0_87, %c0_88, %c0_89] : memref<3x8x128xf32, #tpu.memory_space<vmem>>, vector<1x8x8xf32>
    %366 = vector.shape_cast %365 : vector<1x8x8xf32> to vector<8x8xf32>
    %367 = vector.shape_cast %305 : vector<8x8xf32> to vector<1x8x8xf32>
    tpu.vector_store %arg30[%c0_87, %c0_88, %c0_89], %367 {strides = array<i32>} : memref<3x8x128xf32, #tpu.memory_space<vmem>>, vector<1x8x8xf32>,
    %c0_90 = arith.constant 0 : index
    %c0_91 = arith.constant 0 : index
    %c8 = arith.constant 8 : index
    %368 = vector.load %arg30[%c0_90, %c0_91, %c8] : memref<3x8x128xf32, #tpu.memory_space<vmem>>, vector<1x8x8xf32>
    %369 = vector.shape_cast %368 : vector<1x8x8xf32> to vector<8x8xf32>
    %370 = vector.shape_cast %317 : vector<8x8xf32> to vector<1x8x8xf32>
    tpu.vector_store %arg30[%c0_90, %c0_91, %c8], %370 {strides = array<i32>} : memref<3x8x128xf32, #tpu.memory_space<vmem>>, vector<1x8x8xf32>,
    %c0_92 = arith.constant 0 : index
    %c0_93 = arith.constant 0 : index
    %c16 = arith.constant 16 : index
    %371 = vector.load %arg30[%c0_92, %c0_93, %c16] : memref<3x8x128xf32, #tpu.memory_space<vmem>>, vector<1x8x8xf32>
    %372 = vector.shape_cast %371 : vector<1x8x8xf32> to vector<8x8xf32>
    %373 = vector.shape_cast %364 : vector<8x8xf32> to vector<1x8x8xf32>
    tpu.vector_store %arg30[%c0_92, %c0_93, %c16], %373 {strides = array<i32>} : memref<3x8x128xf32, #tpu.memory_space<vmem>>, vector<1x8x8xf32>,
    %c0_94 = arith.constant 0 : index
    %c0_95 = arith.constant 0 : index
    %c24 = arith.constant 24 : index
    %374 = vector.load %arg30[%c0_94, %c0_95, %c24] : memref<3x8x128xf32, #tpu.memory_space<vmem>>, vector<1x8x16xf32>
    %375 = vector.shape_cast %374 : vector<1x8x16xf32> to vector<8x16xf32>
    %376 = vector.shape_cast %358 : vector<8x16xf32> to vector<1x8x16xf32>
    tpu.vector_store %arg30[%c0_94, %c0_95, %c24], %376 {strides = array<i32>} : memref<3x8x128xf32, #tpu.memory_space<vmem>>, vector<1x8x16xf32>,
    %cst_96 = arith.constant 0.000000e+00 : f32
    %377 = vector.broadcast %cst_96 : f32 to vector<8x88xf32>
    %c0_97 = arith.constant 0 : index
    %c0_98 = arith.constant 0 : index
    %c40 = arith.constant 40 : index
    %378 = vector.load %arg30[%c0_97, %c0_98, %c40] : memref<3x8x128xf32, #tpu.memory_space<vmem>>, vector<1x8x88xf32>
    %379 = vector.shape_cast %378 : vector<1x8x88xf32> to vector<8x88xf32>
    %380 = vector.shape_cast %377 : vector<8x88xf32> to vector<1x8x88xf32>
    tpu.vector_store %arg30[%c0_97, %c0_98, %c40], %380 {strides = array<i32>} : memref<3x8x128xf32, #tpu.memory_space<vmem>>, vector<1x8x88xf32>,
    %cst_99 = arith.constant 0.000000e+00 : f32
    %381 = vector.broadcast %cst_99 : f32 to vector<8x32xf32>
    %cst_100 = arith.constant 0.000000e+00 : f32
    %382 = vector.broadcast %cst_100 : f32 to vector<8x32xf32>
    %383 = vector.extract_strided_slice %70 {offsets = [0, 0], sizes = [8, 128], strides = [1, 1]} : vector<64x128xf32> to vector<8x128xf32>
    %cst_101 = arith.constant dense<0.000000e+00> : vector<8x128xf32>
    %384 = tpu.matmul %381, %12, %cst_101 {dimension_numbers = #tpu.dot_dimension_numbers<[1], [0], [0], [1], [0, 0, 1, 1], [], []>} : vector<8x32xf32>, vector<32x128xf32>, vector<8x128xf32> -> vector<8x128xf32>
    %385 = arith.addf %383, %384 : vector<8x128xf32>
    %386 = arith.mulf %385, %11 : vector<8x128xf32>
    %387 = math.tanh %386 : vector<8x128xf32>
    %cst_102 = arith.constant 5.000000e-01 : f32
    %388 = vector.broadcast %cst_102 : f32 to vector<8x128xf32>
    %389 = arith.mulf %388, %387 : vector<8x128xf32>
    %cst_103 = arith.constant 5.000000e-01 : f32
    %390 = vector.broadcast %cst_103 : f32 to vector<8x128xf32>
    %391 = arith.addf %389, %390 : vector<8x128xf32>
    %392 = arith.select %8, %387, %391 : vector<8x128xi1>, vector<8x128xf32>
    %393 = vector.extract_strided_slice %392 {offsets = [0, 0], sizes = [8, 32], strides = [1, 1]} : vector<8x128xf32> to vector<8x32xf32>
    %394 = vector.extract_strided_slice %392 {offsets = [0, 32], sizes = [8, 32], strides = [1, 1]} : vector<8x128xf32> to vector<8x32xf32>
    %395 = vector.extract_strided_slice %392 {offsets = [0, 64], sizes = [8, 32], strides = [1, 1]} : vector<8x128xf32> to vector<8x32xf32>
    %396 = vector.extract_strided_slice %392 {offsets = [0, 96], sizes = [8, 32], strides = [1, 1]} : vector<8x128xf32> to vector<8x32xf32>
    %397 = arith.mulf %394, %382 : vector<8x32xf32>
    %398 = arith.mulf %393, %395 : vector<8x32xf32>
    %399 = arith.addf %397, %398 : vector<8x32xf32>
    %400 = math.tanh %399 : vector<8x32xf32>
    %401 = arith.mulf %396, %400 : vector<8x32xf32>
    %402 = vector.extract_strided_slice %364 {offsets = [0, 0], sizes = [8, 1], strides = [1, 1]} : vector<8x8xf32> to vector<8x1xf32>
    %403 = vector.broadcast %402 : vector<8x1xf32> to vector<8x32xf32>
    %404 = arith.mulf %401, %403 : vector<8x32xf32>
    %405 = vector.broadcast %402 : vector<8x1xf32> to vector<8x32xf32>
    %406 = arith.mulf %399, %405 : vector<8x32xf32>
    %c1 = arith.constant 1 : index
    %c0_104 = arith.constant 0 : index
    %c0_105 = arith.constant 0 : index
    %407 = vector.load %arg29[%c1, %c0_104, %c0_105] : memref<3x8x256xf32, #tpu.memory_space<vmem>>, vector<1x8x32xf32>
    %408 = vector.shape_cast %407 : vector<1x8x32xf32> to vector<8x32xf32>
    %409 = vector.shape_cast %404 : vector<8x32xf32> to vector<1x8x32xf32>
    tpu.vector_store %arg29[%c1, %c0_104, %c0_105], %409 {strides = array<i32>} : memref<3x8x256xf32, #tpu.memory_space<vmem>>, vector<1x8x32xf32>,
    %410 = vector.extract_strided_slice %70 {offsets = [8, 0], sizes = [8, 128], strides = [1, 1]} : vector<64x128xf32> to vector<8x128xf32>
    %cst_106 = arith.constant dense<0.000000e+00> : vector<8x128xf32>
    %411 = tpu.matmul %404, %12, %cst_106 {dimension_numbers = #tpu.dot_dimension_numbers<[1], [0], [0], [1], [0, 0, 1, 1], [], []>} : vector<8x32xf32>, vector<32x128xf32>, vector<8x128xf32> -> vector<8x128xf32>
    %412 = arith.addf %410, %411 : vector<8x128xf32>
    %413 = arith.mulf %412, %11 : vector<8x128xf32>
    %414 = math.tanh %413 : vector<8x128xf32>
    %cst_107 = arith.constant 5.000000e-01 : f32
    %415 = vector.broadcast %cst_107 : f32 to vector<8x128xf32>
    %416 = arith.mulf %415, %414 : vector<8x128xf32>
    %cst_108 = arith.constant 5.000000e-01 : f32
    %417 = vector.broadcast %cst_108 : f32 to vector<8x128xf32>
    %418 = arith.addf %416, %417 : vector<8x128xf32>
    %419 = arith.select %8, %414, %418 : vector<8x128xi1>, vector<8x128xf32>
    %420 = vector.extract_strided_slice %419 {offsets = [0, 0], sizes = [8, 32], strides = [1, 1]} : vector<8x128xf32> to vector<8x32xf32>
    %421 = vector.extract_strided_slice %419 {offsets = [0, 32], sizes = [8, 32], strides = [1, 1]} : vector<8x128xf32> to vector<8x32xf32>
    %422 = vector.extract_strided_slice %419 {offsets = [0, 64], sizes = [8, 32], strides = [1, 1]} : vector<8x128xf32> to vector<8x32xf32>
    %423 = vector.extract_strided_slice %419 {offsets = [0, 96], sizes = [8, 32], strides = [1, 1]} : vector<8x128xf32> to vector<8x32xf32>
    %424 = arith.mulf %421, %406 : vector<8x32xf32>
    %425 = arith.mulf %420, %422 : vector<8x32xf32>
    %426 = arith.addf %424, %425 : vector<8x32xf32>
    %427 = math.tanh %426 : vector<8x32xf32>
    %428 = arith.mulf %423, %427 : vector<8x32xf32>
    %429 = vector.extract_strided_slice %364 {offsets = [0, 1], sizes = [8, 1], strides = [1, 1]} : vector<8x8xf32> to vector<8x1xf32>
    %430 = vector.broadcast %429 : vector<8x1xf32> to vector<8x32xf32>
    %431 = arith.mulf %428, %430 : vector<8x32xf32>
    %432 = vector.broadcast %429 : vector<8x1xf32> to vector<8x32xf32>
    %433 = arith.mulf %426, %432 : vector<8x32xf32>
    %c1_109 = arith.constant 1 : index
    %c0_110 = arith.constant 0 : index
    %c32_111 = arith.constant 32 : index
    %434 = vector.load %arg29[%c1_109, %c0_110, %c32_111] : memref<3x8x256xf32, #tpu.memory_space<vmem>>, vector<1x8x32xf32>
    %435 = vector.shape_cast %434 : vector<1x8x32xf32> to vector<8x32xf32>
    %436 = vector.shape_cast %431 : vector<8x32xf32> to vector<1x8x32xf32>
    tpu.vector_store %arg29[%c1_109, %c0_110, %c32_111], %436 {strides = array<i32>} : memref<3x8x256xf32, #tpu.memory_space<vmem>>, vector<1x8x32xf32>,
    %437 = vector.extract_strided_slice %70 {offsets = [16, 0], sizes = [8, 128], strides = [1, 1]} : vector<64x128xf32> to vector<8x128xf32>
    %cst_112 = arith.constant dense<0.000000e+00> : vector<8x128xf32>
    %438 = tpu.matmul %431, %12, %cst_112 {dimension_numbers = #tpu.dot_dimension_numbers<[1], [0], [0], [1], [0, 0, 1, 1], [], []>} : vector<8x32xf32>, vector<32x128xf32>, vector<8x128xf32> -> vector<8x128xf32>
    %439 = arith.addf %437, %438 : vector<8x128xf32>
    %440 = arith.mulf %439, %11 : vector<8x128xf32>
    %441 = math.tanh %440 : vector<8x128xf32>
    %cst_113 = arith.constant 5.000000e-01 : f32
    %442 = vector.broadcast %cst_113 : f32 to vector<8x128xf32>
    %443 = arith.mulf %442, %441 : vector<8x128xf32>
    %cst_114 = arith.constant 5.000000e-01 : f32
    %444 = vector.broadcast %cst_114 : f32 to vector<8x128xf32>
    %445 = arith.addf %443, %444 : vector<8x128xf32>
    %446 = arith.select %8, %441, %445 : vector<8x128xi1>, vector<8x128xf32>
    %447 = vector.extract_strided_slice %446 {offsets = [0, 0], sizes = [8, 32], strides = [1, 1]} : vector<8x128xf32> to vector<8x32xf32>
    %448 = vector.extract_strided_slice %446 {offsets = [0, 32], sizes = [8, 32], strides = [1, 1]} : vector<8x128xf32> to vector<8x32xf32>
    %449 = vector.extract_strided_slice %446 {offsets = [0, 64], sizes = [8, 32], strides = [1, 1]} : vector<8x128xf32> to vector<8x32xf32>
    %450 = vector.extract_strided_slice %446 {offsets = [0, 96], sizes = [8, 32], strides = [1, 1]} : vector<8x128xf32> to vector<8x32xf32>
    %451 = arith.mulf %448, %433 : vector<8x32xf32>
    %452 = arith.mulf %447, %449 : vector<8x32xf32>
    %453 = arith.addf %451, %452 : vector<8x32xf32>
    %454 = math.tanh %453 : vector<8x32xf32>
    %455 = arith.mulf %450, %454 : vector<8x32xf32>
    %456 = vector.extract_strided_slice %364 {offsets = [0, 2], sizes = [8, 1], strides = [1, 1]} : vector<8x8xf32> to vector<8x1xf32>
    %457 = vector.broadcast %456 : vector<8x1xf32> to vector<8x32xf32>
    %458 = arith.mulf %455, %457 : vector<8x32xf32>
    %459 = vector.broadcast %456 : vector<8x1xf32> to vector<8x32xf32>
    %460 = arith.mulf %453, %459 : vector<8x32xf32>
    %c1_115 = arith.constant 1 : index
    %c0_116 = arith.constant 0 : index
    %c64_117 = arith.constant 64 : index
    %461 = vector.load %arg29[%c1_115, %c0_116, %c64_117] : memref<3x8x256xf32, #tpu.memory_space<vmem>>, vector<1x8x32xf32>
    %462 = vector.shape_cast %461 : vector<1x8x32xf32> to vector<8x32xf32>
    %463 = vector.shape_cast %458 : vector<8x32xf32> to vector<1x8x32xf32>
    tpu.vector_store %arg29[%c1_115, %c0_116, %c64_117], %463 {strides = array<i32>} : memref<3x8x256xf32, #tpu.memory_space<vmem>>, vector<1x8x32xf32>,
    %464 = vector.extract_strided_slice %70 {offsets = [24, 0], sizes = [8, 128], strides = [1, 1]} : vector<64x128xf32> to vector<8x128xf32>
    %cst_118 = arith.constant dense<0.000000e+00> : vector<8x128xf32>
    %465 = tpu.matmul %458, %12, %cst_118 {dimension_numbers = #tpu.dot_dimension_numbers<[1], [0], [0], [1], [0, 0, 1, 1], [], []>} : vector<8x32xf32>, vector<32x128xf32>, vector<8x128xf32> -> vector<8x128xf32>
    %466 = arith.addf %464, %465 : vector<8x128xf32>
    %467 = arith.mulf %466, %11 : vector<8x128xf32>
    %468 = math.tanh %467 : vector<8x128xf32>
    %cst_119 = arith.constant 5.000000e-01 : f32
    %469 = vector.broadcast %cst_119 : f32 to vector<8x128xf32>
    %470 = arith.mulf %469, %468 : vector<8x128xf32>
    %cst_120 = arith.constant 5.000000e-01 : f32
    %471 = vector.broadcast %cst_120 : f32 to vector<8x128xf32>
    %472 = arith.addf %470, %471 : vector<8x128xf32>
    %473 = arith.select %8, %468, %472 : vector<8x128xi1>, vector<8x128xf32>
    %474 = vector.extract_strided_slice %473 {offsets = [0, 0], sizes = [8, 32], strides = [1, 1]} : vector<8x128xf32> to vector<8x32xf32>
    %475 = vector.extract_strided_slice %473 {offsets = [0, 32], sizes = [8, 32], strides = [1, 1]} : vector<8x128xf32> to vector<8x32xf32>
    %476 = vector.extract_strided_slice %473 {offsets = [0, 64], sizes = [8, 32], strides = [1, 1]} : vector<8x128xf32> to vector<8x32xf32>
    %477 = vector.extract_strided_slice %473 {offsets = [0, 96], sizes = [8, 32], strides = [1, 1]} : vector<8x128xf32> to vector<8x32xf32>
    %478 = arith.mulf %475, %460 : vector<8x32xf32>
    %479 = arith.mulf %474, %476 : vector<8x32xf32>
    %480 = arith.addf %478, %479 : vector<8x32xf32>
    %481 = math.tanh %480 : vector<8x32xf32>
    %482 = arith.mulf %477, %481 : vector<8x32xf32>
    %483 = vector.extract_strided_slice %364 {offsets = [0, 3], sizes = [8, 1], strides = [1, 1]} : vector<8x8xf32> to vector<8x1xf32>
    %484 = vector.broadcast %483 : vector<8x1xf32> to vector<8x32xf32>
    %485 = arith.mulf %482, %484 : vector<8x32xf32>
    %486 = vector.broadcast %483 : vector<8x1xf32> to vector<8x32xf32>
    %487 = arith.mulf %480, %486 : vector<8x32xf32>
    %c1_121 = arith.constant 1 : index
    %c0_122 = arith.constant 0 : index
    %c96_123 = arith.constant 96 : index
    %488 = vector.load %arg29[%c1_121, %c0_122, %c96_123] : memref<3x8x256xf32, #tpu.memory_space<vmem>>, vector<1x8x32xf32>
    %489 = vector.shape_cast %488 : vector<1x8x32xf32> to vector<8x32xf32>
    %490 = vector.shape_cast %485 : vector<8x32xf32> to vector<1x8x32xf32>
    tpu.vector_store %arg29[%c1_121, %c0_122, %c96_123], %490 {strides = array<i32>} : memref<3x8x256xf32, #tpu.memory_space<vmem>>, vector<1x8x32xf32>,
    %491 = vector.extract_strided_slice %70 {offsets = [32, 0], sizes = [8, 128], strides = [1, 1]} : vector<64x128xf32> to vector<8x128xf32>
    %cst_124 = arith.constant dense<0.000000e+00> : vector<8x128xf32>
    %492 = tpu.matmul %485, %12, %cst_124 {dimension_numbers = #tpu.dot_dimension_numbers<[1], [0], [0], [1], [0, 0, 1, 1], [], []>} : vector<8x32xf32>, vector<32x128xf32>, vector<8x128xf32> -> vector<8x128xf32>
    %493 = arith.addf %491, %492 : vector<8x128xf32>
    %494 = arith.mulf %493, %11 : vector<8x128xf32>
    %495 = math.tanh %494 : vector<8x128xf32>
    %cst_125 = arith.constant 5.000000e-01 : f32
    %496 = vector.broadcast %cst_125 : f32 to vector<8x128xf32>
    %497 = arith.mulf %496, %495 : vector<8x128xf32>
    %cst_126 = arith.constant 5.000000e-01 : f32
    %498 = vector.broadcast %cst_126 : f32 to vector<8x128xf32>
    %499 = arith.addf %497, %498 : vector<8x128xf32>
    %500 = arith.select %8, %495, %499 : vector<8x128xi1>, vector<8x128xf32>
    %501 = vector.extract_strided_slice %500 {offsets = [0, 0], sizes = [8, 32], strides = [1, 1]} : vector<8x128xf32> to vector<8x32xf32>
    %502 = vector.extract_strided_slice %500 {offsets = [0, 32], sizes = [8, 32], strides = [1, 1]} : vector<8x128xf32> to vector<8x32xf32>
    %503 = vector.extract_strided_slice %500 {offsets = [0, 64], sizes = [8, 32], strides = [1, 1]} : vector<8x128xf32> to vector<8x32xf32>
    %504 = vector.extract_strided_slice %500 {offsets = [0, 96], sizes = [8, 32], strides = [1, 1]} : vector<8x128xf32> to vector<8x32xf32>
    %505 = arith.mulf %502, %487 : vector<8x32xf32>
    %506 = arith.mulf %501, %503 : vector<8x32xf32>
    %507 = arith.addf %505, %506 : vector<8x32xf32>
    %508 = math.tanh %507 : vector<8x32xf32>
    %509 = arith.mulf %504, %508 : vector<8x32xf32>
    %510 = vector.extract_strided_slice %364 {offsets = [0, 4], sizes = [8, 1], strides = [1, 1]} : vector<8x8xf32> to vector<8x1xf32>
    %511 = vector.broadcast %510 : vector<8x1xf32> to vector<8x32xf32>
    %512 = arith.mulf %509, %511 : vector<8x32xf32>
    %513 = vector.broadcast %510 : vector<8x1xf32> to vector<8x32xf32>
    %514 = arith.mulf %507, %513 : vector<8x32xf32>
    %c1_127 = arith.constant 1 : index
    %c0_128 = arith.constant 0 : index
    %c128_129 = arith.constant 128 : index
    %515 = vector.load %arg29[%c1_127, %c0_128, %c128_129] : memref<3x8x256xf32, #tpu.memory_space<vmem>>, vector<1x8x32xf32>
    %516 = vector.shape_cast %515 : vector<1x8x32xf32> to vector<8x32xf32>
    %517 = vector.shape_cast %512 : vector<8x32xf32> to vector<1x8x32xf32>
    tpu.vector_store %arg29[%c1_127, %c0_128, %c128_129], %517 {strides = array<i32>} : memref<3x8x256xf32, #tpu.memory_space<vmem>>, vector<1x8x32xf32>,
    %518 = vector.extract_strided_slice %70 {offsets = [40, 0], sizes = [8, 128], strides = [1, 1]} : vector<64x128xf32> to vector<8x128xf32>
    %cst_130 = arith.constant dense<0.000000e+00> : vector<8x128xf32>
    %519 = tpu.matmul %512, %12, %cst_130 {dimension_numbers = #tpu.dot_dimension_numbers<[1], [0], [0], [1], [0, 0, 1, 1], [], []>} : vector<8x32xf32>, vector<32x128xf32>, vector<8x128xf32> -> vector<8x128xf32>
    %520 = arith.addf %518, %519 : vector<8x128xf32>
    %521 = arith.mulf %520, %11 : vector<8x128xf32>
    %522 = math.tanh %521 : vector<8x128xf32>
    %cst_131 = arith.constant 5.000000e-01 : f32
    %523 = vector.broadcast %cst_131 : f32 to vector<8x128xf32>
    %524 = arith.mulf %523, %522 : vector<8x128xf32>
    %cst_132 = arith.constant 5.000000e-01 : f32
    %525 = vector.broadcast %cst_132 : f32 to vector<8x128xf32>
    %526 = arith.addf %524, %525 : vector<8x128xf32>
    %527 = arith.select %8, %522, %526 : vector<8x128xi1>, vector<8x128xf32>
    %528 = vector.extract_strided_slice %527 {offsets = [0, 0], sizes = [8, 32], strides = [1, 1]} : vector<8x128xf32> to vector<8x32xf32>
    %529 = vector.extract_strided_slice %527 {offsets = [0, 32], sizes = [8, 32], strides = [1, 1]} : vector<8x128xf32> to vector<8x32xf32>
    %530 = vector.extract_strided_slice %527 {offsets = [0, 64], sizes = [8, 32], strides = [1, 1]} : vector<8x128xf32> to vector<8x32xf32>
    %531 = vector.extract_strided_slice %527 {offsets = [0, 96], sizes = [8, 32], strides = [1, 1]} : vector<8x128xf32> to vector<8x32xf32>
    %532 = arith.mulf %529, %514 : vector<8x32xf32>
    %533 = arith.mulf %528, %530 : vector<8x32xf32>
    %534 = arith.addf %532, %533 : vector<8x32xf32>
    %535 = math.tanh %534 : vector<8x32xf32>
    %536 = arith.mulf %531, %535 : vector<8x32xf32>
    %537 = vector.extract_strided_slice %364 {offsets = [0, 5], sizes = [8, 1], strides = [1, 1]} : vector<8x8xf32> to vector<8x1xf32>
    %538 = vector.broadcast %537 : vector<8x1xf32> to vector<8x32xf32>
    %539 = arith.mulf %536, %538 : vector<8x32xf32>
    %540 = vector.broadcast %537 : vector<8x1xf32> to vector<8x32xf32>
    %541 = arith.mulf %534, %540 : vector<8x32xf32>
    %c1_133 = arith.constant 1 : index
    %c0_134 = arith.constant 0 : index
    %c160_135 = arith.constant 160 : index
    %542 = vector.load %arg29[%c1_133, %c0_134, %c160_135] : memref<3x8x256xf32, #tpu.memory_space<vmem>>, vector<1x8x32xf32>
    %543 = vector.shape_cast %542 : vector<1x8x32xf32> to vector<8x32xf32>
    %544 = vector.shape_cast %539 : vector<8x32xf32> to vector<1x8x32xf32>
    tpu.vector_store %arg29[%c1_133, %c0_134, %c160_135], %544 {strides = array<i32>} : memref<3x8x256xf32, #tpu.memory_space<vmem>>, vector<1x8x32xf32>,
    %545 = vector.extract_strided_slice %70 {offsets = [48, 0], sizes = [8, 128], strides = [1, 1]} : vector<64x128xf32> to vector<8x128xf32>
    %cst_136 = arith.constant dense<0.000000e+00> : vector<8x128xf32>
    %546 = tpu.matmul %539, %12, %cst_136 {dimension_numbers = #tpu.dot_dimension_numbers<[1], [0], [0], [1], [0, 0, 1, 1], [], []>} : vector<8x32xf32>, vector<32x128xf32>, vector<8x128xf32> -> vector<8x128xf32>
    %547 = arith.addf %545, %546 : vector<8x128xf32>
    %548 = arith.mulf %547, %11 : vector<8x128xf32>
    %549 = math.tanh %548 : vector<8x128xf32>
    %cst_137 = arith.constant 5.000000e-01 : f32
    %550 = vector.broadcast %cst_137 : f32 to vector<8x128xf32>
    %551 = arith.mulf %550, %549 : vector<8x128xf32>
    %cst_138 = arith.constant 5.000000e-01 : f32
    %552 = vector.broadcast %cst_138 : f32 to vector<8x128xf32>
    %553 = arith.addf %551, %552 : vector<8x128xf32>
    %554 = arith.select %8, %549, %553 : vector<8x128xi1>, vector<8x128xf32>
    %555 = vector.extract_strided_slice %554 {offsets = [0, 0], sizes = [8, 32], strides = [1, 1]} : vector<8x128xf32> to vector<8x32xf32>
    %556 = vector.extract_strided_slice %554 {offsets = [0, 32], sizes = [8, 32], strides = [1, 1]} : vector<8x128xf32> to vector<8x32xf32>
    %557 = vector.extract_strided_slice %554 {offsets = [0, 64], sizes = [8, 32], strides = [1, 1]} : vector<8x128xf32> to vector<8x32xf32>
    %558 = vector.extract_strided_slice %554 {offsets = [0, 96], sizes = [8, 32], strides = [1, 1]} : vector<8x128xf32> to vector<8x32xf32>
    %559 = arith.mulf %556, %541 : vector<8x32xf32>
    %560 = arith.mulf %555, %557 : vector<8x32xf32>
    %561 = arith.addf %559, %560 : vector<8x32xf32>
    %562 = math.tanh %561 : vector<8x32xf32>
    %563 = arith.mulf %558, %562 : vector<8x32xf32>
    %564 = vector.extract_strided_slice %364 {offsets = [0, 6], sizes = [8, 1], strides = [1, 1]} : vector<8x8xf32> to vector<8x1xf32>
    %565 = vector.broadcast %564 : vector<8x1xf32> to vector<8x32xf32>
    %566 = arith.mulf %563, %565 : vector<8x32xf32>
    %567 = vector.broadcast %564 : vector<8x1xf32> to vector<8x32xf32>
    %568 = arith.mulf %561, %567 : vector<8x32xf32>
    %c1_139 = arith.constant 1 : index
    %c0_140 = arith.constant 0 : index
    %c192_141 = arith.constant 192 : index
    %569 = vector.load %arg29[%c1_139, %c0_140, %c192_141] : memref<3x8x256xf32, #tpu.memory_space<vmem>>, vector<1x8x32xf32>
    %570 = vector.shape_cast %569 : vector<1x8x32xf32> to vector<8x32xf32>
    %571 = vector.shape_cast %566 : vector<8x32xf32> to vector<1x8x32xf32>
    tpu.vector_store %arg29[%c1_139, %c0_140, %c192_141], %571 {strides = array<i32>} : memref<3x8x256xf32, #tpu.memory_space<vmem>>, vector<1x8x32xf32>,
    %572 = vector.extract_strided_slice %70 {offsets = [56, 0], sizes = [8, 128], strides = [1, 1]} : vector<64x128xf32> to vector<8x128xf32>
    %cst_142 = arith.constant dense<0.000000e+00> : vector<8x128xf32>
    %573 = tpu.matmul %566, %12, %cst_142 {dimension_numbers = #tpu.dot_dimension_numbers<[1], [0], [0], [1], [0, 0, 1, 1], [], []>} : vector<8x32xf32>, vector<32x128xf32>, vector<8x128xf32> -> vector<8x128xf32>
    %574 = arith.addf %572, %573 : vector<8x128xf32>
    %575 = arith.mulf %574, %11 : vector<8x128xf32>
    %576 = math.tanh %575 : vector<8x128xf32>
    %cst_143 = arith.constant 5.000000e-01 : f32
    %577 = vector.broadcast %cst_143 : f32 to vector<8x128xf32>
    %578 = arith.mulf %577, %576 : vector<8x128xf32>
    %cst_144 = arith.constant 5.000000e-01 : f32
    %579 = vector.broadcast %cst_144 : f32 to vector<8x128xf32>
    %580 = arith.addf %578, %579 : vector<8x128xf32>
    %581 = arith.select %8, %576, %580 : vector<8x128xi1>, vector<8x128xf32>
    %582 = vector.extract_strided_slice %581 {offsets = [0, 0], sizes = [8, 32], strides = [1, 1]} : vector<8x128xf32> to vector<8x32xf32>
    %583 = vector.extract_strided_slice %581 {offsets = [0, 32], sizes = [8, 32], strides = [1, 1]} : vector<8x128xf32> to vector<8x32xf32>
    %584 = vector.extract_strided_slice %581 {offsets = [0, 64], sizes = [8, 32], strides = [1, 1]} : vector<8x128xf32> to vector<8x32xf32>
    %585 = vector.extract_strided_slice %581 {offsets = [0, 96], sizes = [8, 32], strides = [1, 1]} : vector<8x128xf32> to vector<8x32xf32>
    %586 = arith.mulf %583, %568 : vector<8x32xf32>
    %587 = arith.mulf %582, %584 : vector<8x32xf32>
    %588 = arith.addf %586, %587 : vector<8x32xf32>
    %589 = math.tanh %588 : vector<8x32xf32>
    %590 = arith.mulf %585, %589 : vector<8x32xf32>
    %591 = vector.extract_strided_slice %364 {offsets = [0, 7], sizes = [8, 1], strides = [1, 1]} : vector<8x8xf32> to vector<8x1xf32>
    %592 = vector.broadcast %591 : vector<8x1xf32> to vector<8x32xf32>
    %593 = arith.mulf %590, %592 : vector<8x32xf32>
    %c1_145 = arith.constant 1 : index
    %c0_146 = arith.constant 0 : index
    %c224_147 = arith.constant 224 : index
    %594 = vector.load %arg29[%c1_145, %c0_146, %c224_147] : memref<3x8x256xf32, #tpu.memory_space<vmem>>, vector<1x8x32xf32>
    %595 = vector.shape_cast %594 : vector<1x8x32xf32> to vector<8x32xf32>
    %596 = vector.shape_cast %593 : vector<8x32xf32> to vector<1x8x32xf32>
    tpu.vector_store %arg29[%c1_145, %c0_146, %c224_147], %596 {strides = array<i32>} : memref<3x8x256xf32, #tpu.memory_space<vmem>>, vector<1x8x32xf32>,
    %597 = tpu.concatenate %404, %431, %458, %485, %512, %539, %566, %593 in 0 : vector<8x32xf32>, vector<8x32xf32>, vector<8x32xf32>, vector<8x32xf32>, vector<8x32xf32>, vector<8x32xf32>, vector<8x32xf32>, vector<8x32xf32> -> vector<64x32xf32>
    %cst_148 = arith.constant dense<0.000000e+00> : vector<64x32xf32>
    %598 = tpu.matmul %597, %13, %cst_148 {dimension_numbers = #tpu.dot_dimension_numbers<[1], [0], [0], [1], [0, 0, 1, 1], [], []>} : vector<64x32xf32>, vector<32x32xf32>, vector<64x32xf32> -> vector<64x32xf32>
    %599 = vector.broadcast %14 : vector<1x32xf32> to vector<64x32xf32>
    %600 = arith.addf %598, %599 : vector<64x32xf32>
    %cst_149 = arith.constant 0.000000e+00 : f32
    %601 = vector.broadcast %cst_149 : f32 to vector<64x32xf32>
    %602 = arith.maximumf %600, %601 : vector<64x32xf32>
    %603 = vector.broadcast %15 : vector<1x32xf32> to vector<64x32xf32>
    %604 = arith.mulf %602, %603 : vector<64x32xf32>
    %cst_150 = arith.constant dense<0.000000e+00> : vector<64xf32>
    %605 = vector.multi_reduction <add>, %604, %cst_150 [1] : vector<64x32xf32> to vector<64xf32>
    %606 = vector.shape_cast %605 : vector<64xf32> to vector<64x1xf32>
    %607 = vector.broadcast %16 : vector<1x1xf32> to vector<64x1xf32>
    %608 = arith.addf %606, %607 : vector<64x1xf32>
    %cst_151 = arith.constant -1.000000e+30 : f32
    %609 = vector.broadcast %cst_151 : f32 to vector<8x8xf32>
    %c1_i32_152 = arith.constant 1 : i32
    %610 = vector.broadcast %c1_i32_152 : i32 to vector<8x8xi32>
    %611 = arith.cmpi eq, %2, %610 : vector<8x8xi32>
    %612 = vector.extract_strided_slice %608 {offsets = [8, 0], sizes = [8, 1], strides = [1, 1]} : vector<64x1xf32> to vector<8x1xf32>
    %613 = vector.shape_cast %612 : vector<8x1xf32> to vector<8x1xf32>
    %614 = vector.broadcast %613 : vector<8x1xf32> to vector<8x8xf32>
    %615 = arith.select %611, %614, %609 : vector<8x8xi1>, vector<8x8xf32>
    %c2_i32_153 = arith.constant 2 : i32
    %616 = vector.broadcast %c2_i32_153 : i32 to vector<8x8xi32>
    %617 = arith.cmpi eq, %2, %616 : vector<8x8xi32>
    %618 = vector.extract_strided_slice %608 {offsets = [16, 0], sizes = [8, 1], strides = [1, 1]} : vector<64x1xf32> to vector<8x1xf32>
    %619 = vector.shape_cast %618 : vector<8x1xf32> to vector<8x1xf32>
    %620 = vector.broadcast %619 : vector<8x1xf32> to vector<8x8xf32>
    %621 = arith.select %617, %620, %615 : vector<8x8xi1>, vector<8x8xf32>
    %c3_i32_154 = arith.constant 3 : i32
    %622 = vector.broadcast %c3_i32_154 : i32 to vector<8x8xi32>
    %623 = arith.cmpi eq, %2, %622 : vector<8x8xi32>
    %624 = vector.extract_strided_slice %608 {offsets = [24, 0], sizes = [8, 1], strides = [1, 1]} : vector<64x1xf32> to vector<8x1xf32>
    %625 = vector.shape_cast %624 : vector<8x1xf32> to vector<8x1xf32>
    %626 = vector.broadcast %625 : vector<8x1xf32> to vector<8x8xf32>
    %627 = arith.select %623, %626, %621 : vector<8x8xi1>, vector<8x8xf32>
    %c4_i32_155 = arith.constant 4 : i32
    %628 = vector.broadcast %c4_i32_155 : i32 to vector<8x8xi32>
    %629 = arith.cmpi eq, %2, %628 : vector<8x8xi32>
    %630 = vector.extract_strided_slice %608 {offsets = [32, 0], sizes = [8, 1], strides = [1, 1]} : vector<64x1xf32> to vector<8x1xf32>
    %631 = vector.shape_cast %630 : vector<8x1xf32> to vector<8x1xf32>
    %632 = vector.broadcast %631 : vector<8x1xf32> to vector<8x8xf32>
    %633 = arith.select %629, %632, %627 : vector<8x8xi1>, vector<8x8xf32>
    %c5_i32_156 = arith.constant 5 : i32
    %634 = vector.broadcast %c5_i32_156 : i32 to vector<8x8xi32>
    %635 = arith.cmpi eq, %2, %634 : vector<8x8xi32>
    %636 = vector.extract_strided_slice %608 {offsets = [40, 0], sizes = [8, 1], strides = [1, 1]} : vector<64x1xf32> to vector<8x1xf32>
    %637 = vector.shape_cast %636 : vector<8x1xf32> to vector<8x1xf32>
    %638 = vector.broadcast %637 : vector<8x1xf32> to vector<8x8xf32>
    %639 = arith.select %635, %638, %633 : vector<8x8xi1>, vector<8x8xf32>
    %c6_i32_157 = arith.constant 6 : i32
    %640 = vector.broadcast %c6_i32_157 : i32 to vector<8x8xi32>
    %641 = arith.cmpi eq, %2, %640 : vector<8x8xi32>
    %642 = vector.extract_strided_slice %608 {offsets = [48, 0], sizes = [8, 1], strides = [1, 1]} : vector<64x1xf32> to vector<8x1xf32>
    %643 = vector.shape_cast %642 : vector<8x1xf32> to vector<8x1xf32>
    %644 = vector.broadcast %643 : vector<8x1xf32> to vector<8x8xf32>
    %645 = arith.select %641, %644, %639 : vector<8x8xi1>, vector<8x8xf32>
    %c7_i32_158 = arith.constant 7 : i32
    %646 = vector.broadcast %c7_i32_158 : i32 to vector<8x8xi32>
    %647 = arith.cmpi eq, %2, %646 : vector<8x8xi32>
    %648 = vector.extract_strided_slice %608 {offsets = [56, 0], sizes = [8, 1], strides = [1, 1]} : vector<64x1xf32> to vector<8x1xf32>
    %649 = vector.shape_cast %648 : vector<8x1xf32> to vector<8x1xf32>
    %650 = vector.broadcast %649 : vector<8x1xf32> to vector<8x8xf32>
    %651 = arith.select %647, %650, %645 : vector<8x8xi1>, vector<8x8xf32>
    %652 = arith.addf %651, %0 : vector<8x8xf32>
    %cst_159 = arith.constant dense<0xFF800000> : vector<8xf32>
    %653 = vector.multi_reduction <maximumf>, %652, %cst_159 [1] : vector<8x8xf32> to vector<8xf32>
    %654 = vector.shape_cast %653 : vector<8xf32> to vector<8x1xf32>
    %655 = vector.broadcast %654 : vector<8x1xf32> to vector<8x8xf32>
    %656 = arith.cmpf oeq, %652, %655 : vector<8x8xf32>
    %c8_i32_160 = arith.constant 8 : i32
    %657 = vector.broadcast %c8_i32_160 : i32 to vector<8x8xi32>
    %658 = arith.select %656, %2, %657 : vector<8x8xi1>, vector<8x8xi32>
    %cst_161 = arith.constant dense<2147483647> : vector<8xi32>
    %659 = vector.multi_reduction <minsi>, %658, %cst_161 [1] : vector<8x8xi32> to vector<8xi32>
    %660 = vector.shape_cast %659 : vector<8xi32> to vector<8x1xi32>
    %661 = vector.broadcast %660 : vector<8x1xi32> to vector<8x8xi32>
    %662 = arith.cmpi eq, %2, %661 : vector<8x8xi32>
    %663 = arith.extui %662 : vector<8x8xi1> to vector<8x8xi32>
    %664 = arith.sitofp %663 : vector<8x8xi32> to vector<8x8xf32>
    %665 = vector.broadcast %660 : vector<8x1xi32> to vector<8x8xi32>
    %666 = arith.cmpi sge, %2, %665 : vector<8x8xi32>
    %667 = arith.extui %666 : vector<8x8xi1> to vector<8x8xi32>
    %668 = arith.sitofp %667 : vector<8x8xi32> to vector<8x8xf32>
    %cst_162 = arith.constant 0.000000e+00 : f32
    %669 = vector.broadcast %cst_162 : f32 to vector<8x32xf32>
    %670 = vector.extract_strided_slice %664 {offsets = [0, 1], sizes = [8, 1], strides = [1, 1]} : vector<8x8xf32> to vector<8x1xf32>
    %671 = vector.broadcast %670 : vector<8x1xf32> to vector<8x32xf32>
    %672 = arith.mulf %404, %671 : vector<8x32xf32>
    %673 = arith.addf %669, %672 : vector<8x32xf32>
    %674 = vector.extract_strided_slice %664 {offsets = [0, 2], sizes = [8, 1], strides = [1, 1]} : vector<8x8xf32> to vector<8x1xf32>
    %675 = vector.broadcast %674 : vector<8x1xf32> to vector<8x32xf32>
    %676 = arith.mulf %431, %675 : vector<8x32xf32>
    %677 = arith.addf %673, %676 : vector<8x32xf32>
    %678 = vector.extract_strided_slice %664 {offsets = [0, 3], sizes = [8, 1], strides = [1, 1]} : vector<8x8xf32> to vector<8x1xf32>
    %679 = vector.broadcast %678 : vector<8x1xf32> to vector<8x32xf32>
    %680 = arith.mulf %458, %679 : vector<8x32xf32>
    %681 = arith.addf %677, %680 : vector<8x32xf32>
    %682 = vector.extract_strided_slice %664 {offsets = [0, 4], sizes = [8, 1], strides = [1, 1]} : vector<8x8xf32> to vector<8x1xf32>
    %683 = vector.broadcast %682 : vector<8x1xf32> to vector<8x32xf32>
    %684 = arith.mulf %485, %683 : vector<8x32xf32>
    %685 = arith.addf %681, %684 : vector<8x32xf32>
    %686 = vector.extract_strided_slice %664 {offsets = [0, 5], sizes = [8, 1], strides = [1, 1]} : vector<8x8xf32> to vector<8x1xf32>
    %687 = vector.broadcast %686 : vector<8x1xf32> to vector<8x32xf32>
    %688 = arith.mulf %512, %687 : vector<8x32xf32>
    %689 = arith.addf %685, %688 : vector<8x32xf32>
    %690 = vector.extract_strided_slice %664 {offsets = [0, 6], sizes = [8, 1], strides = [1, 1]} : vector<8x8xf32> to vector<8x1xf32>
    %691 = vector.broadcast %690 : vector<8x1xf32> to vector<8x32xf32>
    %692 = arith.mulf %539, %691 : vector<8x32xf32>
    %693 = arith.addf %689, %692 : vector<8x32xf32>
    %694 = vector.extract_strided_slice %664 {offsets = [0, 7], sizes = [8, 1], strides = [1, 1]} : vector<8x8xf32> to vector<8x1xf32>
    %695 = vector.broadcast %694 : vector<8x1xf32> to vector<8x32xf32>
    %696 = arith.mulf %566, %695 : vector<8x32xf32>
    %697 = arith.addf %693, %696 : vector<8x32xf32>
    %cst_163 = arith.constant dense<0.000000e+00> : vector<8x32xf32>
    %698 = tpu.matmul %697, %17, %cst_163 {dimension_numbers = #tpu.dot_dimension_numbers<[1], [0], [0], [1], [0, 0, 1, 1], [], []>} : vector<8x32xf32>, vector<32x32xf32>, vector<8x32xf32> -> vector<8x32xf32>
    %699 = vector.broadcast %18 : vector<1x32xf32> to vector<8x32xf32>
    %700 = arith.addf %698, %699 : vector<8x32xf32>
    %cst_164 = arith.constant 0.000000e+00 : f32
    %701 = vector.broadcast %cst_164 : f32 to vector<8x32xf32>
    %702 = arith.maximumf %700, %701 : vector<8x32xf32>
    %cst_165 = arith.constant dense<0.000000e+00> : vector<8x16xf32>
    %703 = tpu.matmul %702, %19, %cst_165 {dimension_numbers = #tpu.dot_dimension_numbers<[1], [0], [0], [1], [0, 0, 1, 1], [], []>} : vector<8x32xf32>, vector<32x16xf32>, vector<8x16xf32> -> vector<8x16xf32>
    %704 = vector.broadcast %20 : vector<1x16xf32> to vector<8x16xf32>
    %705 = arith.addf %703, %704 : vector<8x16xf32>
    %706 = vector.extract_strided_slice %705 {offsets = [0, 0], sizes = [8, 8], strides = [1, 1]} : vector<8x16xf32> to vector<8x8xf32>
    %cst_166 = arith.constant 1.000000e-17 : f32
    %707 = vector.broadcast %cst_166 : f32 to vector<8x8xf32>
    %708 = arith.addf %668, %707 : vector<8x8xf32>
    %709 = math.log %708 : vector<8x8xf32>
    %710 = arith.addf %363, %709 : vector<8x8xf32>
    %711 = math.exp %710 : vector<8x8xf32>
    %c1_167 = arith.constant 1 : index
    %c0_168 = arith.constant 0 : index
    %c0_169 = arith.constant 0 : index
    %712 = vector.load %arg30[%c1_167, %c0_168, %c0_169] : memref<3x8x128xf32, #tpu.memory_space<vmem>>, vector<1x8x8xf32>
    %713 = vector.shape_cast %712 : vector<1x8x8xf32> to vector<8x8xf32>
    %714 = vector.shape_cast %652 : vector<8x8xf32> to vector<1x8x8xf32>
    tpu.vector_store %arg30[%c1_167, %c0_168, %c0_169], %714 {strides = array<i32>} : memref<3x8x128xf32, #tpu.memory_space<vmem>>, vector<1x8x8xf32>,
    %c1_170 = arith.constant 1 : index
    %c0_171 = arith.constant 0 : index
    %c8_172 = arith.constant 8 : index
    %715 = vector.load %arg30[%c1_170, %c0_171, %c8_172] : memref<3x8x128xf32, #tpu.memory_space<vmem>>, vector<1x8x8xf32>
    %716 = vector.shape_cast %715 : vector<1x8x8xf32> to vector<8x8xf32>
    %717 = vector.shape_cast %664 : vector<8x8xf32> to vector<1x8x8xf32>
    tpu.vector_store %arg30[%c1_170, %c0_171, %c8_172], %717 {strides = array<i32>} : memref<3x8x128xf32, #tpu.memory_space<vmem>>, vector<1x8x8xf32>,
    %c1_173 = arith.constant 1 : index
    %c0_174 = arith.constant 0 : index
    %c16_175 = arith.constant 16 : index
    %718 = vector.load %arg30[%c1_173, %c0_174, %c16_175] : memref<3x8x128xf32, #tpu.memory_space<vmem>>, vector<1x8x8xf32>
    %719 = vector.shape_cast %718 : vector<1x8x8xf32> to vector<8x8xf32>
    %720 = vector.shape_cast %711 : vector<8x8xf32> to vector<1x8x8xf32>
    tpu.vector_store %arg30[%c1_173, %c0_174, %c16_175], %720 {strides = array<i32>} : memref<3x8x128xf32, #tpu.memory_space<vmem>>, vector<1x8x8xf32>,
    %c1_176 = arith.constant 1 : index
    %c0_177 = arith.constant 0 : index
    %c24_178 = arith.constant 24 : index
    %721 = vector.load %arg30[%c1_176, %c0_177, %c24_178] : memref<3x8x128xf32, #tpu.memory_space<vmem>>, vector<1x8x16xf32>
    %722 = vector.shape_cast %721 : vector<1x8x16xf32> to vector<8x16xf32>
    %723 = vector.shape_cast %705 : vector<8x16xf32> to vector<1x8x16xf32>
    tpu.vector_store %arg30[%c1_176, %c0_177, %c24_178], %723 {strides = array<i32>} : memref<3x8x128xf32, #tpu.memory_space<vmem>>, vector<1x8x16xf32>,
    %cst_179 = arith.constant 0.000000e+00 : f32
    %724 = vector.broadcast %cst_179 : f32 to vector<8x88xf32>
    %c1_180 = arith.constant 1 : index
    %c0_181 = arith.constant 0 : index
    %c40_182 = arith.constant 40 : index
    %725 = vector.load %arg30[%c1_180, %c0_181, %c40_182] : memref<3x8x128xf32, #tpu.memory_space<vmem>>, vector<1x8x88xf32>
    %726 = vector.shape_cast %725 : vector<1x8x88xf32> to vector<8x88xf32>
    %727 = vector.shape_cast %724 : vector<8x88xf32> to vector<1x8x88xf32>
    tpu.vector_store %arg30[%c1_180, %c0_181, %c40_182], %727 {strides = array<i32>} : memref<3x8x128xf32, #tpu.memory_space<vmem>>, vector<1x8x88xf32>,
    %cst_183 = arith.constant 0.000000e+00 : f32
    %728 = vector.broadcast %cst_183 : f32 to vector<8x32xf32>
    %cst_184 = arith.constant 0.000000e+00 : f32
    %729 = vector.broadcast %cst_184 : f32 to vector<8x32xf32>
    %730 = vector.extract_strided_slice %70 {offsets = [0, 0], sizes = [8, 128], strides = [1, 1]} : vector<64x128xf32> to vector<8x128xf32>
    %cst_185 = arith.constant dense<0.000000e+00> : vector<8x128xf32>
    %731 = tpu.matmul %728, %12, %cst_185 {dimension_numbers = #tpu.dot_dimension_numbers<[1], [0], [0], [1], [0, 0, 1, 1], [], []>} : vector<8x32xf32>, vector<32x128xf32>, vector<8x128xf32> -> vector<8x128xf32>
    %732 = arith.addf %730, %731 : vector<8x128xf32>
    %733 = arith.mulf %732, %11 : vector<8x128xf32>
    %734 = math.tanh %733 : vector<8x128xf32>
    %cst_186 = arith.constant 5.000000e-01 : f32
    %735 = vector.broadcast %cst_186 : f32 to vector<8x128xf32>
    %736 = arith.mulf %735, %734 : vector<8x128xf32>
    %cst_187 = arith.constant 5.000000e-01 : f32
    %737 = vector.broadcast %cst_187 : f32 to vector<8x128xf32>
    %738 = arith.addf %736, %737 : vector<8x128xf32>
    %739 = arith.select %8, %734, %738 : vector<8x128xi1>, vector<8x128xf32>
    %740 = vector.extract_strided_slice %739 {offsets = [0, 0], sizes = [8, 32], strides = [1, 1]} : vector<8x128xf32> to vector<8x32xf32>
    %741 = vector.extract_strided_slice %739 {offsets = [0, 32], sizes = [8, 32], strides = [1, 1]} : vector<8x128xf32> to vector<8x32xf32>
    %742 = vector.extract_strided_slice %739 {offsets = [0, 64], sizes = [8, 32], strides = [1, 1]} : vector<8x128xf32> to vector<8x32xf32>
    %743 = vector.extract_strided_slice %739 {offsets = [0, 96], sizes = [8, 32], strides = [1, 1]} : vector<8x128xf32> to vector<8x32xf32>
    %744 = arith.mulf %741, %729 : vector<8x32xf32>
    %745 = arith.mulf %740, %742 : vector<8x32xf32>
    %746 = arith.addf %744, %745 : vector<8x32xf32>
    %747 = math.tanh %746 : vector<8x32xf32>
    %748 = arith.mulf %743, %747 : vector<8x32xf32>
    %749 = vector.extract_strided_slice %711 {offsets = [0, 0], sizes = [8, 1], strides = [1, 1]} : vector<8x8xf32> to vector<8x1xf32>
    %750 = vector.broadcast %749 : vector<8x1xf32> to vector<8x32xf32>
    %751 = arith.mulf %748, %750 : vector<8x32xf32>
    %752 = vector.broadcast %749 : vector<8x1xf32> to vector<8x32xf32>
    %753 = arith.mulf %746, %752 : vector<8x32xf32>
    %c2 = arith.constant 2 : index
    %c0_188 = arith.constant 0 : index
    %c0_189 = arith.constant 0 : index
    %754 = vector.load %arg29[%c2, %c0_188, %c0_189] : memref<3x8x256xf32, #tpu.memory_space<vmem>>, vector<1x8x32xf32>
    %755 = vector.shape_cast %754 : vector<1x8x32xf32> to vector<8x32xf32>
    %756 = vector.shape_cast %751 : vector<8x32xf32> to vector<1x8x32xf32>
    tpu.vector_store %arg29[%c2, %c0_188, %c0_189], %756 {strides = array<i32>} : memref<3x8x256xf32, #tpu.memory_space<vmem>>, vector<1x8x32xf32>,
    %757 = vector.extract_strided_slice %70 {offsets = [8, 0], sizes = [8, 128], strides = [1, 1]} : vector<64x128xf32> to vector<8x128xf32>
    %cst_190 = arith.constant dense<0.000000e+00> : vector<8x128xf32>
    %758 = tpu.matmul %751, %12, %cst_190 {dimension_numbers = #tpu.dot_dimension_numbers<[1], [0], [0], [1], [0, 0, 1, 1], [], []>} : vector<8x32xf32>, vector<32x128xf32>, vector<8x128xf32> -> vector<8x128xf32>
    %759 = arith.addf %757, %758 : vector<8x128xf32>
    %760 = arith.mulf %759, %11 : vector<8x128xf32>
    %761 = math.tanh %760 : vector<8x128xf32>
    %cst_191 = arith.constant 5.000000e-01 : f32
    %762 = vector.broadcast %cst_191 : f32 to vector<8x128xf32>
    %763 = arith.mulf %762, %761 : vector<8x128xf32>
    %cst_192 = arith.constant 5.000000e-01 : f32
    %764 = vector.broadcast %cst_192 : f32 to vector<8x128xf32>
    %765 = arith.addf %763, %764 : vector<8x128xf32>
    %766 = arith.select %8, %761, %765 : vector<8x128xi1>, vector<8x128xf32>
    %767 = vector.extract_strided_slice %766 {offsets = [0, 0], sizes = [8, 32], strides = [1, 1]} : vector<8x128xf32> to vector<8x32xf32>
    %768 = vector.extract_strided_slice %766 {offsets = [0, 32], sizes = [8, 32], strides = [1, 1]} : vector<8x128xf32> to vector<8x32xf32>
    %769 = vector.extract_strided_slice %766 {offsets = [0, 64], sizes = [8, 32], strides = [1, 1]} : vector<8x128xf32> to vector<8x32xf32>
    %770 = vector.extract_strided_slice %766 {offsets = [0, 96], sizes = [8, 32], strides = [1, 1]} : vector<8x128xf32> to vector<8x32xf32>
    %771 = arith.mulf %768, %753 : vector<8x32xf32>
    %772 = arith.mulf %767, %769 : vector<8x32xf32>
    %773 = arith.addf %771, %772 : vector<8x32xf32>
    %774 = math.tanh %773 : vector<8x32xf32>
    %775 = arith.mulf %770, %774 : vector<8x32xf32>
    %776 = vector.extract_strided_slice %711 {offsets = [0, 1], sizes = [8, 1], strides = [1, 1]} : vector<8x8xf32> to vector<8x1xf32>
    %777 = vector.broadcast %776 : vector<8x1xf32> to vector<8x32xf32>
    %778 = arith.mulf %775, %777 : vector<8x32xf32>
    %779 = vector.broadcast %776 : vector<8x1xf32> to vector<8x32xf32>
    %780 = arith.mulf %773, %779 : vector<8x32xf32>
    %c2_193 = arith.constant 2 : index
    %c0_194 = arith.constant 0 : index
    %c32_195 = arith.constant 32 : index
    %781 = vector.load %arg29[%c2_193, %c0_194, %c32_195] : memref<3x8x256xf32, #tpu.memory_space<vmem>>, vector<1x8x32xf32>
    %782 = vector.shape_cast %781 : vector<1x8x32xf32> to vector<8x32xf32>
    %783 = vector.shape_cast %778 : vector<8x32xf32> to vector<1x8x32xf32>
    tpu.vector_store %arg29[%c2_193, %c0_194, %c32_195], %783 {strides = array<i32>} : memref<3x8x256xf32, #tpu.memory_space<vmem>>, vector<1x8x32xf32>,
    %784 = vector.extract_strided_slice %70 {offsets = [16, 0], sizes = [8, 128], strides = [1, 1]} : vector<64x128xf32> to vector<8x128xf32>
    %cst_196 = arith.constant dense<0.000000e+00> : vector<8x128xf32>
    %785 = tpu.matmul %778, %12, %cst_196 {dimension_numbers = #tpu.dot_dimension_numbers<[1], [0], [0], [1], [0, 0, 1, 1], [], []>} : vector<8x32xf32>, vector<32x128xf32>, vector<8x128xf32> -> vector<8x128xf32>
    %786 = arith.addf %784, %785 : vector<8x128xf32>
    %787 = arith.mulf %786, %11 : vector<8x128xf32>
    %788 = math.tanh %787 : vector<8x128xf32>
    %cst_197 = arith.constant 5.000000e-01 : f32
    %789 = vector.broadcast %cst_197 : f32 to vector<8x128xf32>
    %790 = arith.mulf %789, %788 : vector<8x128xf32>
    %cst_198 = arith.constant 5.000000e-01 : f32
    %791 = vector.broadcast %cst_198 : f32 to vector<8x128xf32>
    %792 = arith.addf %790, %791 : vector<8x128xf32>
    %793 = arith.select %8, %788, %792 : vector<8x128xi1>, vector<8x128xf32>
    %794 = vector.extract_strided_slice %793 {offsets = [0, 0], sizes = [8, 32], strides = [1, 1]} : vector<8x128xf32> to vector<8x32xf32>
    %795 = vector.extract_strided_slice %793 {offsets = [0, 32], sizes = [8, 32], strides = [1, 1]} : vector<8x128xf32> to vector<8x32xf32>
    %796 = vector.extract_strided_slice %793 {offsets = [0, 64], sizes = [8, 32], strides = [1, 1]} : vector<8x128xf32> to vector<8x32xf32>
    %797 = vector.extract_strided_slice %793 {offsets = [0, 96], sizes = [8, 32], strides = [1, 1]} : vector<8x128xf32> to vector<8x32xf32>
    %798 = arith.mulf %795, %780 : vector<8x32xf32>
    %799 = arith.mulf %794, %796 : vector<8x32xf32>
    %800 = arith.addf %798, %799 : vector<8x32xf32>
    %801 = math.tanh %800 : vector<8x32xf32>
    %802 = arith.mulf %797, %801 : vector<8x32xf32>
    %803 = vector.extract_strided_slice %711 {offsets = [0, 2], sizes = [8, 1], strides = [1, 1]} : vector<8x8xf32> to vector<8x1xf32>
    %804 = vector.broadcast %803 : vector<8x1xf32> to vector<8x32xf32>
    %805 = arith.mulf %802, %804 : vector<8x32xf32>
    %806 = vector.broadcast %803 : vector<8x1xf32> to vector<8x32xf32>
    %807 = arith.mulf %800, %806 : vector<8x32xf32>
    %c2_199 = arith.constant 2 : index
    %c0_200 = arith.constant 0 : index
    %c64_201 = arith.constant 64 : index
    %808 = vector.load %arg29[%c2_199, %c0_200, %c64_201] : memref<3x8x256xf32, #tpu.memory_space<vmem>>, vector<1x8x32xf32>
    %809 = vector.shape_cast %808 : vector<1x8x32xf32> to vector<8x32xf32>
    %810 = vector.shape_cast %805 : vector<8x32xf32> to vector<1x8x32xf32>
    tpu.vector_store %arg29[%c2_199, %c0_200, %c64_201], %810 {strides = array<i32>} : memref<3x8x256xf32, #tpu.memory_space<vmem>>, vector<1x8x32xf32>,
    %811 = vector.extract_strided_slice %70 {offsets = [24, 0], sizes = [8, 128], strides = [1, 1]} : vector<64x128xf32> to vector<8x128xf32>
    %cst_202 = arith.constant dense<0.000000e+00> : vector<8x128xf32>
    %812 = tpu.matmul %805, %12, %cst_202 {dimension_numbers = #tpu.dot_dimension_numbers<[1], [0], [0], [1], [0, 0, 1, 1], [], []>} : vector<8x32xf32>, vector<32x128xf32>, vector<8x128xf32> -> vector<8x128xf32>
    %813 = arith.addf %811, %812 : vector<8x128xf32>
    %814 = arith.mulf %813, %11 : vector<8x128xf32>
    %815 = math.tanh %814 : vector<8x128xf32>
    %cst_203 = arith.constant 5.000000e-01 : f32
    %816 = vector.broadcast %cst_203 : f32 to vector<8x128xf32>
    %817 = arith.mulf %816, %815 : vector<8x128xf32>
    %cst_204 = arith.constant 5.000000e-01 : f32
    %818 = vector.broadcast %cst_204 : f32 to vector<8x128xf32>
    %819 = arith.addf %817, %818 : vector<8x128xf32>
    %820 = arith.select %8, %815, %819 : vector<8x128xi1>, vector<8x128xf32>
    %821 = vector.extract_strided_slice %820 {offsets = [0, 0], sizes = [8, 32], strides = [1, 1]} : vector<8x128xf32> to vector<8x32xf32>
    %822 = vector.extract_strided_slice %820 {offsets = [0, 32], sizes = [8, 32], strides = [1, 1]} : vector<8x128xf32> to vector<8x32xf32>
    %823 = vector.extract_strided_slice %820 {offsets = [0, 64], sizes = [8, 32], strides = [1, 1]} : vector<8x128xf32> to vector<8x32xf32>
    %824 = vector.extract_strided_slice %820 {offsets = [0, 96], sizes = [8, 32], strides = [1, 1]} : vector<8x128xf32> to vector<8x32xf32>
    %825 = arith.mulf %822, %807 : vector<8x32xf32>
    %826 = arith.mulf %821, %823 : vector<8x32xf32>
    %827 = arith.addf %825, %826 : vector<8x32xf32>
    %828 = math.tanh %827 : vector<8x32xf32>
    %829 = arith.mulf %824, %828 : vector<8x32xf32>
    %830 = vector.extract_strided_slice %711 {offsets = [0, 3], sizes = [8, 1], strides = [1, 1]} : vector<8x8xf32> to vector<8x1xf32>
    %831 = vector.broadcast %830 : vector<8x1xf32> to vector<8x32xf32>
    %832 = arith.mulf %829, %831 : vector<8x32xf32>
    %833 = vector.broadcast %830 : vector<8x1xf32> to vector<8x32xf32>
    %834 = arith.mulf %827, %833 : vector<8x32xf32>
    %c2_205 = arith.constant 2 : index
    %c0_206 = arith.constant 0 : index
    %c96_207 = arith.constant 96 : index
    %835 = vector.load %arg29[%c2_205, %c0_206, %c96_207] : memref<3x8x256xf32, #tpu.memory_space<vmem>>, vector<1x8x32xf32>
    %836 = vector.shape_cast %835 : vector<1x8x32xf32> to vector<8x32xf32>
    %837 = vector.shape_cast %832 : vector<8x32xf32> to vector<1x8x32xf32>
    tpu.vector_store %arg29[%c2_205, %c0_206, %c96_207], %837 {strides = array<i32>} : memref<3x8x256xf32, #tpu.memory_space<vmem>>, vector<1x8x32xf32>,
    %838 = vector.extract_strided_slice %70 {offsets = [32, 0], sizes = [8, 128], strides = [1, 1]} : vector<64x128xf32> to vector<8x128xf32>
    %cst_208 = arith.constant dense<0.000000e+00> : vector<8x128xf32>
    %839 = tpu.matmul %832, %12, %cst_208 {dimension_numbers = #tpu.dot_dimension_numbers<[1], [0], [0], [1], [0, 0, 1, 1], [], []>} : vector<8x32xf32>, vector<32x128xf32>, vector<8x128xf32> -> vector<8x128xf32>
    %840 = arith.addf %838, %839 : vector<8x128xf32>
    %841 = arith.mulf %840, %11 : vector<8x128xf32>
    %842 = math.tanh %841 : vector<8x128xf32>
    %cst_209 = arith.constant 5.000000e-01 : f32
    %843 = vector.broadcast %cst_209 : f32 to vector<8x128xf32>
    %844 = arith.mulf %843, %842 : vector<8x128xf32>
    %cst_210 = arith.constant 5.000000e-01 : f32
    %845 = vector.broadcast %cst_210 : f32 to vector<8x128xf32>
    %846 = arith.addf %844, %845 : vector<8x128xf32>
    %847 = arith.select %8, %842, %846 : vector<8x128xi1>, vector<8x128xf32>
    %848 = vector.extract_strided_slice %847 {offsets = [0, 0], sizes = [8, 32], strides = [1, 1]} : vector<8x128xf32> to vector<8x32xf32>
    %849 = vector.extract_strided_slice %847 {offsets = [0, 32], sizes = [8, 32], strides = [1, 1]} : vector<8x128xf32> to vector<8x32xf32>
    %850 = vector.extract_strided_slice %847 {offsets = [0, 64], sizes = [8, 32], strides = [1, 1]} : vector<8x128xf32> to vector<8x32xf32>
    %851 = vector.extract_strided_slice %847 {offsets = [0, 96], sizes = [8, 32], strides = [1, 1]} : vector<8x128xf32> to vector<8x32xf32>
    %852 = arith.mulf %849, %834 : vector<8x32xf32>
    %853 = arith.mulf %848, %850 : vector<8x32xf32>
    %854 = arith.addf %852, %853 : vector<8x32xf32>
    %855 = math.tanh %854 : vector<8x32xf32>
    %856 = arith.mulf %851, %855 : vector<8x32xf32>
    %857 = vector.extract_strided_slice %711 {offsets = [0, 4], sizes = [8, 1], strides = [1, 1]} : vector<8x8xf32> to vector<8x1xf32>
    %858 = vector.broadcast %857 : vector<8x1xf32> to vector<8x32xf32>
    %859 = arith.mulf %856, %858 : vector<8x32xf32>
    %860 = vector.broadcast %857 : vector<8x1xf32> to vector<8x32xf32>
    %861 = arith.mulf %854, %860 : vector<8x32xf32>
    %c2_211 = arith.constant 2 : index
    %c0_212 = arith.constant 0 : index
    %c128_213 = arith.constant 128 : index
    %862 = vector.load %arg29[%c2_211, %c0_212, %c128_213] : memref<3x8x256xf32, #tpu.memory_space<vmem>>, vector<1x8x32xf32>
    %863 = vector.shape_cast %862 : vector<1x8x32xf32> to vector<8x32xf32>
    %864 = vector.shape_cast %859 : vector<8x32xf32> to vector<1x8x32xf32>
    tpu.vector_store %arg29[%c2_211, %c0_212, %c128_213], %864 {strides = array<i32>} : memref<3x8x256xf32, #tpu.memory_space<vmem>>, vector<1x8x32xf32>,
    %865 = vector.extract_strided_slice %70 {offsets = [40, 0], sizes = [8, 128], strides = [1, 1]} : vector<64x128xf32> to vector<8x128xf32>
    %cst_214 = arith.constant dense<0.000000e+00> : vector<8x128xf32>
    %866 = tpu.matmul %859, %12, %cst_214 {dimension_numbers = #tpu.dot_dimension_numbers<[1], [0], [0], [1], [0, 0, 1, 1], [], []>} : vector<8x32xf32>, vector<32x128xf32>, vector<8x128xf32> -> vector<8x128xf32>
    %867 = arith.addf %865, %866 : vector<8x128xf32>
    %868 = arith.mulf %867, %11 : vector<8x128xf32>
    %869 = math.tanh %868 : vector<8x128xf32>
    %cst_215 = arith.constant 5.000000e-01 : f32
    %870 = vector.broadcast %cst_215 : f32 to vector<8x128xf32>
    %871 = arith.mulf %870, %869 : vector<8x128xf32>
    %cst_216 = arith.constant 5.000000e-01 : f32
    %872 = vector.broadcast %cst_216 : f32 to vector<8x128xf32>
    %873 = arith.addf %871, %872 : vector<8x128xf32>
    %874 = arith.select %8, %869, %873 : vector<8x128xi1>, vector<8x128xf32>
    %875 = vector.extract_strided_slice %874 {offsets = [0, 0], sizes = [8, 32], strides = [1, 1]} : vector<8x128xf32> to vector<8x32xf32>
    %876 = vector.extract_strided_slice %874 {offsets = [0, 32], sizes = [8, 32], strides = [1, 1]} : vector<8x128xf32> to vector<8x32xf32>
    %877 = vector.extract_strided_slice %874 {offsets = [0, 64], sizes = [8, 32], strides = [1, 1]} : vector<8x128xf32> to vector<8x32xf32>
    %878 = vector.extract_strided_slice %874 {offsets = [0, 96], sizes = [8, 32], strides = [1, 1]} : vector<8x128xf32> to vector<8x32xf32>
    %879 = arith.mulf %876, %861 : vector<8x32xf32>
    %880 = arith.mulf %875, %877 : vector<8x32xf32>
    %881 = arith.addf %879, %880 : vector<8x32xf32>
    %882 = math.tanh %881 : vector<8x32xf32>
    %883 = arith.mulf %878, %882 : vector<8x32xf32>
    %884 = vector.extract_strided_slice %711 {offsets = [0, 5], sizes = [8, 1], strides = [1, 1]} : vector<8x8xf32> to vector<8x1xf32>
    %885 = vector.broadcast %884 : vector<8x1xf32> to vector<8x32xf32>
    %886 = arith.mulf %883, %885 : vector<8x32xf32>
    %887 = vector.broadcast %884 : vector<8x1xf32> to vector<8x32xf32>
    %888 = arith.mulf %881, %887 : vector<8x32xf32>
    %c2_217 = arith.constant 2 : index
    %c0_218 = arith.constant 0 : index
    %c160_219 = arith.constant 160 : index
    %889 = vector.load %arg29[%c2_217, %c0_218, %c160_219] : memref<3x8x256xf32, #tpu.memory_space<vmem>>, vector<1x8x32xf32>
    %890 = vector.shape_cast %889 : vector<1x8x32xf32> to vector<8x32xf32>
    %891 = vector.shape_cast %886 : vector<8x32xf32> to vector<1x8x32xf32>
    tpu.vector_store %arg29[%c2_217, %c0_218, %c160_219], %891 {strides = array<i32>} : memref<3x8x256xf32, #tpu.memory_space<vmem>>, vector<1x8x32xf32>,
    %892 = vector.extract_strided_slice %70 {offsets = [48, 0], sizes = [8, 128], strides = [1, 1]} : vector<64x128xf32> to vector<8x128xf32>
    %cst_220 = arith.constant dense<0.000000e+00> : vector<8x128xf32>
    %893 = tpu.matmul %886, %12, %cst_220 {dimension_numbers = #tpu.dot_dimension_numbers<[1], [0], [0], [1], [0, 0, 1, 1], [], []>} : vector<8x32xf32>, vector<32x128xf32>, vector<8x128xf32> -> vector<8x128xf32>
    %894 = arith.addf %892, %893 : vector<8x128xf32>
    %895 = arith.mulf %894, %11 : vector<8x128xf32>
    %896 = math.tanh %895 : vector<8x128xf32>
    %cst_221 = arith.constant 5.000000e-01 : f32
    %897 = vector.broadcast %cst_221 : f32 to vector<8x128xf32>
    %898 = arith.mulf %897, %896 : vector<8x128xf32>
    %cst_222 = arith.constant 5.000000e-01 : f32
    %899 = vector.broadcast %cst_222 : f32 to vector<8x128xf32>
    %900 = arith.addf %898, %899 : vector<8x128xf32>
    %901 = arith.select %8, %896, %900 : vector<8x128xi1>, vector<8x128xf32>
    %902 = vector.extract_strided_slice %901 {offsets = [0, 0], sizes = [8, 32], strides = [1, 1]} : vector<8x128xf32> to vector<8x32xf32>
    %903 = vector.extract_strided_slice %901 {offsets = [0, 32], sizes = [8, 32], strides = [1, 1]} : vector<8x128xf32> to vector<8x32xf32>
    %904 = vector.extract_strided_slice %901 {offsets = [0, 64], sizes = [8, 32], strides = [1, 1]} : vector<8x128xf32> to vector<8x32xf32>
    %905 = vector.extract_strided_slice %901 {offsets = [0, 96], sizes = [8, 32], strides = [1, 1]} : vector<8x128xf32> to vector<8x32xf32>
    %906 = arith.mulf %903, %888 : vector<8x32xf32>
    %907 = arith.mulf %902, %904 : vector<8x32xf32>
    %908 = arith.addf %906, %907 : vector<8x32xf32>
    %909 = math.tanh %908 : vector<8x32xf32>
    %910 = arith.mulf %905, %909 : vector<8x32xf32>
    %911 = vector.extract_strided_slice %711 {offsets = [0, 6], sizes = [8, 1], strides = [1, 1]} : vector<8x8xf32> to vector<8x1xf32>
    %912 = vector.broadcast %911 : vector<8x1xf32> to vector<8x32xf32>
    %913 = arith.mulf %910, %912 : vector<8x32xf32>
    %914 = vector.broadcast %911 : vector<8x1xf32> to vector<8x32xf32>
    %915 = arith.mulf %908, %914 : vector<8x32xf32>
    %c2_223 = arith.constant 2 : index
    %c0_224 = arith.constant 0 : index
    %c192_225 = arith.constant 192 : index
    %916 = vector.load %arg29[%c2_223, %c0_224, %c192_225] : memref<3x8x256xf32, #tpu.memory_space<vmem>>, vector<1x8x32xf32>
    %917 = vector.shape_cast %916 : vector<1x8x32xf32> to vector<8x32xf32>
    %918 = vector.shape_cast %913 : vector<8x32xf32> to vector<1x8x32xf32>
    tpu.vector_store %arg29[%c2_223, %c0_224, %c192_225], %918 {strides = array<i32>} : memref<3x8x256xf32, #tpu.memory_space<vmem>>, vector<1x8x32xf32>,
    %919 = vector.extract_strided_slice %70 {offsets = [56, 0], sizes = [8, 128], strides = [1, 1]} : vector<64x128xf32> to vector<8x128xf32>
    %cst_226 = arith.constant dense<0.000000e+00> : vector<8x128xf32>
    %920 = tpu.matmul %913, %12, %cst_226 {dimension_numbers = #tpu.dot_dimension_numbers<[1], [0], [0], [1], [0, 0, 1, 1], [], []>} : vector<8x32xf32>, vector<32x128xf32>, vector<8x128xf32> -> vector<8x128xf32>
    %921 = arith.addf %919, %920 : vector<8x128xf32>
    %922 = arith.mulf %921, %11 : vector<8x128xf32>
    %923 = math.tanh %922 : vector<8x128xf32>
    %cst_227 = arith.constant 5.000000e-01 : f32
    %924 = vector.broadcast %cst_227 : f32 to vector<8x128xf32>
    %925 = arith.mulf %924, %923 : vector<8x128xf32>
    %cst_228 = arith.constant 5.000000e-01 : f32
    %926 = vector.broadcast %cst_228 : f32 to vector<8x128xf32>
    %927 = arith.addf %925, %926 : vector<8x128xf32>
    %928 = arith.select %8, %923, %927 : vector<8x128xi1>, vector<8x128xf32>
    %929 = vector.extract_strided_slice %928 {offsets = [0, 0], sizes = [8, 32], strides = [1, 1]} : vector<8x128xf32> to vector<8x32xf32>
    %930 = vector.extract_strided_slice %928 {offsets = [0, 32], sizes = [8, 32], strides = [1, 1]} : vector<8x128xf32> to vector<8x32xf32>
    %931 = vector.extract_strided_slice %928 {offsets = [0, 64], sizes = [8, 32], strides = [1, 1]} : vector<8x128xf32> to vector<8x32xf32>
    %932 = vector.extract_strided_slice %928 {offsets = [0, 96], sizes = [8, 32], strides = [1, 1]} : vector<8x128xf32> to vector<8x32xf32>
    %933 = arith.mulf %930, %915 : vector<8x32xf32>
    %934 = arith.mulf %929, %931 : vector<8x32xf32>
    %935 = arith.addf %933, %934 : vector<8x32xf32>
    %936 = math.tanh %935 : vector<8x32xf32>
    %937 = arith.mulf %932, %936 : vector<8x32xf32>
    %938 = vector.extract_strided_slice %711 {offsets = [0, 7], sizes = [8, 1], strides = [1, 1]} : vector<8x8xf32> to vector<8x1xf32>
    %939 = vector.broadcast %938 : vector<8x1xf32> to vector<8x32xf32>
    %940 = arith.mulf %937, %939 : vector<8x32xf32>
    %c2_229 = arith.constant 2 : index
    %c0_230 = arith.constant 0 : index
    %c224_231 = arith.constant 224 : index
    %941 = vector.load %arg29[%c2_229, %c0_230, %c224_231] : memref<3x8x256xf32, #tpu.memory_space<vmem>>, vector<1x8x32xf32>
    %942 = vector.shape_cast %941 : vector<1x8x32xf32> to vector<8x32xf32>
    %943 = vector.shape_cast %940 : vector<8x32xf32> to vector<1x8x32xf32>
    tpu.vector_store %arg29[%c2_229, %c0_230, %c224_231], %943 {strides = array<i32>} : memref<3x8x256xf32, #tpu.memory_space<vmem>>, vector<1x8x32xf32>,
    %cst_232 = arith.constant 0.000000e+00 : f32
    %944 = vector.broadcast %cst_232 : f32 to vector<8x8xf32>
    %cst_233 = arith.constant 0.000000e+00 : f32
    %945 = vector.broadcast %cst_233 : f32 to vector<8x32xf32>
    %946 = vector.extract_strided_slice %1 {offsets = [0, 1], sizes = [8, 1], strides = [1, 1]} : vector<8x8xf32> to vector<8x1xf32>
    %947 = vector.broadcast %946 : vector<8x1xf32> to vector<8x32xf32>
    %948 = arith.mulf %751, %947 : vector<8x32xf32>
    %949 = arith.addf %945, %948 : vector<8x32xf32>
    %950 = vector.extract_strided_slice %1 {offsets = [0, 2], sizes = [8, 1], strides = [1, 1]} : vector<8x8xf32> to vector<8x1xf32>
    %951 = vector.broadcast %950 : vector<8x1xf32> to vector<8x32xf32>
    %952 = arith.mulf %778, %951 : vector<8x32xf32>
    %953 = arith.addf %949, %952 : vector<8x32xf32>
    %954 = vector.extract_strided_slice %1 {offsets = [0, 3], sizes = [8, 1], strides = [1, 1]} : vector<8x8xf32> to vector<8x1xf32>
    %955 = vector.broadcast %954 : vector<8x1xf32> to vector<8x32xf32>
    %956 = arith.mulf %805, %955 : vector<8x32xf32>
    %957 = arith.addf %953, %956 : vector<8x32xf32>
    %958 = vector.extract_strided_slice %1 {offsets = [0, 4], sizes = [8, 1], strides = [1, 1]} : vector<8x8xf32> to vector<8x1xf32>
    %959 = vector.broadcast %958 : vector<8x1xf32> to vector<8x32xf32>
    %960 = arith.mulf %832, %959 : vector<8x32xf32>
    %961 = arith.addf %957, %960 : vector<8x32xf32>
    %962 = vector.extract_strided_slice %1 {offsets = [0, 5], sizes = [8, 1], strides = [1, 1]} : vector<8x8xf32> to vector<8x1xf32>
    %963 = vector.broadcast %962 : vector<8x1xf32> to vector<8x32xf32>
    %964 = arith.mulf %859, %963 : vector<8x32xf32>
    %965 = arith.addf %961, %964 : vector<8x32xf32>
    %966 = vector.extract_strided_slice %1 {offsets = [0, 6], sizes = [8, 1], strides = [1, 1]} : vector<8x8xf32> to vector<8x1xf32>
    %967 = vector.broadcast %966 : vector<8x1xf32> to vector<8x32xf32>
    %968 = arith.mulf %886, %967 : vector<8x32xf32>
    %969 = arith.addf %965, %968 : vector<8x32xf32>
    %970 = vector.extract_strided_slice %1 {offsets = [0, 7], sizes = [8, 1], strides = [1, 1]} : vector<8x8xf32> to vector<8x1xf32>
    %971 = vector.broadcast %970 : vector<8x1xf32> to vector<8x32xf32>
    %972 = arith.mulf %913, %971 : vector<8x32xf32>
    %973 = arith.addf %969, %972 : vector<8x32xf32>
    %cst_234 = arith.constant dense<0.000000e+00> : vector<8x32xf32>
    %974 = tpu.matmul %973, %17, %cst_234 {dimension_numbers = #tpu.dot_dimension_numbers<[1], [0], [0], [1], [0, 0, 1, 1], [], []>} : vector<8x32xf32>, vector<32x32xf32>, vector<8x32xf32> -> vector<8x32xf32>
    %975 = vector.broadcast %18 : vector<1x32xf32> to vector<8x32xf32>
    %976 = arith.addf %974, %975 : vector<8x32xf32>
    %cst_235 = arith.constant 0.000000e+00 : f32
    %977 = vector.broadcast %cst_235 : f32 to vector<8x32xf32>
    %978 = arith.maximumf %976, %977 : vector<8x32xf32>
    %cst_236 = arith.constant dense<0.000000e+00> : vector<8x16xf32>
    %979 = tpu.matmul %978, %19, %cst_236 {dimension_numbers = #tpu.dot_dimension_numbers<[1], [0], [0], [1], [0, 0, 1, 1], [], []>} : vector<8x32xf32>, vector<32x16xf32>, vector<8x16xf32> -> vector<8x16xf32>
    %980 = vector.broadcast %20 : vector<1x16xf32> to vector<8x16xf32>
    %981 = arith.addf %979, %980 : vector<8x16xf32>
    %982 = vector.extract_strided_slice %981 {offsets = [0, 0], sizes = [8, 8], strides = [1, 1]} : vector<8x16xf32> to vector<8x8xf32>
    %cst_237 = arith.constant 0.000000e+00 : f32
    %983 = vector.broadcast %cst_237 : f32 to vector<8x8xf32>
    %c2_238 = arith.constant 2 : index
    %c0_239 = arith.constant 0 : index
    %c0_240 = arith.constant 0 : index
    %984 = vector.load %arg30[%c2_238, %c0_239, %c0_240] : memref<3x8x128xf32, #tpu.memory_space<vmem>>, vector<1x8x8xf32>
    %985 = vector.shape_cast %984 : vector<1x8x8xf32> to vector<8x8xf32>
    %986 = vector.shape_cast %944 : vector<8x8xf32> to vector<1x8x8xf32>
    tpu.vector_store %arg30[%c2_238, %c0_239, %c0_240], %986 {strides = array<i32>} : memref<3x8x128xf32, #tpu.memory_space<vmem>>, vector<1x8x8xf32>,
    %c2_241 = arith.constant 2 : index
    %c0_242 = arith.constant 0 : index
    %c8_243 = arith.constant 8 : index
    %987 = vector.load %arg30[%c2_241, %c0_242, %c8_243] : memref<3x8x128xf32, #tpu.memory_space<vmem>>, vector<1x8x8xf32>
    %988 = vector.shape_cast %987 : vector<1x8x8xf32> to vector<8x8xf32>
    %989 = vector.shape_cast %1 : vector<8x8xf32> to vector<1x8x8xf32>
    tpu.vector_store %arg30[%c2_241, %c0_242, %c8_243], %989 {strides = array<i32>} : memref<3x8x128xf32, #tpu.memory_space<vmem>>, vector<1x8x8xf32>,
    %c2_244 = arith.constant 2 : index
    %c0_245 = arith.constant 0 : index
    %c16_246 = arith.constant 16 : index
    %990 = vector.load %arg30[%c2_244, %c0_245, %c16_246] : memref<3x8x128xf32, #tpu.memory_space<vmem>>, vector<1x8x8xf32>
    %991 = vector.shape_cast %990 : vector<1x8x8xf32> to vector<8x8xf32>
    %992 = vector.shape_cast %983 : vector<8x8xf32> to vector<1x8x8xf32>
    tpu.vector_store %arg30[%c2_244, %c0_245, %c16_246], %992 {strides = array<i32>} : memref<3x8x128xf32, #tpu.memory_space<vmem>>, vector<1x8x8xf32>,
    %c2_247 = arith.constant 2 : index
    %c0_248 = arith.constant 0 : index
    %c24_249 = arith.constant 24 : index
    %993 = vector.load %arg30[%c2_247, %c0_248, %c24_249] : memref<3x8x128xf32, #tpu.memory_space<vmem>>, vector<1x8x16xf32>
    %994 = vector.shape_cast %993 : vector<1x8x16xf32> to vector<8x16xf32>
    %995 = vector.shape_cast %981 : vector<8x16xf32> to vector<1x8x16xf32>
    tpu.vector_store %arg30[%c2_247, %c0_248, %c24_249], %995 {strides = array<i32>} : memref<3x8x128xf32, #tpu.memory_space<vmem>>, vector<1x8x16xf32>,
    %cst_250 = arith.constant 0.000000e+00 : f32
    %996 = vector.broadcast %cst_250 : f32 to vector<8x88xf32>
    %c2_251 = arith.constant 2 : index
    %c0_252 = arith.constant 0 : index
    %c40_253 = arith.constant 40 : index
    %997 = vector.load %arg30[%c2_251, %c0_252, %c40_253] : memref<3x8x128xf32, #tpu.memory_space<vmem>>, vector<1x8x88xf32>
    %998 = vector.shape_cast %997 : vector<1x8x88xf32> to vector<8x88xf32>
    %999 = vector.shape_cast %996 : vector<8x88xf32> to vector<1x8x88xf32>
    tpu.vector_store %arg30[%c2_251, %c0_252, %c40_253], %999 {strides = array<i32>} : memref<3x8x128xf32, #tpu.memory_space<vmem>>, vector<1x8x88xf32>,
    %1000 = tpu.concatenate %359, %706, %982 in 0 : vector<8x8xf32>, vector<8x8xf32>, vector<8x8xf32> -> vector<24x8xf32>
    %c0_254 = arith.constant 0 : index
    %c0_255 = arith.constant 0 : index
    %1001 = vector.load %arg15[%c0_254, %c0_255] : memref<8x32xf32, #tpu.memory_space<vmem>>, vector<8x32xf32>
    %cst_256 = arith.constant dense<0.000000e+00> : vector<24x32xf32>
    %1002 = tpu.matmul %1000, %1001, %cst_256 {dimension_numbers = #tpu.dot_dimension_numbers<[1], [0], [0], [1], [0, 0, 1, 1], [], []>} : vector<24x8xf32>, vector<8x32xf32>, vector<24x32xf32> -> vector<24x32xf32>
    %c0_257 = arith.constant 0 : index
    %c0_258 = arith.constant 0 : index
    %1003 = vector.load %arg16[%c0_257, %c0_258] : memref<1x32xf32, #tpu.memory_space<vmem>>, vector<1x32xf32>
    %1004 = vector.broadcast %1003 : vector<1x32xf32> to vector<24x32xf32>
    %1005 = arith.addf %1002, %1004 : vector<24x32xf32>
    %cst_259 = arith.constant 0.000000e+00 : f32
    %1006 = vector.broadcast %cst_259 : f32 to vector<24x32xf32>
    %1007 = arith.maximumf %1005, %1006 : vector<24x32xf32>
    %c0_260 = arith.constant 0 : index
    %c0_261 = arith.constant 0 : index
    %1008 = vector.load %arg17[%c0_260, %c0_261] : memref<32x32xf32, #tpu.memory_space<vmem>>, vector<32x32xf32>
    %cst_262 = arith.constant dense<0.000000e+00> : vector<24x32xf32>
    %1009 = tpu.matmul %1007, %1008, %cst_262 {dimension_numbers = #tpu.dot_dimension_numbers<[1], [0], [0], [1], [0, 0, 1, 1], [], []>} : vector<24x32xf32>, vector<32x32xf32>, vector<24x32xf32> -> vector<24x32xf32>
    %c0_263 = arith.constant 0 : index
    %c0_264 = arith.constant 0 : index
    %1010 = vector.load %arg18[%c0_263, %c0_264] : memref<1x32xf32, #tpu.memory_space<vmem>>, vector<1x32xf32>
    %1011 = vector.broadcast %1010 : vector<1x32xf32> to vector<24x32xf32>
    %1012 = arith.addf %1009, %1011 : vector<24x32xf32>
    %c0_265 = arith.constant 0 : index
    %c0_266 = arith.constant 0 : index
    %1013 = vector.load %arg19[%c0_265, %c0_266] : memref<32x32xf32, #tpu.memory_space<vmem>>, vector<32x32xf32>
    %cst_267 = arith.constant dense<0.000000e+00> : vector<24x32xf32>
    %1014 = tpu.matmul %1012, %1013, %cst_267 {dimension_numbers = #tpu.dot_dimension_numbers<[1], [0], [0], [1], [0, 0, 1, 1], [], []>} : vector<24x32xf32>, vector<32x32xf32>, vector<24x32xf32> -> vector<24x32xf32>
    %c0_268 = arith.constant 0 : index
    %c0_269 = arith.constant 0 : index
    %1015 = vector.load %arg20[%c0_268, %c0_269] : memref<1x32xf32, #tpu.memory_space<vmem>>, vector<1x32xf32>
    %1016 = vector.broadcast %1015 : vector<1x32xf32> to vector<24x32xf32>
    %1017 = arith.addf %1014, %1016 : vector<24x32xf32>
    %c0_270 = arith.constant 0 : index
    %c0_271 = arith.constant 0 : index
    %1018 = vector.load %arg23[%c0_270, %c0_271] : memref<32x128xf32, #tpu.memory_space<vmem>>, vector<32x128xf32>
    %c0_272 = arith.constant 0 : index
    %c0_273 = arith.constant 0 : index
    %1019 = vector.load %arg25[%c0_272, %c0_273] : memref<32x32xf32, #tpu.memory_space<vmem>>, vector<32x32xf32>
    %c0_274 = arith.constant 0 : index
    %c0_275 = arith.constant 0 : index
    %1020 = vector.load %arg26[%c0_274, %c0_275] : memref<1x32xf32, #tpu.memory_space<vmem>>, vector<1x32xf32>
    %c0_276 = arith.constant 0 : index
    %c0_277 = arith.constant 0 : index
    %1021 = vector.load %arg27[%c0_276, %c0_277] : memref<32x128xf32, #tpu.memory_space<vmem>>, vector<32x128xf32>
    %c0_278 = arith.constant 0 : index
    %c0_279 = arith.constant 0 : index
    %1022 = vector.load %arg28[%c0_278, %c0_279] : memref<1x128xf32, #tpu.memory_space<vmem>>, vector<1x128xf32>
    %c0_280 = arith.constant 0 : index
    %c0_281 = arith.constant 0 : index
    %1023 = vector.load %arg21[%c0_280, %c0_281] : memref<128x32xf32, #tpu.memory_space<vmem>>, vector<128x32xf32>
    %c0_282 = arith.constant 0 : index
    %c0_283 = arith.constant 0 : index
    %1024 = vector.load %arg22[%c0_282, %c0_283] : memref<32x128xf32, #tpu.memory_space<vmem>>, vector<32x128xf32>
    %cst_284 = arith.constant dense<0.000000e+00> : vector<128x128xf32>
    %1025 = tpu.matmul %1023, %1024, %cst_284 {dimension_numbers = #tpu.dot_dimension_numbers<[1], [0], [0], [1], [0, 0, 1, 1], [], []>} : vector<128x32xf32>, vector<32x128xf32>, vector<128x128xf32> -> vector<128x128xf32>
    %c0_285 = arith.constant 0 : index
    %c0_286 = arith.constant 0 : index
    %1026 = vector.load %arg24[%c0_285, %c0_286] : memref<1x128xf32, #tpu.memory_space<vmem>>, vector<1x128xf32>
    %1027 = vector.broadcast %1026 : vector<1x128xf32> to vector<128x128xf32>
    %1028 = arith.addf %1025, %1027 : vector<128x128xf32>
    %1029 = vector.extract_strided_slice %1028 {offsets = [0, 0], sizes = [1, 128], strides = [1, 1]} : vector<128x128xf32> to vector<1x128xf32>
    %1030 = vector.shape_cast %1029 : vector<1x128xf32> to vector<1x128xf32>
    %1031 = vector.broadcast %1030 : vector<1x128xf32> to vector<24x128xf32>
    %1032 = tpu.iota {dimensions = array<i32: 1>} : vector<24x128xi32>
    %c64_i32_287 = arith.constant 64 : i32
    %1033 = vector.broadcast %c64_i32_287 : i32 to vector<24x128xi32>
    %1034 = arith.cmpi sge, %1032, %1033 : vector<24x128xi32>
    %c96_i32_288 = arith.constant 96 : i32
    %1035 = vector.broadcast %c96_i32_288 : i32 to vector<24x128xi32>
    %1036 = arith.cmpi slt, %1032, %1035 : vector<24x128xi32>
    %1037 = arith.andi %1034, %1036 : vector<24x128xi1>
    %cst_289 = arith.constant 1.000000e+00 : f32
    %cst_290 = arith.constant 5.000000e-01 : f32
    %1038 = vector.broadcast %cst_289 : f32 to vector<24x128xf32>
    %1039 = vector.broadcast %cst_290 : f32 to vector<24x128xf32>
    %1040 = arith.select %1037, %1038, %1039 : vector<24x128xi1>, vector<24x128xf32>
    %1041 = tpu.iota {dimensions = array<i32: 1>} : vector<24x128xi32>
    %cst_291 = arith.constant dense<0.000000e+00> : vector<24x128xf32>
    %1042 = tpu.matmul %1012, %1018, %cst_291 {dimension_numbers = #tpu.dot_dimension_numbers<[1], [0], [0], [1], [0, 0, 1, 1], [], []>} : vector<24x32xf32>, vector<32x128xf32>, vector<24x128xf32> -> vector<24x128xf32>
    %1043 = arith.addf %1031, %1042 : vector<24x128xf32>
    %1044 = arith.mulf %1043, %1040 : vector<24x128xf32>
    %1045 = math.tanh %1044 : vector<24x128xf32>
    %cst_292 = arith.constant 5.000000e-01 : f32
    %1046 = vector.broadcast %cst_292 : f32 to vector<24x128xf32>
    %1047 = arith.mulf %1046, %1045 : vector<24x128xf32>
    %cst_293 = arith.constant 5.000000e-01 : f32
    %1048 = vector.broadcast %cst_293 : f32 to vector<24x128xf32>
    %1049 = arith.addf %1047, %1048 : vector<24x128xf32>
    %1050 = arith.select %1037, %1045, %1049 : vector<24x128xi1>, vector<24x128xf32>
    %1051 = vector.extract_strided_slice %1050 {offsets = [0, 0], sizes = [24, 32], strides = [1, 1]} : vector<24x128xf32> to vector<24x32xf32>
    %1052 = vector.extract_strided_slice %1050 {offsets = [0, 32], sizes = [24, 32], strides = [1, 1]} : vector<24x128xf32> to vector<24x32xf32>
    %1053 = vector.extract_strided_slice %1050 {offsets = [0, 64], sizes = [24, 32], strides = [1, 1]} : vector<24x128xf32> to vector<24x32xf32>
    %1054 = vector.extract_strided_slice %1050 {offsets = [0, 96], sizes = [24, 32], strides = [1, 1]} : vector<24x128xf32> to vector<24x32xf32>
    %1055 = arith.mulf %1052, %1017 : vector<24x32xf32>
    %1056 = arith.mulf %1051, %1053 : vector<24x32xf32>
    %1057 = arith.addf %1055, %1056 : vector<24x32xf32>
    %1058 = math.tanh %1057 : vector<24x32xf32>
    %1059 = arith.mulf %1054, %1058 : vector<24x32xf32>
    %cst_294 = arith.constant dense<0.000000e+00> : vector<24x32xf32>
    %1060 = tpu.matmul %1059, %1019, %cst_294 {dimension_numbers = #tpu.dot_dimension_numbers<[1], [0], [0], [1], [0, 0, 1, 1], [], []>} : vector<24x32xf32>, vector<32x32xf32>, vector<24x32xf32> -> vector<24x32xf32>
    %1061 = vector.broadcast %1020 : vector<1x32xf32> to vector<24x32xf32>
    %1062 = arith.addf %1060, %1061 : vector<24x32xf32>
    %cst_295 = arith.constant 0.000000e+00 : f32
    %1063 = vector.broadcast %cst_295 : f32 to vector<24x32xf32>
    %1064 = arith.maximumf %1062, %1063 : vector<24x32xf32>
    %cst_296 = arith.constant dense<0.000000e+00> : vector<24x128xf32>
    %1065 = tpu.matmul %1064, %1021, %cst_296 {dimension_numbers = #tpu.dot_dimension_numbers<[1], [0], [0], [1], [0, 0, 1, 1], [], []>} : vector<24x32xf32>, vector<32x128xf32>, vector<24x128xf32> -> vector<24x128xf32>
    %1066 = vector.broadcast %1022 : vector<1x128xf32> to vector<24x128xf32>
    %1067 = arith.addf %1065, %1066 : vector<24x128xf32>
    %c0_297 = arith.constant 0 : index
    %c0_298 = arith.constant 0 : index
    %1068 = vector.load %arg31[%c0_297, %c0_298] : memref<24x1024xf32, #tpu.memory_space<vmem>>, vector<24x128xf32>
    tpu.vector_store %arg31[%c0_297, %c0_298], %1067 {strides = array<i32>} : memref<24x1024xf32, #tpu.memory_space<vmem>>, vector<24x128xf32>,
    %cst_299 = arith.constant dense<0xFF800000> : vector<24xf32>
    %1069 = vector.multi_reduction <maximumf>, %1067, %cst_299 [1] : vector<24x128xf32> to vector<24xf32>
    %1070 = vector.shape_cast %1069 : vector<24xf32> to vector<24x1xf32>
    %1071 = vector.broadcast %1070 : vector<24x1xf32> to vector<24x128xf32>
    %1072 = arith.cmpf oeq, %1067, %1071 : vector<24x128xf32>
    %c128_i32 = arith.constant 128 : i32
    %1073 = vector.broadcast %c128_i32 : i32 to vector<24x128xi32>
    %1074 = arith.select %1072, %1041, %1073 : vector<24x128xi1>, vector<24x128xi32>
    %cst_300 = arith.constant dense<2147483647> : vector<24xi32>
    %1075 = vector.multi_reduction <minsi>, %1074, %cst_300 [1] : vector<24x128xi32> to vector<24xi32>
    %1076 = vector.shape_cast %1075 : vector<24xi32> to vector<24x1xi32>
    %1077 = vector.broadcast %1076 : vector<24x1xi32> to vector<24x128xi32>
    %1078 = arith.cmpi eq, %1041, %1077 : vector<24x128xi32>
    %1079 = arith.extui %1078 : vector<24x128xi1> to vector<24x128xi32>
    %1080 = arith.sitofp %1079 : vector<24x128xi32> to vector<24x128xf32>
    %cst_301 = arith.constant dense<0.000000e+00> : vector<24x128xf32>
    %1081 = tpu.matmul %1080, %1028, %cst_301 {dimension_numbers = #tpu.dot_dimension_numbers<[1], [0], [0], [1], [0, 0, 1, 1], [], []>} : vector<24x128xf32>, vector<128x128xf32>, vector<24x128xf32> -> vector<24x128xf32>
    %cst_302 = arith.constant dense<0.000000e+00> : vector<24x128xf32>
    %1082 = tpu.matmul %1059, %1018, %cst_302 {dimension_numbers = #tpu.dot_dimension_numbers<[1], [0], [0], [1], [0, 0, 1, 1], [], []>} : vector<24x32xf32>, vector<32x128xf32>, vector<24x128xf32> -> vector<24x128xf32>
    %1083 = arith.addf %1081, %1082 : vector<24x128xf32>
    %1084 = arith.mulf %1083, %1040 : vector<24x128xf32>
    %1085 = math.tanh %1084 : vector<24x128xf32>
    %cst_303 = arith.constant 5.000000e-01 : f32
    %1086 = vector.broadcast %cst_303 : f32 to vector<24x128xf32>
    %1087 = arith.mulf %1086, %1085 : vector<24x128xf32>
    %cst_304 = arith.constant 5.000000e-01 : f32
    %1088 = vector.broadcast %cst_304 : f32 to vector<24x128xf32>
    %1089 = arith.addf %1087, %1088 : vector<24x128xf32>
    %1090 = arith.select %1037, %1085, %1089 : vector<24x128xi1>, vector<24x128xf32>
    %1091 = vector.extract_strided_slice %1090 {offsets = [0, 0], sizes = [24, 32], strides = [1, 1]} : vector<24x128xf32> to vector<24x32xf32>
    %1092 = vector.extract_strided_slice %1090 {offsets = [0, 32], sizes = [24, 32], strides = [1, 1]} : vector<24x128xf32> to vector<24x32xf32>
    %1093 = vector.extract_strided_slice %1090 {offsets = [0, 64], sizes = [24, 32], strides = [1, 1]} : vector<24x128xf32> to vector<24x32xf32>
    %1094 = vector.extract_strided_slice %1090 {offsets = [0, 96], sizes = [24, 32], strides = [1, 1]} : vector<24x128xf32> to vector<24x32xf32>
    %1095 = arith.mulf %1092, %1057 : vector<24x32xf32>
    %1096 = arith.mulf %1091, %1093 : vector<24x32xf32>
    %1097 = arith.addf %1095, %1096 : vector<24x32xf32>
    %1098 = math.tanh %1097 : vector<24x32xf32>
    %1099 = arith.mulf %1094, %1098 : vector<24x32xf32>
    %cst_305 = arith.constant dense<0.000000e+00> : vector<24x32xf32>
    %1100 = tpu.matmul %1099, %1019, %cst_305 {dimension_numbers = #tpu.dot_dimension_numbers<[1], [0], [0], [1], [0, 0, 1, 1], [], []>} : vector<24x32xf32>, vector<32x32xf32>, vector<24x32xf32> -> vector<24x32xf32>
    %1101 = vector.broadcast %1020 : vector<1x32xf32> to vector<24x32xf32>
    %1102 = arith.addf %1100, %1101 : vector<24x32xf32>
    %cst_306 = arith.constant 0.000000e+00 : f32
    %1103 = vector.broadcast %cst_306 : f32 to vector<24x32xf32>
    %1104 = arith.maximumf %1102, %1103 : vector<24x32xf32>
    %cst_307 = arith.constant dense<0.000000e+00> : vector<24x128xf32>
    %1105 = tpu.matmul %1104, %1021, %cst_307 {dimension_numbers = #tpu.dot_dimension_numbers<[1], [0], [0], [1], [0, 0, 1, 1], [], []>} : vector<24x32xf32>, vector<32x128xf32>, vector<24x128xf32> -> vector<24x128xf32>
    %1106 = vector.broadcast %1022 : vector<1x128xf32> to vector<24x128xf32>
    %1107 = arith.addf %1105, %1106 : vector<24x128xf32>
    %c0_308 = arith.constant 0 : index
    %c128_309 = arith.constant 128 : index
    %1108 = vector.load %arg31[%c0_308, %c128_309] : memref<24x1024xf32, #tpu.memory_space<vmem>>, vector<24x128xf32>
    tpu.vector_store %arg31[%c0_308, %c128_309], %1107 {strides = array<i32>} : memref<24x1024xf32, #tpu.memory_space<vmem>>, vector<24x128xf32>,
    %cst_310 = arith.constant dense<0xFF800000> : vector<24xf32>
    %1109 = vector.multi_reduction <maximumf>, %1107, %cst_310 [1] : vector<24x128xf32> to vector<24xf32>
    %1110 = vector.shape_cast %1109 : vector<24xf32> to vector<24x1xf32>
    %1111 = vector.broadcast %1110 : vector<24x1xf32> to vector<24x128xf32>
    %1112 = arith.cmpf oeq, %1107, %1111 : vector<24x128xf32>
    %c128_i32_311 = arith.constant 128 : i32
    %1113 = vector.broadcast %c128_i32_311 : i32 to vector<24x128xi32>
    %1114 = arith.select %1112, %1041, %1113 : vector<24x128xi1>, vector<24x128xi32>
    %cst_312 = arith.constant dense<2147483647> : vector<24xi32>
    %1115 = vector.multi_reduction <minsi>, %1114, %cst_312 [1] : vector<24x128xi32> to vector<24xi32>
    %1116 = vector.shape_cast %1115 : vector<24xi32> to vector<24x1xi32>
    %1117 = vector.broadcast %1116 : vector<24x1xi32> to vector<24x128xi32>
    %1118 = arith.cmpi eq, %1041, %1117 : vector<24x128xi32>
    %1119 = arith.extui %1118 : vector<24x128xi1> to vector<24x128xi32>
    %1120 = arith.sitofp %1119 : vector<24x128xi32> to vector<24x128xf32>
    %cst_313 = arith.constant dense<0.000000e+00> : vector<24x128xf32>
    %1121 = tpu.matmul %1120, %1028, %cst_313 {dimension_numbers = #tpu.dot_dimension_numbers<[1], [0], [0], [1], [0, 0, 1, 1], [], []>} : vector<24x128xf32>, vector<128x128xf32>, vector<24x128xf32> -> vector<24x128xf32>
    %cst_314 = arith.constant dense<0.000000e+00> : vector<24x128xf32>
    %1122 = tpu.matmul %1099, %1018, %cst_314 {dimension_numbers = #tpu.dot_dimension_numbers<[1], [0], [0], [1], [0, 0, 1, 1], [], []>} : vector<24x32xf32>, vector<32x128xf32>, vector<24x128xf32> -> vector<24x128xf32>
    %1123 = arith.addf %1121, %1122 : vector<24x128xf32>
    %1124 = arith.mulf %1123, %1040 : vector<24x128xf32>
    %1125 = math.tanh %1124 : vector<24x128xf32>
    %cst_315 = arith.constant 5.000000e-01 : f32
    %1126 = vector.broadcast %cst_315 : f32 to vector<24x128xf32>
    %1127 = arith.mulf %1126, %1125 : vector<24x128xf32>
    %cst_316 = arith.constant 5.000000e-01 : f32
    %1128 = vector.broadcast %cst_316 : f32 to vector<24x128xf32>
    %1129 = arith.addf %1127, %1128 : vector<24x128xf32>
    %1130 = arith.select %1037, %1125, %1129 : vector<24x128xi1>, vector<24x128xf32>
    %1131 = vector.extract_strided_slice %1130 {offsets = [0, 0], sizes = [24, 32], strides = [1, 1]} : vector<24x128xf32> to vector<24x32xf32>
    %1132 = vector.extract_strided_slice %1130 {offsets = [0, 32], sizes = [24, 32], strides = [1, 1]} : vector<24x128xf32> to vector<24x32xf32>
    %1133 = vector.extract_strided_slice %1130 {offsets = [0, 64], sizes = [24, 32], strides = [1, 1]} : vector<24x128xf32> to vector<24x32xf32>
    %1134 = vector.extract_strided_slice %1130 {offsets = [0, 96], sizes = [24, 32], strides = [1, 1]} : vector<24x128xf32> to vector<24x32xf32>
    %1135 = arith.mulf %1132, %1097 : vector<24x32xf32>
    %1136 = arith.mulf %1131, %1133 : vector<24x32xf32>
    %1137 = arith.addf %1135, %1136 : vector<24x32xf32>
    %1138 = math.tanh %1137 : vector<24x32xf32>
    %1139 = arith.mulf %1134, %1138 : vector<24x32xf32>
    %cst_317 = arith.constant dense<0.000000e+00> : vector<24x32xf32>
    %1140 = tpu.matmul %1139, %1019, %cst_317 {dimension_numbers = #tpu.dot_dimension_numbers<[1], [0], [0], [1], [0, 0, 1, 1], [], []>} : vector<24x32xf32>, vector<32x32xf32>, vector<24x32xf32> -> vector<24x32xf32>
    %1141 = vector.broadcast %1020 : vector<1x32xf32> to vector<24x32xf32>
    %1142 = arith.addf %1140, %1141 : vector<24x32xf32>
    %cst_318 = arith.constant 0.000000e+00 : f32
    %1143 = vector.broadcast %cst_318 : f32 to vector<24x32xf32>
    %1144 = arith.maximumf %1142, %1143 : vector<24x32xf32>
    %cst_319 = arith.constant dense<0.000000e+00> : vector<24x128xf32>
    %1145 = tpu.matmul %1144, %1021, %cst_319 {dimension_numbers = #tpu.dot_dimension_numbers<[1], [0], [0], [1], [0, 0, 1, 1], [], []>} : vector<24x32xf32>, vector<32x128xf32>, vector<24x128xf32> -> vector<24x128xf32>
    %1146 = vector.broadcast %1022 : vector<1x128xf32> to vector<24x128xf32>
    %1147 = arith.addf %1145, %1146 : vector<24x128xf32>
    %c0_320 = arith.constant 0 : index
    %c256 = arith.constant 256 : index
    %1148 = vector.load %arg31[%c0_320, %c256] : memref<24x1024xf32, #tpu.memory_space<vmem>>, vector<24x128xf32>
    tpu.vector_store %arg31[%c0_320, %c256], %1147 {strides = array<i32>} : memref<24x1024xf32, #tpu.memory_space<vmem>>, vector<24x128xf32>,
    %cst_321 = arith.constant dense<0xFF800000> : vector<24xf32>
    %1149 = vector.multi_reduction <maximumf>, %1147, %cst_321 [1] : vector<24x128xf32> to vector<24xf32>
    %1150 = vector.shape_cast %1149 : vector<24xf32> to vector<24x1xf32>
    %1151 = vector.broadcast %1150 : vector<24x1xf32> to vector<24x128xf32>
    %1152 = arith.cmpf oeq, %1147, %1151 : vector<24x128xf32>
    %c128_i32_322 = arith.constant 128 : i32
    %1153 = vector.broadcast %c128_i32_322 : i32 to vector<24x128xi32>
    %1154 = arith.select %1152, %1041, %1153 : vector<24x128xi1>, vector<24x128xi32>
    %cst_323 = arith.constant dense<2147483647> : vector<24xi32>
    %1155 = vector.multi_reduction <minsi>, %1154, %cst_323 [1] : vector<24x128xi32> to vector<24xi32>
    %1156 = vector.shape_cast %1155 : vector<24xi32> to vector<24x1xi32>
    %1157 = vector.broadcast %1156 : vector<24x1xi32> to vector<24x128xi32>
    %1158 = arith.cmpi eq, %1041, %1157 : vector<24x128xi32>
    %1159 = arith.extui %1158 : vector<24x128xi1> to vector<24x128xi32>
    %1160 = arith.sitofp %1159 : vector<24x128xi32> to vector<24x128xf32>
    %cst_324 = arith.constant dense<0.000000e+00> : vector<24x128xf32>
    %1161 = tpu.matmul %1160, %1028, %cst_324 {dimension_numbers = #tpu.dot_dimension_numbers<[1], [0], [0], [1], [0, 0, 1, 1], [], []>} : vector<24x128xf32>, vector<128x128xf32>, vector<24x128xf32> -> vector<24x128xf32>
    %cst_325 = arith.constant dense<0.000000e+00> : vector<24x128xf32>
    %1162 = tpu.matmul %1139, %1018, %cst_325 {dimension_numbers = #tpu.dot_dimension_numbers<[1], [0], [0], [1], [0, 0, 1, 1], [], []>} : vector<24x32xf32>, vector<32x128xf32>, vector<24x128xf32> -> vector<24x128xf32>
    %1163 = arith.addf %1161, %1162 : vector<24x128xf32>
    %1164 = arith.mulf %1163, %1040 : vector<24x128xf32>
    %1165 = math.tanh %1164 : vector<24x128xf32>
    %cst_326 = arith.constant 5.000000e-01 : f32
    %1166 = vector.broadcast %cst_326 : f32 to vector<24x128xf32>
    %1167 = arith.mulf %1166, %1165 : vector<24x128xf32>
    %cst_327 = arith.constant 5.000000e-01 : f32
    %1168 = vector.broadcast %cst_327 : f32 to vector<24x128xf32>
    %1169 = arith.addf %1167, %1168 : vector<24x128xf32>
    %1170 = arith.select %1037, %1165, %1169 : vector<24x128xi1>, vector<24x128xf32>
    %1171 = vector.extract_strided_slice %1170 {offsets = [0, 0], sizes = [24, 32], strides = [1, 1]} : vector<24x128xf32> to vector<24x32xf32>
    %1172 = vector.extract_strided_slice %1170 {offsets = [0, 32], sizes = [24, 32], strides = [1, 1]} : vector<24x128xf32> to vector<24x32xf32>
    %1173 = vector.extract_strided_slice %1170 {offsets = [0, 64], sizes = [24, 32], strides = [1, 1]} : vector<24x128xf32> to vector<24x32xf32>
    %1174 = vector.extract_strided_slice %1170 {offsets = [0, 96], sizes = [24, 32], strides = [1, 1]} : vector<24x128xf32> to vector<24x32xf32>
    %1175 = arith.mulf %1172, %1137 : vector<24x32xf32>
    %1176 = arith.mulf %1171, %1173 : vector<24x32xf32>
    %1177 = arith.addf %1175, %1176 : vector<24x32xf32>
    %1178 = math.tanh %1177 : vector<24x32xf32>
    %1179 = arith.mulf %1174, %1178 : vector<24x32xf32>
    %cst_328 = arith.constant dense<0.000000e+00> : vector<24x32xf32>
    %1180 = tpu.matmul %1179, %1019, %cst_328 {dimension_numbers = #tpu.dot_dimension_numbers<[1], [0], [0], [1], [0, 0, 1, 1], [], []>} : vector<24x32xf32>, vector<32x32xf32>, vector<24x32xf32> -> vector<24x32xf32>
    %1181 = vector.broadcast %1020 : vector<1x32xf32> to vector<24x32xf32>
    %1182 = arith.addf %1180, %1181 : vector<24x32xf32>
    %cst_329 = arith.constant 0.000000e+00 : f32
    %1183 = vector.broadcast %cst_329 : f32 to vector<24x32xf32>
    %1184 = arith.maximumf %1182, %1183 : vector<24x32xf32>
    %cst_330 = arith.constant dense<0.000000e+00> : vector<24x128xf32>
    %1185 = tpu.matmul %1184, %1021, %cst_330 {dimension_numbers = #tpu.dot_dimension_numbers<[1], [0], [0], [1], [0, 0, 1, 1], [], []>} : vector<24x32xf32>, vector<32x128xf32>, vector<24x128xf32> -> vector<24x128xf32>
    %1186 = vector.broadcast %1022 : vector<1x128xf32> to vector<24x128xf32>
    %1187 = arith.addf %1185, %1186 : vector<24x128xf32>
    %c0_331 = arith.constant 0 : index
    %c384 = arith.constant 384 : index
    %1188 = vector.load %arg31[%c0_331, %c384] : memref<24x1024xf32, #tpu.memory_space<vmem>>, vector<24x128xf32>
    tpu.vector_store %arg31[%c0_331, %c384], %1187 {strides = array<i32>} : memref<24x1024xf32, #tpu.memory_space<vmem>>, vector<24x128xf32>,
    %cst_332 = arith.constant dense<0xFF800000> : vector<24xf32>
    %1189 = vector.multi_reduction <maximumf>, %1187, %cst_332 [1] : vector<24x128xf32> to vector<24xf32>
    %1190 = vector.shape_cast %1189 : vector<24xf32> to vector<24x1xf32>
    %1191 = vector.broadcast %1190 : vector<24x1xf32> to vector<24x128xf32>
    %1192 = arith.cmpf oeq, %1187, %1191 : vector<24x128xf32>
    %c128_i32_333 = arith.constant 128 : i32
    %1193 = vector.broadcast %c128_i32_333 : i32 to vector<24x128xi32>
    %1194 = arith.select %1192, %1041, %1193 : vector<24x128xi1>, vector<24x128xi32>
    %cst_334 = arith.constant dense<2147483647> : vector<24xi32>
    %1195 = vector.multi_reduction <minsi>, %1194, %cst_334 [1] : vector<24x128xi32> to vector<24xi32>
    %1196 = vector.shape_cast %1195 : vector<24xi32> to vector<24x1xi32>
    %1197 = vector.broadcast %1196 : vector<24x1xi32> to vector<24x128xi32>
    %1198 = arith.cmpi eq, %1041, %1197 : vector<24x128xi32>
    %1199 = arith.extui %1198 : vector<24x128xi1> to vector<24x128xi32>
    %1200 = arith.sitofp %1199 : vector<24x128xi32> to vector<24x128xf32>
    %cst_335 = arith.constant dense<0.000000e+00> : vector<24x128xf32>
    %1201 = tpu.matmul %1200, %1028, %cst_335 {dimension_numbers = #tpu.dot_dimension_numbers<[1], [0], [0], [1], [0, 0, 1, 1], [], []>} : vector<24x128xf32>, vector<128x128xf32>, vector<24x128xf32> -> vector<24x128xf32>
    %cst_336 = arith.constant dense<0.000000e+00> : vector<24x128xf32>
    %1202 = tpu.matmul %1179, %1018, %cst_336 {dimension_numbers = #tpu.dot_dimension_numbers<[1], [0], [0], [1], [0, 0, 1, 1], [], []>} : vector<24x32xf32>, vector<32x128xf32>, vector<24x128xf32> -> vector<24x128xf32>
    %1203 = arith.addf %1201, %1202 : vector<24x128xf32>
    %1204 = arith.mulf %1203, %1040 : vector<24x128xf32>
    %1205 = math.tanh %1204 : vector<24x128xf32>
    %cst_337 = arith.constant 5.000000e-01 : f32
    %1206 = vector.broadcast %cst_337 : f32 to vector<24x128xf32>
    %1207 = arith.mulf %1206, %1205 : vector<24x128xf32>
    %cst_338 = arith.constant 5.000000e-01 : f32
    %1208 = vector.broadcast %cst_338 : f32 to vector<24x128xf32>
    %1209 = arith.addf %1207, %1208 : vector<24x128xf32>
    %1210 = arith.select %1037, %1205, %1209 : vector<24x128xi1>, vector<24x128xf32>
    %1211 = vector.extract_strided_slice %1210 {offsets = [0, 0], sizes = [24, 32], strides = [1, 1]} : vector<24x128xf32> to vector<24x32xf32>
    %1212 = vector.extract_strided_slice %1210 {offsets = [0, 32], sizes = [24, 32], strides = [1, 1]} : vector<24x128xf32> to vector<24x32xf32>
    %1213 = vector.extract_strided_slice %1210 {offsets = [0, 64], sizes = [24, 32], strides = [1, 1]} : vector<24x128xf32> to vector<24x32xf32>
    %1214 = vector.extract_strided_slice %1210 {offsets = [0, 96], sizes = [24, 32], strides = [1, 1]} : vector<24x128xf32> to vector<24x32xf32>
    %1215 = arith.mulf %1212, %1177 : vector<24x32xf32>
    %1216 = arith.mulf %1211, %1213 : vector<24x32xf32>
    %1217 = arith.addf %1215, %1216 : vector<24x32xf32>
    %1218 = math.tanh %1217 : vector<24x32xf32>
    %1219 = arith.mulf %1214, %1218 : vector<24x32xf32>
    %cst_339 = arith.constant dense<0.000000e+00> : vector<24x32xf32>
    %1220 = tpu.matmul %1219, %1019, %cst_339 {dimension_numbers = #tpu.dot_dimension_numbers<[1], [0], [0], [1], [0, 0, 1, 1], [], []>} : vector<24x32xf32>, vector<32x32xf32>, vector<24x32xf32> -> vector<24x32xf32>
    %1221 = vector.broadcast %1020 : vector<1x32xf32> to vector<24x32xf32>
    %1222 = arith.addf %1220, %1221 : vector<24x32xf32>
    %cst_340 = arith.constant 0.000000e+00 : f32
    %1223 = vector.broadcast %cst_340 : f32 to vector<24x32xf32>
    %1224 = arith.maximumf %1222, %1223 : vector<24x32xf32>
    %cst_341 = arith.constant dense<0.000000e+00> : vector<24x128xf32>
    %1225 = tpu.matmul %1224, %1021, %cst_341 {dimension_numbers = #tpu.dot_dimension_numbers<[1], [0], [0], [1], [0, 0, 1, 1], [], []>} : vector<24x32xf32>, vector<32x128xf32>, vector<24x128xf32> -> vector<24x128xf32>
    %1226 = vector.broadcast %1022 : vector<1x128xf32> to vector<24x128xf32>
    %1227 = arith.addf %1225, %1226 : vector<24x128xf32>
    %c0_342 = arith.constant 0 : index
    %c512 = arith.constant 512 : index
    %1228 = vector.load %arg31[%c0_342, %c512] : memref<24x1024xf32, #tpu.memory_space<vmem>>, vector<24x128xf32>
    tpu.vector_store %arg31[%c0_342, %c512], %1227 {strides = array<i32>} : memref<24x1024xf32, #tpu.memory_space<vmem>>, vector<24x128xf32>,
    %cst_343 = arith.constant dense<0xFF800000> : vector<24xf32>
    %1229 = vector.multi_reduction <maximumf>, %1227, %cst_343 [1] : vector<24x128xf32> to vector<24xf32>
    %1230 = vector.shape_cast %1229 : vector<24xf32> to vector<24x1xf32>
    %1231 = vector.broadcast %1230 : vector<24x1xf32> to vector<24x128xf32>
    %1232 = arith.cmpf oeq, %1227, %1231 : vector<24x128xf32>
    %c128_i32_344 = arith.constant 128 : i32
    %1233 = vector.broadcast %c128_i32_344 : i32 to vector<24x128xi32>
    %1234 = arith.select %1232, %1041, %1233 : vector<24x128xi1>, vector<24x128xi32>
    %cst_345 = arith.constant dense<2147483647> : vector<24xi32>
    %1235 = vector.multi_reduction <minsi>, %1234, %cst_345 [1] : vector<24x128xi32> to vector<24xi32>
    %1236 = vector.shape_cast %1235 : vector<24xi32> to vector<24x1xi32>
    %1237 = vector.broadcast %1236 : vector<24x1xi32> to vector<24x128xi32>
    %1238 = arith.cmpi eq, %1041, %1237 : vector<24x128xi32>
    %1239 = arith.extui %1238 : vector<24x128xi1> to vector<24x128xi32>
    %1240 = arith.sitofp %1239 : vector<24x128xi32> to vector<24x128xf32>
    %cst_346 = arith.constant dense<0.000000e+00> : vector<24x128xf32>
    %1241 = tpu.matmul %1240, %1028, %cst_346 {dimension_numbers = #tpu.dot_dimension_numbers<[1], [0], [0], [1], [0, 0, 1, 1], [], []>} : vector<24x128xf32>, vector<128x128xf32>, vector<24x128xf32> -> vector<24x128xf32>
    %cst_347 = arith.constant dense<0.000000e+00> : vector<24x128xf32>
    %1242 = tpu.matmul %1219, %1018, %cst_347 {dimension_numbers = #tpu.dot_dimension_numbers<[1], [0], [0], [1], [0, 0, 1, 1], [], []>} : vector<24x32xf32>, vector<32x128xf32>, vector<24x128xf32> -> vector<24x128xf32>
    %1243 = arith.addf %1241, %1242 : vector<24x128xf32>
    %1244 = arith.mulf %1243, %1040 : vector<24x128xf32>
    %1245 = math.tanh %1244 : vector<24x128xf32>
    %cst_348 = arith.constant 5.000000e-01 : f32
    %1246 = vector.broadcast %cst_348 : f32 to vector<24x128xf32>
    %1247 = arith.mulf %1246, %1245 : vector<24x128xf32>
    %cst_349 = arith.constant 5.000000e-01 : f32
    %1248 = vector.broadcast %cst_349 : f32 to vector<24x128xf32>
    %1249 = arith.addf %1247, %1248 : vector<24x128xf32>
    %1250 = arith.select %1037, %1245, %1249 : vector<24x128xi1>, vector<24x128xf32>
    %1251 = vector.extract_strided_slice %1250 {offsets = [0, 0], sizes = [24, 32], strides = [1, 1]} : vector<24x128xf32> to vector<24x32xf32>
    %1252 = vector.extract_strided_slice %1250 {offsets = [0, 32], sizes = [24, 32], strides = [1, 1]} : vector<24x128xf32> to vector<24x32xf32>
    %1253 = vector.extract_strided_slice %1250 {offsets = [0, 64], sizes = [24, 32], strides = [1, 1]} : vector<24x128xf32> to vector<24x32xf32>
    %1254 = vector.extract_strided_slice %1250 {offsets = [0, 96], sizes = [24, 32], strides = [1, 1]} : vector<24x128xf32> to vector<24x32xf32>
    %1255 = arith.mulf %1252, %1217 : vector<24x32xf32>
    %1256 = arith.mulf %1251, %1253 : vector<24x32xf32>
    %1257 = arith.addf %1255, %1256 : vector<24x32xf32>
    %1258 = math.tanh %1257 : vector<24x32xf32>
    %1259 = arith.mulf %1254, %1258 : vector<24x32xf32>
    %cst_350 = arith.constant dense<0.000000e+00> : vector<24x32xf32>
    %1260 = tpu.matmul %1259, %1019, %cst_350 {dimension_numbers = #tpu.dot_dimension_numbers<[1], [0], [0], [1], [0, 0, 1, 1], [], []>} : vector<24x32xf32>, vector<32x32xf32>, vector<24x32xf32> -> vector<24x32xf32>
    %1261 = vector.broadcast %1020 : vector<1x32xf32> to vector<24x32xf32>
    %1262 = arith.addf %1260, %1261 : vector<24x32xf32>
    %cst_351 = arith.constant 0.000000e+00 : f32
    %1263 = vector.broadcast %cst_351 : f32 to vector<24x32xf32>
    %1264 = arith.maximumf %1262, %1263 : vector<24x32xf32>
    %cst_352 = arith.constant dense<0.000000e+00> : vector<24x128xf32>
    %1265 = tpu.matmul %1264, %1021, %cst_352 {dimension_numbers = #tpu.dot_dimension_numbers<[1], [0], [0], [1], [0, 0, 1, 1], [], []>} : vector<24x32xf32>, vector<32x128xf32>, vector<24x128xf32> -> vector<24x128xf32>
    %1266 = vector.broadcast %1022 : vector<1x128xf32> to vector<24x128xf32>
    %1267 = arith.addf %1265, %1266 : vector<24x128xf32>
    %c0_353 = arith.constant 0 : index
    %c640 = arith.constant 640 : index
    %1268 = vector.load %arg31[%c0_353, %c640] : memref<24x1024xf32, #tpu.memory_space<vmem>>, vector<24x128xf32>
    tpu.vector_store %arg31[%c0_353, %c640], %1267 {strides = array<i32>} : memref<24x1024xf32, #tpu.memory_space<vmem>>, vector<24x128xf32>,
    %cst_354 = arith.constant dense<0xFF800000> : vector<24xf32>
    %1269 = vector.multi_reduction <maximumf>, %1267, %cst_354 [1] : vector<24x128xf32> to vector<24xf32>
    %1270 = vector.shape_cast %1269 : vector<24xf32> to vector<24x1xf32>
    %1271 = vector.broadcast %1270 : vector<24x1xf32> to vector<24x128xf32>
    %1272 = arith.cmpf oeq, %1267, %1271 : vector<24x128xf32>
    %c128_i32_355 = arith.constant 128 : i32
    %1273 = vector.broadcast %c128_i32_355 : i32 to vector<24x128xi32>
    %1274 = arith.select %1272, %1041, %1273 : vector<24x128xi1>, vector<24x128xi32>
    %cst_356 = arith.constant dense<2147483647> : vector<24xi32>
    %1275 = vector.multi_reduction <minsi>, %1274, %cst_356 [1] : vector<24x128xi32> to vector<24xi32>
    %1276 = vector.shape_cast %1275 : vector<24xi32> to vector<24x1xi32>
    %1277 = vector.broadcast %1276 : vector<24x1xi32> to vector<24x128xi32>
    %1278 = arith.cmpi eq, %1041, %1277 : vector<24x128xi32>
    %1279 = arith.extui %1278 : vector<24x128xi1> to vector<24x128xi32>
    %1280 = arith.sitofp %1279 : vector<24x128xi32> to vector<24x128xf32>
    %cst_357 = arith.constant dense<0.000000e+00> : vector<24x128xf32>
    %1281 = tpu.matmul %1280, %1028, %cst_357 {dimension_numbers = #tpu.dot_dimension_numbers<[1], [0], [0], [1], [0, 0, 1, 1], [], []>} : vector<24x128xf32>, vector<128x128xf32>, vector<24x128xf32> -> vector<24x128xf32>
    %cst_358 = arith.constant dense<0.000000e+00> : vector<24x128xf32>
    %1282 = tpu.matmul %1259, %1018, %cst_358 {dimension_numbers = #tpu.dot_dimension_numbers<[1], [0], [0], [1], [0, 0, 1, 1], [], []>} : vector<24x32xf32>, vector<32x128xf32>, vector<24x128xf32> -> vector<24x128xf32>
    %1283 = arith.addf %1281, %1282 : vector<24x128xf32>
    %1284 = arith.mulf %1283, %1040 : vector<24x128xf32>
    %1285 = math.tanh %1284 : vector<24x128xf32>
    %cst_359 = arith.constant 5.000000e-01 : f32
    %1286 = vector.broadcast %cst_359 : f32 to vector<24x128xf32>
    %1287 = arith.mulf %1286, %1285 : vector<24x128xf32>
    %cst_360 = arith.constant 5.000000e-01 : f32
    %1288 = vector.broadcast %cst_360 : f32 to vector<24x128xf32>
    %1289 = arith.addf %1287, %1288 : vector<24x128xf32>
    %1290 = arith.select %1037, %1285, %1289 : vector<24x128xi1>, vector<24x128xf32>
    %1291 = vector.extract_strided_slice %1290 {offsets = [0, 0], sizes = [24, 32], strides = [1, 1]} : vector<24x128xf32> to vector<24x32xf32>
    %1292 = vector.extract_strided_slice %1290 {offsets = [0, 32], sizes = [24, 32], strides = [1, 1]} : vector<24x128xf32> to vector<24x32xf32>
    %1293 = vector.extract_strided_slice %1290 {offsets = [0, 64], sizes = [24, 32], strides = [1, 1]} : vector<24x128xf32> to vector<24x32xf32>
    %1294 = vector.extract_strided_slice %1290 {offsets = [0, 96], sizes = [24, 32], strides = [1, 1]} : vector<24x128xf32> to vector<24x32xf32>
    %1295 = arith.mulf %1292, %1257 : vector<24x32xf32>
    %1296 = arith.mulf %1291, %1293 : vector<24x32xf32>
    %1297 = arith.addf %1295, %1296 : vector<24x32xf32>
    %1298 = math.tanh %1297 : vector<24x32xf32>
    %1299 = arith.mulf %1294, %1298 : vector<24x32xf32>
    %cst_361 = arith.constant dense<0.000000e+00> : vector<24x32xf32>
    %1300 = tpu.matmul %1299, %1019, %cst_361 {dimension_numbers = #tpu.dot_dimension_numbers<[1], [0], [0], [1], [0, 0, 1, 1], [], []>} : vector<24x32xf32>, vector<32x32xf32>, vector<24x32xf32> -> vector<24x32xf32>
    %1301 = vector.broadcast %1020 : vector<1x32xf32> to vector<24x32xf32>
    %1302 = arith.addf %1300, %1301 : vector<24x32xf32>
    %cst_362 = arith.constant 0.000000e+00 : f32
    %1303 = vector.broadcast %cst_362 : f32 to vector<24x32xf32>
    %1304 = arith.maximumf %1302, %1303 : vector<24x32xf32>
    %cst_363 = arith.constant dense<0.000000e+00> : vector<24x128xf32>
    %1305 = tpu.matmul %1304, %1021, %cst_363 {dimension_numbers = #tpu.dot_dimension_numbers<[1], [0], [0], [1], [0, 0, 1, 1], [], []>} : vector<24x32xf32>, vector<32x128xf32>, vector<24x128xf32> -> vector<24x128xf32>
    %1306 = vector.broadcast %1022 : vector<1x128xf32> to vector<24x128xf32>
    %1307 = arith.addf %1305, %1306 : vector<24x128xf32>
    %c0_364 = arith.constant 0 : index
    %c768 = arith.constant 768 : index
    %1308 = vector.load %arg31[%c0_364, %c768] : memref<24x1024xf32, #tpu.memory_space<vmem>>, vector<24x128xf32>
    tpu.vector_store %arg31[%c0_364, %c768], %1307 {strides = array<i32>} : memref<24x1024xf32, #tpu.memory_space<vmem>>, vector<24x128xf32>,
    %cst_365 = arith.constant dense<0xFF800000> : vector<24xf32>
    %1309 = vector.multi_reduction <maximumf>, %1307, %cst_365 [1] : vector<24x128xf32> to vector<24xf32>
    %1310 = vector.shape_cast %1309 : vector<24xf32> to vector<24x1xf32>
    %1311 = vector.broadcast %1310 : vector<24x1xf32> to vector<24x128xf32>
    %1312 = arith.cmpf oeq, %1307, %1311 : vector<24x128xf32>
    %c128_i32_366 = arith.constant 128 : i32
    %1313 = vector.broadcast %c128_i32_366 : i32 to vector<24x128xi32>
    %1314 = arith.select %1312, %1041, %1313 : vector<24x128xi1>, vector<24x128xi32>
    %cst_367 = arith.constant dense<2147483647> : vector<24xi32>
    %1315 = vector.multi_reduction <minsi>, %1314, %cst_367 [1] : vector<24x128xi32> to vector<24xi32>
    %1316 = vector.shape_cast %1315 : vector<24xi32> to vector<24x1xi32>
    %1317 = vector.broadcast %1316 : vector<24x1xi32> to vector<24x128xi32>
    %1318 = arith.cmpi eq, %1041, %1317 : vector<24x128xi32>
    %1319 = arith.extui %1318 : vector<24x128xi1> to vector<24x128xi32>
    %1320 = arith.sitofp %1319 : vector<24x128xi32> to vector<24x128xf32>
    %cst_368 = arith.constant dense<0.000000e+00> : vector<24x128xf32>
    %1321 = tpu.matmul %1320, %1028, %cst_368 {dimension_numbers = #tpu.dot_dimension_numbers<[1], [0], [0], [1], [0, 0, 1, 1], [], []>} : vector<24x128xf32>, vector<128x128xf32>, vector<24x128xf32> -> vector<24x128xf32>
    %cst_369 = arith.constant dense<0.000000e+00> : vector<24x128xf32>
    %1322 = tpu.matmul %1299, %1018, %cst_369 {dimension_numbers = #tpu.dot_dimension_numbers<[1], [0], [0], [1], [0, 0, 1, 1], [], []>} : vector<24x32xf32>, vector<32x128xf32>, vector<24x128xf32> -> vector<24x128xf32>
    %1323 = arith.addf %1321, %1322 : vector<24x128xf32>
    %1324 = arith.mulf %1323, %1040 : vector<24x128xf32>
    %1325 = math.tanh %1324 : vector<24x128xf32>
    %cst_370 = arith.constant 5.000000e-01 : f32
    %1326 = vector.broadcast %cst_370 : f32 to vector<24x128xf32>
    %1327 = arith.mulf %1326, %1325 : vector<24x128xf32>
    %cst_371 = arith.constant 5.000000e-01 : f32
    %1328 = vector.broadcast %cst_371 : f32 to vector<24x128xf32>
    %1329 = arith.addf %1327, %1328 : vector<24x128xf32>
    %1330 = arith.select %1037, %1325, %1329 : vector<24x128xi1>, vector<24x128xf32>
    %1331 = vector.extract_strided_slice %1330 {offsets = [0, 0], sizes = [24, 32], strides = [1, 1]} : vector<24x128xf32> to vector<24x32xf32>
    %1332 = vector.extract_strided_slice %1330 {offsets = [0, 32], sizes = [24, 32], strides = [1, 1]} : vector<24x128xf32> to vector<24x32xf32>
    %1333 = vector.extract_strided_slice %1330 {offsets = [0, 64], sizes = [24, 32], strides = [1, 1]} : vector<24x128xf32> to vector<24x32xf32>
    %1334 = vector.extract_strided_slice %1330 {offsets = [0, 96], sizes = [24, 32], strides = [1, 1]} : vector<24x128xf32> to vector<24x32xf32>
    %1335 = arith.mulf %1332, %1297 : vector<24x32xf32>
    %1336 = arith.mulf %1331, %1333 : vector<24x32xf32>
    %1337 = arith.addf %1335, %1336 : vector<24x32xf32>
    %1338 = math.tanh %1337 : vector<24x32xf32>
    %1339 = arith.mulf %1334, %1338 : vector<24x32xf32>
    %cst_372 = arith.constant dense<0.000000e+00> : vector<24x32xf32>
    %1340 = tpu.matmul %1339, %1019, %cst_372 {dimension_numbers = #tpu.dot_dimension_numbers<[1], [0], [0], [1], [0, 0, 1, 1], [], []>} : vector<24x32xf32>, vector<32x32xf32>, vector<24x32xf32> -> vector<24x32xf32>
    %1341 = vector.broadcast %1020 : vector<1x32xf32> to vector<24x32xf32>
    %1342 = arith.addf %1340, %1341 : vector<24x32xf32>
    %cst_373 = arith.constant 0.000000e+00 : f32
    %1343 = vector.broadcast %cst_373 : f32 to vector<24x32xf32>
    %1344 = arith.maximumf %1342, %1343 : vector<24x32xf32>
    %cst_374 = arith.constant dense<0.000000e+00> : vector<24x128xf32>
    %1345 = tpu.matmul %1344, %1021, %cst_374 {dimension_numbers = #tpu.dot_dimension_numbers<[1], [0], [0], [1], [0, 0, 1, 1], [], []>} : vector<24x32xf32>, vector<32x128xf32>, vector<24x128xf32> -> vector<24x128xf32>
    %1346 = vector.broadcast %1022 : vector<1x128xf32> to vector<24x128xf32>
    %1347 = arith.addf %1345, %1346 : vector<24x128xf32>
    %c0_375 = arith.constant 0 : index
    %c896 = arith.constant 896 : index
    %1348 = vector.load %arg31[%c0_375, %c896] : memref<24x1024xf32, #tpu.memory_space<vmem>>, vector<24x128xf32>
    tpu.vector_store %arg31[%c0_375, %c896], %1347 {strides = array<i32>} : memref<24x1024xf32, #tpu.memory_space<vmem>>, vector<24x128xf32>,
    return
  }
}

</mosaic_0001>

<llo_original>
// kernel: squeeze.21
$region0: #{squeeze.21}
  %s0 = inlined_call_operand.vmem [shape: f32[1,4,256], index: 0, kind: input, shape index: {}]
  %s1 = inlined_call_operand.hbm [shape: f32[4,8,32], index: 1, kind: output, shape index: {}]
  $region1: #{squeeze.21} parent=0
    #allocation0 [shape = 'u8[16384]{0}', space=vmem, size = 0x4000, scoped, tag = 'operand span for operand 1']
    #allocation1 [shape = 's32[1]{0}', space=sflag, size = 0x4, scoped, tag = 'scoped memory for squeeze.21']
    #allocation2 [shape = 'u8[8192]{0}', space=vmem, size = 0x2000, scoped, tag = 'scoped mem for input reshape']
    %2 = vsyncpa [#allocation1], 0
    %s4 = sshll.u32 1, 4
    %s5 = ssub.s32 %s4, 1
    %s6 = scalar_lea.vmem %s0, 4
    %v7 = vld [vmem:[%s6] sm:%s5]
    %s8 = scalar_lea.vmem [#allocation2], 8
    %9 = vst [vmem:[%s8] sm:%s5] %v7
    %v10 = vld [vmem:[%s0] sm:%s5]
    %11 = vst [vmem:[#allocation2] sm:%s5] %v10
    %v12 = vld [vmem:[#allocation2] sm:$0xf]
    %vm13 = vcmask 261120
    %14 = vst.msk [vmem:[#allocation0] ss:$8 sm:$0xf] %vm13, %v12
    %s15 = scalar_lea.vmem [#allocation2], 8
    %v16 = vld [vmem:[%s15] sm:$0xf]
    %vm17 = vcmask 261120
    %s18 = scalar_lea.vmem [#allocation0], 4
    %19 = vst.msk [vmem:[%s18] ss:$8 sm:$0xf] %vm17, %v16
    %v20 = vld.sshfl [vmem:[#allocation2] sm:$0xff pattern:$0xb3a29180]
    %21 = vrot.lane.b32.xlu0 %v20, 96
    %v22 = vpop.permute.xlu0 %21
    %vm23 = vcmask 261120
    %s24 = scalar_lea.vmem [#allocation0], 1
    %25 = vst.msk [vmem:[%s24] ss:$4 sm:$0xff] %vm23, %v22
    %v26 = vld.sshfl [vmem:[#allocation2] sm:$0xff pattern:$0xb3a29180]
    %27 = vrot.lane.b32.xlu0 %v26, 64
    %v28 = vpop.permute.xlu0 %27
    %vm29 = vcmask 261120
    %s30 = scalar_lea.vmem [#allocation0], 2
    %31 = vst.msk [vmem:[%s30] ss:$4 sm:$0xff] %vm29, %v28
    %v32 = vld.sshfl [vmem:[#allocation2] sm:$0xff pattern:$0xb3a29180]
    %33 = vrot.lane.b32.xlu0 %v32, 32
    %v34 = vpop.permute.xlu0 %33
    %vm35 = vcmask 261120
    %s36 = scalar_lea.vmem [#allocation0], 3
    %37 = vst.msk [vmem:[%s36] ss:$4 sm:$0xff] %vm35, %v34
    %s39 = ssub.s32 512, 512
    %40 = vsyncadd [#allocation1], %s39
    %s42 = sshll.u32 [#allocation0], 4
    %s43 = int_to_ptr.vmem [resolvable:$true] %s42
    %45 = dma.vmem_to_hbm [thread:$0]  %s43, 512, %s1, [#allocation1]
    %46 = dma.done [#allocation1], 512
    %47 = vsyncpa [#allocation1], 1

// kernel: run.1
$region0: #{run.1}
  #allocation0 [shape = 'u32[]', space=smem, size = 0x4, offset = 0x4, fixed_abs, tag = 'smem constant byte address 0x4 - core index']
  #allocation1 [shape = 'u32[144,128]{1,0:T(1,128)}', space=vmem, size = 0x12000, scoped, tag = 'internal scratch']
  #allocation2 [shape = 'f32[1,1]{1,0:T(1,128)S(1)}', space=vmem, size = 0x200, scoped, tag = 'scoped memory for run.1']
  %s0 = inlined_call_operand.smem [shape: u32[32], index: -1, kind: input, shape index: {}]
  %s1 = sld [smem:[%s0]]
  %s2 = scalar_lea.smem %s0, 1
  %s3 = sld [smem:[%s2]]
  %s4 = scalar_lea.smem %s0, 2
  %s5 = sld [smem:[%s4]]
  %s6 = scalar_lea.smem %s0, 3
  %s7 = sld [smem:[%s6]]
  %s8 = scalar_lea.smem %s0, 4
  %s9 = sld [smem:[%s8]]
  %s10 = scalar_lea.smem %s0, 5
  %s11 = sld [smem:[%s10]]
  %s12 = scalar_lea.smem %s0, 6
  %s13 = sld [smem:[%s12]]
  %s14 = scalar_lea.smem %s0, 7
  %s15 = sld [smem:[%s14]]
  %s16 = scalar_lea.smem %s0, 8
  %s17 = sld [smem:[%s16]]
  %s18 = scalar_lea.smem %s0, 9
  %s19 = sld [smem:[%s18]]
  %s20 = scalar_lea.smem %s0, 10
  %s21 = sld [smem:[%s20]]
  %s22 = scalar_lea.smem %s0, 11
  %s23 = sld [smem:[%s22]]
  %s24 = scalar_lea.smem %s0, 12
  %s25 = sld [smem:[%s24]]
  %s26 = scalar_lea.smem %s0, 13
  %s27 = sld [smem:[%s26]]
  %s28 = scalar_lea.smem %s0, 14
  %s29 = sld [smem:[%s28]]
  %s30 = scalar_lea.smem %s0, 15
  %s31 = sld [smem:[%s30]]
  %s32 = scalar_lea.smem %s0, 16
  %s33 = sld [smem:[%s32]]
  %s34 = scalar_lea.smem %s0, 17
  %s35 = sld [smem:[%s34]]
  %s36 = scalar_lea.smem %s0, 18
  %s37 = sld [smem:[%s36]]
  %s38 = scalar_lea.smem %s0, 19
  %s39 = sld [smem:[%s38]]
  %s40 = scalar_lea.smem %s0, 20
  %s41 = sld [smem:[%s40]]
  %s42 = scalar_lea.smem %s0, 21
  %s43 = sld [smem:[%s42]]
  %s44 = scalar_lea.smem %s0, 22
  %s45 = sld [smem:[%s44]]
  %s46 = scalar_lea.smem %s0, 23
  %s47 = sld [smem:[%s46]]
  %s48 = scalar_lea.smem %s0, 24
  %s49 = sld [smem:[%s48]]
  %s50 = scalar_lea.smem %s0, 25
  %s51 = sld [smem:[%s50]]
  %s52 = scalar_lea.smem %s0, 26
  %s53 = sld [smem:[%s52]]
  %s54 = scalar_lea.smem %s0, 27
  %s55 = sld [smem:[%s54]]
  %s56 = scalar_lea.smem %s0, 28
  %s57 = sld [smem:[%s56]]
  %s58 = scalar_lea.smem %s0, 29
  %s59 = sld [smem:[%s58]]
  %s60 = scalar_lea.smem %s0, 30
  %s61 = sld [smem:[%s60]]
  %s62 = scalar_lea.smem %s0, 31
  %s63 = sld [smem:[%s62]]
  %64 = xla_tuple %s59, %s61, %s63
  %s65 = sld [smem:[#allocation0]]
  $region142: #{run.1} parent=0
    _
  %s67 = ssub.s32 1, %s65
  %s68 = scalar_select 0, %s67, %s65
  %v69 = vstv %s21
  %70 = vst [vmem:[#allocation2] sm:$0x1] %v69
  // Predicated region
  $region2: #{run.1} parent=0 // pred_check
    _
  $region3: #{run.1} parent=0 // pred_check_branch
    %72 = sbr.rel (0) target = $region5
  $region4: #{run.1} parent=0 // pred_region
    _
  $region5: #{run.1} parent=0 // pred_fallthru
    _
  // Predicated region
  $region6: #{run.1} parent=0 // pred_check
    _
  $region7: #{run.1} parent=0 // pred_check_branch
    %74 = sbr.rel (0) target = $region9
  $region8: #{run.1} parent=0 // pred_region
    _
  $region9: #{run.1} parent=0 // pred_fallthru
    _
  // Predicated region
  $region10: #{run.1} parent=0 // pred_check
    _
  $region11: #{run.1} parent=0 // pred_check_branch
    %76 = sbr.rel (0) target = $region13
  $region12: #{run.1} parent=0 // pred_region
    _
  $region13: #{run.1} parent=0 // pred_fallthru
    _
  // Predicated region
  $region14: #{run.1} parent=0 // pred_check
    _
  $region15: #{run.1} parent=0 // pred_check_branch
    %78 = sbr.rel (0) target = $region17
  $region16: #{run.1} parent=0 // pred_region
    _
  $region17: #{run.1} parent=0 // pred_fallthru
    _
  // Predicated region
  $region18: #{run.1} parent=0 // pred_check
    _
  $region19: #{run.1} parent=0 // pred_check_branch
    %80 = sbr.rel (0) target = $region21
  $region20: #{run.1} parent=0 // pred_region
    _
  $region21: #{run.1} parent=0 // pred_fallthru
    _
  // Predicated region
  $region22: #{run.1} parent=0 // pred_check
    _
  $region23: #{run.1} parent=0 // pred_check_branch
    %82 = sbr.rel (0) target = $region25
  $region24: #{run.1} parent=0 // pred_region
    _
  $region25: #{run.1} parent=0 // pred_fallthru
    _
  // Predicated region
  $region26: #{run.1} parent=0 // pred_check
    _
  $region27: #{run.1} parent=0 // pred_check_branch
    %84 = sbr.rel (0) target = $region29
  $region28: #{run.1} parent=0 // pred_region
    _
  $region29: #{run.1} parent=0 // pred_fallthru
    _
  // Predicated region
  $region30: #{run.1} parent=0 // pred_check
    _
  $region31: #{run.1} parent=0 // pred_check_branch
    %86 = sbr.rel (0) target = $region33
  $region32: #{run.1} parent=0 // pred_region
    _
  $region33: #{run.1} parent=0 // pred_fallthru
    _
  // Predicated region
  $region34: #{run.1} parent=0 // pred_check
    _
  $region35: #{run.1} parent=0 // pred_check_branch
    %88 = sbr.rel (0) target = $region37
  $region36: #{run.1} parent=0 // pred_region
    _
  $region37: #{run.1} parent=0 // pred_fallthru
    _
  // Predicated region
  $region38: #{run.1} parent=0 // pred_check
    _
  $region39: #{run.1} parent=0 // pred_check_branch
    %90 = sbr.rel (0) target = $region41
  $region40: #{run.1} parent=0 // pred_region
    _
  $region41: #{run.1} parent=0 // pred_fallthru
    _
  // Predicated region
  $region42: #{run.1} parent=0 // pred_check
    _
  $region43: #{run.1} parent=0 // pred_check_branch
    %92 = sbr.rel (0) target = $region45
  $region44: #{run.1} parent=0 // pred_region
    _
  $region45: #{run.1} parent=0 // pred_fallthru
    _
  // Predicated region
  $region46: #{run.1} parent=0 // pred_check
    _
  $region47: #{run.1} parent=0 // pred_check_branch
    %94 = sbr.rel (0) target = $region49
  $region48: #{run.1} parent=0 // pred_region
    _
  $region49: #{run.1} parent=0 // pred_fallthru
    _
  // Predicated region
  $region50: #{run.1} parent=0 // pred_check
    _
  $region51: #{run.1} parent=0 // pred_check_branch
    %96 = sbr.rel (0) target = $region53
  $region52: #{run.1} parent=0 // pred_region
    _
  $region53: #{run.1} parent=0 // pred_fallthru
    _
  // Predicated region
  $region54: #{run.1} parent=0 // pred_check
    _
  $region55: #{run.1} parent=0 // pred_check_branch
    %98 = sbr.rel (0) target = $region57
  $region56: #{run.1} parent=0 // pred_region
    _
  $region57: #{run.1} parent=0 // pred_fallthru
    _
  // Predicated region
  $region58: #{run.1} parent=0 // pred_check
    _
  $region59: #{run.1} parent=0 // pred_check_branch
    %100 = sbr.rel (0) target = $region61
  $region60: #{run.1} parent=0 // pred_region
    _
  $region61: #{run.1} parent=0 // pred_fallthru
    _
  // Predicated region
  $region62: #{run.1} parent=0 // pred_check
    _
  $region63: #{run.1} parent=0 // pred_check_branch
    %102 = sbr.rel (0) target = $region65
  $region64: #{run.1} parent=0 // pred_region
    _
  $region65: #{run.1} parent=0 // pred_fallthru
    _
  // Predicated region
  $region66: #{run.1} parent=0 // pred_check
    _
  $region67: #{run.1} parent=0 // pred_check_branch
    %104 = sbr.rel (0) target = $region69
  $region68: #{run.1} parent=0 // pred_region
    _
  $region69: #{run.1} parent=0 // pred_fallthru
    _
  // Predicated region
  $region70: #{run.1} parent=0 // pred_check
    _
  $region71: #{run.1} parent=0 // pred_check_branch
    %106 = sbr.rel (0) target = $region73
  $region72: #{run.1} parent=0 // pred_region
    _
  $region73: #{run.1} parent=0 // pred_fallthru
    _
  // Predicated region
  $region74: #{run.1} parent=0 // pred_check
    _
  $region75: #{run.1} parent=0 // pred_check_branch
    %108 = sbr.rel (0) target = $region77
  $region76: #{run.1} parent=0 // pred_region
    _
  $region77: #{run.1} parent=0 // pred_fallthru
    _
  // Predicated region
  $region78: #{run.1} parent=0 // pred_check
    _
  $region79: #{run.1} parent=0 // pred_check_branch
    %110 = sbr.rel (0) target = $region81
  $region80: #{run.1} parent=0 // pred_region
    _
  $region81: #{run.1} parent=0 // pred_fallthru
    _
  // Predicated region
  $region82: #{run.1} parent=0 // pred_check
    _
  $region83: #{run.1} parent=0 // pred_check_branch
    %112 = sbr.rel (0) target = $region85
  $region84: #{run.1} parent=0 // pred_region
    _
  $region85: #{run.1} parent=0 // pred_fallthru
    _
  // Predicated region
  $region86: #{run.1} parent=0 // pred_check
    _
  $region87: #{run.1} parent=0 // pred_check_branch
    %114 = sbr.rel (0) target = $region89
  $region88: #{run.1} parent=0 // pred_region
    _
  $region89: #{run.1} parent=0 // pred_fallthru
    _
  // Predicated region
  $region90: #{run.1} parent=0 // pred_check
    _
  $region91: #{run.1} parent=0 // pred_check_branch
    %116 = sbr.rel (0) target = $region93
  $region92: #{run.1} parent=0 // pred_region
    _
  $region93: #{run.1} parent=0 // pred_fallthru
    _
  // Predicated region
  $region94: #{run.1} parent=0 // pred_check
    _
  $region95: #{run.1} parent=0 // pred_check_branch
    %118 = sbr.rel (0) target = $region97
  $region96: #{run.1} parent=0 // pred_region
    _
  $region97: #{run.1} parent=0 // pred_fallthru
    _
  // Predicated region
  $region98: #{run.1} parent=0 // pred_check
    _
  $region99: #{run.1} parent=0 // pred_check_branch
    %120 = sbr.rel (0) target = $region101
  $region100: #{run.1} parent=0 // pred_region
    _
  $region101: #{run.1} parent=0 // pred_fallthru
    _
  // Predicated region
  $region102: #{run.1} parent=0 // pred_check
    _
  $region103: #{run.1} parent=0 // pred_check_branch
    %122 = sbr.rel (0) target = $region105
  $region104: #{run.1} parent=0 // pred_region
    _
  $region105: #{run.1} parent=0 // pred_fallthru
    _
  // Predicated region
  $region106: #{run.1} parent=0 // pred_check
    _
  $region107: #{run.1} parent=0 // pred_check_branch
    %124 = sbr.rel (0) target = $region109
  $region108: #{run.1} parent=0 // pred_region
    _
  $region109: #{run.1} parent=0 // pred_fallthru
    _
  // Predicated region
  $region110: #{run.1} parent=0 // pred_check
    _
  $region111: #{run.1} parent=0 // pred_check_branch
    %126 = sbr.rel (0) target = $region113
  $region112: #{run.1} parent=0 // pred_region
    _
  $region113: #{run.1} parent=0 // pred_fallthru
    _
  // Predicated region
  $region114: #{run.1} parent=0 // pred_check
    _
  $region115: #{run.1} parent=0 // pred_check_branch
    %128 = sbr.rel (0) target = $region117
  $region116: #{run.1} parent=0 // pred_region
    _
  $region117: #{run.1} parent=0 // pred_fallthru
    _
  %v129 = vld [vmem:[%s3] sm:$0xff]
  %v130 = vld [vmem:[%s5] sm:$0xff]
  %v131 = vlaneseq
  %v132 = vand.u32 %v131, 127
  %vm133 = vcmp.ge.s32.totalorder %v132, 64
  %vm134 = vcmp.lt.s32.totalorder %v132, 96
  %vm135 = vmand %vm133, %vm134
  %v136 = vsel %vm135, 1.0, 0.5
  %v137 = vld [vmem:[%s11] sm:$0xff]
  %v138 = vld [vmem:[%s11 + $0x8] sm:$0xff]
  %v139 = vld [vmem:[%s11 + $0x10] sm:$0xff]
  %v140 = vld [vmem:[%s11 + $0x18] sm:$0xff]
  %v141 = vld [vmem:[%s15] sm:$0xff]
  %v142 = vld [vmem:[%s15 + $0x8] sm:$0xff]
  %v143 = vld [vmem:[%s15 + $0x10] sm:$0xff]
  %v144 = vld [vmem:[%s15 + $0x18] sm:$0xff]
  %v145 = vld [vmem:[%s17] sm:$0x1]
  %v146 = vld [vmem:[%s19] sm:$0x1]
  %v147 = vld [vmem:[#allocation2] sm:$0x1]
  %v148 = vld [vmem:[%s23] sm:$0xff]
  %v149 = vld [vmem:[%s23 + $0x8] sm:$0xff]
  %v150 = vld [vmem:[%s23 + $0x10] sm:$0xff]
  %v151 = vld [vmem:[%s23 + $0x18] sm:$0xff]
  %v152 = vld [vmem:[%s25] sm:$0x1]
  %v153 = vld [vmem:[%s27] sm:$0xff]
  %v154 = vld [vmem:[%s27 + $0x8] sm:$0xff]
  %v155 = vld [vmem:[%s27 + $0x10] sm:$0xff]
  %v156 = vld [vmem:[%s27 + $0x18] sm:$0xff]
  %v157 = vld [vmem:[%s29] sm:$0x1]
  %v158 = vld [vmem:[%s1] sm:$0xff]
  %v159 = vld [vmem:[%s7] sm:$0xff]
  %v160 = vld [vmem:[%s7 + $0x8] sm:$0xff]
  %v161 = vld [vmem:[%s7 + $0x10] sm:$0xff]
  %v162 = vld [vmem:[%s7 + $0x18] sm:$0xff]
  %v163 = vld [vmem:[%s7 + $0x20] sm:$0xff]
  %v164 = vld [vmem:[%s7 + $0x28] sm:$0xff]
  %v165 = vld [vmem:[%s7 + $0x30] sm:$0xff]
  %v166 = vld [vmem:[%s7 + $0x38] sm:$0xff]
  %v167 = vld [vmem:[%s7 + $0x40] sm:$0xff]
  %v168 = vld [vmem:[%s7 + $0x48] sm:$0xff]
  %v169 = vld [vmem:[%s7 + $0x50] sm:$0xff]
  %v170 = vld [vmem:[%s7 + $0x58] sm:$0xff]
  %v171 = vld [vmem:[%s7 + $0x60] sm:$0xff]
  %v172 = vld [vmem:[%s7 + $0x68] sm:$0xff]
  %v173 = vld [vmem:[%s7 + $0x70] sm:$0xff]
  %v174 = vld [vmem:[%s7 + $0x78] sm:$0xff]
  %v175 = vld [vmem:[%s9] sm:$0xff]
  %v176 = vld [vmem:[%s9 + $0x8] sm:$0xff]
  %v177 = vld [vmem:[%s9 + $0x10] sm:$0xff]
  %v178 = vld [vmem:[%s9 + $0x18] sm:$0xff]
  %v179 = vld [vmem:[%s13] sm:$0x1]
  %v181 = vlaneseq
  %v182 = vshrl.u32 %v181, 7
  %v183 = vsub.s32 0, %v182
  %v184 = vrot.slane %v179, %v183
  %vm186 = vcmask 261120
  %v188 = vsel %vm186, %v159, 0
  %v191 = vsel %vm186, %v160, 0
  %v194 = vsel %vm186, %v161, 0
  %v197 = vsel %vm186, %v162, 0
  %v200 = vsel %vm186, %v163, 0
  %v203 = vsel %vm186, %v164, 0
  %v206 = vsel %vm186, %v165, 0
  %v209 = vsel %vm186, %v166, 0
  %v212 = vsel %vm186, %v167, 0
  %v215 = vsel %vm186, %v168, 0
  %v218 = vsel %vm186, %v169, 0
  %v221 = vsel %vm186, %v170, 0
  %v224 = vsel %vm186, %v171, 0
  %v227 = vsel %vm186, %v172, 0
  %v230 = vsel %vm186, %v173, 0
  %v233 = vsel %vm186, %v174, 0
  %235 = vmatprep.subr.mxu0 0.0
  %236 = vmatpush1.msra.mxu0 0.0
  %237 = vmatprep.subr.mxu0 0.0
  %238 = vmatpush1.msra.mxu0 0.0
  %239 = vmatprep.subr.mxu0 0.0
  %240 = vmatpush1.msra.mxu0 0.0
  %241 = vmatprep.subr.mxu0 0.0
  %242 = vmatpush1.msra.mxu0 0.0
  %243 = vmatprep.subr.mxu0 0.0
  %244 = vmatpush1.msra.mxu0 0.0
  %245 = vmatprep.subr.mxu0 0.0
  %246 = vmatpush1.msra.mxu0 0.0
  %247 = vmatprep.subr.mxu0 0.0
  %248 = vmatpush1.msra.mxu0 0.0
  %249 = vmatprep.subr.mxu0 0.0
  %250 = vmatpush1.msra.mxu0 0.0
  %251 = vmatprep.subr.mxu0 0.0
  %252 = vmatpush1.msra.mxu0 0.0
  %253 = vmatprep.subr.mxu0 0.0
  %254 = vmatpush1.msra.mxu0 0.0
  %255 = vmatprep.subr.mxu0 0.0
  %256 = vmatpush1.msra.mxu0 0.0
  %257 = vmatprep.subr.mxu0 0.0
  %258 = vmatpush1.msra.mxu0 0.0
  %259 = vmatprep.subr.mxu0 0.0
  %260 = vmatpush1.msra.mxu0 %v178
  %261 = vmatprep.subr.mxu0 0.0
  %262 = vmatpush1.msra.mxu0 %v177
  %263 = vmatprep.subr.mxu0 0.0
  %264 = vmatpush1.msra.mxu0 %v176
  %265 = vmatprep.subr.mxu0 0.0
  %266 = vmatpush1.msra.mxu0 %v175
  %267 = vmatprep.subr.mxu0 0.0
  %268 = vmatpush2.msra.mxu0 0.0
  %269 = vmatprep.subr.mxu0 0.0
  %270 = vmatpush2.msra.mxu0 0.0
  %271 = vmatprep.subr.mxu0 0.0
  %272 = vmatpush2.msra.mxu0 0.0
  %273 = vmatprep.subr.mxu0 0.0
  %274 = vmatpush2.msra.mxu0 0.0
  %275 = vmatprep.subr.mxu0 0.0
  %276 = vmatpush2.msra.mxu0 0.0
  %277 = vmatprep.subr.mxu0 0.0
  %278 = vmatpush2.msra.mxu0 0.0
  %279 = vmatprep.subr.mxu0 0.0
  %280 = vmatpush2.msra.mxu0 0.0
  %281 = vmatprep.subr.mxu0 0.0
  %282 = vmatpush2.msra.mxu0 0.0
  %283 = vmatprep.subr.mxu0 0.0
  %284 = vmatpush2.msra.mxu0 0.0
  %285 = vmatprep.subr.mxu0 0.0
  %286 = vmatpush2.msra.mxu0 0.0
  %287 = vmatprep.subr.mxu0 0.0
  %288 = vmatpush2.msra.mxu0 0.0
  %289 = vmatprep.subr.mxu0 0.0
  %290 = vmatpush2.msra.mxu0 0.0
  %291 = vmatprep.subr.mxu0 0.0
  %292 = vmatpush2.msra.mxu0 0.0
  %293 = vmatprep.subr.mxu0 0.0
  %294 = vmatpush2.msra.mxu0 0.0
  %295 = vmatprep.subr.mxu0 0.0
  %296 = vmatpush2.msra.mxu0 0.0
  %297 = vmatprep.subr.mxu0 0.0
  %298 = vmatpush2.msra.mxu0 0.0
  %299 = vmatprep.mubr.f32.mxu0 0.0
  %300 = vmatmul.mubr.f32.gmra.mxu0 %v188
  %v301 = vpop.f32.mrf.mxu0
  %v302 = vadd.f32 %v184, %v301
  %v303 = vpop.f32.mrf.mxu0
  %304 = vmatprep.mubr.f32.mxu0 0.0
  %305 = vmatmul.mubr.f32.gmra.mxu0 %v191
  %v306 = vpop.f32.mrf.mxu0
  %v307 = vadd.f32 %v184, %v306
  %v308 = vpop.f32.mrf.mxu0
  %309 = vmatprep.mubr.f32.mxu0 0.0
  %310 = vmatmul.mubr.f32.gmra.mxu0 %v194
  %v311 = vpop.f32.mrf.mxu0
  %v312 = vadd.f32 %v184, %v311
  %v313 = vpop.f32.mrf.mxu0
  %314 = vmatprep.mubr.f32.mxu0 0.0
  %315 = vmatmul.mubr.f32.gmra.mxu0 %v197
  %v316 = vpop.f32.mrf.mxu0
  %v317 = vadd.f32 %v184, %v316
  %v318 = vpop.f32.mrf.mxu0
  %319 = vmatprep.mubr.f32.mxu0 0.0
  %320 = vmatmul.mubr.f32.gmra.mxu0 %v200
  %v321 = vpop.f32.mrf.mxu0
  %v322 = vadd.f32 %v184, %v321
  %v323 = vpop.f32.mrf.mxu0
  %324 = vmatprep.mubr.f32.mxu0 0.0
  %325 = vmatmul.mubr.f32.gmra.mxu0 %v203
  %v326 = vpop.f32.mrf.mxu0
  %v327 = vadd.f32 %v184, %v326
  %v328 = vpop.f32.mrf.mxu0
  %329 = vmatprep.mubr.f32.mxu0 0.0
  %330 = vmatmul.mubr.f32.gmra.mxu0 %v206
  %v331 = vpop.f32.mrf.mxu0
  %v332 = vadd.f32 %v184, %v331
  %v333 = vpop.f32.mrf.mxu0
  %334 = vmatprep.mubr.f32.mxu0 0.0
  %335 = vmatmul.mubr.f32.gmra.mxu0 %v209
  %v336 = vpop.f32.mrf.mxu0
  %v337 = vadd.f32 %v184, %v336
  %v338 = vpop.f32.mrf.mxu0
  %339 = vmatprep.mubr.f32.mxu0 0.0
  %340 = vmatmul.mubr.f32.gmra.mxu0 %v212
  %v341 = vpop.f32.mrf.mxu0
  %v342 = vadd.f32 %v184, %v341
  %v343 = vpop.f32.mrf.mxu0
  %344 = vmatprep.mubr.f32.mxu0 0.0
  %345 = vmatmul.mubr.f32.gmra.mxu0 %v215
  %v346 = vpop.f32.mrf.mxu0
  %v347 = vadd.f32 %v184, %v346
  %v348 = vpop.f32.mrf.mxu0
  %349 = vmatprep.mubr.f32.mxu0 0.0
  %350 = vmatmul.mubr.f32.gmra.mxu0 %v218
  %v351 = vpop.f32.mrf.mxu0
  %v352 = vadd.f32 %v184, %v351
  %v353 = vpop.f32.mrf.mxu0
  %354 = vmatprep.mubr.f32.mxu0 0.0
  %355 = vmatmul.mubr.f32.gmra.mxu0 %v221
  %v356 = vpop.f32.mrf.mxu0
  %v357 = vadd.f32 %v184, %v356
  %v358 = vpop.f32.mrf.mxu0
  %359 = vmatprep.mubr.f32.mxu0 0.0
  %360 = vmatmul.mubr.f32.gmra.mxu0 %v224
  %v361 = vpop.f32.mrf.mxu0
  %v362 = vadd.f32 %v184, %v361
  %v363 = vpop.f32.mrf.mxu0
  %364 = vmatprep.mubr.f32.mxu0 0.0
  %365 = vmatmul.mubr.f32.gmra.mxu0 %v227
  %v366 = vpop.f32.mrf.mxu0
  %v367 = vadd.f32 %v184, %v366
  %v368 = vpop.f32.mrf.mxu0
  %369 = vmatprep.mubr.f32.mxu0 0.0
  %370 = vmatmul.mubr.f32.gmra.mxu0 %v230
  %v371 = vpop.f32.mrf.mxu0
  %v372 = vadd.f32 %v184, %v371
  %v373 = vpop.f32.mrf.mxu0
  %374 = vmatprep.mubr.f32.mxu0 0.0
  %375 = vmatmul.mubr.f32.gmra.mxu0 %v233
  %v376 = vpop.f32.mrf.mxu0
  %v377 = vadd.f32 %v184, %v376
  %v378 = vpop.f32.mrf.mxu0
  %379 = vdwg.mxu0
  %380 = vset.pattern.permute.xlu0 0
  %381 = vperm.xlu0 %380, %v158
  %v382 = vpop.permute.xlu0 %381
  %vm383 = vcmp.eq.s32.totalorder %v132, %v382
  %v384 = vsel %vm383, 1, 0
  %v385 = vcvt.s32.f32 %v384
  %386 = vset.pattern.permute.xlu0 1
  %387 = vperm.xlu0 %386, %v158
  %v388 = vpop.permute.xlu0 %387
  %vm389 = vcmp.eq.s32.totalorder %v132, %v388
  %v390 = vsel %vm389, 1, 0
  %v391 = vcvt.s32.f32 %v390
  %392 = vset.pattern.permute.xlu0 2
  %393 = vperm.xlu0 %392, %v158
  %v394 = vpop.permute.xlu0 %393
  %vm395 = vcmp.eq.s32.totalorder %v132, %v394
  %v396 = vsel %vm395, 1, 0
  %v397 = vcvt.s32.f32 %v396
  %398 = vset.pattern.permute.xlu0 3
  %399 = vperm.xlu0 %398, %v158
  %v400 = vpop.permute.xlu0 %399
  %vm401 = vcmp.eq.s32.totalorder %v132, %v400
  %v402 = vsel %vm401, 1, 0
  %v403 = vcvt.s32.f32 %v402
  %404 = vset.pattern.permute.xlu0 4
  %405 = vperm.xlu0 %404, %v158
  %v406 = vpop.permute.xlu0 %405
  %vm407 = vcmp.eq.s32.totalorder %v132, %v406
  %v408 = vsel %vm407, 1, 0
  %v409 = vcvt.s32.f32 %v408
  %410 = vset.pattern.permute.xlu0 5
  %411 = vperm.xlu0 %410, %v158
  %v412 = vpop.permute.xlu0 %411
  %vm413 = vcmp.eq.s32.totalorder %v132, %v412
  %v414 = vsel %vm413, 1, 0
  %v415 = vcvt.s32.f32 %v414
  %416 = vset.pattern.permute.xlu0 6
  %417 = vperm.xlu0 %416, %v158
  %v418 = vpop.permute.xlu0 %417
  %vm419 = vcmp.eq.s32.totalorder %v132, %v418
  %v420 = vsel %vm419, 1, 0
  %v421 = vcvt.s32.f32 %v420
  %422 = vset.pattern.permute.xlu0 7
  %423 = vperm.xlu0 %422, %v158
  %v424 = vpop.permute.xlu0 %423
  %vm425 = vcmp.eq.s32.totalorder %v132, %v424
  %v426 = vsel %vm425, 1, 0
  %v427 = vcvt.s32.f32 %v426
  %428 = vmatprep.subr.mxu0 0.0
  %429 = vmatpush1.msra.mxu0 %v377
  %430 = vmatprep.subr.mxu0 0.0
  %431 = vmatpush1.msra.mxu0 %v372
  %432 = vmatprep.subr.mxu0 0.0
  %433 = vmatpush1.msra.mxu0 %v367
  %434 = vmatprep.subr.mxu0 0.0
  %435 = vmatpush1.msra.mxu0 %v362
  %436 = vmatprep.subr.mxu0 0.0
  %437 = vmatpush1.msra.mxu0 %v357
  %438 = vmatprep.subr.mxu0 0.0
  %439 = vmatpush1.msra.mxu0 %v352
  %440 = vmatprep.subr.mxu0 0.0
  %441 = vmatpush1.msra.mxu0 %v347
  %442 = vmatprep.subr.mxu0 0.0
  %443 = vmatpush1.msra.mxu0 %v342
  %444 = vmatprep.subr.mxu0 0.0
  %445 = vmatpush1.msra.mxu0 %v337
  %446 = vmatprep.subr.mxu0 0.0
  %447 = vmatpush1.msra.mxu0 %v332
  %448 = vmatprep.subr.mxu0 0.0
  %449 = vmatpush1.msra.mxu0 %v327
  %450 = vmatprep.subr.mxu0 0.0
  %451 = vmatpush1.msra.mxu0 %v322
  %452 = vmatprep.subr.mxu0 0.0
  %453 = vmatpush1.msra.mxu0 %v317
  %454 = vmatprep.subr.mxu0 0.0
  %455 = vmatpush1.msra.mxu0 %v312
  %456 = vmatprep.subr.mxu0 0.0
  %457 = vmatpush1.msra.mxu0 %v307
  %458 = vmatprep.subr.mxu0 0.0
  %459 = vmatpush1.msra.mxu0 %v302
  %460 = vmatprep.subr.mxu0 0.0
  %461 = vmatpush2.msra.mxu0 0.0
  %462 = vmatprep.subr.mxu0 0.0
  %463 = vmatpush2.msra.mxu0 0.0
  %464 = vmatprep.subr.mxu0 0.0
  %465 = vmatpush2.msra.mxu0 0.0
  %466 = vmatprep.subr.mxu0 0.0
  %467 = vmatpush2.msra.mxu0 0.0
  %468 = vmatprep.subr.mxu0 0.0
  %469 = vmatpush2.msra.mxu0 0.0
  %470 = vmatprep.subr.mxu0 0.0
  %471 = vmatpush2.msra.mxu0 0.0
  %472 = vmatprep.subr.mxu0 0.0
  %473 = vmatpush2.msra.mxu0 0.0
  %474 = vmatprep.subr.mxu0 0.0
  %475 = vmatpush2.msra.mxu0 0.0
  %476 = vmatprep.subr.mxu0 0.0
  %477 = vmatpush2.msra.mxu0 0.0
  %478 = vmatprep.subr.mxu0 0.0
  %479 = vmatpush2.msra.mxu0 0.0
  %480 = vmatprep.subr.mxu0 0.0
  %481 = vmatpush2.msra.mxu0 0.0
  %482 = vmatprep.subr.mxu0 0.0
  %483 = vmatpush2.msra.mxu0 0.0
  %484 = vmatprep.subr.mxu0 0.0
  %485 = vmatpush2.msra.mxu0 0.0
  %486 = vmatprep.subr.mxu0 0.0
  %487 = vmatpush2.msra.mxu0 0.0
  %488 = vmatprep.subr.mxu0 0.0
  %489 = vmatpush2.msra.mxu0 0.0
  %490 = vmatprep.subr.mxu0 0.0
  %491 = vmatpush2.msra.mxu0 0.0
  %492 = vmatprep.mubr.f32.mxu0 0.0
  %493 = vmatmul.mubr.f32.gmra.mxu0 %v385
  %v494 = vpop.f32.mrf.mxu0
  %v495 = vadd.f32 0.0, %v494
  %v496 = vpop.f32.mrf.mxu0
  %497 = vmatprep.mubr.f32.mxu0 0.0
  %498 = vmatmul.mubr.f32.gmra.mxu0 %v391
  %v499 = vpop.f32.mrf.mxu0
  %v500 = vadd.f32 0.0, %v499
  %v501 = vpop.f32.mrf.mxu0
  %502 = vmatprep.mubr.f32.mxu0 0.0
  %503 = vmatmul.mubr.f32.gmra.mxu0 %v397
  %v504 = vpop.f32.mrf.mxu0
  %v505 = vadd.f32 0.0, %v504
  %v506 = vpop.f32.mrf.mxu0
  %507 = vmatprep.mubr.f32.mxu0 0.0
  %508 = vmatmul.mubr.f32.gmra.mxu0 %v403
  %v509 = vpop.f32.mrf.mxu0
  %v510 = vadd.f32 0.0, %v509
  %v511 = vpop.f32.mrf.mxu0
  %512 = vmatprep.mubr.f32.mxu0 0.0
  %513 = vmatmul.mubr.f32.gmra.mxu0 %v409
  %v514 = vpop.f32.mrf.mxu0
  %v515 = vadd.f32 0.0, %v514
  %v516 = vpop.f32.mrf.mxu0
  %517 = vmatprep.mubr.f32.mxu0 0.0
  %518 = vmatmul.mubr.f32.gmra.mxu0 %v415
  %v519 = vpop.f32.mrf.mxu0
  %v520 = vadd.f32 0.0, %v519
  %v521 = vpop.f32.mrf.mxu0
  %522 = vmatprep.mubr.f32.mxu0 0.0
  %523 = vmatmul.mubr.f32.gmra.mxu0 %v421
  %v524 = vpop.f32.mrf.mxu0
  %v525 = vadd.f32 0.0, %v524
  %v526 = vpop.f32.mrf.mxu0
  %527 = vmatprep.mubr.f32.mxu0 0.0
  %528 = vmatmul.mubr.f32.gmra.mxu0 %v427
  %v529 = vpop.f32.mrf.mxu0
  %v530 = vadd.f32 0.0, %v529
  %v531 = vpop.f32.mrf.mxu0
  %532 = vdwg.mxu0
  %v534 = vsel %vm186, 0.0, 0
  %536 = vmatprep.subr.mxu0 0.0
  %537 = vmatpush1.msra.mxu0 0.0
  %538 = vmatprep.subr.mxu0 0.0
  %539 = vmatpush1.msra.mxu0 0.0
  %540 = vmatprep.subr.mxu0 0.0
  %541 = vmatpush1.msra.mxu0 0.0
  %542 = vmatprep.subr.mxu0 0.0
  %543 = vmatpush1.msra.mxu0 0.0
  %544 = vmatprep.subr.mxu0 0.0
  %545 = vmatpush1.msra.mxu0 0.0
  %546 = vmatprep.subr.mxu0 0.0
  %547 = vmatpush1.msra.mxu0 0.0
  %548 = vmatprep.subr.mxu0 0.0
  %549 = vmatpush1.msra.mxu0 0.0
  %550 = vmatprep.subr.mxu0 0.0
  %551 = vmatpush1.msra.mxu0 0.0
  %552 = vmatprep.subr.mxu0 0.0
  %553 = vmatpush1.msra.mxu0 0.0
  %554 = vmatprep.subr.mxu0 0.0
  %555 = vmatpush1.msra.mxu0 0.0
  %556 = vmatprep.subr.mxu0 0.0
  %557 = vmatpush1.msra.mxu0 0.0
  %558 = vmatprep.subr.mxu0 0.0
  %559 = vmatpush1.msra.mxu0 0.0
  %560 = vmatprep.subr.mxu0 0.0
  %561 = vmatpush1.msra.mxu0 %v140
  %562 = vmatprep.subr.mxu0 0.0
  %563 = vmatpush1.msra.mxu0 %v139
  %564 = vmatprep.subr.mxu0 0.0
  %565 = vmatpush1.msra.mxu0 %v138
  %566 = vmatprep.subr.mxu0 0.0
  %567 = vmatpush1.msra.mxu0 %v137
  %568 = vmatprep.subr.mxu0 0.0
  %569 = vmatpush2.msra.mxu0 0.0
  %570 = vmatprep.subr.mxu0 0.0
  %571 = vmatpush2.msra.mxu0 0.0
  %572 = vmatprep.subr.mxu0 0.0
  %573 = vmatpush2.msra.mxu0 0.0
  %574 = vmatprep.subr.mxu0 0.0
  %575 = vmatpush2.msra.mxu0 0.0
  %576 = vmatprep.subr.mxu0 0.0
  %577 = vmatpush2.msra.mxu0 0.0
  %578 = vmatprep.subr.mxu0 0.0
  %579 = vmatpush2.msra.mxu0 0.0
  %580 = vmatprep.subr.mxu0 0.0
  %581 = vmatpush2.msra.mxu0 0.0
  %582 = vmatprep.subr.mxu0 0.0
  %583 = vmatpush2.msra.mxu0 0.0
  %584 = vmatprep.subr.mxu0 0.0
  %585 = vmatpush2.msra.mxu0 0.0
  %586 = vmatprep.subr.mxu0 0.0
  %587 = vmatpush2.msra.mxu0 0.0
  %588 = vmatprep.subr.mxu0 0.0
  %589 = vmatpush2.msra.mxu0 0.0
  %590 = vmatprep.subr.mxu0 0.0
  %591 = vmatpush2.msra.mxu0 0.0
  %592 = vmatprep.subr.mxu0 0.0
  %593 = vmatpush2.msra.mxu0 0.0
  %594 = vmatprep.subr.mxu0 0.0
  %595 = vmatpush2.msra.mxu0 0.0
  %596 = vmatprep.subr.mxu0 0.0
  %597 = vmatpush2.msra.mxu0 0.0
  %598 = vmatprep.subr.mxu0 0.0
  %599 = vmatpush2.msra.mxu0 0.0
  %600 = vmatprep.mubr.f32.mxu0 0.0
  %601 = vmatmul.mubr.f32.gmra.mxu0 %v534
  %v602 = vpop.f32.mrf.mxu0
  %v603 = vadd.f32 0.0, %v602
  %v604 = vpop.f32.mrf.mxu0
  %605 = vdwg.mxu0
  %v606 = vadd.f32 %v495, %v603
  %v607 = vmul.f32 %v606, %v136
  %v608 = vtanh.pop %v607
  %v609 = vmul.f32 %v608, 0.5
  %v610 = vadd.f32 %v609, 0.5
  %v611 = vsel %vm135, %v608, %v610
  %v612 = vmul.f32 %v611, 0.0
  %614 = vrot.lane.b32.xlu0 %v611, 64
  %v615 = vpop.permute.xlu0 %614
  %v617 = vmul.f32 %v611, %v615
  %619 = vrot.lane.b32.xlu0 %v617, 32
  %v620 = vpop.permute.xlu0 %619
  %v622 = vadd.f32 %v612, %v620
  %v623 = vtanh.pop %v622
  %625 = vrot.lane.b32.xlu0 %v623, 64
  %v626 = vpop.permute.xlu0 %625
  %v628 = vmul.f32 %v611, %v626
  %630 = vrot.lane.b32.xlu0 %v628, 32
  %v631 = vpop.permute.xlu0 %630
  %633 = vst.msk [vmem:[%s59] sm:$0xff] %vm186, %v631
  %v634 = vsel %vm186, %v631, 0
  %636 = vmatprep.subr.mxu0 0.0
  %637 = vmatpush1.msra.mxu0 0.0
  %638 = vmatprep.subr.mxu0 0.0
  %639 = vmatpush1.msra.mxu0 0.0
  %640 = vmatprep.subr.mxu0 0.0
  %641 = vmatpush1.msra.mxu0 0.0
  %642 = vmatprep.subr.mxu0 0.0
  %643 = vmatpush1.msra.mxu0 0.0
  %644 = vmatprep.subr.mxu0 0.0
  %645 = vmatpush1.msra.mxu0 0.0
  %646 = vmatprep.subr.mxu0 0.0
  %647 = vmatpush1.msra.mxu0 0.0
  %648 = vmatprep.subr.mxu0 0.0
  %649 = vmatpush1.msra.mxu0 0.0
  %650 = vmatprep.subr.mxu0 0.0
  %651 = vmatpush1.msra.mxu0 0.0
  %652 = vmatprep.subr.mxu0 0.0
  %653 = vmatpush1.msra.mxu0 0.0
  %654 = vmatprep.subr.mxu0 0.0
  %655 = vmatpush1.msra.mxu0 0.0
  %656 = vmatprep.subr.mxu0 0.0
  %657 = vmatpush1.msra.mxu0 0.0
  %658 = vmatprep.subr.mxu0 0.0
  %659 = vmatpush1.msra.mxu0 0.0
  %660 = vmatprep.subr.mxu0 0.0
  %661 = vmatpush1.msra.mxu0 %v140
  %662 = vmatprep.subr.mxu0 0.0
  %663 = vmatpush1.msra.mxu0 %v139
  %664 = vmatprep.subr.mxu0 0.0
  %665 = vmatpush1.msra.mxu0 %v138
  %666 = vmatprep.subr.mxu0 0.0
  %667 = vmatpush1.msra.mxu0 %v137
  %668 = vmatprep.subr.mxu0 0.0
  %669 = vmatpush2.msra.mxu0 0.0
  %670 = vmatprep.subr.mxu0 0.0
  %671 = vmatpush2.msra.mxu0 0.0
  %672 = vmatprep.subr.mxu0 0.0
  %673 = vmatpush2.msra.mxu0 0.0
  %674 = vmatprep.subr.mxu0 0.0
  %675 = vmatpush2.msra.mxu0 0.0
  %676 = vmatprep.subr.mxu0 0.0
  %677 = vmatpush2.msra.mxu0 0.0
  %678 = vmatprep.subr.mxu0 0.0
  %679 = vmatpush2.msra.mxu0 0.0
  %680 = vmatprep.subr.mxu0 0.0
  %681 = vmatpush2.msra.mxu0 0.0
  %682 = vmatprep.subr.mxu0 0.0
  %683 = vmatpush2.msra.mxu0 0.0
  %684 = vmatprep.subr.mxu0 0.0
  %685 = vmatpush2.msra.mxu0 0.0
  %686 = vmatprep.subr.mxu0 0.0
  %687 = vmatpush2.msra.mxu0 0.0
  %688 = vmatprep.subr.mxu0 0.0
  %689 = vmatpush2.msra.mxu0 0.0
  %690 = vmatprep.subr.mxu0 0.0
  %691 = vmatpush2.msra.mxu0 0.0
  %692 = vmatprep.subr.mxu0 0.0
  %693 = vmatpush2.msra.mxu0 0.0
  %694 = vmatprep.subr.mxu0 0.0
  %695 = vmatpush2.msra.mxu0 0.0
  %696 = vmatprep.subr.mxu0 0.0
  %697 = vmatpush2.msra.mxu0 0.0
  %698 = vmatprep.subr.mxu0 0.0
  %699 = vmatpush2.msra.mxu0 0.0
  %700 = vmatprep.mubr.f32.mxu0 0.0
  %701 = vmatmul.mubr.f32.gmra.mxu0 %v634
  %v702 = vpop.f32.mrf.mxu0
  %v703 = vadd.f32 0.0, %v702
  %v704 = vpop.f32.mrf.mxu0
  %705 = vdwg.mxu0
  %v706 = vadd.f32 %v500, %v703
  %v707 = vmul.f32 %v706, %v136
  %v708 = vtanh.pop %v707
  %v709 = vmul.f32 %v708, 0.5
  %v710 = vadd.f32 %v709, 0.5
  %v711 = vsel %vm135, %v708, %v710
  %v712 = vmul.f32 %v711, %v622
  %714 = vrot.lane.b32.xlu0 %v711, 64
  %v715 = vpop.permute.xlu0 %714
  %v717 = vmul.f32 %v711, %v715
  %719 = vrot.lane.b32.xlu0 %v717, 32
  %v720 = vpop.permute.xlu0 %719
  %v722 = vadd.f32 %v712, %v720
  %v723 = vtanh.pop %v722
  %725 = vrot.lane.b32.xlu0 %v723, 64
  %v726 = vpop.permute.xlu0 %725
  %v728 = vmul.f32 %v711, %v726
  %730 = vrot.lane.b32.xlu0 %v728, 64
  %v731 = vpop.permute.xlu0 %730
  %vm733 = vcmask 523520
  %734 = vst.msk [vmem:[%s59] sm:$0xff] %vm733, %v731
  %735 = vrot.lane.b32.xlu0 %v728, 32
  %v736 = vpop.permute.xlu0 %735
  %v737 = vsel %vm186, %v736, 0
  %739 = vmatprep.subr.mxu0 0.0
  %740 = vmatpush1.msra.mxu0 0.0
  %741 = vmatprep.subr.mxu0 0.0
  %742 = vmatpush1.msra.mxu0 0.0
  %743 = vmatprep.subr.mxu0 0.0
  %744 = vmatpush1.msra.mxu0 0.0
  %745 = vmatprep.subr.mxu0 0.0
  %746 = vmatpush1.msra.mxu0 0.0
  %747 = vmatprep.subr.mxu0 0.0
  %748 = vmatpush1.msra.mxu0 0.0
  %749 = vmatprep.subr.mxu0 0.0
  %750 = vmatpush1.msra.mxu0 0.0
  %751 = vmatprep.subr.mxu0 0.0
  %752 = vmatpush1.msra.mxu0 0.0
  %753 = vmatprep.subr.mxu0 0.0
  %754 = vmatpush1.msra.mxu0 0.0
  %755 = vmatprep.subr.mxu0 0.0
  %756 = vmatpush1.msra.mxu0 0.0
  %757 = vmatprep.subr.mxu0 0.0
  %758 = vmatpush1.msra.mxu0 0.0
  %759 = vmatprep.subr.mxu0 0.0
  %760 = vmatpush1.msra.mxu0 0.0
  %761 = vmatprep.subr.mxu0 0.0
  %762 = vmatpush1.msra.mxu0 0.0
  %763 = vmatprep.subr.mxu0 0.0
  %764 = vmatpush1.msra.mxu0 %v140
  %765 = vmatprep.subr.mxu0 0.0
  %766 = vmatpush1.msra.mxu0 %v139
  %767 = vmatprep.subr.mxu0 0.0
  %768 = vmatpush1.msra.mxu0 %v138
  %769 = vmatprep.subr.mxu0 0.0
  %770 = vmatpush1.msra.mxu0 %v137
  %771 = vmatprep.subr.mxu0 0.0
  %772 = vmatpush2.msra.mxu0 0.0
  %773 = vmatprep.subr.mxu0 0.0
  %774 = vmatpush2.msra.mxu0 0.0
  %775 = vmatprep.subr.mxu0 0.0
  %776 = vmatpush2.msra.mxu0 0.0
  %777 = vmatprep.subr.mxu0 0.0
  %778 = vmatpush2.msra.mxu0 0.0
  %779 = vmatprep.subr.mxu0 0.0
  %780 = vmatpush2.msra.mxu0 0.0
  %781 = vmatprep.subr.mxu0 0.0
  %782 = vmatpush2.msra.mxu0 0.0
  %783 = vmatprep.subr.mxu0 0.0
  %784 = vmatpush2.msra.mxu0 0.0
  %785 = vmatprep.subr.mxu0 0.0
  %786 = vmatpush2.msra.mxu0 0.0
  %787 = vmatprep.subr.mxu0 0.0
  %788 = vmatpush2.msra.mxu0 0.0
  %789 = vmatprep.subr.mxu0 0.0
  %790 = vmatpush2.msra.mxu0 0.0
  %791 = vmatprep.subr.mxu0 0.0
  %792 = vmatpush2.msra.mxu0 0.0
  %793 = vmatprep.subr.mxu0 0.0
  %794 = vmatpush2.msra.mxu0 0.0
  %795 = vmatprep.subr.mxu0 0.0
  %796 = vmatpush2.msra.mxu0 0.0
  %797 = vmatprep.subr.mxu0 0.0
  %798 = vmatpush2.msra.mxu0 0.0
  %799 = vmatprep.subr.mxu0 0.0
  %800 = vmatpush2.msra.mxu0 0.0
  %801 = vmatprep.subr.mxu0 0.0
  %802 = vmatpush2.msra.mxu0 0.0
  %803 = vmatprep.mubr.f32.mxu0 0.0
  %804 = vmatmul.mubr.f32.gmra.mxu0 %v737
  %v805 = vpop.f32.mrf.mxu0
  %v806 = vadd.f32 0.0, %v805
  %v807 = vpop.f32.mrf.mxu0
  %808 = vdwg.mxu0
  %v809 = vadd.f32 %v505, %v806
  %v810 = vmul.f32 %v809, %v136
  %v811 = vtanh.pop %v810
  %v812 = vmul.f32 %v811, 0.5
  %v813 = vadd.f32 %v812, 0.5
  %v814 = vsel %vm135, %v811, %v813
  %v815 = vmul.f32 %v814, %v722
  %817 = vrot.lane.b32.xlu0 %v814, 64
  %v818 = vpop.permute.xlu0 %817
  %v820 = vmul.f32 %v814, %v818
  %822 = vrot.lane.b32.xlu0 %v820, 32
  %v823 = vpop.permute.xlu0 %822
  %v825 = vadd.f32 %v815, %v823
  %v826 = vtanh.pop %v825
  %828 = vrot.lane.b32.xlu0 %v826, 64
  %v829 = vpop.permute.xlu0 %828
  %v831 = vmul.f32 %v814, %v829
  %833 = vrot.lane.b32.xlu0 %v831, 96
  %v834 = vpop.permute.xlu0 %833
  %vm836 = vcmask 785920
  %837 = vst.msk [vmem:[%s59] sm:$0xff] %vm836, %v834
  %838 = vrot.lane.b32.xlu0 %v831, 32
  %v839 = vpop.permute.xlu0 %838
  %v840 = vsel %vm186, %v839, 0
  %842 = vmatprep.subr.mxu0 0.0
  %843 = vmatpush1.msra.mxu0 0.0
  %844 = vmatprep.subr.mxu0 0.0
  %845 = vmatpush1.msra.mxu0 0.0
  %846 = vmatprep.subr.mxu0 0.0
  %847 = vmatpush1.msra.mxu0 0.0
  %848 = vmatprep.subr.mxu0 0.0
  %849 = vmatpush1.msra.mxu0 0.0
  %850 = vmatprep.subr.mxu0 0.0
  %851 = vmatpush1.msra.mxu0 0.0
  %852 = vmatprep.subr.mxu0 0.0
  %853 = vmatpush1.msra.mxu0 0.0
  %854 = vmatprep.subr.mxu0 0.0
  %855 = vmatpush1.msra.mxu0 0.0
  %856 = vmatprep.subr.mxu0 0.0
  %857 = vmatpush1.msra.mxu0 0.0
  %858 = vmatprep.subr.mxu0 0.0
  %859 = vmatpush1.msra.mxu0 0.0
  %860 = vmatprep.subr.mxu0 0.0
  %861 = vmatpush1.msra.mxu0 0.0
  %862 = vmatprep.subr.mxu0 0.0
  %863 = vmatpush1.msra.mxu0 0.0
  %864 = vmatprep.subr.mxu0 0.0
  %865 = vmatpush1.msra.mxu0 0.0
  %866 = vmatprep.subr.mxu0 0.0
  %867 = vmatpush1.msra.mxu0 %v140
  %868 = vmatprep.subr.mxu0 0.0
  %869 = vmatpush1.msra.mxu0 %v139
  %870 = vmatprep.subr.mxu0 0.0
  %871 = vmatpush1.msra.mxu0 %v138
  %872 = vmatprep.subr.mxu0 0.0
  %873 = vmatpush1.msra.mxu0 %v137
  %874 = vmatprep.subr.mxu0 0.0
  %875 = vmatpush2.msra.mxu0 0.0
  %876 = vmatprep.subr.mxu0 0.0
  %877 = vmatpush2.msra.mxu0 0.0
  %878 = vmatprep.subr.mxu0 0.0
  %879 = vmatpush2.msra.mxu0 0.0
  %880 = vmatprep.subr.mxu0 0.0
  %881 = vmatpush2.msra.mxu0 0.0
  %882 = vmatprep.subr.mxu0 0.0
  %883 = vmatpush2.msra.mxu0 0.0
  %884 = vmatprep.subr.mxu0 0.0
  %885 = vmatpush2.msra.mxu0 0.0
  %886 = vmatprep.subr.mxu0 0.0
  %887 = vmatpush2.msra.mxu0 0.0
  %888 = vmatprep.subr.mxu0 0.0
  %889 = vmatpush2.msra.mxu0 0.0
  %890 = vmatprep.subr.mxu0 0.0
  %891 = vmatpush2.msra.mxu0 0.0
  %892 = vmatprep.subr.mxu0 0.0
  %893 = vmatpush2.msra.mxu0 0.0
  %894 = vmatprep.subr.mxu0 0.0
  %895 = vmatpush2.msra.mxu0 0.0
  %896 = vmatprep.subr.mxu0 0.0
  %897 = vmatpush2.msra.mxu0 0.0
  %898 = vmatprep.subr.mxu0 0.0
  %899 = vmatpush2.msra.mxu0 0.0
  %900 = vmatprep.subr.mxu0 0.0
  %901 = vmatpush2.msra.mxu0 0.0
  %902 = vmatprep.subr.mxu0 0.0
  %903 = vmatpush2.msra.mxu0 0.0
  %904 = vmatprep.subr.mxu0 0.0
  %905 = vmatpush2.msra.mxu0 0.0
  %906 = vmatprep.mubr.f32.mxu0 0.0
  %907 = vmatmul.mubr.f32.gmra.mxu0 %v840
  %v908 = vpop.f32.mrf.mxu0
  %v909 = vadd.f32 0.0, %v908
  %v910 = vpop.f32.mrf.mxu0
  %911 = vdwg.mxu0
  %v912 = vadd.f32 %v510, %v909
  %v913 = vmul.f32 %v912, %v136
  %v914 = vtanh.pop %v913
  %v915 = vmul.f32 %v914, 0.5
  %v916 = vadd.f32 %v915, 0.5
  %v917 = vsel %vm135, %v914, %v916
  %v918 = vmul.f32 %v917, %v825
  %920 = vrot.lane.b32.xlu0 %v917, 64
  %v921 = vpop.permute.xlu0 %920
  %v923 = vmul.f32 %v917, %v921
  %925 = vrot.lane.b32.xlu0 %v923, 32
  %v926 = vpop.permute.xlu0 %925
  %v928 = vadd.f32 %v918, %v926
  %v929 = vtanh.pop %v928
  %931 = vrot.lane.b32.xlu0 %v929, 64
  %v932 = vpop.permute.xlu0 %931
  %v934 = vmul.f32 %v917, %v932
  %vm935 = vcmask 1048320
  %936 = vst.msk [vmem:[%s59] sm:$0xff] %vm935, %v934
  %938 = vrot.lane.b32.xlu0 %v934, 32
  %v939 = vpop.permute.xlu0 %938
  %v940 = vsel %vm186, %v939, 0
  %942 = vmatprep.subr.mxu0 0.0
  %943 = vmatpush1.msra.mxu0 0.0
  %944 = vmatprep.subr.mxu0 0.0
  %945 = vmatpush1.msra.mxu0 0.0
  %946 = vmatprep.subr.mxu0 0.0
  %947 = vmatpush1.msra.mxu0 0.0
  %948 = vmatprep.subr.mxu0 0.0
  %949 = vmatpush1.msra.mxu0 0.0
  %950 = vmatprep.subr.mxu0 0.0
  %951 = vmatpush1.msra.mxu0 0.0
  %952 = vmatprep.subr.mxu0 0.0
  %953 = vmatpush1.msra.mxu0 0.0
  %954 = vmatprep.subr.mxu0 0.0
  %955 = vmatpush1.msra.mxu0 0.0
  %956 = vmatprep.subr.mxu0 0.0
  %957 = vmatpush1.msra.mxu0 0.0
  %958 = vmatprep.subr.mxu0 0.0
  %959 = vmatpush1.msra.mxu0 0.0
  %960 = vmatprep.subr.mxu0 0.0
  %961 = vmatpush1.msra.mxu0 0.0
  %962 = vmatprep.subr.mxu0 0.0
  %963 = vmatpush1.msra.mxu0 0.0
  %964 = vmatprep.subr.mxu0 0.0
  %965 = vmatpush1.msra.mxu0 0.0
  %966 = vmatprep.subr.mxu0 0.0
  %967 = vmatpush1.msra.mxu0 %v140
  %968 = vmatprep.subr.mxu0 0.0
  %969 = vmatpush1.msra.mxu0 %v139
  %970 = vmatprep.subr.mxu0 0.0
  %971 = vmatpush1.msra.mxu0 %v138
  %972 = vmatprep.subr.mxu0 0.0
  %973 = vmatpush1.msra.mxu0 %v137
  %974 = vmatprep.subr.mxu0 0.0
  %975 = vmatpush2.msra.mxu0 0.0
  %976 = vmatprep.subr.mxu0 0.0
  %977 = vmatpush2.msra.mxu0 0.0
  %978 = vmatprep.subr.mxu0 0.0
  %979 = vmatpush2.msra.mxu0 0.0
  %980 = vmatprep.subr.mxu0 0.0
  %981 = vmatpush2.msra.mxu0 0.0
  %982 = vmatprep.subr.mxu0 0.0
  %983 = vmatpush2.msra.mxu0 0.0
  %984 = vmatprep.subr.mxu0 0.0
  %985 = vmatpush2.msra.mxu0 0.0
  %986 = vmatprep.subr.mxu0 0.0
  %987 = vmatpush2.msra.mxu0 0.0
  %988 = vmatprep.subr.mxu0 0.0
  %989 = vmatpush2.msra.mxu0 0.0
  %990 = vmatprep.subr.mxu0 0.0
  %991 = vmatpush2.msra.mxu0 0.0
  %992 = vmatprep.subr.mxu0 0.0
  %993 = vmatpush2.msra.mxu0 0.0
  %994 = vmatprep.subr.mxu0 0.0
  %995 = vmatpush2.msra.mxu0 0.0
  %996 = vmatprep.subr.mxu0 0.0
  %997 = vmatpush2.msra.mxu0 0.0
  %998 = vmatprep.subr.mxu0 0.0
  %999 = vmatpush2.msra.mxu0 0.0
  %1000 = vmatprep.subr.mxu0 0.0
  %1001 = vmatpush2.msra.mxu0 0.0
  %1002 = vmatprep.subr.mxu0 0.0
  %1003 = vmatpush2.msra.mxu0 0.0
  %1004 = vmatprep.subr.mxu0 0.0
  %1005 = vmatpush2.msra.mxu0 0.0
  %1006 = vmatprep.mubr.f32.mxu0 0.0
  %1007 = vmatmul.mubr.f32.gmra.mxu0 %v940
  %v1008 = vpop.f32.mrf.mxu0
  %v1009 = vadd.f32 0.0, %v1008
  %v1010 = vpop.f32.mrf.mxu0
  %1011 = vdwg.mxu0
  %v1012 = vadd.f32 %v515, %v1009
  %v1013 = vmul.f32 %v1012, %v136
  %v1014 = vtanh.pop %v1013
  %v1015 = vmul.f32 %v1014, 0.5
  %v1016 = vadd.f32 %v1015, 0.5
  %v1017 = vsel %vm135, %v1014, %v1016
  %v1018 = vmul.f32 %v1017, %v928
  %1020 = vrot.lane.b32.xlu0 %v1017, 64
  %v1021 = vpop.permute.xlu0 %1020
  %v1023 = vmul.f32 %v1017, %v1021
  %1025 = vrot.lane.b32.xlu0 %v1023, 32
  %v1026 = vpop.permute.xlu0 %1025
  %v1028 = vadd.f32 %v1018, %v1026
  %v1029 = vtanh.pop %v1028
  %1031 = vrot.lane.b32.xlu0 %v1029, 64
  %v1032 = vpop.permute.xlu0 %1031
  %v1034 = vmul.f32 %v1017, %v1032
  %1036 = vrot.lane.b32.xlu0 %v1034, 32
  %v1037 = vpop.permute.xlu0 %1036
  %1039 = vst.msk [vmem:[%s59 + $0x8] sm:$0xff] %vm186, %v1037
  %v1040 = vsel %vm186, %v1037, 0
  %1042 = vmatprep.subr.mxu0 0.0
  %1043 = vmatpush1.msra.mxu0 0.0
  %1044 = vmatprep.subr.mxu0 0.0
  %1045 = vmatpush1.msra.mxu0 0.0
  %1046 = vmatprep.subr.mxu0 0.0
  %1047 = vmatpush1.msra.mxu0 0.0
  %1048 = vmatprep.subr.mxu0 0.0
  %1049 = vmatpush1.msra.mxu0 0.0
  %1050 = vmatprep.subr.mxu0 0.0
  %1051 = vmatpush1.msra.mxu0 0.0
  %1052 = vmatprep.subr.mxu0 0.0
  %1053 = vmatpush1.msra.mxu0 0.0
  %1054 = vmatprep.subr.mxu0 0.0
  %1055 = vmatpush1.msra.mxu0 0.0
  %1056 = vmatprep.subr.mxu0 0.0
  %1057 = vmatpush1.msra.mxu0 0.0
  %1058 = vmatprep.subr.mxu0 0.0
  %1059 = vmatpush1.msra.mxu0 0.0
  %1060 = vmatprep.subr.mxu0 0.0
  %1061 = vmatpush1.msra.mxu0 0.0
  %1062 = vmatprep.subr.mxu0 0.0
  %1063 = vmatpush1.msra.mxu0 0.0
  %1064 = vmatprep.subr.mxu0 0.0
  %1065 = vmatpush1.msra.mxu0 0.0
  %1066 = vmatprep.subr.mxu0 0.0
  %1067 = vmatpush1.msra.mxu0 %v140
  %1068 = vmatprep.subr.mxu0 0.0
  %1069 = vmatpush1.msra.mxu0 %v139
  %1070 = vmatprep.subr.mxu0 0.0
  %1071 = vmatpush1.msra.mxu0 %v138
  %1072 = vmatprep.subr.mxu0 0.0
  %1073 = vmatpush1.msra.mxu0 %v137
  %1074 = vmatprep.subr.mxu0 0.0
  %1075 = vmatpush2.msra.mxu0 0.0
  %1076 = vmatprep.subr.mxu0 0.0
  %1077 = vmatpush2.msra.mxu0 0.0
  %1078 = vmatprep.subr.mxu0 0.0
  %1079 = vmatpush2.msra.mxu0 0.0
  %1080 = vmatprep.subr.mxu0 0.0
  %1081 = vmatpush2.msra.mxu0 0.0
  %1082 = vmatprep.subr.mxu0 0.0
  %1083 = vmatpush2.msra.mxu0 0.0
  %1084 = vmatprep.subr.mxu0 0.0
  %1085 = vmatpush2.msra.mxu0 0.0
  %1086 = vmatprep.subr.mxu0 0.0
  %1087 = vmatpush2.msra.mxu0 0.0
  %1088 = vmatprep.subr.mxu0 0.0
  %1089 = vmatpush2.msra.mxu0 0.0
  %1090 = vmatprep.subr.mxu0 0.0
  %1091 = vmatpush2.msra.mxu0 0.0
  %1092 = vmatprep.subr.mxu0 0.0
  %1093 = vmatpush2.msra.mxu0 0.0
  %1094 = vmatprep.subr.mxu0 0.0
  %1095 = vmatpush2.msra.mxu0 0.0
  %1096 = vmatprep.subr.mxu0 0.0
  %1097 = vmatpush2.msra.mxu0 0.0
  %1098 = vmatprep.subr.mxu0 0.0
  %1099 = vmatpush2.msra.mxu0 0.0
  %1100 = vmatprep.subr.mxu0 0.0
  %1101 = vmatpush2.msra.mxu0 0.0
  %1102 = vmatprep.subr.mxu0 0.0
  %1103 = vmatpush2.msra.mxu0 0.0
  %1104 = vmatprep.subr.mxu0 0.0
  %1105 = vmatpush2.msra.mxu0 0.0
  %1106 = vmatprep.mubr.f32.mxu0 0.0
  %1107 = vmatmul.mubr.f32.gmra.mxu0 %v1040
  %v1108 = vpop.f32.mrf.mxu0
  %v1109 = vadd.f32 0.0, %v1108
  %v1110 = vpop.f32.mrf.mxu0
  %1111 = vdwg.mxu0
  %v1112 = vadd.f32 %v520, %v1109
  %v1113 = vmul.f32 %v1112, %v136
  %v1114 = vtanh.pop %v1113
  %v1115 = vmul.f32 %v1114, 0.5
  %v1116 = vadd.f32 %v1115, 0.5
  %v1117 = vsel %vm135, %v1114, %v1116
  %v1118 = vmul.f32 %v1117, %v1028
  %1120 = vrot.lane.b32.xlu0 %v1117, 64
  %v1121 = vpop.permute.xlu0 %1120
  %v1123 = vmul.f32 %v1117, %v1121
  %1125 = vrot.lane.b32.xlu0 %v1123, 32
  %v1126 = vpop.permute.xlu0 %1125
  %v1128 = vadd.f32 %v1118, %v1126
  %v1129 = vtanh.pop %v1128
  %1131 = vrot.lane.b32.xlu0 %v1129, 64
  %v1132 = vpop.permute.xlu0 %1131
  %v1134 = vmul.f32 %v1117, %v1132
  %1136 = vrot.lane.b32.xlu0 %v1134, 64
  %v1137 = vpop.permute.xlu0 %1136
  %1139 = vst.msk [vmem:[%s59 + $0x8] sm:$0xff] %vm733, %v1137
  %1140 = vrot.lane.b32.xlu0 %v1134, 32
  %v1141 = vpop.permute.xlu0 %1140
  %v1142 = vsel %vm186, %v1141, 0
  %1144 = vmatprep.subr.mxu0 0.0
  %1145 = vmatpush1.msra.mxu0 0.0
  %1146 = vmatprep.subr.mxu0 0.0
  %1147 = vmatpush1.msra.mxu0 0.0
  %1148 = vmatprep.subr.mxu0 0.0
  %1149 = vmatpush1.msra.mxu0 0.0
  %1150 = vmatprep.subr.mxu0 0.0
  %1151 = vmatpush1.msra.mxu0 0.0
  %1152 = vmatprep.subr.mxu0 0.0
  %1153 = vmatpush1.msra.mxu0 0.0
  %1154 = vmatprep.subr.mxu0 0.0
  %1155 = vmatpush1.msra.mxu0 0.0
  %1156 = vmatprep.subr.mxu0 0.0
  %1157 = vmatpush1.msra.mxu0 0.0
  %1158 = vmatprep.subr.mxu0 0.0
  %1159 = vmatpush1.msra.mxu0 0.0
  %1160 = vmatprep.subr.mxu0 0.0
  %1161 = vmatpush1.msra.mxu0 0.0
  %1162 = vmatprep.subr.mxu0 0.0
  %1163 = vmatpush1.msra.mxu0 0.0
  %1164 = vmatprep.subr.mxu0 0.0
  %1165 = vmatpush1.msra.mxu0 0.0
  %1166 = vmatprep.subr.mxu0 0.0
  %1167 = vmatpush1.msra.mxu0 0.0
  %1168 = vmatprep.subr.mxu0 0.0
  %1169 = vmatpush1.msra.mxu0 %v140
  %1170 = vmatprep.subr.mxu0 0.0
  %1171 = vmatpush1.msra.mxu0 %v139
  %1172 = vmatprep.subr.mxu0 0.0
  %1173 = vmatpush1.msra.mxu0 %v138
  %1174 = vmatprep.subr.mxu0 0.0
  %1175 = vmatpush1.msra.mxu0 %v137
  %1176 = vmatprep.subr.mxu0 0.0
  %1177 = vmatpush2.msra.mxu0 0.0
  %1178 = vmatprep.subr.mxu0 0.0
  %1179 = vmatpush2.msra.mxu0 0.0
  %1180 = vmatprep.subr.mxu0 0.0
  %1181 = vmatpush2.msra.mxu0 0.0
  %1182 = vmatprep.subr.mxu0 0.0
  %1183 = vmatpush2.msra.mxu0 0.0
  %1184 = vmatprep.subr.mxu0 0.0
  %1185 = vmatpush2.msra.mxu0 0.0
  %1186 = vmatprep.subr.mxu0 0.0
  %1187 = vmatpush2.msra.mxu0 0.0
  %1188 = vmatprep.subr.mxu0 0.0
  %1189 = vmatpush2.msra.mxu0 0.0
  %1190 = vmatprep.subr.mxu0 0.0
  %1191 = vmatpush2.msra.mxu0 0.0
  %1192 = vmatprep.subr.mxu0 0.0
  %1193 = vmatpush2.msra.mxu0 0.0
  %1194 = vmatprep.subr.mxu0 0.0
  %1195 = vmatpush2.msra.mxu0 0.0
  %1196 = vmatprep.subr.mxu0 0.0
  %1197 = vmatpush2.msra.mxu0 0.0
  %1198 = vmatprep.subr.mxu0 0.0
  %1199 = vmatpush2.msra.mxu0 0.0
  %1200 = vmatprep.subr.mxu0 0.0
  %1201 = vmatpush2.msra.mxu0 0.0
  %1202 = vmatprep.subr.mxu0 0.0
  %1203 = vmatpush2.msra.mxu0 0.0
  %1204 = vmatprep.subr.mxu0 0.0
  %1205 = vmatpush2.msra.mxu0 0.0
  %1206 = vmatprep.subr.mxu0 0.0
  %1207 = vmatpush2.msra.mxu0 0.0
  %1208 = vmatprep.mubr.f32.mxu0 0.0
  %1209 = vmatmul.mubr.f32.gmra.mxu0 %v1142
  %v1210 = vpop.f32.mrf.mxu0
  %v1211 = vadd.f32 0.0, %v1210
  %v1212 = vpop.f32.mrf.mxu0
  %1213 = vdwg.mxu0
  %v1214 = vadd.f32 %v525, %v1211
  %v1215 = vmul.f32 %v1214, %v136
  %v1216 = vtanh.pop %v1215
  %v1217 = vmul.f32 %v1216, 0.5
  %v1218 = vadd.f32 %v1217, 0.5
  %v1219 = vsel %vm135, %v1216, %v1218
  %v1220 = vmul.f32 %v1219, %v1128
  %1222 = vrot.lane.b32.xlu0 %v1219, 64
  %v1223 = vpop.permute.xlu0 %1222
  %v1225 = vmul.f32 %v1219, %v1223
  %1227 = vrot.lane.b32.xlu0 %v1225, 32
  %v1228 = vpop.permute.xlu0 %1227
  %v1230 = vadd.f32 %v1220, %v1228
  %v1231 = vtanh.pop %v1230
  %1233 = vrot.lane.b32.xlu0 %v1231, 64
  %v1234 = vpop.permute.xlu0 %1233
  %v1236 = vmul.f32 %v1219, %v1234
  %1238 = vrot.lane.b32.xlu0 %v1236, 96
  %v1239 = vpop.permute.xlu0 %1238
  %1241 = vst.msk [vmem:[%s59 + $0x8] sm:$0xff] %vm836, %v1239
  %1242 = vrot.lane.b32.xlu0 %v1236, 32
  %v1243 = vpop.permute.xlu0 %1242
  %v1244 = vsel %vm186, %v1243, 0
  %1246 = vmatprep.subr.mxu0 0.0
  %1247 = vmatpush1.msra.mxu0 0.0
  %1248 = vmatprep.subr.mxu0 0.0
  %1249 = vmatpush1.msra.mxu0 0.0
  %1250 = vmatprep.subr.mxu0 0.0
  %1251 = vmatpush1.msra.mxu0 0.0
  %1252 = vmatprep.subr.mxu0 0.0
  %1253 = vmatpush1.msra.mxu0 0.0
  %1254 = vmatprep.subr.mxu0 0.0
  %1255 = vmatpush1.msra.mxu0 0.0
  %1256 = vmatprep.subr.mxu0 0.0
  %1257 = vmatpush1.msra.mxu0 0.0
  %1258 = vmatprep.subr.mxu0 0.0
  %1259 = vmatpush1.msra.mxu0 0.0
  %1260 = vmatprep.subr.mxu0 0.0
  %1261 = vmatpush1.msra.mxu0 0.0
  %1262 = vmatprep.subr.mxu0 0.0
  %1263 = vmatpush1.msra.mxu0 0.0
  %1264 = vmatprep.subr.mxu0 0.0
  %1265 = vmatpush1.msra.mxu0 0.0
  %1266 = vmatprep.subr.mxu0 0.0
  %1267 = vmatpush1.msra.mxu0 0.0
  %1268 = vmatprep.subr.mxu0 0.0
  %1269 = vmatpush1.msra.mxu0 0.0
  %1270 = vmatprep.subr.mxu0 0.0
  %1271 = vmatpush1.msra.mxu0 %v140
  %1272 = vmatprep.subr.mxu0 0.0
  %1273 = vmatpush1.msra.mxu0 %v139
  %1274 = vmatprep.subr.mxu0 0.0
  %1275 = vmatpush1.msra.mxu0 %v138
  %1276 = vmatprep.subr.mxu0 0.0
  %1277 = vmatpush1.msra.mxu0 %v137
  %1278 = vmatprep.subr.mxu0 0.0
  %1279 = vmatpush2.msra.mxu0 0.0
  %1280 = vmatprep.subr.mxu0 0.0
  %1281 = vmatpush2.msra.mxu0 0.0
  %1282 = vmatprep.subr.mxu0 0.0
  %1283 = vmatpush2.msra.mxu0 0.0
  %1284 = vmatprep.subr.mxu0 0.0
  %1285 = vmatpush2.msra.mxu0 0.0
  %1286 = vmatprep.subr.mxu0 0.0
  %1287 = vmatpush2.msra.mxu0 0.0
  %1288 = vmatprep.subr.mxu0 0.0
  %1289 = vmatpush2.msra.mxu0 0.0
  %1290 = vmatprep.subr.mxu0 0.0
  %1291 = vmatpush2.msra.mxu0 0.0
  %1292 = vmatprep.subr.mxu0 0.0
  %1293 = vmatpush2.msra.mxu0 0.0
  %1294 = vmatprep.subr.mxu0 0.0
  %1295 = vmatpush2.msra.mxu0 0.0
  %1296 = vmatprep.subr.mxu0 0.0
  %1297 = vmatpush2.msra.mxu0 0.0
  %1298 = vmatprep.subr.mxu0 0.0
  %1299 = vmatpush2.msra.mxu0 0.0
  %1300 = vmatprep.subr.mxu0 0.0
  %1301 = vmatpush2.msra.mxu0 0.0
  %1302 = vmatprep.subr.mxu0 0.0
  %1303 = vmatpush2.msra.mxu0 0.0
  %1304 = vmatprep.subr.mxu0 0.0
  %1305 = vmatpush2.msra.mxu0 0.0
  %1306 = vmatprep.subr.mxu0 0.0
  %1307 = vmatpush2.msra.mxu0 0.0
  %1308 = vmatprep.subr.mxu0 0.0
  %1309 = vmatpush2.msra.mxu0 0.0
  %1310 = vmatprep.mubr.f32.mxu0 0.0
  %1311 = vmatmul.mubr.f32.gmra.mxu0 %v1244
  %v1312 = vpop.f32.mrf.mxu0
  %v1313 = vadd.f32 0.0, %v1312
  %v1314 = vpop.f32.mrf.mxu0
  %1315 = vdwg.mxu0
  %v1316 = vadd.f32 %v530, %v1313
  %v1317 = vmul.f32 %v1316, %v136
  %v1318 = vtanh.pop %v1317
  %v1319 = vmul.f32 %v1318, 0.5
  %v1320 = vadd.f32 %v1319, 0.5
  %v1321 = vsel %vm135, %v1318, %v1320
  %v1322 = vmul.f32 %v1321, %v1230
  %1324 = vrot.lane.b32.xlu0 %v1321, 64
  %v1325 = vpop.permute.xlu0 %1324
  %v1327 = vmul.f32 %v1321, %v1325
  %1329 = vrot.lane.b32.xlu0 %v1327, 32
  %v1330 = vpop.permute.xlu0 %1329
  %v1332 = vadd.f32 %v1322, %v1330
  %v1333 = vtanh.pop %v1332
  %1335 = vrot.lane.b32.xlu0 %v1333, 64
  %v1336 = vpop.permute.xlu0 %1335
  %v1338 = vmul.f32 %v1321, %v1336
  %1339 = vst.msk [vmem:[%s59 + $0x8] sm:$0xff] %vm935, %v1338
  %v1341 = vlaneseq
  %v1342 = vshrl.u32 %v1341, 7
  %v1343 = vsub.s32 0, %v1342
  %v1344 = vrot.slane %v145, %v1343
  %1347 = vrot.lane.b32.xlu0 %v1338, 32
  %v1348 = vpop.permute.xlu0 %1347
  %v1349 = vsel %vm186, %v1348, 0
  %1351 = vmatprep.subr.mxu0 0.0
  %1352 = vmatpush1.msra.mxu0 0.0
  %1353 = vmatprep.subr.mxu0 0.0
  %1354 = vmatpush1.msra.mxu0 0.0
  %1355 = vmatprep.subr.mxu0 0.0
  %1356 = vmatpush1.msra.mxu0 0.0
  %1357 = vmatprep.subr.mxu0 0.0
  %1358 = vmatpush1.msra.mxu0 0.0
  %1359 = vmatprep.subr.mxu0 0.0
  %1360 = vmatpush1.msra.mxu0 0.0
  %1361 = vmatprep.subr.mxu0 0.0
  %1362 = vmatpush1.msra.mxu0 0.0
  %1363 = vmatprep.subr.mxu0 0.0
  %1364 = vmatpush1.msra.mxu0 0.0
  %1365 = vmatprep.subr.mxu0 0.0
  %1366 = vmatpush1.msra.mxu0 0.0
  %1367 = vmatprep.subr.mxu0 0.0
  %1368 = vmatpush1.msra.mxu0 0.0
  %1369 = vmatprep.subr.mxu0 0.0
  %1370 = vmatpush1.msra.mxu0 0.0
  %1371 = vmatprep.subr.mxu0 0.0
  %1372 = vmatpush1.msra.mxu0 0.0
  %1373 = vmatprep.subr.mxu0 0.0
  %1374 = vmatpush1.msra.mxu0 0.0
  %1375 = vmatprep.subr.mxu0 0.0
  %1376 = vmatpush1.msra.mxu0 %v144
  %1377 = vmatprep.subr.mxu0 0.0
  %1378 = vmatpush1.msra.mxu0 %v143
  %1379 = vmatprep.subr.mxu0 0.0
  %1380 = vmatpush1.msra.mxu0 %v142
  %1381 = vmatprep.subr.mxu0 0.0
  %1382 = vmatpush1.msra.mxu0 %v141
  %1383 = vmatprep.subr.mxu0 0.0
  %1384 = vmatpush2.msra.mxu0 0.0
  %1385 = vmatprep.subr.mxu0 0.0
  %1386 = vmatpush2.msra.mxu0 0.0
  %1387 = vmatprep.subr.mxu0 0.0
  %1388 = vmatpush2.msra.mxu0 0.0
  %1389 = vmatprep.subr.mxu0 0.0
  %1390 = vmatpush2.msra.mxu0 0.0
  %1391 = vmatprep.subr.mxu0 0.0
  %1392 = vmatpush2.msra.mxu0 0.0
  %1393 = vmatprep.subr.mxu0 0.0
  %1394 = vmatpush2.msra.mxu0 0.0
  %1395 = vmatprep.subr.mxu0 0.0
  %1396 = vmatpush2.msra.mxu0 0.0
  %1397 = vmatprep.subr.mxu0 0.0
  %1398 = vmatpush2.msra.mxu0 0.0
  %1399 = vmatprep.subr.mxu0 0.0
  %1400 = vmatpush2.msra.mxu0 0.0
  %1401 = vmatprep.subr.mxu0 0.0
  %1402 = vmatpush2.msra.mxu0 0.0
  %1403 = vmatprep.subr.mxu0 0.0
  %1404 = vmatpush2.msra.mxu0 0.0
  %1405 = vmatprep.subr.mxu0 0.0
  %1406 = vmatpush2.msra.mxu0 0.0
  %1407 = vmatprep.subr.mxu0 0.0
  %1408 = vmatpush2.msra.mxu0 0.0
  %1409 = vmatprep.subr.mxu0 0.0
  %1410 = vmatpush2.msra.mxu0 0.0
  %1411 = vmatprep.subr.mxu0 0.0
  %1412 = vmatpush2.msra.mxu0 0.0
  %1413 = vmatprep.subr.mxu0 0.0
  %1414 = vmatpush2.msra.mxu0 0.0
  %1415 = vmatprep.mubr.f32.mxu0 0.0
  %1416 = vmatmul.mubr.f32.gmra.mxu0 %v634
  %v1417 = vpop.f32.mrf.mxu0
  %v1418 = vpop.f32.mrf.mxu0
  %1419 = vmatprep.mubr.f32.mxu0 0.0
  %1420 = vmatmul.mubr.f32.gmra.mxu0 %v737
  %v1421 = vpop.f32.mrf.mxu0
  %v1422 = vadd.f32 %v1344, %v1421
  %v1423 = vpop.f32.mrf.mxu0
  %1424 = vmatprep.mubr.f32.mxu0 0.0
  %1425 = vmatmul.mubr.f32.gmra.mxu0 %v840
  %v1426 = vpop.f32.mrf.mxu0
  %v1427 = vadd.f32 %v1344, %v1426
  %v1428 = vpop.f32.mrf.mxu0
  %1429 = vmatprep.mubr.f32.mxu0 0.0
  %1430 = vmatmul.mubr.f32.gmra.mxu0 %v940
  %v1431 = vpop.f32.mrf.mxu0
  %v1432 = vadd.f32 %v1344, %v1431
  %v1433 = vpop.f32.mrf.mxu0
  %1434 = vmatprep.mubr.f32.mxu0 0.0
  %1435 = vmatmul.mubr.f32.gmra.mxu0 %v1040
  %v1436 = vpop.f32.mrf.mxu0
  %v1437 = vadd.f32 %v1344, %v1436
  %v1438 = vpop.f32.mrf.mxu0
  %1439 = vmatprep.mubr.f32.mxu0 0.0
  %1440 = vmatmul.mubr.f32.gmra.mxu0 %v1142
  %v1441 = vpop.f32.mrf.mxu0
  %v1442 = vadd.f32 %v1344, %v1441
  %v1443 = vpop.f32.mrf.mxu0
  %1444 = vmatprep.mubr.f32.mxu0 0.0
  %1445 = vmatmul.mubr.f32.gmra.mxu0 %v1244
  %v1446 = vpop.f32.mrf.mxu0
  %v1447 = vadd.f32 %v1344, %v1446
  %v1448 = vpop.f32.mrf.mxu0
  %1449 = vmatprep.mubr.f32.mxu0 0.0
  %1450 = vmatmul.mubr.f32.gmra.mxu0 %v1349
  %v1451 = vpop.f32.mrf.mxu0
  %v1452 = vadd.f32 %v1344, %v1451
  %v1453 = vpop.f32.mrf.mxu0
  %1454 = vdwg.mxu0
  %v1455 = vmax.f32 %v1422, 0.0
  %v1456 = vmax.f32 %v1427, 0.0
  %v1457 = vmax.f32 %v1432, 0.0
  %v1458 = vmax.f32 %v1437, 0.0
  %v1459 = vmax.f32 %v1442, 0.0
  %v1460 = vmax.f32 %v1447, 0.0
  %v1461 = vmax.f32 %v1452, 0.0
  %v1463 = vlaneseq
  %v1464 = vshrl.u32 %v1463, 7
  %v1465 = vsub.s32 0, %v1464
  %v1466 = vrot.slane %v146, %v1465
  %v1468 = vmul.f32 %v1455, %v1466
  %v1469 = vmul.f32 %v1456, %v1466
  %v1470 = vmul.f32 %v1457, %v1466
  %v1471 = vmul.f32 %v1458, %v1466
  %v1472 = vmul.f32 %v1459, %v1466
  %v1473 = vmul.f32 %v1460, %v1466
  %v1474 = vmul.f32 %v1461, %v1466
  %v1475 = vsel %vm186, %v1468, 0.0
  %1476 = vadd.xlane.f32.xlu0 %v1475
  %v1477 = vpop.xlane.xlu0 %1476
  %v1478 = vsel %vm186, %v1469, 0.0
  %1479 = vadd.xlane.f32.xlu0 %v1478
  %v1480 = vpop.xlane.xlu0 %1479
  %v1481 = vsel %vm186, %v1470, 0.0
  %1482 = vadd.xlane.f32.xlu0 %v1481
  %v1483 = vpop.xlane.xlu0 %1482
  %v1484 = vsel %vm186, %v1471, 0.0
  %1485 = vadd.xlane.f32.xlu0 %v1484
  %v1486 = vpop.xlane.xlu0 %1485
  %v1487 = vsel %vm186, %v1472, 0.0
  %1488 = vadd.xlane.f32.xlu0 %v1487
  %v1489 = vpop.xlane.xlu0 %1488
  %v1490 = vsel %vm186, %v1473, 0.0
  %1491 = vadd.xlane.f32.xlu0 %v1490
  %v1492 = vpop.xlane.xlu0 %1491
  %v1493 = vsel %vm186, %v1474, 0.0
  %1494 = vadd.xlane.f32.xlu0 %v1493
  %v1495 = vpop.xlane.xlu0 %1494
  %v1497 = vlaneseq
  %v1498 = vshrl.u32 %v1497, 7
  %v1499 = vsub.s32 0, %v1498
  %v1500 = vrot.slane %v147, %v1499
  %v1502 = vadd.f32 %v1477, %v1500
  %v1503 = vadd.f32 %v1480, %v1500
  %v1504 = vadd.f32 %v1483, %v1500
  %v1505 = vadd.f32 %v1486, %v1500
  %v1506 = vadd.f32 %v1489, %v1500
  %v1507 = vadd.f32 %v1492, %v1500
  %v1508 = vadd.f32 %v1495, %v1500
  %vm1509 = vcmp.eq.s32.totalorder %v132, 1
  %1511 = vset.pattern.permute.xlu0 0
  %1512 = vperm.xlu0 %1511, %v1502
  %v1513 = vpop.permute.xlu0 %1512
  %v1515 = vsel %vm1509, %v1513, -1e+30
  %vm1516 = vcmp.eq.s32.totalorder %v132, 2
  %1518 = vset.pattern.permute.xlu0 0
  %1519 = vperm.xlu0 %1518, %v1503
  %v1520 = vpop.permute.xlu0 %1519
  %v1522 = vsel %vm1516, %v1520, %v1515
  %vm1523 = vcmp.eq.s32.totalorder %v132, 3
  %1525 = vset.pattern.permute.xlu0 0
  %1526 = vperm.xlu0 %1525, %v1504
  %v1527 = vpop.permute.xlu0 %1526
  %v1529 = vsel %vm1523, %v1527, %v1522
  %vm1530 = vcmp.eq.s32.totalorder %v132, 4
  %1532 = vset.pattern.permute.xlu0 0
  %1533 = vperm.xlu0 %1532, %v1505
  %v1534 = vpop.permute.xlu0 %1533
  %v1536 = vsel %vm1530, %v1534, %v1529
  %vm1537 = vcmp.eq.s32.totalorder %v132, 5
  %1539 = vset.pattern.permute.xlu0 0
  %1540 = vperm.xlu0 %1539, %v1506
  %v1541 = vpop.permute.xlu0 %1540
  %v1543 = vsel %vm1537, %v1541, %v1536
  %vm1544 = vcmp.eq.s32.totalorder %v132, 6
  %1546 = vset.pattern.permute.xlu0 0
  %1547 = vperm.xlu0 %1546, %v1507
  %v1548 = vpop.permute.xlu0 %1547
  %v1550 = vsel %vm1544, %v1548, %v1543
  %vm1551 = vcmp.eq.s32.totalorder %v132, 7
  %1553 = vset.pattern.permute.xlu0 0
  %1554 = vperm.xlu0 %1553, %v1508
  %v1555 = vpop.permute.xlu0 %1554
  %v1557 = vsel %vm1551, %v1555, %v1550
  %v1558 = vadd.f32 %v1557, %v129
  %vm1559 = vcmask 64512
  %v1560 = vsel %vm1559, %v1558, -inf
  %1561 = vmax.xlane.f32.xlu0 %v1560
  %v1562 = vpop.xlane.xlu0 %1561
  %vm1563 = vcmp.eq.f32.partialorder %v1558, %v1562
  %v1564 = vsel %vm1563, %v132, 8
  %v1565 = vsel %vm1559, %v1564, 2147483647
  %v1566 = vand.u32 %v1565, 65535
  %v1567 = vshra.s32 %v1565, 16
  %v1568 = vcvt.s32.f32 %v1566
  %v1569 = vcvt.s32.f32 %v1567
  %1570 = vmin.xlane.f32.xlu0 %v1569
  %v1571 = vpop.xlane.xlu0 %1570
  %vm1572 = vcmp.eq.f32.partialorder %v1569, %v1571
  %v1573 = vsel %vm1572, %v1568, inf
  %1574 = vmin.xlane.f32.xlu0 %v1573
  %v1575 = vpop.xlane.xlu0 %1574
  %v1576 = vcvt.f32.s32 %v1575
  %v1577 = vcvt.f32.s32 %v1571
  %v1578 = vshll.u32 %v1577, 16
  %v1579 = vadd.s32 %v1578, %v1576
  %vm1580 = vcmp.eq.s32.totalorder %v132, %v1579
  %v1581 = vsel %vm1580, 1, 0
  %v1582 = vcvt.s32.f32 %v1581
  %vm1583 = vcmp.ge.s32.totalorder %v132, %v1579
  %v1584 = vsel %vm1583, 1, 0
  %v1585 = vcvt.s32.f32 %v1584
  %1587 = vset.pattern.permute.xlu0 1
  %1588 = vperm.xlu0 %1587, %v1582
  %v1589 = vpop.permute.xlu0 %1588
  %v1591 = vmul.f32 %v628, %v1589
  %v1592 = vadd.f32 %v1591, 0.0
  %1593 = vset.pattern.permute.xlu0 2
  %1594 = vperm.xlu0 %1593, %v1582
  %v1595 = vpop.permute.xlu0 %1594
  %v1597 = vmul.f32 %v728, %v1595
  %v1598 = vadd.f32 %v1592, %v1597
  %1599 = vset.pattern.permute.xlu0 3
  %1600 = vperm.xlu0 %1599, %v1582
  %v1601 = vpop.permute.xlu0 %1600
  %v1603 = vmul.f32 %v831, %v1601
  %v1604 = vadd.f32 %v1598, %v1603
  %1605 = vset.pattern.permute.xlu0 4
  %1606 = vperm.xlu0 %1605, %v1582
  %v1607 = vpop.permute.xlu0 %1606
  %v1609 = vmul.f32 %v934, %v1607
  %v1610 = vadd.f32 %v1604, %v1609
  %1611 = vset.pattern.permute.xlu0 5
  %1612 = vperm.xlu0 %1611, %v1582
  %v1613 = vpop.permute.xlu0 %1612
  %v1615 = vmul.f32 %v1034, %v1613
  %v1616 = vadd.f32 %v1610, %v1615
  %1617 = vset.pattern.permute.xlu0 6
  %1618 = vperm.xlu0 %1617, %v1582
  %v1619 = vpop.permute.xlu0 %1618
  %v1621 = vmul.f32 %v1134, %v1619
  %v1622 = vadd.f32 %v1616, %v1621
  %1623 = vset.pattern.permute.xlu0 7
  %1624 = vperm.xlu0 %1623, %v1582
  %v1625 = vpop.permute.xlu0 %1624
  %v1627 = vmul.f32 %v1236, %v1625
  %v1628 = vadd.f32 %v1622, %v1627
  %v1630 = vlaneseq
  %v1631 = vshrl.u32 %v1630, 7
  %v1632 = vsub.s32 0, %v1631
  %v1633 = vrot.slane %v152, %v1632
  %1636 = vrot.lane.b32.xlu0 %v1628, 32
  %v1637 = vpop.permute.xlu0 %1636
  %v1638 = vsel %vm186, %v1637, 0
  %1640 = vmatprep.subr.mxu0 0.0
  %1641 = vmatpush1.msra.mxu0 0.0
  %1642 = vmatprep.subr.mxu0 0.0
  %1643 = vmatpush1.msra.mxu0 0.0
  %1644 = vmatprep.subr.mxu0 0.0
  %1645 = vmatpush1.msra.mxu0 0.0
  %1646 = vmatprep.subr.mxu0 0.0
  %1647 = vmatpush1.msra.mxu0 0.0
  %1648 = vmatprep.subr.mxu0 0.0
  %1649 = vmatpush1.msra.mxu0 0.0
  %1650 = vmatprep.subr.mxu0 0.0
  %1651 = vmatpush1.msra.mxu0 0.0
  %1652 = vmatprep.subr.mxu0 0.0
  %1653 = vmatpush1.msra.mxu0 0.0
  %1654 = vmatprep.subr.mxu0 0.0
  %1655 = vmatpush1.msra.mxu0 0.0
  %1656 = vmatprep.subr.mxu0 0.0
  %1657 = vmatpush1.msra.mxu0 0.0
  %1658 = vmatprep.subr.mxu0 0.0
  %1659 = vmatpush1.msra.mxu0 0.0
  %1660 = vmatprep.subr.mxu0 0.0
  %1661 = vmatpush1.msra.mxu0 0.0
  %1662 = vmatprep.subr.mxu0 0.0
  %1663 = vmatpush1.msra.mxu0 0.0
  %1664 = vmatprep.subr.mxu0 0.0
  %1665 = vmatpush1.msra.mxu0 %v151
  %1666 = vmatprep.subr.mxu0 0.0
  %1667 = vmatpush1.msra.mxu0 %v150
  %1668 = vmatprep.subr.mxu0 0.0
  %1669 = vmatpush1.msra.mxu0 %v149
  %1670 = vmatprep.subr.mxu0 0.0
  %1671 = vmatpush1.msra.mxu0 %v148
  %1672 = vmatprep.subr.mxu0 0.0
  %1673 = vmatpush2.msra.mxu0 0.0
  %1674 = vmatprep.subr.mxu0 0.0
  %1675 = vmatpush2.msra.mxu0 0.0
  %1676 = vmatprep.subr.mxu0 0.0
  %1677 = vmatpush2.msra.mxu0 0.0
  %1678 = vmatprep.subr.mxu0 0.0
  %1679 = vmatpush2.msra.mxu0 0.0
  %1680 = vmatprep.subr.mxu0 0.0
  %1681 = vmatpush2.msra.mxu0 0.0
  %1682 = vmatprep.subr.mxu0 0.0
  %1683 = vmatpush2.msra.mxu0 0.0
  %1684 = vmatprep.subr.mxu0 0.0
  %1685 = vmatpush2.msra.mxu0 0.0
  %1686 = vmatprep.subr.mxu0 0.0
  %1687 = vmatpush2.msra.mxu0 0.0
  %1688 = vmatprep.subr.mxu0 0.0
  %1689 = vmatpush2.msra.mxu0 0.0
  %1690 = vmatprep.subr.mxu0 0.0
  %1691 = vmatpush2.msra.mxu0 0.0
  %1692 = vmatprep.subr.mxu0 0.0
  %1693 = vmatpush2.msra.mxu0 0.0
  %1694 = vmatprep.subr.mxu0 0.0
  %1695 = vmatpush2.msra.mxu0 0.0
  %1696 = vmatprep.subr.mxu0 0.0
  %1697 = vmatpush2.msra.mxu0 0.0
  %1698 = vmatprep.subr.mxu0 0.0
  %1699 = vmatpush2.msra.mxu0 0.0
  %1700 = vmatprep.subr.mxu0 0.0
  %1701 = vmatpush2.msra.mxu0 0.0
  %1702 = vmatprep.subr.mxu0 0.0
  %1703 = vmatpush2.msra.mxu0 0.0
  %1704 = vmatprep.mubr.f32.mxu0 0.0
  %1705 = vmatmul.mubr.f32.gmra.mxu0 %v1638
  %v1706 = vpop.f32.mrf.mxu0
  %v1707 = vadd.f32 %v1633, %v1706
  %v1708 = vpop.f32.mrf.mxu0
  %1709 = vdwg.mxu0
  %v1710 = vmax.f32 %v1707, 0.0
  %v1712 = vlaneseq
  %v1713 = vshrl.u32 %v1712, 7
  %v1714 = vsub.s32 0, %v1713
  %v1715 = vrot.slane %v157, %v1714
  %v1718 = vsel %vm186, %v1710, 0
  %1720 = vmatprep.subr.mxu0 0.0
  %1721 = vmatpush1.msra.mxu0 0.0
  %1722 = vmatprep.subr.mxu0 0.0
  %1723 = vmatpush1.msra.mxu0 0.0
  %1724 = vmatprep.subr.mxu0 0.0
  %1725 = vmatpush1.msra.mxu0 0.0
  %1726 = vmatprep.subr.mxu0 0.0
  %1727 = vmatpush1.msra.mxu0 0.0
  %1728 = vmatprep.subr.mxu0 0.0
  %1729 = vmatpush1.msra.mxu0 0.0
  %1730 = vmatprep.subr.mxu0 0.0
  %1731 = vmatpush1.msra.mxu0 0.0
  %1732 = vmatprep.subr.mxu0 0.0
  %1733 = vmatpush1.msra.mxu0 0.0
  %1734 = vmatprep.subr.mxu0 0.0
  %1735 = vmatpush1.msra.mxu0 0.0
  %1736 = vmatprep.subr.mxu0 0.0
  %1737 = vmatpush1.msra.mxu0 0.0
  %1738 = vmatprep.subr.mxu0 0.0
  %1739 = vmatpush1.msra.mxu0 0.0
  %1740 = vmatprep.subr.mxu0 0.0
  %1741 = vmatpush1.msra.mxu0 0.0
  %1742 = vmatprep.subr.mxu0 0.0
  %1743 = vmatpush1.msra.mxu0 0.0
  %1744 = vmatprep.subr.mxu0 0.0
  %1745 = vmatpush1.msra.mxu0 %v156
  %1746 = vmatprep.subr.mxu0 0.0
  %1747 = vmatpush1.msra.mxu0 %v155
  %1748 = vmatprep.subr.mxu0 0.0
  %1749 = vmatpush1.msra.mxu0 %v154
  %1750 = vmatprep.subr.mxu0 0.0
  %1751 = vmatpush1.msra.mxu0 %v153
  %1752 = vmatprep.subr.mxu0 0.0
  %1753 = vmatpush2.msra.mxu0 0.0
  %1754 = vmatprep.subr.mxu0 0.0
  %1755 = vmatpush2.msra.mxu0 0.0
  %1756 = vmatprep.subr.mxu0 0.0
  %1757 = vmatpush2.msra.mxu0 0.0
  %1758 = vmatprep.subr.mxu0 0.0
  %1759 = vmatpush2.msra.mxu0 0.0
  %1760 = vmatprep.subr.mxu0 0.0
  %1761 = vmatpush2.msra.mxu0 0.0
  %1762 = vmatprep.subr.mxu0 0.0
  %1763 = vmatpush2.msra.mxu0 0.0
  %1764 = vmatprep.subr.mxu0 0.0
  %1765 = vmatpush2.msra.mxu0 0.0
  %1766 = vmatprep.subr.mxu0 0.0
  %1767 = vmatpush2.msra.mxu0 0.0
  %1768 = vmatprep.subr.mxu0 0.0
  %1769 = vmatpush2.msra.mxu0 0.0
  %1770 = vmatprep.subr.mxu0 0.0
  %1771 = vmatpush2.msra.mxu0 0.0
  %1772 = vmatprep.subr.mxu0 0.0
  %1773 = vmatpush2.msra.mxu0 0.0
  %1774 = vmatprep.subr.mxu0 0.0
  %1775 = vmatpush2.msra.mxu0 0.0
  %1776 = vmatprep.subr.mxu0 0.0
  %1777 = vmatpush2.msra.mxu0 0.0
  %1778 = vmatprep.subr.mxu0 0.0
  %1779 = vmatpush2.msra.mxu0 0.0
  %1780 = vmatprep.subr.mxu0 0.0
  %1781 = vmatpush2.msra.mxu0 0.0
  %1782 = vmatprep.subr.mxu0 0.0
  %1783 = vmatpush2.msra.mxu0 0.0
  %1784 = vmatprep.mubr.f32.mxu0 0.0
  %1785 = vmatmul.mubr.f32.gmra.mxu0 %v1718
  %v1786 = vpop.f32.mrf.mxu0
  %v1787 = vadd.f32 %v1715, %v1786
  %v1788 = vpop.f32.mrf.mxu0
  %1789 = vdwg.mxu0
  %v1790 = vadd.f32 %v1585, 1e-17
  %v1791 = vlog2.pop %v1790
  %v1792 = vmul.f32 %v1791, 0.6931472
  %v1793 = vadd.f32 %v1792, 0.0
  %v1794 = vmul.f32 %v1793, 1.442695
  %v1795 = vpow.pop %v1794
  %1796 = vst.msk [vmem:[%s61] sm:$0xff] %vm1559, %v1558
  %1797 = vrot.lane.b32.xlu0 %v1582, 8
  %v1798 = vpop.permute.xlu0 %1797
  %vm1800 = vcmask 130112
  %1801 = vst.msk [vmem:[%s61] sm:$0xff] %vm1800, %v1798
  %1803 = vrot.lane.b32.xlu0 %v1795, 16
  %v1804 = vpop.permute.xlu0 %1803
  %vm1806 = vcmask 195712
  %1807 = vst.msk [vmem:[%s61] sm:$0xff] %vm1806, %v1804
  %1809 = vrot.lane.b32.xlu0 %v1787, 24
  %v1810 = vpop.permute.xlu0 %1809
  %vm1812 = vcmask 326848
  %1813 = vst.msk [vmem:[%s61] sm:$0xff] %vm1812, %v1810
  %vm1814 = vcmask 1047872
  %1815 = vst.msk [vmem:[%s61] sm:$0xff] %vm1814, 0.0
  %1816 = vset.pattern.permute.xlu0 0
  %1817 = vperm.xlu0 %1816, %v1795
  %v1818 = vpop.permute.xlu0 %1817
  %v1820 = vmul.f32 %v628, %v1818
  %v1821 = vmul.f32 %v622, %v1818
  %1823 = vrot.lane.b32.xlu0 %v1820, 32
  %v1824 = vpop.permute.xlu0 %1823
  %s1826 = scalar_lea.vmem %s59, 16
  %1827 = vst.msk [vmem:[%s1826] sm:$0xff] %vm186, %v1824
  %v1828 = vsel %vm186, %v1824, 0
  %1830 = vmatprep.subr.mxu0 0.0
  %1831 = vmatpush1.msra.mxu0 0.0
  %1832 = vmatprep.subr.mxu0 0.0
  %1833 = vmatpush1.msra.mxu0 0.0
  %1834 = vmatprep.subr.mxu0 0.0
  %1835 = vmatpush1.msra.mxu0 0.0
  %1836 = vmatprep.subr.mxu0 0.0
  %1837 = vmatpush1.msra.mxu0 0.0
  %1838 = vmatprep.subr.mxu0 0.0
  %1839 = vmatpush1.msra.mxu0 0.0
  %1840 = vmatprep.subr.mxu0 0.0
  %1841 = vmatpush1.msra.mxu0 0.0
  %1842 = vmatprep.subr.mxu0 0.0
  %1843 = vmatpush1.msra.mxu0 0.0
  %1844 = vmatprep.subr.mxu0 0.0
  %1845 = vmatpush1.msra.mxu0 0.0
  %1846 = vmatprep.subr.mxu0 0.0
  %1847 = vmatpush1.msra.mxu0 0.0
  %1848 = vmatprep.subr.mxu0 0.0
  %1849 = vmatpush1.msra.mxu0 0.0
  %1850 = vmatprep.subr.mxu0 0.0
  %1851 = vmatpush1.msra.mxu0 0.0
  %1852 = vmatprep.subr.mxu0 0.0
  %1853 = vmatpush1.msra.mxu0 0.0
  %1854 = vmatprep.subr.mxu0 0.0
  %1855 = vmatpush1.msra.mxu0 %v140
  %1856 = vmatprep.subr.mxu0 0.0
  %1857 = vmatpush1.msra.mxu0 %v139
  %1858 = vmatprep.subr.mxu0 0.0
  %1859 = vmatpush1.msra.mxu0 %v138
  %1860 = vmatprep.subr.mxu0 0.0
  %1861 = vmatpush1.msra.mxu0 %v137
  %1862 = vmatprep.subr.mxu0 0.0
  %1863 = vmatpush2.msra.mxu0 0.0
  %1864 = vmatprep.subr.mxu0 0.0
  %1865 = vmatpush2.msra.mxu0 0.0
  %1866 = vmatprep.subr.mxu0 0.0
  %1867 = vmatpush2.msra.mxu0 0.0
  %1868 = vmatprep.subr.mxu0 0.0
  %1869 = vmatpush2.msra.mxu0 0.0
  %1870 = vmatprep.subr.mxu0 0.0
  %1871 = vmatpush2.msra.mxu0 0.0
  %1872 = vmatprep.subr.mxu0 0.0
  %1873 = vmatpush2.msra.mxu0 0.0
  %1874 = vmatprep.subr.mxu0 0.0
  %1875 = vmatpush2.msra.mxu0 0.0
  %1876 = vmatprep.subr.mxu0 0.0
  %1877 = vmatpush2.msra.mxu0 0.0
  %1878 = vmatprep.subr.mxu0 0.0
  %1879 = vmatpush2.msra.mxu0 0.0
  %1880 = vmatprep.subr.mxu0 0.0
  %1881 = vmatpush2.msra.mxu0 0.0
  %1882 = vmatprep.subr.mxu0 0.0
  %1883 = vmatpush2.msra.mxu0 0.0
  %1884 = vmatprep.subr.mxu0 0.0
  %1885 = vmatpush2.msra.mxu0 0.0
  %1886 = vmatprep.subr.mxu0 0.0
  %1887 = vmatpush2.msra.mxu0 0.0
  %1888 = vmatprep.subr.mxu0 0.0
  %1889 = vmatpush2.msra.mxu0 0.0
  %1890 = vmatprep.subr.mxu0 0.0
  %1891 = vmatpush2.msra.mxu0 0.0
  %1892 = vmatprep.subr.mxu0 0.0
  %1893 = vmatpush2.msra.mxu0 0.0
  %1894 = vmatprep.mubr.f32.mxu0 0.0
  %1895 = vmatmul.mubr.f32.gmra.mxu0 %v1828
  %v1896 = vpop.f32.mrf.mxu0
  %v1897 = vadd.f32 0.0, %v1896
  %v1898 = vpop.f32.mrf.mxu0
  %1899 = vdwg.mxu0
  %v1900 = vadd.f32 %v500, %v1897
  %v1901 = vmul.f32 %v1900, %v136
  %v1902 = vtanh.pop %v1901
  %v1903 = vmul.f32 %v1902, 0.5
  %v1904 = vadd.f32 %v1903, 0.5
  %v1905 = vsel %vm135, %v1902, %v1904
  %v1906 = vmul.f32 %v1905, %v1821
  %1908 = vrot.lane.b32.xlu0 %v1905, 64
  %v1909 = vpop.permute.xlu0 %1908
  %v1911 = vmul.f32 %v1905, %v1909
  %1913 = vrot.lane.b32.xlu0 %v1911, 32
  %v1914 = vpop.permute.xlu0 %1913
  %v1916 = vadd.f32 %v1906, %v1914
  %v1917 = vtanh.pop %v1916
  %1919 = vrot.lane.b32.xlu0 %v1917, 64
  %v1920 = vpop.permute.xlu0 %1919
  %v1922 = vmul.f32 %v1905, %v1920
  %1923 = vset.pattern.permute.xlu0 1
  %1924 = vperm.xlu0 %1923, %v1795
  %v1925 = vpop.permute.xlu0 %1924
  %v1927 = vmul.f32 %v1922, %v1925
  %v1928 = vmul.f32 %v1916, %v1925
  %1930 = vrot.lane.b32.xlu0 %v1927, 64
  %v1931 = vpop.permute.xlu0 %1930
  %1933 = vst.msk [vmem:[%s1826] sm:$0xff] %vm733, %v1931
  %1934 = vrot.lane.b32.xlu0 %v1927, 32
  %v1935 = vpop.permute.xlu0 %1934
  %v1936 = vsel %vm186, %v1935, 0
  %1938 = vmatprep.subr.mxu0 0.0
  %1939 = vmatpush1.msra.mxu0 0.0
  %1940 = vmatprep.subr.mxu0 0.0
  %1941 = vmatpush1.msra.mxu0 0.0
  %1942 = vmatprep.subr.mxu0 0.0
  %1943 = vmatpush1.msra.mxu0 0.0
  %1944 = vmatprep.subr.mxu0 0.0
  %1945 = vmatpush1.msra.mxu0 0.0
  %1946 = vmatprep.subr.mxu0 0.0
  %1947 = vmatpush1.msra.mxu0 0.0
  %1948 = vmatprep.subr.mxu0 0.0
  %1949 = vmatpush1.msra.mxu0 0.0
  %1950 = vmatprep.subr.mxu0 0.0
  %1951 = vmatpush1.msra.mxu0 0.0
  %1952 = vmatprep.subr.mxu0 0.0
  %1953 = vmatpush1.msra.mxu0 0.0
  %1954 = vmatprep.subr.mxu0 0.0
  %1955 = vmatpush1.msra.mxu0 0.0
  %1956 = vmatprep.subr.mxu0 0.0
  %1957 = vmatpush1.msra.mxu0 0.0
  %1958 = vmatprep.subr.mxu0 0.0
  %1959 = vmatpush1.msra.mxu0 0.0
  %1960 = vmatprep.subr.mxu0 0.0
  %1961 = vmatpush1.msra.mxu0 0.0
  %1962 = vmatprep.subr.mxu0 0.0
  %1963 = vmatpush1.msra.mxu0 %v140
  %1964 = vmatprep.subr.mxu0 0.0
  %1965 = vmatpush1.msra.mxu0 %v139
  %1966 = vmatprep.subr.mxu0 0.0
  %1967 = vmatpush1.msra.mxu0 %v138
  %1968 = vmatprep.subr.mxu0 0.0
  %1969 = vmatpush1.msra.mxu0 %v137
  %1970 = vmatprep.subr.mxu0 0.0
  %1971 = vmatpush2.msra.mxu0 0.0
  %1972 = vmatprep.subr.mxu0 0.0
  %1973 = vmatpush2.msra.mxu0 0.0
  %1974 = vmatprep.subr.mxu0 0.0
  %1975 = vmatpush2.msra.mxu0 0.0
  %1976 = vmatprep.subr.mxu0 0.0
  %1977 = vmatpush2.msra.mxu0 0.0
  %1978 = vmatprep.subr.mxu0 0.0
  %1979 = vmatpush2.msra.mxu0 0.0
  %1980 = vmatprep.subr.mxu0 0.0
  %1981 = vmatpush2.msra.mxu0 0.0
  %1982 = vmatprep.subr.mxu0 0.0
  %1983 = vmatpush2.msra.mxu0 0.0
  %1984 = vmatprep.subr.mxu0 0.0
  %1985 = vmatpush2.msra.mxu0 0.0
  %1986 = vmatprep.subr.mxu0 0.0
  %1987 = vmatpush2.msra.mxu0 0.0
  %1988 = vmatprep.subr.mxu0 0.0
  %1989 = vmatpush2.msra.mxu0 0.0
  %1990 = vmatprep.subr.mxu0 0.0
  %1991 = vmatpush2.msra.mxu0 0.0
  %1992 = vmatprep.subr.mxu0 0.0
  %1993 = vmatpush2.msra.mxu0 0.0
  %1994 = vmatprep.subr.mxu0 0.0
  %1995 = vmatpush2.msra.mxu0 0.0
  %1996 = vmatprep.subr.mxu0 0.0
  %1997 = vmatpush2.msra.mxu0 0.0
  %1998 = vmatprep.subr.mxu0 0.0
  %1999 = vmatpush2.msra.mxu0 0.0
  %2000 = vmatprep.subr.mxu0 0.0
  %2001 = vmatpush2.msra.mxu0 0.0
  %2002 = vmatprep.mubr.f32.mxu0 0.0
  %2003 = vmatmul.mubr.f32.gmra.mxu0 %v1936
  %v2004 = vpop.f32.mrf.mxu0
  %v2005 = vadd.f32 0.0, %v2004
  %v2006 = vpop.f32.mrf.mxu0
  %2007 = vdwg.mxu0
  %v2008 = vadd.f32 %v505, %v2005
  %v2009 = vmul.f32 %v2008, %v136
  %v2010 = vtanh.pop %v2009
  %v2011 = vmul.f32 %v2010, 0.5
  %v2012 = vadd.f32 %v2011, 0.5
  %v2013 = vsel %vm135, %v2010, %v2012
  %v2014 = vmul.f32 %v2013, %v1928
  %2016 = vrot.lane.b32.xlu0 %v2013, 64
  %v2017 = vpop.permute.xlu0 %2016
  %v2019 = vmul.f32 %v2013, %v2017
  %2021 = vrot.lane.b32.xlu0 %v2019, 32
  %v2022 = vpop.permute.xlu0 %2021
  %v2024 = vadd.f32 %v2014, %v2022
  %v2025 = vtanh.pop %v2024
  %2027 = vrot.lane.b32.xlu0 %v2025, 64
  %v2028 = vpop.permute.xlu0 %2027
  %v2030 = vmul.f32 %v2013, %v2028
  %2031 = vset.pattern.permute.xlu0 2
  %2032 = vperm.xlu0 %2031, %v1795
  %v2033 = vpop.permute.xlu0 %2032
  %v2035 = vmul.f32 %v2030, %v2033
  %v2036 = vmul.f32 %v2024, %v2033
  %2038 = vrot.lane.b32.xlu0 %v2035, 96
  %v2039 = vpop.permute.xlu0 %2038
  %2041 = vst.msk [vmem:[%s1826] sm:$0xff] %vm836, %v2039
  %2042 = vrot.lane.b32.xlu0 %v2035, 32
  %v2043 = vpop.permute.xlu0 %2042
  %v2044 = vsel %vm186, %v2043, 0
  %2046 = vmatprep.subr.mxu0 0.0
  %2047 = vmatpush1.msra.mxu0 0.0
  %2048 = vmatprep.subr.mxu0 0.0
  %2049 = vmatpush1.msra.mxu0 0.0
  %2050 = vmatprep.subr.mxu0 0.0
  %2051 = vmatpush1.msra.mxu0 0.0
  %2052 = vmatprep.subr.mxu0 0.0
  %2053 = vmatpush1.msra.mxu0 0.0
  %2054 = vmatprep.subr.mxu0 0.0
  %2055 = vmatpush1.msra.mxu0 0.0
  %2056 = vmatprep.subr.mxu0 0.0
  %2057 = vmatpush1.msra.mxu0 0.0
  %2058 = vmatprep.subr.mxu0 0.0
  %2059 = vmatpush1.msra.mxu0 0.0
  %2060 = vmatprep.subr.mxu0 0.0
  %2061 = vmatpush1.msra.mxu0 0.0
  %2062 = vmatprep.subr.mxu0 0.0
  %2063 = vmatpush1.msra.mxu0 0.0
  %2064 = vmatprep.subr.mxu0 0.0
  %2065 = vmatpush1.msra.mxu0 0.0
  %2066 = vmatprep.subr.mxu0 0.0
  %2067 = vmatpush1.msra.mxu0 0.0
  %2068 = vmatprep.subr.mxu0 0.0
  %2069 = vmatpush1.msra.mxu0 0.0
  %2070 = vmatprep.subr.mxu0 0.0
  %2071 = vmatpush1.msra.mxu0 %v140
  %2072 = vmatprep.subr.mxu0 0.0
  %2073 = vmatpush1.msra.mxu0 %v139
  %2074 = vmatprep.subr.mxu0 0.0
  %2075 = vmatpush1.msra.mxu0 %v138
  %2076 = vmatprep.subr.mxu0 0.0
  %2077 = vmatpush1.msra.mxu0 %v137
  %2078 = vmatprep.subr.mxu0 0.0
  %2079 = vmatpush2.msra.mxu0 0.0
  %2080 = vmatprep.subr.mxu0 0.0
  %2081 = vmatpush2.msra.mxu0 0.0
  %2082 = vmatprep.subr.mxu0 0.0
  %2083 = vmatpush2.msra.mxu0 0.0
  %2084 = vmatprep.subr.mxu0 0.0
  %2085 = vmatpush2.msra.mxu0 0.0
  %2086 = vmatprep.subr.mxu0 0.0
  %2087 = vmatpush2.msra.mxu0 0.0
  %2088 = vmatprep.subr.mxu0 0.0
  %2089 = vmatpush2.msra.mxu0 0.0
  %2090 = vmatprep.subr.mxu0 0.0
  %2091 = vmatpush2.msra.mxu0 0.0
  %2092 = vmatprep.subr.mxu0 0.0
  %2093 = vmatpush2.msra.mxu0 0.0
  %2094 = vmatprep.subr.mxu0 0.0
  %2095 = vmatpush2.msra.mxu0 0.0
  %2096 = vmatprep.subr.mxu0 0.0
  %2097 = vmatpush2.msra.mxu0 0.0
  %2098 = vmatprep.subr.mxu0 0.0
  %2099 = vmatpush2.msra.mxu0 0.0
  %2100 = vmatprep.subr.mxu0 0.0
  %2101 = vmatpush2.msra.mxu0 0.0
  %2102 = vmatprep.subr.mxu0 0.0
  %2103 = vmatpush2.msra.mxu0 0.0
  %2104 = vmatprep.subr.mxu0 0.0
  %2105 = vmatpush2.msra.mxu0 0.0
  %2106 = vmatprep.subr.mxu0 0.0
  %2107 = vmatpush2.msra.mxu0 0.0
  %2108 = vmatprep.subr.mxu0 0.0
  %2109 = vmatpush2.msra.mxu0 0.0
  %2110 = vmatprep.mubr.f32.mxu0 0.0
  %2111 = vmatmul.mubr.f32.gmra.mxu0 %v2044
  %v2112 = vpop.f32.mrf.mxu0
  %v2113 = vadd.f32 0.0, %v2112
  %v2114 = vpop.f32.mrf.mxu0
  %2115 = vdwg.mxu0
  %v2116 = vadd.f32 %v510, %v2113
  %v2117 = vmul.f32 %v2116, %v136
  %v2118 = vtanh.pop %v2117
  %v2119 = vmul.f32 %v2118, 0.5
  %v2120 = vadd.f32 %v2119, 0.5
  %v2121 = vsel %vm135, %v2118, %v2120
  %v2122 = vmul.f32 %v2121, %v2036
  %2124 = vrot.lane.b32.xlu0 %v2121, 64
  %v2125 = vpop.permute.xlu0 %2124
  %v2127 = vmul.f32 %v2121, %v2125
  %2129 = vrot.lane.b32.xlu0 %v2127, 32
  %v2130 = vpop.permute.xlu0 %2129
  %v2132 = vadd.f32 %v2122, %v2130
  %v2133 = vtanh.pop %v2132
  %2135 = vrot.lane.b32.xlu0 %v2133, 64
  %v2136 = vpop.permute.xlu0 %2135
  %v2138 = vmul.f32 %v2121, %v2136
  %2139 = vset.pattern.permute.xlu0 3
  %2140 = vperm.xlu0 %2139, %v1795
  %v2141 = vpop.permute.xlu0 %2140
  %v2143 = vmul.f32 %v2138, %v2141
  %v2144 = vmul.f32 %v2132, %v2141
  %2145 = vst.msk [vmem:[%s1826] sm:$0xff] %vm935, %v2143
  %2147 = vrot.lane.b32.xlu0 %v2143, 32
  %v2148 = vpop.permute.xlu0 %2147
  %v2149 = vsel %vm186, %v2148, 0
  %2151 = vmatprep.subr.mxu0 0.0
  %2152 = vmatpush1.msra.mxu0 0.0
  %2153 = vmatprep.subr.mxu0 0.0
  %2154 = vmatpush1.msra.mxu0 0.0
  %2155 = vmatprep.subr.mxu0 0.0
  %2156 = vmatpush1.msra.mxu0 0.0
  %2157 = vmatprep.subr.mxu0 0.0
  %2158 = vmatpush1.msra.mxu0 0.0
  %2159 = vmatprep.subr.mxu0 0.0
  %2160 = vmatpush1.msra.mxu0 0.0
  %2161 = vmatprep.subr.mxu0 0.0
  %2162 = vmatpush1.msra.mxu0 0.0
  %2163 = vmatprep.subr.mxu0 0.0
  %2164 = vmatpush1.msra.mxu0 0.0
  %2165 = vmatprep.subr.mxu0 0.0
  %2166 = vmatpush1.msra.mxu0 0.0
  %2167 = vmatprep.subr.mxu0 0.0
  %2168 = vmatpush1.msra.mxu0 0.0
  %2169 = vmatprep.subr.mxu0 0.0
  %2170 = vmatpush1.msra.mxu0 0.0
  %2171 = vmatprep.subr.mxu0 0.0
  %2172 = vmatpush1.msra.mxu0 0.0
  %2173 = vmatprep.subr.mxu0 0.0
  %2174 = vmatpush1.msra.mxu0 0.0
  %2175 = vmatprep.subr.mxu0 0.0
  %2176 = vmatpush1.msra.mxu0 %v140
  %2177 = vmatprep.subr.mxu0 0.0
  %2178 = vmatpush1.msra.mxu0 %v139
  %2179 = vmatprep.subr.mxu0 0.0
  %2180 = vmatpush1.msra.mxu0 %v138
  %2181 = vmatprep.subr.mxu0 0.0
  %2182 = vmatpush1.msra.mxu0 %v137
  %2183 = vmatprep.subr.mxu0 0.0
  %2184 = vmatpush2.msra.mxu0 0.0
  %2185 = vmatprep.subr.mxu0 0.0
  %2186 = vmatpush2.msra.mxu0 0.0
  %2187 = vmatprep.subr.mxu0 0.0
  %2188 = vmatpush2.msra.mxu0 0.0
  %2189 = vmatprep.subr.mxu0 0.0
  %2190 = vmatpush2.msra.mxu0 0.0
  %2191 = vmatprep.subr.mxu0 0.0
  %2192 = vmatpush2.msra.mxu0 0.0
  %2193 = vmatprep.subr.mxu0 0.0
  %2194 = vmatpush2.msra.mxu0 0.0
  %2195 = vmatprep.subr.mxu0 0.0
  %2196 = vmatpush2.msra.mxu0 0.0
  %2197 = vmatprep.subr.mxu0 0.0
  %2198 = vmatpush2.msra.mxu0 0.0
  %2199 = vmatprep.subr.mxu0 0.0
  %2200 = vmatpush2.msra.mxu0 0.0
  %2201 = vmatprep.subr.mxu0 0.0
  %2202 = vmatpush2.msra.mxu0 0.0
  %2203 = vmatprep.subr.mxu0 0.0
  %2204 = vmatpush2.msra.mxu0 0.0
  %2205 = vmatprep.subr.mxu0 0.0
  %2206 = vmatpush2.msra.mxu0 0.0
  %2207 = vmatprep.subr.mxu0 0.0
  %2208 = vmatpush2.msra.mxu0 0.0
  %2209 = vmatprep.subr.mxu0 0.0
  %2210 = vmatpush2.msra.mxu0 0.0
  %2211 = vmatprep.subr.mxu0 0.0
  %2212 = vmatpush2.msra.mxu0 0.0
  %2213 = vmatprep.subr.mxu0 0.0
  %2214 = vmatpush2.msra.mxu0 0.0
  %2215 = vmatprep.mubr.f32.mxu0 0.0
  %2216 = vmatmul.mubr.f32.gmra.mxu0 %v2149
  %v2217 = vpop.f32.mrf.mxu0
  %v2218 = vadd.f32 0.0, %v2217
  %v2219 = vpop.f32.mrf.mxu0
  %2220 = vdwg.mxu0
  %v2221 = vadd.f32 %v515, %v2218
  %v2222 = vmul.f32 %v2221, %v136
  %v2223 = vtanh.pop %v2222
  %v2224 = vmul.f32 %v2223, 0.5
  %v2225 = vadd.f32 %v2224, 0.5
  %v2226 = vsel %vm135, %v2223, %v2225
  %v2227 = vmul.f32 %v2226, %v2144
  %2229 = vrot.lane.b32.xlu0 %v2226, 64
  %v2230 = vpop.permute.xlu0 %2229
  %v2232 = vmul.f32 %v2226, %v2230
  %2234 = vrot.lane.b32.xlu0 %v2232, 32
  %v2235 = vpop.permute.xlu0 %2234
  %v2237 = vadd.f32 %v2227, %v2235
  %v2238 = vtanh.pop %v2237
  %2240 = vrot.lane.b32.xlu0 %v2238, 64
  %v2241 = vpop.permute.xlu0 %2240
  %v2243 = vmul.f32 %v2226, %v2241
  %2244 = vset.pattern.permute.xlu0 4
  %2245 = vperm.xlu0 %2244, %v1795
  %v2246 = vpop.permute.xlu0 %2245
  %v2248 = vmul.f32 %v2243, %v2246
  %v2249 = vmul.f32 %v2237, %v2246
  %2251 = vrot.lane.b32.xlu0 %v2248, 32
  %v2252 = vpop.permute.xlu0 %2251
  %2254 = vst.msk [vmem:[%s1826 + $0x8] sm:$0xff] %vm186, %v2252
  %v2255 = vsel %vm186, %v2252, 0
  %2257 = vmatprep.subr.mxu0 0.0
  %2258 = vmatpush1.msra.mxu0 0.0
  %2259 = vmatprep.subr.mxu0 0.0
  %2260 = vmatpush1.msra.mxu0 0.0
  %2261 = vmatprep.subr.mxu0 0.0
  %2262 = vmatpush1.msra.mxu0 0.0
  %2263 = vmatprep.subr.mxu0 0.0
  %2264 = vmatpush1.msra.mxu0 0.0
  %2265 = vmatprep.subr.mxu0 0.0
  %2266 = vmatpush1.msra.mxu0 0.0
  %2267 = vmatprep.subr.mxu0 0.0
  %2268 = vmatpush1.msra.mxu0 0.0
  %2269 = vmatprep.subr.mxu0 0.0
  %2270 = vmatpush1.msra.mxu0 0.0
  %2271 = vmatprep.subr.mxu0 0.0
  %2272 = vmatpush1.msra.mxu0 0.0
  %2273 = vmatprep.subr.mxu0 0.0
  %2274 = vmatpush1.msra.mxu0 0.0
  %2275 = vmatprep.subr.mxu0 0.0
  %2276 = vmatpush1.msra.mxu0 0.0
  %2277 = vmatprep.subr.mxu0 0.0
  %2278 = vmatpush1.msra.mxu0 0.0
  %2279 = vmatprep.subr.mxu0 0.0
  %2280 = vmatpush1.msra.mxu0 0.0
  %2281 = vmatprep.subr.mxu0 0.0
  %2282 = vmatpush1.msra.mxu0 %v140
  %2283 = vmatprep.subr.mxu0 0.0
  %2284 = vmatpush1.msra.mxu0 %v139
  %2285 = vmatprep.subr.mxu0 0.0
  %2286 = vmatpush1.msra.mxu0 %v138
  %2287 = vmatprep.subr.mxu0 0.0
  %2288 = vmatpush1.msra.mxu0 %v137
  %2289 = vmatprep.subr.mxu0 0.0
  %2290 = vmatpush2.msra.mxu0 0.0
  %2291 = vmatprep.subr.mxu0 0.0
  %2292 = vmatpush2.msra.mxu0 0.0
  %2293 = vmatprep.subr.mxu0 0.0
  %2294 = vmatpush2.msra.mxu0 0.0
  %2295 = vmatprep.subr.mxu0 0.0
  %2296 = vmatpush2.msra.mxu0 0.0
  %2297 = vmatprep.subr.mxu0 0.0
  %2298 = vmatpush2.msra.mxu0 0.0
  %2299 = vmatprep.subr.mxu0 0.0
  %2300 = vmatpush2.msra.mxu0 0.0
  %2301 = vmatprep.subr.mxu0 0.0
  %2302 = vmatpush2.msra.mxu0 0.0
  %2303 = vmatprep.subr.mxu0 0.0
  %2304 = vmatpush2.msra.mxu0 0.0
  %2305 = vmatprep.subr.mxu0 0.0
  %2306 = vmatpush2.msra.mxu0 0.0
  %2307 = vmatprep.subr.mxu0 0.0
  %2308 = vmatpush2.msra.mxu0 0.0
  %2309 = vmatprep.subr.mxu0 0.0
  %2310 = vmatpush2.msra.mxu0 0.0
  %2311 = vmatprep.subr.mxu0 0.0
  %2312 = vmatpush2.msra.mxu0 0.0
  %2313 = vmatprep.subr.mxu0 0.0
  %2314 = vmatpush2.msra.mxu0 0.0
  %2315 = vmatprep.subr.mxu0 0.0
  %2316 = vmatpush2.msra.mxu0 0.0
  %2317 = vmatprep.subr.mxu0 0.0
  %2318 = vmatpush2.msra.mxu0 0.0
  %2319 = vmatprep.subr.mxu0 0.0
  %2320 = vmatpush2.msra.mxu0 0.0
  %2321 = vmatprep.mubr.f32.mxu0 0.0
  %2322 = vmatmul.mubr.f32.gmra.mxu0 %v2255
  %v2323 = vpop.f32.mrf.mxu0
  %v2324 = vadd.f32 0.0, %v2323
  %v2325 = vpop.f32.mrf.mxu0
  %2326 = vdwg.mxu0
  %v2327 = vadd.f32 %v520, %v2324
  %v2328 = vmul.f32 %v2327, %v136
  %v2329 = vtanh.pop %v2328
  %v2330 = vmul.f32 %v2329, 0.5
  %v2331 = vadd.f32 %v2330, 0.5
  %v2332 = vsel %vm135, %v2329, %v2331
  %v2333 = vmul.f32 %v2332, %v2249
  %2335 = vrot.lane.b32.xlu0 %v2332, 64
  %v2336 = vpop.permute.xlu0 %2335
  %v2338 = vmul.f32 %v2332, %v2336
  %2340 = vrot.lane.b32.xlu0 %v2338, 32
  %v2341 = vpop.permute.xlu0 %2340
  %v2343 = vadd.f32 %v2333, %v2341
  %v2344 = vtanh.pop %v2343
  %2346 = vrot.lane.b32.xlu0 %v2344, 64
  %v2347 = vpop.permute.xlu0 %2346
  %v2349 = vmul.f32 %v2332, %v2347
  %2350 = vset.pattern.permute.xlu0 5
  %2351 = vperm.xlu0 %2350, %v1795
  %v2352 = vpop.permute.xlu0 %2351
  %v2354 = vmul.f32 %v2349, %v2352
  %v2355 = vmul.f32 %v2343, %v2352
  %2357 = vrot.lane.b32.xlu0 %v2354, 64
  %v2358 = vpop.permute.xlu0 %2357
  %2360 = vst.msk [vmem:[%s1826 + $0x8] sm:$0xff] %vm733, %v2358
  %2361 = vrot.lane.b32.xlu0 %v2354, 32
  %v2362 = vpop.permute.xlu0 %2361
  %v2363 = vsel %vm186, %v2362, 0
  %2365 = vmatprep.subr.mxu0 0.0
  %2366 = vmatpush1.msra.mxu0 0.0
  %2367 = vmatprep.subr.mxu0 0.0
  %2368 = vmatpush1.msra.mxu0 0.0
  %2369 = vmatprep.subr.mxu0 0.0
  %2370 = vmatpush1.msra.mxu0 0.0
  %2371 = vmatprep.subr.mxu0 0.0
  %2372 = vmatpush1.msra.mxu0 0.0
  %2373 = vmatprep.subr.mxu0 0.0
  %2374 = vmatpush1.msra.mxu0 0.0
  %2375 = vmatprep.subr.mxu0 0.0
  %2376 = vmatpush1.msra.mxu0 0.0
  %2377 = vmatprep.subr.mxu0 0.0
  %2378 = vmatpush1.msra.mxu0 0.0
  %2379 = vmatprep.subr.mxu0 0.0
  %2380 = vmatpush1.msra.mxu0 0.0
  %2381 = vmatprep.subr.mxu0 0.0
  %2382 = vmatpush1.msra.mxu0 0.0
  %2383 = vmatprep.subr.mxu0 0.0
  %2384 = vmatpush1.msra.mxu0 0.0
  %2385 = vmatprep.subr.mxu0 0.0
  %2386 = vmatpush1.msra.mxu0 0.0
  %2387 = vmatprep.subr.mxu0 0.0
  %2388 = vmatpush1.msra.mxu0 0.0
  %2389 = vmatprep.subr.mxu0 0.0
  %2390 = vmatpush1.msra.mxu0 %v140
  %2391 = vmatprep.subr.mxu0 0.0
  %2392 = vmatpush1.msra.mxu0 %v139
  %2393 = vmatprep.subr.mxu0 0.0
  %2394 = vmatpush1.msra.mxu0 %v138
  %2395 = vmatprep.subr.mxu0 0.0
  %2396 = vmatpush1.msra.mxu0 %v137
  %2397 = vmatprep.subr.mxu0 0.0
  %2398 = vmatpush2.msra.mxu0 0.0
  %2399 = vmatprep.subr.mxu0 0.0
  %2400 = vmatpush2.msra.mxu0 0.0
  %2401 = vmatprep.subr.mxu0 0.0
  %2402 = vmatpush2.msra.mxu0 0.0
  %2403 = vmatprep.subr.mxu0 0.0
  %2404 = vmatpush2.msra.mxu0 0.0
  %2405 = vmatprep.subr.mxu0 0.0
  %2406 = vmatpush2.msra.mxu0 0.0
  %2407 = vmatprep.subr.mxu0 0.0
  %2408 = vmatpush2.msra.mxu0 0.0
  %2409 = vmatprep.subr.mxu0 0.0
  %2410 = vmatpush2.msra.mxu0 0.0
  %2411 = vmatprep.subr.mxu0 0.0
  %2412 = vmatpush2.msra.mxu0 0.0
  %2413 = vmatprep.subr.mxu0 0.0
  %2414 = vmatpush2.msra.mxu0 0.0
  %2415 = vmatprep.subr.mxu0 0.0
  %2416 = vmatpush2.msra.mxu0 0.0
  %2417 = vmatprep.subr.mxu0 0.0
  %2418 = vmatpush2.msra.mxu0 0.0
  %2419 = vmatprep.subr.mxu0 0.0
  %2420 = vmatpush2.msra.mxu0 0.0
  %2421 = vmatprep.subr.mxu0 0.0
  %2422 = vmatpush2.msra.mxu0 0.0
  %2423 = vmatprep.subr.mxu0 0.0
  %2424 = vmatpush2.msra.mxu0 0.0
  %2425 = vmatprep.subr.mxu0 0.0
  %2426 = vmatpush2.msra.mxu0 0.0
  %2427 = vmatprep.subr.mxu0 0.0
  %2428 = vmatpush2.msra.mxu0 0.0
  %2429 = vmatprep.mubr.f32.mxu0 0.0
  %2430 = vmatmul.mubr.f32.gmra.mxu0 %v2363
  %v2431 = vpop.f32.mrf.mxu0
  %v2432 = vadd.f32 0.0, %v2431
  %v2433 = vpop.f32.mrf.mxu0
  %2434 = vdwg.mxu0
  %v2435 = vadd.f32 %v525, %v2432
  %v2436 = vmul.f32 %v2435, %v136
  %v2437 = vtanh.pop %v2436
  %v2438 = vmul.f32 %v2437, 0.5
  %v2439 = vadd.f32 %v2438, 0.5
  %v2440 = vsel %vm135, %v2437, %v2439
  %v2441 = vmul.f32 %v2440, %v2355
  %2443 = vrot.lane.b32.xlu0 %v2440, 64
  %v2444 = vpop.permute.xlu0 %2443
  %v2446 = vmul.f32 %v2440, %v2444
  %2448 = vrot.lane.b32.xlu0 %v2446, 32
  %v2449 = vpop.permute.xlu0 %2448
  %v2451 = vadd.f32 %v2441, %v2449
  %v2452 = vtanh.pop %v2451
  %2454 = vrot.lane.b32.xlu0 %v2452, 64
  %v2455 = vpop.permute.xlu0 %2454
  %v2457 = vmul.f32 %v2440, %v2455
  %2458 = vset.pattern.permute.xlu0 6
  %2459 = vperm.xlu0 %2458, %v1795
  %v2460 = vpop.permute.xlu0 %2459
  %v2462 = vmul.f32 %v2457, %v2460
  %v2463 = vmul.f32 %v2451, %v2460
  %2465 = vrot.lane.b32.xlu0 %v2462, 96
  %v2466 = vpop.permute.xlu0 %2465
  %2468 = vst.msk [vmem:[%s1826 + $0x8] sm:$0xff] %vm836, %v2466
  %2469 = vrot.lane.b32.xlu0 %v2462, 32
  %v2470 = vpop.permute.xlu0 %2469
  %v2471 = vsel %vm186, %v2470, 0
  %2473 = vmatprep.subr.mxu0 0.0
  %2474 = vmatpush1.msra.mxu0 0.0
  %2475 = vmatprep.subr.mxu0 0.0
  %2476 = vmatpush1.msra.mxu0 0.0
  %2477 = vmatprep.subr.mxu0 0.0
  %2478 = vmatpush1.msra.mxu0 0.0
  %2479 = vmatprep.subr.mxu0 0.0
  %2480 = vmatpush1.msra.mxu0 0.0
  %2481 = vmatprep.subr.mxu0 0.0
  %2482 = vmatpush1.msra.mxu0 0.0
  %2483 = vmatprep.subr.mxu0 0.0
  %2484 = vmatpush1.msra.mxu0 0.0
  %2485 = vmatprep.subr.mxu0 0.0
  %2486 = vmatpush1.msra.mxu0 0.0
  %2487 = vmatprep.subr.mxu0 0.0
  %2488 = vmatpush1.msra.mxu0 0.0
  %2489 = vmatprep.subr.mxu0 0.0
  %2490 = vmatpush1.msra.mxu0 0.0
  %2491 = vmatprep.subr.mxu0 0.0
  %2492 = vmatpush1.msra.mxu0 0.0
  %2493 = vmatprep.subr.mxu0 0.0
  %2494 = vmatpush1.msra.mxu0 0.0
  %2495 = vmatprep.subr.mxu0 0.0
  %2496 = vmatpush1.msra.mxu0 0.0
  %2497 = vmatprep.subr.mxu0 0.0
  %2498 = vmatpush1.msra.mxu0 %v140
  %2499 = vmatprep.subr.mxu0 0.0
  %2500 = vmatpush1.msra.mxu0 %v139
  %2501 = vmatprep.subr.mxu0 0.0
  %2502 = vmatpush1.msra.mxu0 %v138
  %2503 = vmatprep.subr.mxu0 0.0
  %2504 = vmatpush1.msra.mxu0 %v137
  %2505 = vmatprep.subr.mxu0 0.0
  %2506 = vmatpush2.msra.mxu0 0.0
  %2507 = vmatprep.subr.mxu0 0.0
  %2508 = vmatpush2.msra.mxu0 0.0
  %2509 = vmatprep.subr.mxu0 0.0
  %2510 = vmatpush2.msra.mxu0 0.0
  %2511 = vmatprep.subr.mxu0 0.0
  %2512 = vmatpush2.msra.mxu0 0.0
  %2513 = vmatprep.subr.mxu0 0.0
  %2514 = vmatpush2.msra.mxu0 0.0
  %2515 = vmatprep.subr.mxu0 0.0
  %2516 = vmatpush2.msra.mxu0 0.0
  %2517 = vmatprep.subr.mxu0 0.0
  %2518 = vmatpush2.msra.mxu0 0.0
  %2519 = vmatprep.subr.mxu0 0.0
  %2520 = vmatpush2.msra.mxu0 0.0
  %2521 = vmatprep.subr.mxu0 0.0
  %2522 = vmatpush2.msra.mxu0 0.0
  %2523 = vmatprep.subr.mxu0 0.0
  %2524 = vmatpush2.msra.mxu0 0.0
  %2525 = vmatprep.subr.mxu0 0.0
  %2526 = vmatpush2.msra.mxu0 0.0
  %2527 = vmatprep.subr.mxu0 0.0
  %2528 = vmatpush2.msra.mxu0 0.0
  %2529 = vmatprep.subr.mxu0 0.0
  %2530 = vmatpush2.msra.mxu0 0.0
  %2531 = vmatprep.subr.mxu0 0.0
  %2532 = vmatpush2.msra.mxu0 0.0
  %2533 = vmatprep.subr.mxu0 0.0
  %2534 = vmatpush2.msra.mxu0 0.0
  %2535 = vmatprep.subr.mxu0 0.0
  %2536 = vmatpush2.msra.mxu0 0.0
  %2537 = vmatprep.mubr.f32.mxu0 0.0
  %2538 = vmatmul.mubr.f32.gmra.mxu0 %v2471
  %v2539 = vpop.f32.mrf.mxu0
  %v2540 = vadd.f32 0.0, %v2539
  %v2541 = vpop.f32.mrf.mxu0
  %2542 = vdwg.mxu0
  %v2543 = vadd.f32 %v530, %v2540
  %v2544 = vmul.f32 %v2543, %v136
  %v2545 = vtanh.pop %v2544
  %v2546 = vmul.f32 %v2545, 0.5
  %v2547 = vadd.f32 %v2546, 0.5
  %v2548 = vsel %vm135, %v2545, %v2547
  %v2549 = vmul.f32 %v2548, %v2463
  %2551 = vrot.lane.b32.xlu0 %v2548, 64
  %v2552 = vpop.permute.xlu0 %2551
  %v2554 = vmul.f32 %v2548, %v2552
  %2556 = vrot.lane.b32.xlu0 %v2554, 32
  %v2557 = vpop.permute.xlu0 %2556
  %v2559 = vadd.f32 %v2549, %v2557
  %v2560 = vtanh.pop %v2559
  %2562 = vrot.lane.b32.xlu0 %v2560, 64
  %v2563 = vpop.permute.xlu0 %2562
  %v2565 = vmul.f32 %v2548, %v2563
  %2566 = vset.pattern.permute.xlu0 7
  %2567 = vperm.xlu0 %2566, %v1795
  %v2568 = vpop.permute.xlu0 %2567
  %v2570 = vmul.f32 %v2565, %v2568
  %2571 = vst.msk [vmem:[%s1826 + $0x8] sm:$0xff] %vm935, %v2570
  %2573 = vrot.lane.b32.xlu0 %v2570, 32
  %v2574 = vpop.permute.xlu0 %2573
  %v2575 = vsel %vm186, %v2574, 0
  %2577 = vmatprep.subr.mxu0 0.0
  %2578 = vmatpush1.msra.mxu0 0.0
  %2579 = vmatprep.subr.mxu0 0.0
  %2580 = vmatpush1.msra.mxu0 0.0
  %2581 = vmatprep.subr.mxu0 0.0
  %2582 = vmatpush1.msra.mxu0 0.0
  %2583 = vmatprep.subr.mxu0 0.0
  %2584 = vmatpush1.msra.mxu0 0.0
  %2585 = vmatprep.subr.mxu0 0.0
  %2586 = vmatpush1.msra.mxu0 0.0
  %2587 = vmatprep.subr.mxu0 0.0
  %2588 = vmatpush1.msra.mxu0 0.0
  %2589 = vmatprep.subr.mxu0 0.0
  %2590 = vmatpush1.msra.mxu0 0.0
  %2591 = vmatprep.subr.mxu0 0.0
  %2592 = vmatpush1.msra.mxu0 0.0
  %2593 = vmatprep.subr.mxu0 0.0
  %2594 = vmatpush1.msra.mxu0 0.0
  %2595 = vmatprep.subr.mxu0 0.0
  %2596 = vmatpush1.msra.mxu0 0.0
  %2597 = vmatprep.subr.mxu0 0.0
  %2598 = vmatpush1.msra.mxu0 0.0
  %2599 = vmatprep.subr.mxu0 0.0
  %2600 = vmatpush1.msra.mxu0 0.0
  %2601 = vmatprep.subr.mxu0 0.0
  %2602 = vmatpush1.msra.mxu0 %v144
  %2603 = vmatprep.subr.mxu0 0.0
  %2604 = vmatpush1.msra.mxu0 %v143
  %2605 = vmatprep.subr.mxu0 0.0
  %2606 = vmatpush1.msra.mxu0 %v142
  %2607 = vmatprep.subr.mxu0 0.0
  %2608 = vmatpush1.msra.mxu0 %v141
  %2609 = vmatprep.subr.mxu0 0.0
  %2610 = vmatpush2.msra.mxu0 0.0
  %2611 = vmatprep.subr.mxu0 0.0
  %2612 = vmatpush2.msra.mxu0 0.0
  %2613 = vmatprep.subr.mxu0 0.0
  %2614 = vmatpush2.msra.mxu0 0.0
  %2615 = vmatprep.subr.mxu0 0.0
  %2616 = vmatpush2.msra.mxu0 0.0
  %2617 = vmatprep.subr.mxu0 0.0
  %2618 = vmatpush2.msra.mxu0 0.0
  %2619 = vmatprep.subr.mxu0 0.0
  %2620 = vmatpush2.msra.mxu0 0.0
  %2621 = vmatprep.subr.mxu0 0.0
  %2622 = vmatpush2.msra.mxu0 0.0
  %2623 = vmatprep.subr.mxu0 0.0
  %2624 = vmatpush2.msra.mxu0 0.0
  %2625 = vmatprep.subr.mxu0 0.0
  %2626 = vmatpush2.msra.mxu0 0.0
  %2627 = vmatprep.subr.mxu0 0.0
  %2628 = vmatpush2.msra.mxu0 0.0
  %2629 = vmatprep.subr.mxu0 0.0
  %2630 = vmatpush2.msra.mxu0 0.0
  %2631 = vmatprep.subr.mxu0 0.0
  %2632 = vmatpush2.msra.mxu0 0.0
  %2633 = vmatprep.subr.mxu0 0.0
  %2634 = vmatpush2.msra.mxu0 0.0
  %2635 = vmatprep.subr.mxu0 0.0
  %2636 = vmatpush2.msra.mxu0 0.0
  %2637 = vmatprep.subr.mxu0 0.0
  %2638 = vmatpush2.msra.mxu0 0.0
  %2639 = vmatprep.subr.mxu0 0.0
  %2640 = vmatpush2.msra.mxu0 0.0
  %2641 = vmatprep.mubr.f32.mxu0 0.0
  %2642 = vmatmul.mubr.f32.gmra.mxu0 %v1828
  %v2643 = vpop.f32.mrf.mxu0
  %v2644 = vpop.f32.mrf.mxu0
  %2645 = vmatprep.mubr.f32.mxu0 0.0
  %2646 = vmatmul.mubr.f32.gmra.mxu0 %v1936
  %v2647 = vpop.f32.mrf.mxu0
  %v2648 = vadd.f32 %v1344, %v2647
  %v2649 = vpop.f32.mrf.mxu0
  %2650 = vmatprep.mubr.f32.mxu0 0.0
  %2651 = vmatmul.mubr.f32.gmra.mxu0 %v2044
  %v2652 = vpop.f32.mrf.mxu0
  %v2653 = vadd.f32 %v1344, %v2652
  %v2654 = vpop.f32.mrf.mxu0
  %2655 = vmatprep.mubr.f32.mxu0 0.0
  %2656 = vmatmul.mubr.f32.gmra.mxu0 %v2149
  %v2657 = vpop.f32.mrf.mxu0
  %v2658 = vadd.f32 %v1344, %v2657
  %v2659 = vpop.f32.mrf.mxu0
  %2660 = vmatprep.mubr.f32.mxu0 0.0
  %2661 = vmatmul.mubr.f32.gmra.mxu0 %v2255
  %v2662 = vpop.f32.mrf.mxu0
  %v2663 = vadd.f32 %v1344, %v2662
  %v2664 = vpop.f32.mrf.mxu0
  %2665 = vmatprep.mubr.f32.mxu0 0.0
  %2666 = vmatmul.mubr.f32.gmra.mxu0 %v2363
  %v2667 = vpop.f32.mrf.mxu0
  %v2668 = vadd.f32 %v1344, %v2667
  %v2669 = vpop.f32.mrf.mxu0
  %2670 = vmatprep.mubr.f32.mxu0 0.0
  %2671 = vmatmul.mubr.f32.gmra.mxu0 %v2471
  %v2672 = vpop.f32.mrf.mxu0
  %v2673 = vadd.f32 %v1344, %v2672
  %v2674 = vpop.f32.mrf.mxu0
  %2675 = vmatprep.mubr.f32.mxu0 0.0
  %2676 = vmatmul.mubr.f32.gmra.mxu0 %v2575
  %v2677 = vpop.f32.mrf.mxu0
  %v2678 = vadd.f32 %v1344, %v2677
  %v2679 = vpop.f32.mrf.mxu0
  %2680 = vdwg.mxu0
  %v2681 = vmax.f32 %v2648, 0.0
  %v2682 = vmax.f32 %v2653, 0.0
  %v2683 = vmax.f32 %v2658, 0.0
  %v2684 = vmax.f32 %v2663, 0.0
  %v2685 = vmax.f32 %v2668, 0.0
  %v2686 = vmax.f32 %v2673, 0.0
  %v2687 = vmax.f32 %v2678, 0.0
  %v2688 = vmul.f32 %v2681, %v1466
  %v2689 = vmul.f32 %v2682, %v1466
  %v2690 = vmul.f32 %v2683, %v1466
  %v2691 = vmul.f32 %v2684, %v1466
  %v2692 = vmul.f32 %v2685, %v1466
  %v2693 = vmul.f32 %v2686, %v1466
  %v2694 = vmul.f32 %v2687, %v1466
  %v2695 = vsel %vm186, %v2688, 0.0
  %2696 = vadd.xlane.f32.xlu0 %v2695
  %v2697 = vpop.xlane.xlu0 %2696
  %v2698 = vsel %vm186, %v2689, 0.0
  %2699 = vadd.xlane.f32.xlu0 %v2698
  %v2700 = vpop.xlane.xlu0 %2699
  %v2701 = vsel %vm186, %v2690, 0.0
  %2702 = vadd.xlane.f32.xlu0 %v2701
  %v2703 = vpop.xlane.xlu0 %2702
  %v2704 = vsel %vm186, %v2691, 0.0
  %2705 = vadd.xlane.f32.xlu0 %v2704
  %v2706 = vpop.xlane.xlu0 %2705
  %v2707 = vsel %vm186, %v2692, 0.0
  %2708 = vadd.xlane.f32.xlu0 %v2707
  %v2709 = vpop.xlane.xlu0 %2708
  %v2710 = vsel %vm186, %v2693, 0.0
  %2711 = vadd.xlane.f32.xlu0 %v2710
  %v2712 = vpop.xlane.xlu0 %2711
  %v2713 = vsel %vm186, %v2694, 0.0
  %2714 = vadd.xlane.f32.xlu0 %v2713
  %v2715 = vpop.xlane.xlu0 %2714
  %v2716 = vadd.f32 %v2697, %v1500
  %v2717 = vadd.f32 %v2700, %v1500
  %v2718 = vadd.f32 %v2703, %v1500
  %v2719 = vadd.f32 %v2706, %v1500
  %v2720 = vadd.f32 %v2709, %v1500
  %v2721 = vadd.f32 %v2712, %v1500
  %v2722 = vadd.f32 %v2715, %v1500
  %2724 = vset.pattern.permute.xlu0 0
  %2725 = vperm.xlu0 %2724, %v2716
  %v2726 = vpop.permute.xlu0 %2725
  %v2728 = vsel %vm1509, %v2726, -1e+30
  %2730 = vset.pattern.permute.xlu0 0
  %2731 = vperm.xlu0 %2730, %v2717
  %v2732 = vpop.permute.xlu0 %2731
  %v2734 = vsel %vm1516, %v2732, %v2728
  %2736 = vset.pattern.permute.xlu0 0
  %2737 = vperm.xlu0 %2736, %v2718
  %v2738 = vpop.permute.xlu0 %2737
  %v2740 = vsel %vm1523, %v2738, %v2734
  %2742 = vset.pattern.permute.xlu0 0
  %2743 = vperm.xlu0 %2742, %v2719
  %v2744 = vpop.permute.xlu0 %2743
  %v2746 = vsel %vm1530, %v2744, %v2740
  %2748 = vset.pattern.permute.xlu0 0
  %2749 = vperm.xlu0 %2748, %v2720
  %v2750 = vpop.permute.xlu0 %2749
  %v2752 = vsel %vm1537, %v2750, %v2746
  %2754 = vset.pattern.permute.xlu0 0
  %2755 = vperm.xlu0 %2754, %v2721
  %v2756 = vpop.permute.xlu0 %2755
  %v2758 = vsel %vm1544, %v2756, %v2752
  %2760 = vset.pattern.permute.xlu0 0
  %2761 = vperm.xlu0 %2760, %v2722
  %v2762 = vpop.permute.xlu0 %2761
  %v2764 = vsel %vm1551, %v2762, %v2758
  %v2765 = vadd.f32 %v2764, %v129
  %v2766 = vsel %vm1559, %v2765, -inf
  %2767 = vmax.xlane.f32.xlu0 %v2766
  %v2768 = vpop.xlane.xlu0 %2767
  %vm2769 = vcmp.eq.f32.partialorder %v2765, %v2768
  %v2770 = vsel %vm2769, %v132, 8
  %v2771 = vsel %vm1559, %v2770, 2147483647
  %v2772 = vand.u32 %v2771, 65535
  %v2773 = vshra.s32 %v2771, 16
  %v2774 = vcvt.s32.f32 %v2772
  %v2775 = vcvt.s32.f32 %v2773
  %2776 = vmin.xlane.f32.xlu0 %v2775
  %v2777 = vpop.xlane.xlu0 %2776
  %vm2778 = vcmp.eq.f32.partialorder %v2775, %v2777
  %v2779 = vsel %vm2778, %v2774, inf
  %2780 = vmin.xlane.f32.xlu0 %v2779
  %v2781 = vpop.xlane.xlu0 %2780
  %v2782 = vcvt.f32.s32 %v2781
  %v2783 = vcvt.f32.s32 %v2777
  %v2784 = vshll.u32 %v2783, 16
  %v2785 = vadd.s32 %v2784, %v2782
  %vm2786 = vcmp.eq.s32.totalorder %v132, %v2785
  %v2787 = vsel %vm2786, 1, 0
  %v2788 = vcvt.s32.f32 %v2787
  %vm2789 = vcmp.ge.s32.totalorder %v132, %v2785
  %v2790 = vsel %vm2789, 1, 0
  %v2791 = vcvt.s32.f32 %v2790
  %2793 = vset.pattern.permute.xlu0 1
  %2794 = vperm.xlu0 %2793, %v2788
  %v2795 = vpop.permute.xlu0 %2794
  %v2797 = vmul.f32 %v1820, %v2795
  %v2798 = vadd.f32 %v2797, 0.0
  %2799 = vset.pattern.permute.xlu0 2
  %2800 = vperm.xlu0 %2799, %v2788
  %v2801 = vpop.permute.xlu0 %2800
  %v2803 = vmul.f32 %v1927, %v2801
  %v2804 = vadd.f32 %v2798, %v2803
  %2805 = vset.pattern.permute.xlu0 3
  %2806 = vperm.xlu0 %2805, %v2788
  %v2807 = vpop.permute.xlu0 %2806
  %v2809 = vmul.f32 %v2035, %v2807
  %v2810 = vadd.f32 %v2804, %v2809
  %2811 = vset.pattern.permute.xlu0 4
  %2812 = vperm.xlu0 %2811, %v2788
  %v2813 = vpop.permute.xlu0 %2812
  %v2815 = vmul.f32 %v2143, %v2813
  %v2816 = vadd.f32 %v2810, %v2815
  %2817 = vset.pattern.permute.xlu0 5
  %2818 = vperm.xlu0 %2817, %v2788
  %v2819 = vpop.permute.xlu0 %2818
  %v2821 = vmul.f32 %v2248, %v2819
  %v2822 = vadd.f32 %v2816, %v2821
  %2823 = vset.pattern.permute.xlu0 6
  %2824 = vperm.xlu0 %2823, %v2788
  %v2825 = vpop.permute.xlu0 %2824
  %v2827 = vmul.f32 %v2354, %v2825
  %v2828 = vadd.f32 %v2822, %v2827
  %2829 = vset.pattern.permute.xlu0 7
  %2830 = vperm.xlu0 %2829, %v2788
  %v2831 = vpop.permute.xlu0 %2830
  %v2833 = vmul.f32 %v2462, %v2831
  %v2834 = vadd.f32 %v2828, %v2833
  %2836 = vrot.lane.b32.xlu0 %v2834, 32
  %v2837 = vpop.permute.xlu0 %2836
  %v2838 = vsel %vm186, %v2837, 0
  %2840 = vmatprep.subr.mxu0 0.0
  %2841 = vmatpush1.msra.mxu0 0.0
  %2842 = vmatprep.subr.mxu0 0.0
  %2843 = vmatpush1.msra.mxu0 0.0
  %2844 = vmatprep.subr.mxu0 0.0
  %2845 = vmatpush1.msra.mxu0 0.0
  %2846 = vmatprep.subr.mxu0 0.0
  %2847 = vmatpush1.msra.mxu0 0.0
  %2848 = vmatprep.subr.mxu0 0.0
  %2849 = vmatpush1.msra.mxu0 0.0
  %2850 = vmatprep.subr.mxu0 0.0
  %2851 = vmatpush1.msra.mxu0 0.0
  %2852 = vmatprep.subr.mxu0 0.0
  %2853 = vmatpush1.msra.mxu0 0.0
  %2854 = vmatprep.subr.mxu0 0.0
  %2855 = vmatpush1.msra.mxu0 0.0
  %2856 = vmatprep.subr.mxu0 0.0
  %2857 = vmatpush1.msra.mxu0 0.0
  %2858 = vmatprep.subr.mxu0 0.0
  %2859 = vmatpush1.msra.mxu0 0.0
  %2860 = vmatprep.subr.mxu0 0.0
  %2861 = vmatpush1.msra.mxu0 0.0
  %2862 = vmatprep.subr.mxu0 0.0
  %2863 = vmatpush1.msra.mxu0 0.0
  %2864 = vmatprep.subr.mxu0 0.0
  %2865 = vmatpush1.msra.mxu0 %v151
  %2866 = vmatprep.subr.mxu0 0.0
  %2867 = vmatpush1.msra.mxu0 %v150
  %2868 = vmatprep.subr.mxu0 0.0
  %2869 = vmatpush1.msra.mxu0 %v149
  %2870 = vmatprep.subr.mxu0 0.0
  %2871 = vmatpush1.msra.mxu0 %v148
  %2872 = vmatprep.subr.mxu0 0.0
  %2873 = vmatpush2.msra.mxu0 0.0
  %2874 = vmatprep.subr.mxu0 0.0
  %2875 = vmatpush2.msra.mxu0 0.0
  %2876 = vmatprep.subr.mxu0 0.0
  %2877 = vmatpush2.msra.mxu0 0.0
  %2878 = vmatprep.subr.mxu0 0.0
  %2879 = vmatpush2.msra.mxu0 0.0
  %2880 = vmatprep.subr.mxu0 0.0
  %2881 = vmatpush2.msra.mxu0 0.0
  %2882 = vmatprep.subr.mxu0 0.0
  %2883 = vmatpush2.msra.mxu0 0.0
  %2884 = vmatprep.subr.mxu0 0.0
  %2885 = vmatpush2.msra.mxu0 0.0
  %2886 = vmatprep.subr.mxu0 0.0
  %2887 = vmatpush2.msra.mxu0 0.0
  %2888 = vmatprep.subr.mxu0 0.0
  %2889 = vmatpush2.msra.mxu0 0.0
  %2890 = vmatprep.subr.mxu0 0.0
  %2891 = vmatpush2.msra.mxu0 0.0
  %2892 = vmatprep.subr.mxu0 0.0
  %2893 = vmatpush2.msra.mxu0 0.0
  %2894 = vmatprep.subr.mxu0 0.0
  %2895 = vmatpush2.msra.mxu0 0.0
  %2896 = vmatprep.subr.mxu0 0.0
  %2897 = vmatpush2.msra.mxu0 0.0
  %2898 = vmatprep.subr.mxu0 0.0
  %2899 = vmatpush2.msra.mxu0 0.0
  %2900 = vmatprep.subr.mxu0 0.0
  %2901 = vmatpush2.msra.mxu0 0.0
  %2902 = vmatprep.subr.mxu0 0.0
  %2903 = vmatpush2.msra.mxu0 0.0
  %2904 = vmatprep.mubr.f32.mxu0 0.0
  %2905 = vmatmul.mubr.f32.gmra.mxu0 %v2838
  %v2906 = vpop.f32.mrf.mxu0
  %v2907 = vadd.f32 %v1633, %v2906
  %v2908 = vpop.f32.mrf.mxu0
  %2909 = vdwg.mxu0
  %v2910 = vmax.f32 %v2907, 0.0
  %v2912 = vsel %vm186, %v2910, 0
  %2914 = vmatprep.subr.mxu0 0.0
  %2915 = vmatpush1.msra.mxu0 0.0
  %2916 = vmatprep.subr.mxu0 0.0
  %2917 = vmatpush1.msra.mxu0 0.0
  %2918 = vmatprep.subr.mxu0 0.0
  %2919 = vmatpush1.msra.mxu0 0.0
  %2920 = vmatprep.subr.mxu0 0.0
  %2921 = vmatpush1.msra.mxu0 0.0
  %2922 = vmatprep.subr.mxu0 0.0
  %2923 = vmatpush1.msra.mxu0 0.0
  %2924 = vmatprep.subr.mxu0 0.0
  %2925 = vmatpush1.msra.mxu0 0.0
  %2926 = vmatprep.subr.mxu0 0.0
  %2927 = vmatpush1.msra.mxu0 0.0
  %2928 = vmatprep.subr.mxu0 0.0
  %2929 = vmatpush1.msra.mxu0 0.0
  %2930 = vmatprep.subr.mxu0 0.0
  %2931 = vmatpush1.msra.mxu0 0.0
  %2932 = vmatprep.subr.mxu0 0.0
  %2933 = vmatpush1.msra.mxu0 0.0
  %2934 = vmatprep.subr.mxu0 0.0
  %2935 = vmatpush1.msra.mxu0 0.0
  %2936 = vmatprep.subr.mxu0 0.0
  %2937 = vmatpush1.msra.mxu0 0.0
  %2938 = vmatprep.subr.mxu0 0.0
  %2939 = vmatpush1.msra.mxu0 %v156
  %2940 = vmatprep.subr.mxu0 0.0
  %2941 = vmatpush1.msra.mxu0 %v155
  %2942 = vmatprep.subr.mxu0 0.0
  %2943 = vmatpush1.msra.mxu0 %v154
  %2944 = vmatprep.subr.mxu0 0.0
  %2945 = vmatpush1.msra.mxu0 %v153
  %2946 = vmatprep.subr.mxu0 0.0
  %2947 = vmatpush2.msra.mxu0 0.0
  %2948 = vmatprep.subr.mxu0 0.0
  %2949 = vmatpush2.msra.mxu0 0.0
  %2950 = vmatprep.subr.mxu0 0.0
  %2951 = vmatpush2.msra.mxu0 0.0
  %2952 = vmatprep.subr.mxu0 0.0
  %2953 = vmatpush2.msra.mxu0 0.0
  %2954 = vmatprep.subr.mxu0 0.0
  %2955 = vmatpush2.msra.mxu0 0.0
  %2956 = vmatprep.subr.mxu0 0.0
  %2957 = vmatpush2.msra.mxu0 0.0
  %2958 = vmatprep.subr.mxu0 0.0
  %2959 = vmatpush2.msra.mxu0 0.0
  %2960 = vmatprep.subr.mxu0 0.0
  %2961 = vmatpush2.msra.mxu0 0.0
  %2962 = vmatprep.subr.mxu0 0.0
  %2963 = vmatpush2.msra.mxu0 0.0
  %2964 = vmatprep.subr.mxu0 0.0
  %2965 = vmatpush2.msra.mxu0 0.0
  %2966 = vmatprep.subr.mxu0 0.0
  %2967 = vmatpush2.msra.mxu0 0.0
  %2968 = vmatprep.subr.mxu0 0.0
  %2969 = vmatpush2.msra.mxu0 0.0
  %2970 = vmatprep.subr.mxu0 0.0
  %2971 = vmatpush2.msra.mxu0 0.0
  %2972 = vmatprep.subr.mxu0 0.0
  %2973 = vmatpush2.msra.mxu0 0.0
  %2974 = vmatprep.subr.mxu0 0.0
  %2975 = vmatpush2.msra.mxu0 0.0
  %2976 = vmatprep.subr.mxu0 0.0
  %2977 = vmatpush2.msra.mxu0 0.0
  %2978 = vmatprep.mubr.f32.mxu0 0.0
  %2979 = vmatmul.mubr.f32.gmra.mxu0 %v2912
  %v2980 = vpop.f32.mrf.mxu0
  %v2981 = vadd.f32 %v1715, %v2980
  %v2982 = vpop.f32.mrf.mxu0
  %2983 = vdwg.mxu0
  %v2984 = vadd.f32 %v2791, 1e-17
  %v2985 = vlog2.pop %v2984
  %v2986 = vmul.f32 %v2985, 0.6931472
  %v2987 = vadd.f32 %v1793, %v2986
  %v2988 = vmul.f32 %v2987, 1.442695
  %v2989 = vpow.pop %v2988
  %s2990 = scalar_lea.vmem %s61, 8
  %2991 = vst.msk [vmem:[%s2990] sm:$0xff] %vm1559, %v2765
  %2992 = vrot.lane.b32.xlu0 %v2788, 8
  %v2993 = vpop.permute.xlu0 %2992
  %2995 = vst.msk [vmem:[%s2990] sm:$0xff] %vm1800, %v2993
  %2997 = vrot.lane.b32.xlu0 %v2989, 16
  %v2998 = vpop.permute.xlu0 %2997
  %3000 = vst.msk [vmem:[%s2990] sm:$0xff] %vm1806, %v2998
  %3002 = vrot.lane.b32.xlu0 %v2981, 24
  %v3003 = vpop.permute.xlu0 %3002
  %3005 = vst.msk [vmem:[%s2990] sm:$0xff] %vm1812, %v3003
  %3006 = vst.msk [vmem:[%s2990] sm:$0xff] %vm1814, 0.0
  %3007 = vset.pattern.permute.xlu0 0
  %3008 = vperm.xlu0 %3007, %v2989
  %v3009 = vpop.permute.xlu0 %3008
  %v3011 = vmul.f32 %v628, %v3009
  %v3012 = vmul.f32 %v622, %v3009
  %3014 = vrot.lane.b32.xlu0 %v3011, 32
  %v3015 = vpop.permute.xlu0 %3014
  %s3017 = scalar_lea.vmem %s59, 32
  %3018 = vst.msk [vmem:[%s3017] sm:$0xff] %vm186, %v3015
  %v3019 = vsel %vm186, %v3015, 0
  %3021 = vmatprep.subr.mxu0 0.0
  %3022 = vmatpush1.msra.mxu0 0.0
  %3023 = vmatprep.subr.mxu0 0.0
  %3024 = vmatpush1.msra.mxu0 0.0
  %3025 = vmatprep.subr.mxu0 0.0
  %3026 = vmatpush1.msra.mxu0 0.0
  %3027 = vmatprep.subr.mxu0 0.0
  %3028 = vmatpush1.msra.mxu0 0.0
  %3029 = vmatprep.subr.mxu0 0.0
  %3030 = vmatpush1.msra.mxu0 0.0
  %3031 = vmatprep.subr.mxu0 0.0
  %3032 = vmatpush1.msra.mxu0 0.0
  %3033 = vmatprep.subr.mxu0 0.0
  %3034 = vmatpush1.msra.mxu0 0.0
  %3035 = vmatprep.subr.mxu0 0.0
  %3036 = vmatpush1.msra.mxu0 0.0
  %3037 = vmatprep.subr.mxu0 0.0
  %3038 = vmatpush1.msra.mxu0 0.0
  %3039 = vmatprep.subr.mxu0 0.0
  %3040 = vmatpush1.msra.mxu0 0.0
  %3041 = vmatprep.subr.mxu0 0.0
  %3042 = vmatpush1.msra.mxu0 0.0
  %3043 = vmatprep.subr.mxu0 0.0
  %3044 = vmatpush1.msra.mxu0 0.0
  %3045 = vmatprep.subr.mxu0 0.0
  %3046 = vmatpush1.msra.mxu0 %v140
  %3047 = vmatprep.subr.mxu0 0.0
  %3048 = vmatpush1.msra.mxu0 %v139
  %3049 = vmatprep.subr.mxu0 0.0
  %3050 = vmatpush1.msra.mxu0 %v138
  %3051 = vmatprep.subr.mxu0 0.0
  %3052 = vmatpush1.msra.mxu0 %v137
  %3053 = vmatprep.subr.mxu0 0.0
  %3054 = vmatpush2.msra.mxu0 0.0
  %3055 = vmatprep.subr.mxu0 0.0
  %3056 = vmatpush2.msra.mxu0 0.0
  %3057 = vmatprep.subr.mxu0 0.0
  %3058 = vmatpush2.msra.mxu0 0.0
  %3059 = vmatprep.subr.mxu0 0.0
  %3060 = vmatpush2.msra.mxu0 0.0
  %3061 = vmatprep.subr.mxu0 0.0
  %3062 = vmatpush2.msra.mxu0 0.0
  %3063 = vmatprep.subr.mxu0 0.0
  %3064 = vmatpush2.msra.mxu0 0.0
  %3065 = vmatprep.subr.mxu0 0.0
  %3066 = vmatpush2.msra.mxu0 0.0
  %3067 = vmatprep.subr.mxu0 0.0
  %3068 = vmatpush2.msra.mxu0 0.0
  %3069 = vmatprep.subr.mxu0 0.0
  %3070 = vmatpush2.msra.mxu0 0.0
  %3071 = vmatprep.subr.mxu0 0.0
  %3072 = vmatpush2.msra.mxu0 0.0
  %3073 = vmatprep.subr.mxu0 0.0
  %3074 = vmatpush2.msra.mxu0 0.0
  %3075 = vmatprep.subr.mxu0 0.0
  %3076 = vmatpush2.msra.mxu0 0.0
  %3077 = vmatprep.subr.mxu0 0.0
  %3078 = vmatpush2.msra.mxu0 0.0
  %3079 = vmatprep.subr.mxu0 0.0
  %3080 = vmatpush2.msra.mxu0 0.0
  %3081 = vmatprep.subr.mxu0 0.0
  %3082 = vmatpush2.msra.mxu0 0.0
  %3083 = vmatprep.subr.mxu0 0.0
  %3084 = vmatpush2.msra.mxu0 0.0
  %3085 = vmatprep.mubr.f32.mxu0 0.0
  %3086 = vmatmul.mubr.f32.gmra.mxu0 %v3019
  %v3087 = vpop.f32.mrf.mxu0
  %v3088 = vadd.f32 0.0, %v3087
  %v3089 = vpop.f32.mrf.mxu0
  %3090 = vdwg.mxu0
  %v3091 = vadd.f32 %v500, %v3088
  %v3092 = vmul.f32 %v3091, %v136
  %v3093 = vtanh.pop %v3092
  %v3094 = vmul.f32 %v3093, 0.5
  %v3095 = vadd.f32 %v3094, 0.5
  %v3096 = vsel %vm135, %v3093, %v3095
  %v3097 = vmul.f32 %v3096, %v3012
  %3099 = vrot.lane.b32.xlu0 %v3096, 64
  %v3100 = vpop.permute.xlu0 %3099
  %v3102 = vmul.f32 %v3096, %v3100
  %3104 = vrot.lane.b32.xlu0 %v3102, 32
  %v3105 = vpop.permute.xlu0 %3104
  %v3107 = vadd.f32 %v3097, %v3105
  %v3108 = vtanh.pop %v3107
  %3110 = vrot.lane.b32.xlu0 %v3108, 64
  %v3111 = vpop.permute.xlu0 %3110
  %v3113 = vmul.f32 %v3096, %v3111
  %3114 = vset.pattern.permute.xlu0 1
  %3115 = vperm.xlu0 %3114, %v2989
  %v3116 = vpop.permute.xlu0 %3115
  %v3118 = vmul.f32 %v3113, %v3116
  %v3119 = vmul.f32 %v3107, %v3116
  %3121 = vrot.lane.b32.xlu0 %v3118, 64
  %v3122 = vpop.permute.xlu0 %3121
  %3124 = vst.msk [vmem:[%s3017] sm:$0xff] %vm733, %v3122
  %3125 = vrot.lane.b32.xlu0 %v3118, 32
  %v3126 = vpop.permute.xlu0 %3125
  %v3127 = vsel %vm186, %v3126, 0
  %3129 = vmatprep.subr.mxu0 0.0
  %3130 = vmatpush1.msra.mxu0 0.0
  %3131 = vmatprep.subr.mxu0 0.0
  %3132 = vmatpush1.msra.mxu0 0.0
  %3133 = vmatprep.subr.mxu0 0.0
  %3134 = vmatpush1.msra.mxu0 0.0
  %3135 = vmatprep.subr.mxu0 0.0
  %3136 = vmatpush1.msra.mxu0 0.0
  %3137 = vmatprep.subr.mxu0 0.0
  %3138 = vmatpush1.msra.mxu0 0.0
  %3139 = vmatprep.subr.mxu0 0.0
  %3140 = vmatpush1.msra.mxu0 0.0
  %3141 = vmatprep.subr.mxu0 0.0
  %3142 = vmatpush1.msra.mxu0 0.0
  %3143 = vmatprep.subr.mxu0 0.0
  %3144 = vmatpush1.msra.mxu0 0.0
  %3145 = vmatprep.subr.mxu0 0.0
  %3146 = vmatpush1.msra.mxu0 0.0
  %3147 = vmatprep.subr.mxu0 0.0
  %3148 = vmatpush1.msra.mxu0 0.0
  %3149 = vmatprep.subr.mxu0 0.0
  %3150 = vmatpush1.msra.mxu0 0.0
  %3151 = vmatprep.subr.mxu0 0.0
  %3152 = vmatpush1.msra.mxu0 0.0
  %3153 = vmatprep.subr.mxu0 0.0
  %3154 = vmatpush1.msra.mxu0 %v140
  %3155 = vmatprep.subr.mxu0 0.0
  %3156 = vmatpush1.msra.mxu0 %v139
  %3157 = vmatprep.subr.mxu0 0.0
  %3158 = vmatpush1.msra.mxu0 %v138
  %3159 = vmatprep.subr.mxu0 0.0
  %3160 = vmatpush1.msra.mxu0 %v137
  %3161 = vmatprep.subr.mxu0 0.0
  %3162 = vmatpush2.msra.mxu0 0.0
  %3163 = vmatprep.subr.mxu0 0.0
  %3164 = vmatpush2.msra.mxu0 0.0
  %3165 = vmatprep.subr.mxu0 0.0
  %3166 = vmatpush2.msra.mxu0 0.0
  %3167 = vmatprep.subr.mxu0 0.0
  %3168 = vmatpush2.msra.mxu0 0.0
  %3169 = vmatprep.subr.mxu0 0.0
  %3170 = vmatpush2.msra.mxu0 0.0
  %3171 = vmatprep.subr.mxu0 0.0
  %3172 = vmatpush2.msra.mxu0 0.0
  %3173 = vmatprep.subr.mxu0 0.0
  %3174 = vmatpush2.msra.mxu0 0.0
  %3175 = vmatprep.subr.mxu0 0.0
  %3176 = vmatpush2.msra.mxu0 0.0
  %3177 = vmatprep.subr.mxu0 0.0
  %3178 = vmatpush2.msra.mxu0 0.0
  %3179 = vmatprep.subr.mxu0 0.0
  %3180 = vmatpush2.msra.mxu0 0.0
  %3181 = vmatprep.subr.mxu0 0.0
  %3182 = vmatpush2.msra.mxu0 0.0
  %3183 = vmatprep.subr.mxu0 0.0
  %3184 = vmatpush2.msra.mxu0 0.0
  %3185 = vmatprep.subr.mxu0 0.0
  %3186 = vmatpush2.msra.mxu0 0.0
  %3187 = vmatprep.subr.mxu0 0.0
  %3188 = vmatpush2.msra.mxu0 0.0
  %3189 = vmatprep.subr.mxu0 0.0
  %3190 = vmatpush2.msra.mxu0 0.0
  %3191 = vmatprep.subr.mxu0 0.0
  %3192 = vmatpush2.msra.mxu0 0.0
  %3193 = vmatprep.mubr.f32.mxu0 0.0
  %3194 = vmatmul.mubr.f32.gmra.mxu0 %v3127
  %v3195 = vpop.f32.mrf.mxu0
  %v3196 = vadd.f32 0.0, %v3195
  %v3197 = vpop.f32.mrf.mxu0
  %3198 = vdwg.mxu0
  %v3199 = vadd.f32 %v505, %v3196
  %v3200 = vmul.f32 %v3199, %v136
  %v3201 = vtanh.pop %v3200
  %v3202 = vmul.f32 %v3201, 0.5
  %v3203 = vadd.f32 %v3202, 0.5
  %v3204 = vsel %vm135, %v3201, %v3203
  %v3205 = vmul.f32 %v3204, %v3119
  %3207 = vrot.lane.b32.xlu0 %v3204, 64
  %v3208 = vpop.permute.xlu0 %3207
  %v3210 = vmul.f32 %v3204, %v3208
  %3212 = vrot.lane.b32.xlu0 %v3210, 32
  %v3213 = vpop.permute.xlu0 %3212
  %v3215 = vadd.f32 %v3205, %v3213
  %v3216 = vtanh.pop %v3215
  %3218 = vrot.lane.b32.xlu0 %v3216, 64
  %v3219 = vpop.permute.xlu0 %3218
  %v3221 = vmul.f32 %v3204, %v3219
  %3222 = vset.pattern.permute.xlu0 2
  %3223 = vperm.xlu0 %3222, %v2989
  %v3224 = vpop.permute.xlu0 %3223
  %v3226 = vmul.f32 %v3221, %v3224
  %v3227 = vmul.f32 %v3215, %v3224
  %3229 = vrot.lane.b32.xlu0 %v3226, 96
  %v3230 = vpop.permute.xlu0 %3229
  %3232 = vst.msk [vmem:[%s3017] sm:$0xff] %vm836, %v3230
  %3233 = vrot.lane.b32.xlu0 %v3226, 32
  %v3234 = vpop.permute.xlu0 %3233
  %v3235 = vsel %vm186, %v3234, 0
  %3237 = vmatprep.subr.mxu0 0.0
  %3238 = vmatpush1.msra.mxu0 0.0
  %3239 = vmatprep.subr.mxu0 0.0
  %3240 = vmatpush1.msra.mxu0 0.0
  %3241 = vmatprep.subr.mxu0 0.0
  %3242 = vmatpush1.msra.mxu0 0.0
  %3243 = vmatprep.subr.mxu0 0.0
  %3244 = vmatpush1.msra.mxu0 0.0
  %3245 = vmatprep.subr.mxu0 0.0
  %3246 = vmatpush1.msra.mxu0 0.0
  %3247 = vmatprep.subr.mxu0 0.0
  %3248 = vmatpush1.msra.mxu0 0.0
  %3249 = vmatprep.subr.mxu0 0.0
  %3250 = vmatpush1.msra.mxu0 0.0
  %3251 = vmatprep.subr.mxu0 0.0
  %3252 = vmatpush1.msra.mxu0 0.0
  %3253 = vmatprep.subr.mxu0 0.0
  %3254 = vmatpush1.msra.mxu0 0.0
  %3255 = vmatprep.subr.mxu0 0.0
  %3256 = vmatpush1.msra.mxu0 0.0
  %3257 = vmatprep.subr.mxu0 0.0
  %3258 = vmatpush1.msra.mxu0 0.0
  %3259 = vmatprep.subr.mxu0 0.0
  %3260 = vmatpush1.msra.mxu0 0.0
  %3261 = vmatprep.subr.mxu0 0.0
  %3262 = vmatpush1.msra.mxu0 %v140
  %3263 = vmatprep.subr.mxu0 0.0
  %3264 = vmatpush1.msra.mxu0 %v139
  %3265 = vmatprep.subr.mxu0 0.0
  %3266 = vmatpush1.msra.mxu0 %v138
  %3267 = vmatprep.subr.mxu0 0.0
  %3268 = vmatpush1.msra.mxu0 %v137
  %3269 = vmatprep.subr.mxu0 0.0
  %3270 = vmatpush2.msra.mxu0 0.0
  %3271 = vmatprep.subr.mxu0 0.0
  %3272 = vmatpush2.msra.mxu0 0.0
  %3273 = vmatprep.subr.mxu0 0.0
  %3274 = vmatpush2.msra.mxu0 0.0
  %3275 = vmatprep.subr.mxu0 0.0
  %3276 = vmatpush2.msra.mxu0 0.0
  %3277 = vmatprep.subr.mxu0 0.0
  %3278 = vmatpush2.msra.mxu0 0.0
  %3279 = vmatprep.subr.mxu0 0.0
  %3280 = vmatpush2.msra.mxu0 0.0
  %3281 = vmatprep.subr.mxu0 0.0
  %3282 = vmatpush2.msra.mxu0 0.0
  %3283 = vmatprep.subr.mxu0 0.0
  %3284 = vmatpush2.msra.mxu0 0.0
  %3285 = vmatprep.subr.mxu0 0.0
  %3286 = vmatpush2.msra.mxu0 0.0
  %3287 = vmatprep.subr.mxu0 0.0
  %3288 = vmatpush2.msra.mxu0 0.0
  %3289 = vmatprep.subr.mxu0 0.0
  %3290 = vmatpush2.msra.mxu0 0.0
  %3291 = vmatprep.subr.mxu0 0.0
  %3292 = vmatpush2.msra.mxu0 0.0
  %3293 = vmatprep.subr.mxu0 0.0
  %3294 = vmatpush2.msra.mxu0 0.0
  %3295 = vmatprep.subr.mxu0 0.0
  %3296 = vmatpush2.msra.mxu0 0.0
  %3297 = vmatprep.subr.mxu0 0.0
  %3298 = vmatpush2.msra.mxu0 0.0
  %3299 = vmatprep.subr.mxu0 0.0
  %3300 = vmatpush2.msra.mxu0 0.0
  %3301 = vmatprep.mubr.f32.mxu0 0.0
  %3302 = vmatmul.mubr.f32.gmra.mxu0 %v3235
  %v3303 = vpop.f32.mrf.mxu0
  %v3304 = vadd.f32 0.0, %v3303
  %v3305 = vpop.f32.mrf.mxu0
  %3306 = vdwg.mxu0
  %v3307 = vadd.f32 %v510, %v3304
  %v3308 = vmul.f32 %v3307, %v136
  %v3309 = vtanh.pop %v3308
  %v3310 = vmul.f32 %v3309, 0.5
  %v3311 = vadd.f32 %v3310, 0.5
  %v3312 = vsel %vm135, %v3309, %v3311
  %v3313 = vmul.f32 %v3312, %v3227
  %3315 = vrot.lane.b32.xlu0 %v3312, 64
  %v3316 = vpop.permute.xlu0 %3315
  %v3318 = vmul.f32 %v3312, %v3316
  %3320 = vrot.lane.b32.xlu0 %v3318, 32
  %v3321 = vpop.permute.xlu0 %3320
  %v3323 = vadd.f32 %v3313, %v3321
  %v3324 = vtanh.pop %v3323
  %3326 = vrot.lane.b32.xlu0 %v3324, 64
  %v3327 = vpop.permute.xlu0 %3326
  %v3329 = vmul.f32 %v3312, %v3327
  %3330 = vset.pattern.permute.xlu0 3
  %3331 = vperm.xlu0 %3330, %v2989
  %v3332 = vpop.permute.xlu0 %3331
  %v3334 = vmul.f32 %v3329, %v3332
  %v3335 = vmul.f32 %v3323, %v3332
  %3336 = vst.msk [vmem:[%s3017] sm:$0xff] %vm935, %v3334
  %3338 = vrot.lane.b32.xlu0 %v3334, 32
  %v3339 = vpop.permute.xlu0 %3338
  %v3340 = vsel %vm186, %v3339, 0
  %3342 = vmatprep.subr.mxu0 0.0
  %3343 = vmatpush1.msra.mxu0 0.0
  %3344 = vmatprep.subr.mxu0 0.0
  %3345 = vmatpush1.msra.mxu0 0.0
  %3346 = vmatprep.subr.mxu0 0.0
  %3347 = vmatpush1.msra.mxu0 0.0
  %3348 = vmatprep.subr.mxu0 0.0
  %3349 = vmatpush1.msra.mxu0 0.0
  %3350 = vmatprep.subr.mxu0 0.0
  %3351 = vmatpush1.msra.mxu0 0.0
  %3352 = vmatprep.subr.mxu0 0.0
  %3353 = vmatpush1.msra.mxu0 0.0
  %3354 = vmatprep.subr.mxu0 0.0
  %3355 = vmatpush1.msra.mxu0 0.0
  %3356 = vmatprep.subr.mxu0 0.0
  %3357 = vmatpush1.msra.mxu0 0.0
  %3358 = vmatprep.subr.mxu0 0.0
  %3359 = vmatpush1.msra.mxu0 0.0
  %3360 = vmatprep.subr.mxu0 0.0
  %3361 = vmatpush1.msra.mxu0 0.0
  %3362 = vmatprep.subr.mxu0 0.0
  %3363 = vmatpush1.msra.mxu0 0.0
  %3364 = vmatprep.subr.mxu0 0.0
  %3365 = vmatpush1.msra.mxu0 0.0
  %3366 = vmatprep.subr.mxu0 0.0
  %3367 = vmatpush1.msra.mxu0 %v140
  %3368 = vmatprep.subr.mxu0 0.0
  %3369 = vmatpush1.msra.mxu0 %v139
  %3370 = vmatprep.subr.mxu0 0.0
  %3371 = vmatpush1.msra.mxu0 %v138
  %3372 = vmatprep.subr.mxu0 0.0
  %3373 = vmatpush1.msra.mxu0 %v137
  %3374 = vmatprep.subr.mxu0 0.0
  %3375 = vmatpush2.msra.mxu0 0.0
  %3376 = vmatprep.subr.mxu0 0.0
  %3377 = vmatpush2.msra.mxu0 0.0
  %3378 = vmatprep.subr.mxu0 0.0
  %3379 = vmatpush2.msra.mxu0 0.0
  %3380 = vmatprep.subr.mxu0 0.0
  %3381 = vmatpush2.msra.mxu0 0.0
  %3382 = vmatprep.subr.mxu0 0.0
  %3383 = vmatpush2.msra.mxu0 0.0
  %3384 = vmatprep.subr.mxu0 0.0
  %3385 = vmatpush2.msra.mxu0 0.0
  %3386 = vmatprep.subr.mxu0 0.0
  %3387 = vmatpush2.msra.mxu0 0.0
  %3388 = vmatprep.subr.mxu0 0.0
  %3389 = vmatpush2.msra.mxu0 0.0
  %3390 = vmatprep.subr.mxu0 0.0
  %3391 = vmatpush2.msra.mxu0 0.0
  %3392 = vmatprep.subr.mxu0 0.0
  %3393 = vmatpush2.msra.mxu0 0.0
  %3394 = vmatprep.subr.mxu0 0.0
  %3395 = vmatpush2.msra.mxu0 0.0
  %3396 = vmatprep.subr.mxu0 0.0
  %3397 = vmatpush2.msra.mxu0 0.0
  %3398 = vmatprep.subr.mxu0 0.0
  %3399 = vmatpush2.msra.mxu0 0.0
  %3400 = vmatprep.subr.mxu0 0.0
  %3401 = vmatpush2.msra.mxu0 0.0
  %3402 = vmatprep.subr.mxu0 0.0
  %3403 = vmatpush2.msra.mxu0 0.0
  %3404 = vmatprep.subr.mxu0 0.0
  %3405 = vmatpush2.msra.mxu0 0.0
  %3406 = vmatprep.mubr.f32.mxu0 0.0
  %3407 = vmatmul.mubr.f32.gmra.mxu0 %v3340
  %v3408 = vpop.f32.mrf.mxu0
  %v3409 = vadd.f32 0.0, %v3408
  %v3410 = vpop.f32.mrf.mxu0
  %3411 = vdwg.mxu0
  %v3412 = vadd.f32 %v515, %v3409
  %v3413 = vmul.f32 %v3412, %v136
  %v3414 = vtanh.pop %v3413
  %v3415 = vmul.f32 %v3414, 0.5
  %v3416 = vadd.f32 %v3415, 0.5
  %v3417 = vsel %vm135, %v3414, %v3416
  %v3418 = vmul.f32 %v3417, %v3335
  %3420 = vrot.lane.b32.xlu0 %v3417, 64
  %v3421 = vpop.permute.xlu0 %3420
  %v3423 = vmul.f32 %v3417, %v3421
  %3425 = vrot.lane.b32.xlu0 %v3423, 32
  %v3426 = vpop.permute.xlu0 %3425
  %v3428 = vadd.f32 %v3418, %v3426
  %v3429 = vtanh.pop %v3428
  %3431 = vrot.lane.b32.xlu0 %v3429, 64
  %v3432 = vpop.permute.xlu0 %3431
  %v3434 = vmul.f32 %v3417, %v3432
  %3435 = vset.pattern.permute.xlu0 4
  %3436 = vperm.xlu0 %3435, %v2989
  %v3437 = vpop.permute.xlu0 %3436
  %v3439 = vmul.f32 %v3434, %v3437
  %v3440 = vmul.f32 %v3428, %v3437
  %3442 = vrot.lane.b32.xlu0 %v3439, 32
  %v3443 = vpop.permute.xlu0 %3442
  %3445 = vst.msk [vmem:[%s3017 + $0x8] sm:$0xff] %vm186, %v3443
  %v3446 = vsel %vm186, %v3443, 0
  %3448 = vmatprep.subr.mxu0 0.0
  %3449 = vmatpush1.msra.mxu0 0.0
  %3450 = vmatprep.subr.mxu0 0.0
  %3451 = vmatpush1.msra.mxu0 0.0
  %3452 = vmatprep.subr.mxu0 0.0
  %3453 = vmatpush1.msra.mxu0 0.0
  %3454 = vmatprep.subr.mxu0 0.0
  %3455 = vmatpush1.msra.mxu0 0.0
  %3456 = vmatprep.subr.mxu0 0.0
  %3457 = vmatpush1.msra.mxu0 0.0
  %3458 = vmatprep.subr.mxu0 0.0
  %3459 = vmatpush1.msra.mxu0 0.0
  %3460 = vmatprep.subr.mxu0 0.0
  %3461 = vmatpush1.msra.mxu0 0.0
  %3462 = vmatprep.subr.mxu0 0.0
  %3463 = vmatpush1.msra.mxu0 0.0
  %3464 = vmatprep.subr.mxu0 0.0
  %3465 = vmatpush1.msra.mxu0 0.0
  %3466 = vmatprep.subr.mxu0 0.0
  %3467 = vmatpush1.msra.mxu0 0.0
  %3468 = vmatprep.subr.mxu0 0.0
  %3469 = vmatpush1.msra.mxu0 0.0
  %3470 = vmatprep.subr.mxu0 0.0
  %3471 = vmatpush1.msra.mxu0 0.0
  %3472 = vmatprep.subr.mxu0 0.0
  %3473 = vmatpush1.msra.mxu0 %v140
  %3474 = vmatprep.subr.mxu0 0.0
  %3475 = vmatpush1.msra.mxu0 %v139
  %3476 = vmatprep.subr.mxu0 0.0
  %3477 = vmatpush1.msra.mxu0 %v138
  %3478 = vmatprep.subr.mxu0 0.0
  %3479 = vmatpush1.msra.mxu0 %v137
  %3480 = vmatprep.subr.mxu0 0.0
  %3481 = vmatpush2.msra.mxu0 0.0
  %3482 = vmatprep.subr.mxu0 0.0
  %3483 = vmatpush2.msra.mxu0 0.0
  %3484 = vmatprep.subr.mxu0 0.0
  %3485 = vmatpush2.msra.mxu0 0.0
  %3486 = vmatprep.subr.mxu0 0.0
  %3487 = vmatpush2.msra.mxu0 0.0
  %3488 = vmatprep.subr.mxu0 0.0
  %3489 = vmatpush2.msra.mxu0 0.0
  %3490 = vmatprep.subr.mxu0 0.0
  %3491 = vmatpush2.msra.mxu0 0.0
  %3492 = vmatprep.subr.mxu0 0.0
  %3493 = vmatpush2.msra.mxu0 0.0
  %3494 = vmatprep.subr.mxu0 0.0
  %3495 = vmatpush2.msra.mxu0 0.0
  %3496 = vmatprep.subr.mxu0 0.0
  %3497 = vmatpush2.msra.mxu0 0.0
  %3498 = vmatprep.subr.mxu0 0.0
  %3499 = vmatpush2.msra.mxu0 0.0
  %3500 = vmatprep.subr.mxu0 0.0
  %3501 = vmatpush2.msra.mxu0 0.0
  %3502 = vmatprep.subr.mxu0 0.0
  %3503 = vmatpush2.msra.mxu0 0.0
  %3504 = vmatprep.subr.mxu0 0.0
  %3505 = vmatpush2.msra.mxu0 0.0
  %3506 = vmatprep.subr.mxu0 0.0
  %3507 = vmatpush2.msra.mxu0 0.0
  %3508 = vmatprep.subr.mxu0 0.0
  %3509 = vmatpush2.msra.mxu0 0.0
  %3510 = vmatprep.subr.mxu0 0.0
  %3511 = vmatpush2.msra.mxu0 0.0
  %3512 = vmatprep.mubr.f32.mxu0 0.0
  %3513 = vmatmul.mubr.f32.gmra.mxu0 %v3446
  %v3514 = vpop.f32.mrf.mxu0
  %v3515 = vadd.f32 0.0, %v3514
  %v3516 = vpop.f32.mrf.mxu0
  %3517 = vdwg.mxu0
  %v3518 = vadd.f32 %v520, %v3515
  %v3519 = vmul.f32 %v3518, %v136
  %v3520 = vtanh.pop %v3519
  %v3521 = vmul.f32 %v3520, 0.5
  %v3522 = vadd.f32 %v3521, 0.5
  %v3523 = vsel %vm135, %v3520, %v3522
  %v3524 = vmul.f32 %v3523, %v3440
  %3526 = vrot.lane.b32.xlu0 %v3523, 64
  %v3527 = vpop.permute.xlu0 %3526
  %v3529 = vmul.f32 %v3523, %v3527
  %3531 = vrot.lane.b32.xlu0 %v3529, 32
  %v3532 = vpop.permute.xlu0 %3531
  %v3534 = vadd.f32 %v3524, %v3532
  %v3535 = vtanh.pop %v3534
  %3537 = vrot.lane.b32.xlu0 %v3535, 64
  %v3538 = vpop.permute.xlu0 %3537
  %v3540 = vmul.f32 %v3523, %v3538
  %3541 = vset.pattern.permute.xlu0 5
  %3542 = vperm.xlu0 %3541, %v2989
  %v3543 = vpop.permute.xlu0 %3542
  %v3545 = vmul.f32 %v3540, %v3543
  %v3546 = vmul.f32 %v3534, %v3543
  %3548 = vrot.lane.b32.xlu0 %v3545, 64
  %v3549 = vpop.permute.xlu0 %3548
  %3551 = vst.msk [vmem:[%s3017 + $0x8] sm:$0xff] %vm733, %v3549
  %3552 = vrot.lane.b32.xlu0 %v3545, 32
  %v3553 = vpop.permute.xlu0 %3552
  %v3554 = vsel %vm186, %v3553, 0
  %3556 = vmatprep.subr.mxu0 0.0
  %3557 = vmatpush1.msra.mxu0 0.0
  %3558 = vmatprep.subr.mxu0 0.0
  %3559 = vmatpush1.msra.mxu0 0.0
  %3560 = vmatprep.subr.mxu0 0.0
  %3561 = vmatpush1.msra.mxu0 0.0
  %3562 = vmatprep.subr.mxu0 0.0
  %3563 = vmatpush1.msra.mxu0 0.0
  %3564 = vmatprep.subr.mxu0 0.0
  %3565 = vmatpush1.msra.mxu0 0.0
  %3566 = vmatprep.subr.mxu0 0.0
  %3567 = vmatpush1.msra.mxu0 0.0
  %3568 = vmatprep.subr.mxu0 0.0
  %3569 = vmatpush1.msra.mxu0 0.0
  %3570 = vmatprep.subr.mxu0 0.0
  %3571 = vmatpush1.msra.mxu0 0.0
  %3572 = vmatprep.subr.mxu0 0.0
  %3573 = vmatpush1.msra.mxu0 0.0
  %3574 = vmatprep.subr.mxu0 0.0
  %3575 = vmatpush1.msra.mxu0 0.0
  %3576 = vmatprep.subr.mxu0 0.0
  %3577 = vmatpush1.msra.mxu0 0.0
  %3578 = vmatprep.subr.mxu0 0.0
  %3579 = vmatpush1.msra.mxu0 0.0
  %3580 = vmatprep.subr.mxu0 0.0
  %3581 = vmatpush1.msra.mxu0 %v140
  %3582 = vmatprep.subr.mxu0 0.0
  %3583 = vmatpush1.msra.mxu0 %v139
  %3584 = vmatprep.subr.mxu0 0.0
  %3585 = vmatpush1.msra.mxu0 %v138
  %3586 = vmatprep.subr.mxu0 0.0
  %3587 = vmatpush1.msra.mxu0 %v137
  %3588 = vmatprep.subr.mxu0 0.0
  %3589 = vmatpush2.msra.mxu0 0.0
  %3590 = vmatprep.subr.mxu0 0.0
  %3591 = vmatpush2.msra.mxu0 0.0
  %3592 = vmatprep.subr.mxu0 0.0
  %3593 = vmatpush2.msra.mxu0 0.0
  %3594 = vmatprep.subr.mxu0 0.0
  %3595 = vmatpush2.msra.mxu0 0.0
  %3596 = vmatprep.subr.mxu0 0.0
  %3597 = vmatpush2.msra.mxu0 0.0
  %3598 = vmatprep.subr.mxu0 0.0
  %3599 = vmatpush2.msra.mxu0 0.0
  %3600 = vmatprep.subr.mxu0 0.0
  %3601 = vmatpush2.msra.mxu0 0.0
  %3602 = vmatprep.subr.mxu0 0.0
  %3603 = vmatpush2.msra.mxu0 0.0
  %3604 = vmatprep.subr.mxu0 0.0
  %3605 = vmatpush2.msra.mxu0 0.0
  %3606 = vmatprep.subr.mxu0 0.0
  %3607 = vmatpush2.msra.mxu0 0.0
  %3608 = vmatprep.subr.mxu0 0.0
  %3609 = vmatpush2.msra.mxu0 0.0
  %3610 = vmatprep.subr.mxu0 0.0
  %3611 = vmatpush2.msra.mxu0 0.0
  %3612 = vmatprep.subr.mxu0 0.0
  %3613 = vmatpush2.msra.mxu0 0.0
  %3614 = vmatprep.subr.mxu0 0.0
  %3615 = vmatpush2.msra.mxu0 0.0
  %3616 = vmatprep.subr.mxu0 0.0
  %3617 = vmatpush2.msra.mxu0 0.0
  %3618 = vmatprep.subr.mxu0 0.0
  %3619 = vmatpush2.msra.mxu0 0.0
  %3620 = vmatprep.mubr.f32.mxu0 0.0
  %3621 = vmatmul.mubr.f32.gmra.mxu0 %v3554
  %v3622 = vpop.f32.mrf.mxu0
  %v3623 = vadd.f32 0.0, %v3622
  %v3624 = vpop.f32.mrf.mxu0
  %3625 = vdwg.mxu0
  %v3626 = vadd.f32 %v525, %v3623
  %v3627 = vmul.f32 %v3626, %v136
  %v3628 = vtanh.pop %v3627
  %v3629 = vmul.f32 %v3628, 0.5
  %v3630 = vadd.f32 %v3629, 0.5
  %v3631 = vsel %vm135, %v3628, %v3630
  %v3632 = vmul.f32 %v3631, %v3546
  %3634 = vrot.lane.b32.xlu0 %v3631, 64
  %v3635 = vpop.permute.xlu0 %3634
  %v3637 = vmul.f32 %v3631, %v3635
  %3639 = vrot.lane.b32.xlu0 %v3637, 32
  %v3640 = vpop.permute.xlu0 %3639
  %v3642 = vadd.f32 %v3632, %v3640
  %v3643 = vtanh.pop %v3642
  %3645 = vrot.lane.b32.xlu0 %v3643, 64
  %v3646 = vpop.permute.xlu0 %3645
  %v3648 = vmul.f32 %v3631, %v3646
  %3649 = vset.pattern.permute.xlu0 6
  %3650 = vperm.xlu0 %3649, %v2989
  %v3651 = vpop.permute.xlu0 %3650
  %v3653 = vmul.f32 %v3648, %v3651
  %v3654 = vmul.f32 %v3642, %v3651
  %3656 = vrot.lane.b32.xlu0 %v3653, 96
  %v3657 = vpop.permute.xlu0 %3656
  %3659 = vst.msk [vmem:[%s3017 + $0x8] sm:$0xff] %vm836, %v3657
  %3660 = vrot.lane.b32.xlu0 %v3653, 32
  %v3661 = vpop.permute.xlu0 %3660
  %v3662 = vsel %vm186, %v3661, 0
  %3664 = vmatprep.subr.mxu0 0.0
  %3665 = vmatpush1.msra.mxu0 0.0
  %3666 = vmatprep.subr.mxu0 0.0
  %3667 = vmatpush1.msra.mxu0 0.0
  %3668 = vmatprep.subr.mxu0 0.0
  %3669 = vmatpush1.msra.mxu0 0.0
  %3670 = vmatprep.subr.mxu0 0.0
  %3671 = vmatpush1.msra.mxu0 0.0
  %3672 = vmatprep.subr.mxu0 0.0
  %3673 = vmatpush1.msra.mxu0 0.0
  %3674 = vmatprep.subr.mxu0 0.0
  %3675 = vmatpush1.msra.mxu0 0.0
  %3676 = vmatprep.subr.mxu0 0.0
  %3677 = vmatpush1.msra.mxu0 0.0
  %3678 = vmatprep.subr.mxu0 0.0
  %3679 = vmatpush1.msra.mxu0 0.0
  %3680 = vmatprep.subr.mxu0 0.0
  %3681 = vmatpush1.msra.mxu0 0.0
  %3682 = vmatprep.subr.mxu0 0.0
  %3683 = vmatpush1.msra.mxu0 0.0
  %3684 = vmatprep.subr.mxu0 0.0
  %3685 = vmatpush1.msra.mxu0 0.0
  %3686 = vmatprep.subr.mxu0 0.0
  %3687 = vmatpush1.msra.mxu0 0.0
  %3688 = vmatprep.subr.mxu0 0.0
  %3689 = vmatpush1.msra.mxu0 %v140
  %3690 = vmatprep.subr.mxu0 0.0
  %3691 = vmatpush1.msra.mxu0 %v139
  %3692 = vmatprep.subr.mxu0 0.0
  %3693 = vmatpush1.msra.mxu0 %v138
  %3694 = vmatprep.subr.mxu0 0.0
  %3695 = vmatpush1.msra.mxu0 %v137
  %3696 = vmatprep.subr.mxu0 0.0
  %3697 = vmatpush2.msra.mxu0 0.0
  %3698 = vmatprep.subr.mxu0 0.0
  %3699 = vmatpush2.msra.mxu0 0.0
  %3700 = vmatprep.subr.mxu0 0.0
  %3701 = vmatpush2.msra.mxu0 0.0
  %3702 = vmatprep.subr.mxu0 0.0
  %3703 = vmatpush2.msra.mxu0 0.0
  %3704 = vmatprep.subr.mxu0 0.0
  %3705 = vmatpush2.msra.mxu0 0.0
  %3706 = vmatprep.subr.mxu0 0.0
  %3707 = vmatpush2.msra.mxu0 0.0
  %3708 = vmatprep.subr.mxu0 0.0
  %3709 = vmatpush2.msra.mxu0 0.0
  %3710 = vmatprep.subr.mxu0 0.0
  %3711 = vmatpush2.msra.mxu0 0.0
  %3712 = vmatprep.subr.mxu0 0.0
  %3713 = vmatpush2.msra.mxu0 0.0
  %3714 = vmatprep.subr.mxu0 0.0
  %3715 = vmatpush2.msra.mxu0 0.0
  %3716 = vmatprep.subr.mxu0 0.0
  %3717 = vmatpush2.msra.mxu0 0.0
  %3718 = vmatprep.subr.mxu0 0.0
  %3719 = vmatpush2.msra.mxu0 0.0
  %3720 = vmatprep.subr.mxu0 0.0
  %3721 = vmatpush2.msra.mxu0 0.0
  %3722 = vmatprep.subr.mxu0 0.0
  %3723 = vmatpush2.msra.mxu0 0.0
  %3724 = vmatprep.subr.mxu0 0.0
  %3725 = vmatpush2.msra.mxu0 0.0
  %3726 = vmatprep.subr.mxu0 0.0
  %3727 = vmatpush2.msra.mxu0 0.0
  %3728 = vmatprep.mubr.f32.mxu0 0.0
  %3729 = vmatmul.mubr.f32.gmra.mxu0 %v3662
  %v3730 = vpop.f32.mrf.mxu0
  %v3731 = vadd.f32 0.0, %v3730
  %v3732 = vpop.f32.mrf.mxu0
  %3733 = vdwg.mxu0
  %v3734 = vadd.f32 %v530, %v3731
  %v3735 = vmul.f32 %v3734, %v136
  %v3736 = vtanh.pop %v3735
  %v3737 = vmul.f32 %v3736, 0.5
  %v3738 = vadd.f32 %v3737, 0.5
  %v3739 = vsel %vm135, %v3736, %v3738
  %v3740 = vmul.f32 %v3739, %v3654
  %3742 = vrot.lane.b32.xlu0 %v3739, 64
  %v3743 = vpop.permute.xlu0 %3742
  %v3745 = vmul.f32 %v3739, %v3743
  %3747 = vrot.lane.b32.xlu0 %v3745, 32
  %v3748 = vpop.permute.xlu0 %3747
  %v3750 = vadd.f32 %v3740, %v3748
  %v3751 = vtanh.pop %v3750
  %3753 = vrot.lane.b32.xlu0 %v3751, 64
  %v3754 = vpop.permute.xlu0 %3753
  %v3756 = vmul.f32 %v3739, %v3754
  %3757 = vset.pattern.permute.xlu0 7
  %3758 = vperm.xlu0 %3757, %v2989
  %v3759 = vpop.permute.xlu0 %3758
  %v3761 = vmul.f32 %v3756, %v3759
  %3762 = vst.msk [vmem:[%s3017 + $0x8] sm:$0xff] %vm935, %v3761
  %3764 = vset.pattern.permute.xlu0 1
  %3765 = vperm.xlu0 %3764, %v130
  %v3766 = vpop.permute.xlu0 %3765
  %v3768 = vmul.f32 %v3011, %v3766
  %v3769 = vadd.f32 %v3768, 0.0
  %3770 = vset.pattern.permute.xlu0 2
  %3771 = vperm.xlu0 %3770, %v130
  %v3772 = vpop.permute.xlu0 %3771
  %v3774 = vmul.f32 %v3118, %v3772
  %v3775 = vadd.f32 %v3769, %v3774
  %3776 = vset.pattern.permute.xlu0 3
  %3777 = vperm.xlu0 %3776, %v130
  %v3778 = vpop.permute.xlu0 %3777
  %v3780 = vmul.f32 %v3226, %v3778
  %v3781 = vadd.f32 %v3775, %v3780
  %3782 = vset.pattern.permute.xlu0 4
  %3783 = vperm.xlu0 %3782, %v130
  %v3784 = vpop.permute.xlu0 %3783
  %v3786 = vmul.f32 %v3334, %v3784
  %v3787 = vadd.f32 %v3781, %v3786
  %3788 = vset.pattern.permute.xlu0 5
  %3789 = vperm.xlu0 %3788, %v130
  %v3790 = vpop.permute.xlu0 %3789
  %v3792 = vmul.f32 %v3439, %v3790
  %v3793 = vadd.f32 %v3787, %v3792
  %3794 = vset.pattern.permute.xlu0 6
  %3795 = vperm.xlu0 %3794, %v130
  %v3796 = vpop.permute.xlu0 %3795
  %v3798 = vmul.f32 %v3545, %v3796
  %v3799 = vadd.f32 %v3793, %v3798
  %3800 = vset.pattern.permute.xlu0 7
  %3801 = vperm.xlu0 %3800, %v130
  %v3802 = vpop.permute.xlu0 %3801
  %v3804 = vmul.f32 %v3653, %v3802
  %v3805 = vadd.f32 %v3799, %v3804
  %3807 = vrot.lane.b32.xlu0 %v3805, 32
  %v3808 = vpop.permute.xlu0 %3807
  %v3809 = vsel %vm186, %v3808, 0
  %3811 = vmatprep.subr.mxu0 0.0
  %3812 = vmatpush1.msra.mxu0 0.0
  %3813 = vmatprep.subr.mxu0 0.0
  %3814 = vmatpush1.msra.mxu0 0.0
  %3815 = vmatprep.subr.mxu0 0.0
  %3816 = vmatpush1.msra.mxu0 0.0
  %3817 = vmatprep.subr.mxu0 0.0
  %3818 = vmatpush1.msra.mxu0 0.0
  %3819 = vmatprep.subr.mxu0 0.0
  %3820 = vmatpush1.msra.mxu0 0.0
  %3821 = vmatprep.subr.mxu0 0.0
  %3822 = vmatpush1.msra.mxu0 0.0
  %3823 = vmatprep.subr.mxu0 0.0
  %3824 = vmatpush1.msra.mxu0 0.0
  %3825 = vmatprep.subr.mxu0 0.0
  %3826 = vmatpush1.msra.mxu0 0.0
  %3827 = vmatprep.subr.mxu0 0.0
  %3828 = vmatpush1.msra.mxu0 0.0
  %3829 = vmatprep.subr.mxu0 0.0
  %3830 = vmatpush1.msra.mxu0 0.0
  %3831 = vmatprep.subr.mxu0 0.0
  %3832 = vmatpush1.msra.mxu0 0.0
  %3833 = vmatprep.subr.mxu0 0.0
  %3834 = vmatpush1.msra.mxu0 0.0
  %3835 = vmatprep.subr.mxu0 0.0
  %3836 = vmatpush1.msra.mxu0 %v151
  %3837 = vmatprep.subr.mxu0 0.0
  %3838 = vmatpush1.msra.mxu0 %v150
  %3839 = vmatprep.subr.mxu0 0.0
  %3840 = vmatpush1.msra.mxu0 %v149
  %3841 = vmatprep.subr.mxu0 0.0
  %3842 = vmatpush1.msra.mxu0 %v148
  %3843 = vmatprep.subr.mxu0 0.0
  %3844 = vmatpush2.msra.mxu0 0.0
  %3845 = vmatprep.subr.mxu0 0.0
  %3846 = vmatpush2.msra.mxu0 0.0
  %3847 = vmatprep.subr.mxu0 0.0
  %3848 = vmatpush2.msra.mxu0 0.0
  %3849 = vmatprep.subr.mxu0 0.0
  %3850 = vmatpush2.msra.mxu0 0.0
  %3851 = vmatprep.subr.mxu0 0.0
  %3852 = vmatpush2.msra.mxu0 0.0
  %3853 = vmatprep.subr.mxu0 0.0
  %3854 = vmatpush2.msra.mxu0 0.0
  %3855 = vmatprep.subr.mxu0 0.0
  %3856 = vmatpush2.msra.mxu0 0.0
  %3857 = vmatprep.subr.mxu0 0.0
  %3858 = vmatpush2.msra.mxu0 0.0
  %3859 = vmatprep.subr.mxu0 0.0
  %3860 = vmatpush2.msra.mxu0 0.0
  %3861 = vmatprep.subr.mxu0 0.0
  %3862 = vmatpush2.msra.mxu0 0.0
  %3863 = vmatprep.subr.mxu0 0.0
  %3864 = vmatpush2.msra.mxu0 0.0
  %3865 = vmatprep.subr.mxu0 0.0
  %3866 = vmatpush2.msra.mxu0 0.0
  %3867 = vmatprep.subr.mxu0 0.0
  %3868 = vmatpush2.msra.mxu0 0.0
  %3869 = vmatprep.subr.mxu0 0.0
  %3870 = vmatpush2.msra.mxu0 0.0
  %3871 = vmatprep.subr.mxu0 0.0
  %3872 = vmatpush2.msra.mxu0 0.0
  %3873 = vmatprep.subr.mxu0 0.0
  %3874 = vmatpush2.msra.mxu0 0.0
  %3875 = vmatprep.mubr.f32.mxu0 0.0
  %3876 = vmatmul.mubr.f32.gmra.mxu0 %v3809
  %v3877 = vpop.f32.mrf.mxu0
  %v3878 = vadd.f32 %v1633, %v3877
  %v3879 = vpop.f32.mrf.mxu0
  %3880 = vdwg.mxu0
  %v3881 = vmax.f32 %v3878, 0.0
  %v3883 = vsel %vm186, %v3881, 0
  %3885 = vmatprep.subr.mxu0 0.0
  %3886 = vmatpush1.msra.mxu0 0.0
  %3887 = vmatprep.subr.mxu0 0.0
  %3888 = vmatpush1.msra.mxu0 0.0
  %3889 = vmatprep.subr.mxu0 0.0
  %3890 = vmatpush1.msra.mxu0 0.0
  %3891 = vmatprep.subr.mxu0 0.0
  %3892 = vmatpush1.msra.mxu0 0.0
  %3893 = vmatprep.subr.mxu0 0.0
  %3894 = vmatpush1.msra.mxu0 0.0
  %3895 = vmatprep.subr.mxu0 0.0
  %3896 = vmatpush1.msra.mxu0 0.0
  %3897 = vmatprep.subr.mxu0 0.0
  %3898 = vmatpush1.msra.mxu0 0.0
  %3899 = vmatprep.subr.mxu0 0.0
  %3900 = vmatpush1.msra.mxu0 0.0
  %3901 = vmatprep.subr.mxu0 0.0
  %3902 = vmatpush1.msra.mxu0 0.0
  %3903 = vmatprep.subr.mxu0 0.0
  %3904 = vmatpush1.msra.mxu0 0.0
  %3905 = vmatprep.subr.mxu0 0.0
  %3906 = vmatpush1.msra.mxu0 0.0
  %3907 = vmatprep.subr.mxu0 0.0
  %3908 = vmatpush1.msra.mxu0 0.0
  %3909 = vmatprep.subr.mxu0 0.0
  %3910 = vmatpush1.msra.mxu0 %v156
  %3911 = vmatprep.subr.mxu0 0.0
  %3912 = vmatpush1.msra.mxu0 %v155
  %3913 = vmatprep.subr.mxu0 0.0
  %3914 = vmatpush1.msra.mxu0 %v154
  %3915 = vmatprep.subr.mxu0 0.0
  %3916 = vmatpush1.msra.mxu0 %v153
  %3917 = vmatprep.subr.mxu0 0.0
  %3918 = vmatpush2.msra.mxu0 0.0
  %3919 = vmatprep.subr.mxu0 0.0
  %3920 = vmatpush2.msra.mxu0 0.0
  %3921 = vmatprep.subr.mxu0 0.0
  %3922 = vmatpush2.msra.mxu0 0.0
  %3923 = vmatprep.subr.mxu0 0.0
  %3924 = vmatpush2.msra.mxu0 0.0
  %3925 = vmatprep.subr.mxu0 0.0
  %3926 = vmatpush2.msra.mxu0 0.0
  %3927 = vmatprep.subr.mxu0 0.0
  %3928 = vmatpush2.msra.mxu0 0.0
  %3929 = vmatprep.subr.mxu0 0.0
  %3930 = vmatpush2.msra.mxu0 0.0
  %3931 = vmatprep.subr.mxu0 0.0
  %3932 = vmatpush2.msra.mxu0 0.0
  %3933 = vmatprep.subr.mxu0 0.0
  %3934 = vmatpush2.msra.mxu0 0.0
  %3935 = vmatprep.subr.mxu0 0.0
  %3936 = vmatpush2.msra.mxu0 0.0
  %3937 = vmatprep.subr.mxu0 0.0
  %3938 = vmatpush2.msra.mxu0 0.0
  %3939 = vmatprep.subr.mxu0 0.0
  %3940 = vmatpush2.msra.mxu0 0.0
  %3941 = vmatprep.subr.mxu0 0.0
  %3942 = vmatpush2.msra.mxu0 0.0
  %3943 = vmatprep.subr.mxu0 0.0
  %3944 = vmatpush2.msra.mxu0 0.0
  %3945 = vmatprep.subr.mxu0 0.0
  %3946 = vmatpush2.msra.mxu0 0.0
  %3947 = vmatprep.subr.mxu0 0.0
  %3948 = vmatpush2.msra.mxu0 0.0
  %3949 = vmatprep.mubr.f32.mxu0 0.0
  %3950 = vmatmul.mubr.f32.gmra.mxu0 %v3883
  %v3951 = vpop.f32.mrf.mxu0
  %v3952 = vadd.f32 %v1715, %v3951
  %v3953 = vpop.f32.mrf.mxu0
  %3954 = vdwg.mxu0
  %s3955 = scalar_lea.vmem %s61, 16
  %3956 = vst.msk [vmem:[%s3955] sm:$0xff] %vm1559, 0.0
  %3957 = vrot.lane.b32.xlu0 %v130, 8
  %v3958 = vpop.permute.xlu0 %3957
  %3960 = vst.msk [vmem:[%s3955] sm:$0xff] %vm1800, %v3958
  %3961 = vst.msk [vmem:[%s3955] sm:$0xff] %vm1806, 0.0
  %3963 = vrot.lane.b32.xlu0 %v3952, 24
  %v3964 = vpop.permute.xlu0 %3963
  %3966 = vst.msk [vmem:[%s3955] sm:$0xff] %vm1812, %v3964
  %3967 = vst.msk [vmem:[%s3955] sm:$0xff] %vm1814, 0.0
  %v3968 = vld [vmem:[%s31] sm:$0xff]
  %v3969 = vld [vmem:[%s33] sm:$0x1]
  %v3971 = vlaneseq
  %v3972 = vshrl.u32 %v3971, 7
  %v3973 = vsub.s32 0, %v3972
  %v3974 = vrot.slane %v3969, %v3973
  %v3976 = vsel %vm1559, %v1787, 0
  %v3978 = vsel %vm1559, %v2981, 0
  %v3980 = vsel %vm1559, %v3952, 0
  %3982 = vmatprep.subr.mxu0 0.0
  %3983 = vmatpush1.msra.mxu0 0.0
  %3984 = vmatprep.subr.mxu0 0.0
  %3985 = vmatpush1.msra.mxu0 0.0
  %3986 = vmatprep.subr.mxu0 0.0
  %3987 = vmatpush1.msra.mxu0 0.0
  %3988 = vmatprep.subr.mxu0 0.0
  %3989 = vmatpush1.msra.mxu0 0.0
  %3990 = vmatprep.subr.mxu0 0.0
  %3991 = vmatpush1.msra.mxu0 0.0
  %3992 = vmatprep.subr.mxu0 0.0
  %3993 = vmatpush1.msra.mxu0 0.0
  %3994 = vmatprep.subr.mxu0 0.0
  %3995 = vmatpush1.msra.mxu0 0.0
  %3996 = vmatprep.subr.mxu0 0.0
  %3997 = vmatpush1.msra.mxu0 0.0
  %3998 = vmatprep.subr.mxu0 0.0
  %3999 = vmatpush1.msra.mxu0 0.0
  %4000 = vmatprep.subr.mxu0 0.0
  %4001 = vmatpush1.msra.mxu0 0.0
  %4002 = vmatprep.subr.mxu0 0.0
  %4003 = vmatpush1.msra.mxu0 0.0
  %4004 = vmatprep.subr.mxu0 0.0
  %4005 = vmatpush1.msra.mxu0 0.0
  %4006 = vmatprep.subr.mxu0 0.0
  %4007 = vmatpush1.msra.mxu0 0.0
  %4008 = vmatprep.subr.mxu0 0.0
  %4009 = vmatpush1.msra.mxu0 0.0
  %4010 = vmatprep.subr.mxu0 0.0
  %4011 = vmatpush1.msra.mxu0 0.0
  %4012 = vmatprep.subr.mxu0 0.0
  %4013 = vmatpush1.msra.mxu0 %v3968
  %4014 = vmatprep.subr.mxu0 0.0
  %4015 = vmatpush2.msra.mxu0 0.0
  %4016 = vmatprep.subr.mxu0 0.0
  %4017 = vmatpush2.msra.mxu0 0.0
  %4018 = vmatprep.subr.mxu0 0.0
  %4019 = vmatpush2.msra.mxu0 0.0
  %4020 = vmatprep.subr.mxu0 0.0
  %4021 = vmatpush2.msra.mxu0 0.0
  %4022 = vmatprep.subr.mxu0 0.0
  %4023 = vmatpush2.msra.mxu0 0.0
  %4024 = vmatprep.subr.mxu0 0.0
  %4025 = vmatpush2.msra.mxu0 0.0
  %4026 = vmatprep.subr.mxu0 0.0
  %4027 = vmatpush2.msra.mxu0 0.0
  %4028 = vmatprep.subr.mxu0 0.0
  %4029 = vmatpush2.msra.mxu0 0.0
  %4030 = vmatprep.subr.mxu0 0.0
  %4031 = vmatpush2.msra.mxu0 0.0
  %4032 = vmatprep.subr.mxu0 0.0
  %4033 = vmatpush2.msra.mxu0 0.0
  %4034 = vmatprep.subr.mxu0 0.0
  %4035 = vmatpush2.msra.mxu0 0.0
  %4036 = vmatprep.subr.mxu0 0.0
  %4037 = vmatpush2.msra.mxu0 0.0
  %4038 = vmatprep.subr.mxu0 0.0
  %4039 = vmatpush2.msra.mxu0 0.0
  %4040 = vmatprep.subr.mxu0 0.0
  %4041 = vmatpush2.msra.mxu0 0.0
  %4042 = vmatprep.subr.mxu0 0.0
  %4043 = vmatpush2.msra.mxu0 0.0
  %4044 = vmatprep.subr.mxu0 0.0
  %4045 = vmatpush2.msra.mxu0 0.0
  %4046 = vmatprep.mubr.f32.mxu0 0.0
  %4047 = vmatmul.mubr.f32.gmra.mxu0 %v3976
  %v4048 = vpop.f32.mrf.mxu0
  %v4049 = vadd.f32 %v3974, %v4048
  %v4050 = vpop.f32.mrf.mxu0
  %4051 = vmatprep.mubr.f32.mxu0 0.0
  %4052 = vmatmul.mubr.f32.gmra.mxu0 %v3978
  %v4053 = vpop.f32.mrf.mxu0
  %v4054 = vadd.f32 %v3974, %v4053
  %v4055 = vpop.f32.mrf.mxu0
  %4056 = vmatprep.mubr.f32.mxu0 0.0
  %4057 = vmatmul.mubr.f32.gmra.mxu0 %v3980
  %v4058 = vpop.f32.mrf.mxu0
  %v4059 = vadd.f32 %v3974, %v4058
  %v4060 = vpop.f32.mrf.mxu0
  %4061 = vdwg.mxu0
  %v4062 = vmax.f32 %v4049, 0.0
  %v4063 = vmax.f32 %v4054, 0.0
  %v4064 = vmax.f32 %v4059, 0.0
  %v4065 = vld [vmem:[%s35] sm:$0xff]
  %v4066 = vld [vmem:[%s35 + $0x8] sm:$0xff]
  %v4067 = vld [vmem:[%s35 + $0x10] sm:$0xff]
  %v4068 = vld [vmem:[%s35 + $0x18] sm:$0xff]
  %v4069 = vld [vmem:[%s37] sm:$0x1]
  %v4071 = vlaneseq
  %v4072 = vshrl.u32 %v4071, 7
  %v4073 = vsub.s32 0, %v4072
  %v4074 = vrot.slane %v4069, %v4073
  %v4077 = vsel %vm186, %v4062, 0
  %v4080 = vsel %vm186, %v4063, 0
  %v4083 = vsel %vm186, %v4064, 0
  %4085 = vmatprep.subr.mxu0 0.0
  %4086 = vmatpush1.msra.mxu0 0.0
  %4087 = vmatprep.subr.mxu0 0.0
  %4088 = vmatpush1.msra.mxu0 0.0
  %4089 = vmatprep.subr.mxu0 0.0
  %4090 = vmatpush1.msra.mxu0 0.0
  %4091 = vmatprep.subr.mxu0 0.0
  %4092 = vmatpush1.msra.mxu0 0.0
  %4093 = vmatprep.subr.mxu0 0.0
  %4094 = vmatpush1.msra.mxu0 0.0
  %4095 = vmatprep.subr.mxu0 0.0
  %4096 = vmatpush1.msra.mxu0 0.0
  %4097 = vmatprep.subr.mxu0 0.0
  %4098 = vmatpush1.msra.mxu0 0.0
  %4099 = vmatprep.subr.mxu0 0.0
  %4100 = vmatpush1.msra.mxu0 0.0
  %4101 = vmatprep.subr.mxu0 0.0
  %4102 = vmatpush1.msra.mxu0 0.0
  %4103 = vmatprep.subr.mxu0 0.0
  %4104 = vmatpush1.msra.mxu0 0.0
  %4105 = vmatprep.subr.mxu0 0.0
  %4106 = vmatpush1.msra.mxu0 0.0
  %4107 = vmatprep.subr.mxu0 0.0
  %4108 = vmatpush1.msra.mxu0 0.0
  %4109 = vmatprep.subr.mxu0 0.0
  %4110 = vmatpush1.msra.mxu0 %v4068
  %4111 = vmatprep.subr.mxu0 0.0
  %4112 = vmatpush1.msra.mxu0 %v4067
  %4113 = vmatprep.subr.mxu0 0.0
  %4114 = vmatpush1.msra.mxu0 %v4066
  %4115 = vmatprep.subr.mxu0 0.0
  %4116 = vmatpush1.msra.mxu0 %v4065
  %4117 = vmatprep.subr.mxu0 0.0
  %4118 = vmatpush2.msra.mxu0 0.0
  %4119 = vmatprep.subr.mxu0 0.0
  %4120 = vmatpush2.msra.mxu0 0.0
  %4121 = vmatprep.subr.mxu0 0.0
  %4122 = vmatpush2.msra.mxu0 0.0
  %4123 = vmatprep.subr.mxu0 0.0
  %4124 = vmatpush2.msra.mxu0 0.0
  %4125 = vmatprep.subr.mxu0 0.0
  %4126 = vmatpush2.msra.mxu0 0.0
  %4127 = vmatprep.subr.mxu0 0.0
  %4128 = vmatpush2.msra.mxu0 0.0
  %4129 = vmatprep.subr.mxu0 0.0
  %4130 = vmatpush2.msra.mxu0 0.0
  %4131 = vmatprep.subr.mxu0 0.0
  %4132 = vmatpush2.msra.mxu0 0.0
  %4133 = vmatprep.subr.mxu0 0.0
  %4134 = vmatpush2.msra.mxu0 0.0
  %4135 = vmatprep.subr.mxu0 0.0
  %4136 = vmatpush2.msra.mxu0 0.0
  %4137 = vmatprep.subr.mxu0 0.0
  %4138 = vmatpush2.msra.mxu0 0.0
  %4139 = vmatprep.subr.mxu0 0.0
  %4140 = vmatpush2.msra.mxu0 0.0
  %4141 = vmatprep.subr.mxu0 0.0
  %4142 = vmatpush2.msra.mxu0 0.0
  %4143 = vmatprep.subr.mxu0 0.0
  %4144 = vmatpush2.msra.mxu0 0.0
  %4145 = vmatprep.subr.mxu0 0.0
  %4146 = vmatpush2.msra.mxu0 0.0
  %4147 = vmatprep.subr.mxu0 0.0
  %4148 = vmatpush2.msra.mxu0 0.0
  %4149 = vmatprep.mubr.f32.mxu0 0.0
  %4150 = vmatmul.mubr.f32.gmra.mxu0 %v4077
  %v4151 = vpop.f32.mrf.mxu0
  %v4152 = vadd.f32 %v4074, %v4151
  %v4153 = vpop.f32.mrf.mxu0
  %4154 = vmatprep.mubr.f32.mxu0 0.0
  %4155 = vmatmul.mubr.f32.gmra.mxu0 %v4080
  %v4156 = vpop.f32.mrf.mxu0
  %v4157 = vadd.f32 %v4074, %v4156
  %v4158 = vpop.f32.mrf.mxu0
  %4159 = vmatprep.mubr.f32.mxu0 0.0
  %4160 = vmatmul.mubr.f32.gmra.mxu0 %v4083
  %v4161 = vpop.f32.mrf.mxu0
  %v4162 = vadd.f32 %v4074, %v4161
  %v4163 = vpop.f32.mrf.mxu0
  %4164 = vdwg.mxu0
  %v4165 = vld [vmem:[%s39] sm:$0xff]
  %v4166 = vld [vmem:[%s39 + $0x8] sm:$0xff]
  %v4167 = vld [vmem:[%s39 + $0x10] sm:$0xff]
  %v4168 = vld [vmem:[%s39 + $0x18] sm:$0xff]
  %v4169 = vld [vmem:[%s41] sm:$0x1]
  %v4171 = vlaneseq
  %v4172 = vshrl.u32 %v4171, 7
  %v4173 = vsub.s32 0, %v4172
  %v4174 = vrot.slane %v4169, %v4173
  %v4177 = vsel %vm186, %v4152, 0
  %v4180 = vsel %vm186, %v4157, 0
  %v4183 = vsel %vm186, %v4162, 0
  %4185 = vmatprep.subr.mxu0 0.0
  %4186 = vmatpush1.msra.mxu0 0.0
  %4187 = vmatprep.subr.mxu0 0.0
  %4188 = vmatpush1.msra.mxu0 0.0
  %4189 = vmatprep.subr.mxu0 0.0
  %4190 = vmatpush1.msra.mxu0 0.0
  %4191 = vmatprep.subr.mxu0 0.0
  %4192 = vmatpush1.msra.mxu0 0.0
  %4193 = vmatprep.subr.mxu0 0.0
  %4194 = vmatpush1.msra.mxu0 0.0
  %4195 = vmatprep.subr.mxu0 0.0
  %4196 = vmatpush1.msra.mxu0 0.0
  %4197 = vmatprep.subr.mxu0 0.0
  %4198 = vmatpush1.msra.mxu0 0.0
  %4199 = vmatprep.subr.mxu0 0.0
  %4200 = vmatpush1.msra.mxu0 0.0
  %4201 = vmatprep.subr.mxu0 0.0
  %4202 = vmatpush1.msra.mxu0 0.0
  %4203 = vmatprep.subr.mxu0 0.0
  %4204 = vmatpush1.msra.mxu0 0.0
  %4205 = vmatprep.subr.mxu0 0.0
  %4206 = vmatpush1.msra.mxu0 0.0
  %4207 = vmatprep.subr.mxu0 0.0
  %4208 = vmatpush1.msra.mxu0 0.0
  %4209 = vmatprep.subr.mxu0 0.0
  %4210 = vmatpush1.msra.mxu0 %v4168
  %4211 = vmatprep.subr.mxu0 0.0
  %4212 = vmatpush1.msra.mxu0 %v4167
  %4213 = vmatprep.subr.mxu0 0.0
  %4214 = vmatpush1.msra.mxu0 %v4166
  %4215 = vmatprep.subr.mxu0 0.0
  %4216 = vmatpush1.msra.mxu0 %v4165
  %4217 = vmatprep.subr.mxu0 0.0
  %4218 = vmatpush2.msra.mxu0 0.0
  %4219 = vmatprep.subr.mxu0 0.0
  %4220 = vmatpush2.msra.mxu0 0.0
  %4221 = vmatprep.subr.mxu0 0.0
  %4222 = vmatpush2.msra.mxu0 0.0
  %4223 = vmatprep.subr.mxu0 0.0
  %4224 = vmatpush2.msra.mxu0 0.0
  %4225 = vmatprep.subr.mxu0 0.0
  %4226 = vmatpush2.msra.mxu0 0.0
  %4227 = vmatprep.subr.mxu0 0.0
  %4228 = vmatpush2.msra.mxu0 0.0
  %4229 = vmatprep.subr.mxu0 0.0
  %4230 = vmatpush2.msra.mxu0 0.0
  %4231 = vmatprep.subr.mxu0 0.0
  %4232 = vmatpush2.msra.mxu0 0.0
  %4233 = vmatprep.subr.mxu0 0.0
  %4234 = vmatpush2.msra.mxu0 0.0
  %4235 = vmatprep.subr.mxu0 0.0
  %4236 = vmatpush2.msra.mxu0 0.0
  %4237 = vmatprep.subr.mxu0 0.0
  %4238 = vmatpush2.msra.mxu0 0.0
  %4239 = vmatprep.subr.mxu0 0.0
  %4240 = vmatpush2.msra.mxu0 0.0
  %4241 = vmatprep.subr.mxu0 0.0
  %4242 = vmatpush2.msra.mxu0 0.0
  %4243 = vmatprep.subr.mxu0 0.0
  %4244 = vmatpush2.msra.mxu0 0.0
  %4245 = vmatprep.subr.mxu0 0.0
  %4246 = vmatpush2.msra.mxu0 0.0
  %4247 = vmatprep.subr.mxu0 0.0
  %4248 = vmatpush2.msra.mxu0 0.0
  %4249 = vmatprep.mubr.f32.mxu0 0.0
  %4250 = vmatmul.mubr.f32.gmra.mxu0 %v4177
  %v4251 = vpop.f32.mrf.mxu0
  %v4252 = vadd.f32 %v4174, %v4251
  %v4253 = vpop.f32.mrf.mxu0
  %4254 = vmatprep.mubr.f32.mxu0 0.0
  %4255 = vmatmul.mubr.f32.gmra.mxu0 %v4180
  %v4256 = vpop.f32.mrf.mxu0
  %v4257 = vadd.f32 %v4174, %v4256
  %v4258 = vpop.f32.mrf.mxu0
  %4259 = vmatprep.mubr.f32.mxu0 0.0
  %4260 = vmatmul.mubr.f32.gmra.mxu0 %v4183
  %v4261 = vpop.f32.mrf.mxu0
  %v4262 = vadd.f32 %v4174, %v4261
  %v4263 = vpop.f32.mrf.mxu0
  %4264 = vdwg.mxu0
  %v4265 = vld [vmem:[%s47] sm:$0xff]
  %v4266 = vld [vmem:[%s47 + $0x8] sm:$0xff]
  %v4267 = vld [vmem:[%s47 + $0x10] sm:$0xff]
  %v4268 = vld [vmem:[%s47 + $0x18] sm:$0xff]
  %v4269 = vld [vmem:[%s51] sm:$0xff]
  %v4270 = vld [vmem:[%s51 + $0x8] sm:$0xff]
  %v4271 = vld [vmem:[%s51 + $0x10] sm:$0xff]
  %v4272 = vld [vmem:[%s51 + $0x18] sm:$0xff]
  %v4273 = vld [vmem:[%s53] sm:$0x1]
  %v4274 = vld [vmem:[%s55] sm:$0xff]
  %v4275 = vld [vmem:[%s55 + $0x8] sm:$0xff]
  %v4276 = vld [vmem:[%s55 + $0x10] sm:$0xff]
  %v4277 = vld [vmem:[%s55 + $0x18] sm:$0xff]
  %v4278 = vld [vmem:[%s57] sm:$0x1]
  %v4279 = vld [vmem:[%s43] sm:$0xff]
  %v4280 = vld [vmem:[%s43 + $0x8] sm:$0xff]
  %v4281 = vld [vmem:[%s43 + $0x10] sm:$0xff]
  %v4282 = vld [vmem:[%s43 + $0x18] sm:$0xff]
  %v4283 = vld [vmem:[%s43 + $0x20] sm:$0xff]
  %v4284 = vld [vmem:[%s43 + $0x28] sm:$0xff]
  %v4285 = vld [vmem:[%s43 + $0x30] sm:$0xff]
  %v4286 = vld [vmem:[%s43 + $0x38] sm:$0xff]
  %v4287 = vld [vmem:[%s43 + $0x40] sm:$0xff]
  %v4288 = vld [vmem:[%s43 + $0x48] sm:$0xff]
  %v4289 = vld [vmem:[%s43 + $0x50] sm:$0xff]
  %v4290 = vld [vmem:[%s43 + $0x58] sm:$0xff]
  %v4291 = vld [vmem:[%s43 + $0x60] sm:$0xff]
  %v4292 = vld [vmem:[%s43 + $0x68] sm:$0xff]
  %v4293 = vld [vmem:[%s43 + $0x70] sm:$0xff]
  %v4294 = vld [vmem:[%s43 + $0x78] sm:$0xff]
  %v4295 = vld [vmem:[%s45] sm:$0xff]
  %v4296 = vld [vmem:[%s45 + $0x8] sm:$0xff]
  %v4297 = vld [vmem:[%s45 + $0x10] sm:$0xff]
  %v4298 = vld [vmem:[%s45 + $0x18] sm:$0xff]
  %v4299 = vld [vmem:[%s49] sm:$0x1]
  %v4301 = vlaneseq
  %v4302 = vshrl.u32 %v4301, 7
  %v4303 = vsub.s32 0, %v4302
  %v4304 = vrot.slane %v4299, %v4303
  %v4307 = vsel %vm186, %v4279, 0
  %v4310 = vsel %vm186, %v4280, 0
  %v4313 = vsel %vm186, %v4281, 0
  %v4316 = vsel %vm186, %v4282, 0
  %v4319 = vsel %vm186, %v4283, 0
  %v4322 = vsel %vm186, %v4284, 0
  %v4325 = vsel %vm186, %v4285, 0
  %v4328 = vsel %vm186, %v4286, 0
  %v4331 = vsel %vm186, %v4287, 0
  %v4334 = vsel %vm186, %v4288, 0
  %v4337 = vsel %vm186, %v4289, 0
  %v4340 = vsel %vm186, %v4290, 0
  %v4343 = vsel %vm186, %v4291, 0
  %v4346 = vsel %vm186, %v4292, 0
  %v4349 = vsel %vm186, %v4293, 0
  %v4352 = vsel %vm186, %v4294, 0
  %4354 = vmatprep.subr.mxu0 0.0
  %4355 = vmatpush1.msra.mxu0 0.0
  %4356 = vmatprep.subr.mxu0 0.0
  %4357 = vmatpush1.msra.mxu0 0.0
  %4358 = vmatprep.subr.mxu0 0.0
  %4359 = vmatpush1.msra.mxu0 0.0
  %4360 = vmatprep.subr.mxu0 0.0
  %4361 = vmatpush1.msra.mxu0 0.0
  %4362 = vmatprep.subr.mxu0 0.0
  %4363 = vmatpush1.msra.mxu0 0.0
  %4364 = vmatprep.subr.mxu0 0.0
  %4365 = vmatpush1.msra.mxu0 0.0
  %4366 = vmatprep.subr.mxu0 0.0
  %4367 = vmatpush1.msra.mxu0 0.0
  %4368 = vmatprep.subr.mxu0 0.0
  %4369 = vmatpush1.msra.mxu0 0.0
  %4370 = vmatprep.subr.mxu0 0.0
  %4371 = vmatpush1.msra.mxu0 0.0
  %4372 = vmatprep.subr.mxu0 0.0
  %4373 = vmatpush1.msra.mxu0 0.0
  %4374 = vmatprep.subr.mxu0 0.0
  %4375 = vmatpush1.msra.mxu0 0.0
  %4376 = vmatprep.subr.mxu0 0.0
  %4377 = vmatpush1.msra.mxu0 0.0
  %4378 = vmatprep.subr.mxu0 0.0
  %4379 = vmatpush1.msra.mxu0 %v4298
  %4380 = vmatprep.subr.mxu0 0.0
  %4381 = vmatpush1.msra.mxu0 %v4297
  %4382 = vmatprep.subr.mxu0 0.0
  %4383 = vmatpush1.msra.mxu0 %v4296
  %4384 = vmatprep.subr.mxu0 0.0
  %4385 = vmatpush1.msra.mxu0 %v4295
  %4386 = vmatprep.subr.mxu0 0.0
  %4387 = vmatpush2.msra.mxu0 0.0
  %4388 = vmatprep.subr.mxu0 0.0
  %4389 = vmatpush2.msra.mxu0 0.0
  %4390 = vmatprep.subr.mxu0 0.0
  %4391 = vmatpush2.msra.mxu0 0.0
  %4392 = vmatprep.subr.mxu0 0.0
  %4393 = vmatpush2.msra.mxu0 0.0
  %4394 = vmatprep.subr.mxu0 0.0
  %4395 = vmatpush2.msra.mxu0 0.0
  %4396 = vmatprep.subr.mxu0 0.0
  %4397 = vmatpush2.msra.mxu0 0.0
  %4398 = vmatprep.subr.mxu0 0.0
  %4399 = vmatpush2.msra.mxu0 0.0
  %4400 = vmatprep.subr.mxu0 0.0
  %4401 = vmatpush2.msra.mxu0 0.0
  %4402 = vmatprep.subr.mxu0 0.0
  %4403 = vmatpush2.msra.mxu0 0.0
  %4404 = vmatprep.subr.mxu0 0.0
  %4405 = vmatpush2.msra.mxu0 0.0
  %4406 = vmatprep.subr.mxu0 0.0
  %4407 = vmatpush2.msra.mxu0 0.0
  %4408 = vmatprep.subr.mxu0 0.0
  %4409 = vmatpush2.msra.mxu0 0.0
  %4410 = vmatprep.subr.mxu0 0.0
  %4411 = vmatpush2.msra.mxu0 0.0
  %4412 = vmatprep.subr.mxu0 0.0
  %4413 = vmatpush2.msra.mxu0 0.0
  %4414 = vmatprep.subr.mxu0 0.0
  %4415 = vmatpush2.msra.mxu0 0.0
  %4416 = vmatprep.subr.mxu0 0.0
  %4417 = vmatpush2.msra.mxu0 0.0
  %4418 = vmatprep.mubr.f32.mxu0 0.0
  %4419 = vmatmul.mubr.f32.gmra.mxu0 %v4307
  %v4420 = vpop.f32.mrf.mxu0
  %v4421 = vadd.f32 %v4304, %v4420
  %v4422 = vpop.f32.mrf.mxu0
  %4423 = vmatprep.mubr.f32.mxu0 0.0
  %4424 = vmatmul.mubr.f32.gmra.mxu0 %v4310
  %v4425 = vpop.f32.mrf.mxu0
  %v4426 = vadd.f32 %v4304, %v4425
  %v4427 = vpop.f32.mrf.mxu0
  %4428 = vmatprep.mubr.f32.mxu0 0.0
  %4429 = vmatmul.mubr.f32.gmra.mxu0 %v4313
  %v4430 = vpop.f32.mrf.mxu0
  %v4431 = vadd.f32 %v4304, %v4430
  %v4432 = vpop.f32.mrf.mxu0
  %4433 = vmatprep.mubr.f32.mxu0 0.0
  %4434 = vmatmul.mubr.f32.gmra.mxu0 %v4316
  %v4435 = vpop.f32.mrf.mxu0
  %v4436 = vadd.f32 %v4304, %v4435
  %v4437 = vpop.f32.mrf.mxu0
  %4438 = vmatprep.mubr.f32.mxu0 0.0
  %4439 = vmatmul.mubr.f32.gmra.mxu0 %v4319
  %v4440 = vpop.f32.mrf.mxu0
  %v4441 = vadd.f32 %v4304, %v4440
  %v4442 = vpop.f32.mrf.mxu0
  %4443 = vmatprep.mubr.f32.mxu0 0.0
  %4444 = vmatmul.mubr.f32.gmra.mxu0 %v4322
  %v4445 = vpop.f32.mrf.mxu0
  %v4446 = vadd.f32 %v4304, %v4445
  %v4447 = vpop.f32.mrf.mxu0
  %4448 = vmatprep.mubr.f32.mxu0 0.0
  %4449 = vmatmul.mubr.f32.gmra.mxu0 %v4325
  %v4450 = vpop.f32.mrf.mxu0
  %v4451 = vadd.f32 %v4304, %v4450
  %v4452 = vpop.f32.mrf.mxu0
  %4453 = vmatprep.mubr.f32.mxu0 0.0
  %4454 = vmatmul.mubr.f32.gmra.mxu0 %v4328
  %v4455 = vpop.f32.mrf.mxu0
  %v4456 = vadd.f32 %v4304, %v4455
  %v4457 = vpop.f32.mrf.mxu0
  %4458 = vmatprep.mubr.f32.mxu0 0.0
  %4459 = vmatmul.mubr.f32.gmra.mxu0 %v4331
  %v4460 = vpop.f32.mrf.mxu0
  %v4461 = vadd.f32 %v4304, %v4460
  %v4462 = vpop.f32.mrf.mxu0
  %4463 = vmatprep.mubr.f32.mxu0 0.0
  %4464 = vmatmul.mubr.f32.gmra.mxu0 %v4334
  %v4465 = vpop.f32.mrf.mxu0
  %v4466 = vadd.f32 %v4304, %v4465
  %v4467 = vpop.f32.mrf.mxu0
  %4468 = vmatprep.mubr.f32.mxu0 0.0
  %4469 = vmatmul.mubr.f32.gmra.mxu0 %v4337
  %v4470 = vpop.f32.mrf.mxu0
  %v4471 = vadd.f32 %v4304, %v4470
  %v4472 = vpop.f32.mrf.mxu0
  %4473 = vmatprep.mubr.f32.mxu0 0.0
  %4474 = vmatmul.mubr.f32.gmra.mxu0 %v4340
  %v4475 = vpop.f32.mrf.mxu0
  %v4476 = vadd.f32 %v4304, %v4475
  %v4477 = vpop.f32.mrf.mxu0
  %4478 = vmatprep.mubr.f32.mxu0 0.0
  %4479 = vmatmul.mubr.f32.gmra.mxu0 %v4343
  %v4480 = vpop.f32.mrf.mxu0
  %v4481 = vadd.f32 %v4304, %v4480
  %v4482 = vpop.f32.mrf.mxu0
  %4483 = vmatprep.mubr.f32.mxu0 0.0
  %4484 = vmatmul.mubr.f32.gmra.mxu0 %v4346
  %v4485 = vpop.f32.mrf.mxu0
  %v4486 = vadd.f32 %v4304, %v4485
  %v4487 = vpop.f32.mrf.mxu0
  %4488 = vmatprep.mubr.f32.mxu0 0.0
  %4489 = vmatmul.mubr.f32.gmra.mxu0 %v4349
  %v4490 = vpop.f32.mrf.mxu0
  %v4491 = vadd.f32 %v4304, %v4490
  %v4492 = vpop.f32.mrf.mxu0
  %4493 = vmatprep.mubr.f32.mxu0 0.0
  %4494 = vmatmul.mubr.f32.gmra.mxu0 %v4352
  %v4495 = vpop.f32.mrf.mxu0
  %v4496 = vadd.f32 %v4304, %v4495
  %v4497 = vpop.f32.mrf.mxu0
  %4498 = vdwg.mxu0
  %v4499 = vlaneseq
  %v4500 = vshrl.u32 %v4499, 7
  %v4501 = vsub.s32 0, %v4500
  %v4502 = vrot.slane %v4421, %v4501
  %4503 = vmatprep.subr.mxu0 0.0
  %4504 = vmatpush1.msra.mxu0 0.0
  %4505 = vmatprep.subr.mxu0 0.0
  %4506 = vmatpush1.msra.mxu0 0.0
  %4507 = vmatprep.subr.mxu0 0.0
  %4508 = vmatpush1.msra.mxu0 0.0
  %4509 = vmatprep.subr.mxu0 0.0
  %4510 = vmatpush1.msra.mxu0 0.0
  %4511 = vmatprep.subr.mxu0 0.0
  %4512 = vmatpush1.msra.mxu0 0.0
  %4513 = vmatprep.subr.mxu0 0.0
  %4514 = vmatpush1.msra.mxu0 0.0
  %4515 = vmatprep.subr.mxu0 0.0
  %4516 = vmatpush1.msra.mxu0 0.0
  %4517 = vmatprep.subr.mxu0 0.0
  %4518 = vmatpush1.msra.mxu0 0.0
  %4519 = vmatprep.subr.mxu0 0.0
  %4520 = vmatpush1.msra.mxu0 0.0
  %4521 = vmatprep.subr.mxu0 0.0
  %4522 = vmatpush1.msra.mxu0 0.0
  %4523 = vmatprep.subr.mxu0 0.0
  %4524 = vmatpush1.msra.mxu0 0.0
  %4525 = vmatprep.subr.mxu0 0.0
  %4526 = vmatpush1.msra.mxu0 0.0
  %4527 = vmatprep.subr.mxu0 0.0
  %4528 = vmatpush1.msra.mxu0 %v4268
  %4529 = vmatprep.subr.mxu0 0.0
  %4530 = vmatpush1.msra.mxu0 %v4267
  %4531 = vmatprep.subr.mxu0 0.0
  %4532 = vmatpush1.msra.mxu0 %v4266
  %4533 = vmatprep.subr.mxu0 0.0
  %4534 = vmatpush1.msra.mxu0 %v4265
  %4535 = vmatprep.subr.mxu0 0.0
  %4536 = vmatpush2.msra.mxu0 0.0
  %4537 = vmatprep.subr.mxu0 0.0
  %4538 = vmatpush2.msra.mxu0 0.0
  %4539 = vmatprep.subr.mxu0 0.0
  %4540 = vmatpush2.msra.mxu0 0.0
  %4541 = vmatprep.subr.mxu0 0.0
  %4542 = vmatpush2.msra.mxu0 0.0
  %4543 = vmatprep.subr.mxu0 0.0
  %4544 = vmatpush2.msra.mxu0 0.0
  %4545 = vmatprep.subr.mxu0 0.0
  %4546 = vmatpush2.msra.mxu0 0.0
  %4547 = vmatprep.subr.mxu0 0.0
  %4548 = vmatpush2.msra.mxu0 0.0
  %4549 = vmatprep.subr.mxu0 0.0
  %4550 = vmatpush2.msra.mxu0 0.0
  %4551 = vmatprep.subr.mxu0 0.0
  %4552 = vmatpush2.msra.mxu0 0.0
  %4553 = vmatprep.subr.mxu0 0.0
  %4554 = vmatpush2.msra.mxu0 0.0
  %4555 = vmatprep.subr.mxu0 0.0
  %4556 = vmatpush2.msra.mxu0 0.0
  %4557 = vmatprep.subr.mxu0 0.0
  %4558 = vmatpush2.msra.mxu0 0.0
  %4559 = vmatprep.subr.mxu0 0.0
  %4560 = vmatpush2.msra.mxu0 0.0
  %4561 = vmatprep.subr.mxu0 0.0
  %4562 = vmatpush2.msra.mxu0 0.0
  %4563 = vmatprep.subr.mxu0 0.0
  %4564 = vmatpush2.msra.mxu0 0.0
  %4565 = vmatprep.subr.mxu0 0.0
  %4566 = vmatpush2.msra.mxu0 0.0
  %4567 = vmatprep.mubr.f32.mxu0 0.0
  %4568 = vmatmul.mubr.f32.gmra.mxu0 %v4177
  %v4569 = vpop.f32.mrf.mxu0
  %v4570 = vadd.f32 0.0, %v4569
  %v4571 = vpop.f32.mrf.mxu0
  %4572 = vmatprep.mubr.f32.mxu0 0.0
  %4573 = vmatmul.mubr.f32.gmra.mxu0 %v4180
  %v4574 = vpop.f32.mrf.mxu0
  %v4575 = vadd.f32 0.0, %v4574
  %v4576 = vpop.f32.mrf.mxu0
  %4577 = vmatprep.mubr.f32.mxu0 0.0
  %4578 = vmatmul.mubr.f32.gmra.mxu0 %v4183
  %v4579 = vpop.f32.mrf.mxu0
  %v4580 = vadd.f32 0.0, %v4579
  %v4581 = vpop.f32.mrf.mxu0
  %4582 = vdwg.mxu0
  %v4583 = vadd.f32 %v4502, %v4570
  %v4584 = vadd.f32 %v4502, %v4575
  %v4585 = vadd.f32 %v4502, %v4580
  %v4586 = vmul.f32 %v4583, %v136
  %v4587 = vmul.f32 %v4584, %v136
  %v4588 = vmul.f32 %v4585, %v136
  %v4589 = vtanh.pop %v4586
  %v4590 = vtanh.pop %v4587
  %v4591 = vtanh.pop %v4588
  %v4592 = vmul.f32 %v4589, 0.5
  %v4593 = vmul.f32 %v4590, 0.5
  %v4594 = vmul.f32 %v4591, 0.5
  %v4595 = vadd.f32 %v4592, 0.5
  %v4596 = vadd.f32 %v4593, 0.5
  %v4597 = vadd.f32 %v4594, 0.5
  %v4598 = vsel %vm135, %v4589, %v4595
  %v4599 = vsel %vm135, %v4590, %v4596
  %v4600 = vsel %vm135, %v4591, %v4597
  %4604 = vrot.lane.b32.xlu0 %v4252, 32
  %v4605 = vpop.permute.xlu0 %4604
  %4606 = vrot.lane.b32.xlu0 %v4257, 32
  %v4607 = vpop.permute.xlu0 %4606
  %4608 = vrot.lane.b32.xlu0 %v4262, 32
  %v4609 = vpop.permute.xlu0 %4608
  %v4613 = vmul.f32 %v4598, %v4605
  %v4614 = vmul.f32 %v4599, %v4607
  %v4615 = vmul.f32 %v4600, %v4609
  %4619 = vrot.lane.b32.xlu0 %v4598, 64
  %v4620 = vpop.permute.xlu0 %4619
  %4621 = vrot.lane.b32.xlu0 %v4599, 64
  %v4622 = vpop.permute.xlu0 %4621
  %4623 = vrot.lane.b32.xlu0 %v4600, 64
  %v4624 = vpop.permute.xlu0 %4623
  %v4628 = vmul.f32 %v4598, %v4620
  %v4629 = vmul.f32 %v4599, %v4622
  %v4630 = vmul.f32 %v4600, %v4624
  %4634 = vrot.lane.b32.xlu0 %v4628, 32
  %v4635 = vpop.permute.xlu0 %4634
  %4636 = vrot.lane.b32.xlu0 %v4629, 32
  %v4637 = vpop.permute.xlu0 %4636
  %4638 = vrot.lane.b32.xlu0 %v4630, 32
  %v4639 = vpop.permute.xlu0 %4638
  %v4643 = vadd.f32 %v4613, %v4635
  %v4644 = vadd.f32 %v4614, %v4637
  %v4645 = vadd.f32 %v4615, %v4639
  %v4646 = vtanh.pop %v4643
  %v4647 = vtanh.pop %v4644
  %v4648 = vtanh.pop %v4645
  %4652 = vrot.lane.b32.xlu0 %v4646, 64
  %v4653 = vpop.permute.xlu0 %4652
  %4654 = vrot.lane.b32.xlu0 %v4647, 64
  %v4655 = vpop.permute.xlu0 %4654
  %4656 = vrot.lane.b32.xlu0 %v4648, 64
  %v4657 = vpop.permute.xlu0 %4656
  %v4661 = vmul.f32 %v4598, %v4653
  %v4662 = vmul.f32 %v4599, %v4655
  %v4663 = vmul.f32 %v4600, %v4657
  %v4665 = vlaneseq
  %v4666 = vshrl.u32 %v4665, 7
  %v4667 = vsub.s32 0, %v4666
  %v4668 = vrot.slane %v4273, %v4667
  %4673 = vrot.lane.b32.xlu0 %v4661, 32
  %v4674 = vpop.permute.xlu0 %4673
  %4675 = vrot.lane.b32.xlu0 %v4662, 32
  %v4676 = vpop.permute.xlu0 %4675
  %4677 = vrot.lane.b32.xlu0 %v4663, 32
  %v4678 = vpop.permute.xlu0 %4677
  %v4679 = vsel %vm186, %v4674, 0
  %v4681 = vsel %vm186, %v4676, 0
  %v4683 = vsel %vm186, %v4678, 0
  %4685 = vmatprep.subr.mxu0 0.0
  %4686 = vmatpush1.msra.mxu0 0.0
  %4687 = vmatprep.subr.mxu0 0.0
  %4688 = vmatpush1.msra.mxu0 0.0
  %4689 = vmatprep.subr.mxu0 0.0
  %4690 = vmatpush1.msra.mxu0 0.0
  %4691 = vmatprep.subr.mxu0 0.0
  %4692 = vmatpush1.msra.mxu0 0.0
  %4693 = vmatprep.subr.mxu0 0.0
  %4694 = vmatpush1.msra.mxu0 0.0
  %4695 = vmatprep.subr.mxu0 0.0
  %4696 = vmatpush1.msra.mxu0 0.0
  %4697 = vmatprep.subr.mxu0 0.0
  %4698 = vmatpush1.msra.mxu0 0.0
  %4699 = vmatprep.subr.mxu0 0.0
  %4700 = vmatpush1.msra.mxu0 0.0
  %4701 = vmatprep.subr.mxu0 0.0
  %4702 = vmatpush1.msra.mxu0 0.0
  %4703 = vmatprep.subr.mxu0 0.0
  %4704 = vmatpush1.msra.mxu0 0.0
  %4705 = vmatprep.subr.mxu0 0.0
  %4706 = vmatpush1.msra.mxu0 0.0
  %4707 = vmatprep.subr.mxu0 0.0
  %4708 = vmatpush1.msra.mxu0 0.0
  %4709 = vmatprep.subr.mxu0 0.0
  %4710 = vmatpush1.msra.mxu0 %v4272
  %4711 = vmatprep.subr.mxu0 0.0
  %4712 = vmatpush1.msra.mxu0 %v4271
  %4713 = vmatprep.subr.mxu0 0.0
  %4714 = vmatpush1.msra.mxu0 %v4270
  %4715 = vmatprep.subr.mxu0 0.0
  %4716 = vmatpush1.msra.mxu0 %v4269
  %4717 = vmatprep.subr.mxu0 0.0
  %4718 = vmatpush2.msra.mxu0 0.0
  %4719 = vmatprep.subr.mxu0 0.0
  %4720 = vmatpush2.msra.mxu0 0.0
  %4721 = vmatprep.subr.mxu0 0.0
  %4722 = vmatpush2.msra.mxu0 0.0
  %4723 = vmatprep.subr.mxu0 0.0
  %4724 = vmatpush2.msra.mxu0 0.0
  %4725 = vmatprep.subr.mxu0 0.0
  %4726 = vmatpush2.msra.mxu0 0.0
  %4727 = vmatprep.subr.mxu0 0.0
  %4728 = vmatpush2.msra.mxu0 0.0
  %4729 = vmatprep.subr.mxu0 0.0
  %4730 = vmatpush2.msra.mxu0 0.0
  %4731 = vmatprep.subr.mxu0 0.0
  %4732 = vmatpush2.msra.mxu0 0.0
  %4733 = vmatprep.subr.mxu0 0.0
  %4734 = vmatpush2.msra.mxu0 0.0
  %4735 = vmatprep.subr.mxu0 0.0
  %4736 = vmatpush2.msra.mxu0 0.0
  %4737 = vmatprep.subr.mxu0 0.0
  %4738 = vmatpush2.msra.mxu0 0.0
  %4739 = vmatprep.subr.mxu0 0.0
  %4740 = vmatpush2.msra.mxu0 0.0
  %4741 = vmatprep.subr.mxu0 0.0
  %4742 = vmatpush2.msra.mxu0 0.0
  %4743 = vmatprep.subr.mxu0 0.0
  %4744 = vmatpush2.msra.mxu0 0.0
  %4745 = vmatprep.subr.mxu0 0.0
  %4746 = vmatpush2.msra.mxu0 0.0
  %4747 = vmatprep.subr.mxu0 0.0
  %4748 = vmatpush2.msra.mxu0 0.0
  %4749 = vmatprep.mubr.f32.mxu0 0.0
  %4750 = vmatmul.mubr.f32.gmra.mxu0 %v4679
  %v4751 = vpop.f32.mrf.mxu0
  %v4752 = vadd.f32 %v4668, %v4751
  %v4753 = vpop.f32.mrf.mxu0
  %4754 = vmatprep.mubr.f32.mxu0 0.0
  %4755 = vmatmul.mubr.f32.gmra.mxu0 %v4681
  %v4756 = vpop.f32.mrf.mxu0
  %v4757 = vadd.f32 %v4668, %v4756
  %v4758 = vpop.f32.mrf.mxu0
  %4759 = vmatprep.mubr.f32.mxu0 0.0
  %4760 = vmatmul.mubr.f32.gmra.mxu0 %v4683
  %v4761 = vpop.f32.mrf.mxu0
  %v4762 = vadd.f32 %v4668, %v4761
  %v4763 = vpop.f32.mrf.mxu0
  %4764 = vdwg.mxu0
  %v4765 = vmax.f32 %v4752, 0.0
  %v4766 = vmax.f32 %v4757, 0.0
  %v4767 = vmax.f32 %v4762, 0.0
  %v4769 = vlaneseq
  %v4770 = vshrl.u32 %v4769, 7
  %v4771 = vsub.s32 0, %v4770
  %v4772 = vrot.slane %v4278, %v4771
  %v4775 = vsel %vm186, %v4765, 0
  %v4778 = vsel %vm186, %v4766, 0
  %v4781 = vsel %vm186, %v4767, 0
  %4783 = vmatprep.subr.mxu0 0.0
  %4784 = vmatpush1.msra.mxu0 0.0
  %4785 = vmatprep.subr.mxu0 0.0
  %4786 = vmatpush1.msra.mxu0 0.0
  %4787 = vmatprep.subr.mxu0 0.0
  %4788 = vmatpush1.msra.mxu0 0.0
  %4789 = vmatprep.subr.mxu0 0.0
  %4790 = vmatpush1.msra.mxu0 0.0
  %4791 = vmatprep.subr.mxu0 0.0
  %4792 = vmatpush1.msra.mxu0 0.0
  %4793 = vmatprep.subr.mxu0 0.0
  %4794 = vmatpush1.msra.mxu0 0.0
  %4795 = vmatprep.subr.mxu0 0.0
  %4796 = vmatpush1.msra.mxu0 0.0
  %4797 = vmatprep.subr.mxu0 0.0
  %4798 = vmatpush1.msra.mxu0 0.0
  %4799 = vmatprep.subr.mxu0 0.0
  %4800 = vmatpush1.msra.mxu0 0.0
  %4801 = vmatprep.subr.mxu0 0.0
  %4802 = vmatpush1.msra.mxu0 0.0
  %4803 = vmatprep.subr.mxu0 0.0
  %4804 = vmatpush1.msra.mxu0 0.0
  %4805 = vmatprep.subr.mxu0 0.0
  %4806 = vmatpush1.msra.mxu0 0.0
  %4807 = vmatprep.subr.mxu0 0.0
  %4808 = vmatpush1.msra.mxu0 %v4277
  %4809 = vmatprep.subr.mxu0 0.0
  %4810 = vmatpush1.msra.mxu0 %v4276
  %4811 = vmatprep.subr.mxu0 0.0
  %4812 = vmatpush1.msra.mxu0 %v4275
  %4813 = vmatprep.subr.mxu0 0.0
  %4814 = vmatpush1.msra.mxu0 %v4274
  %4815 = vmatprep.subr.mxu0 0.0
  %4816 = vmatpush2.msra.mxu0 0.0
  %4817 = vmatprep.subr.mxu0 0.0
  %4818 = vmatpush2.msra.mxu0 0.0
  %4819 = vmatprep.subr.mxu0 0.0
  %4820 = vmatpush2.msra.mxu0 0.0
  %4821 = vmatprep.subr.mxu0 0.0
  %4822 = vmatpush2.msra.mxu0 0.0
  %4823 = vmatprep.subr.mxu0 0.0
  %4824 = vmatpush2.msra.mxu0 0.0
  %4825 = vmatprep.subr.mxu0 0.0
  %4826 = vmatpush2.msra.mxu0 0.0
  %4827 = vmatprep.subr.mxu0 0.0
  %4828 = vmatpush2.msra.mxu0 0.0
  %4829 = vmatprep.subr.mxu0 0.0
  %4830 = vmatpush2.msra.mxu0 0.0
  %4831 = vmatprep.subr.mxu0 0.0
  %4832 = vmatpush2.msra.mxu0 0.0
  %4833 = vmatprep.subr.mxu0 0.0
  %4834 = vmatpush2.msra.mxu0 0.0
  %4835 = vmatprep.subr.mxu0 0.0
  %4836 = vmatpush2.msra.mxu0 0.0
  %4837 = vmatprep.subr.mxu0 0.0
  %4838 = vmatpush2.msra.mxu0 0.0
  %4839 = vmatprep.subr.mxu0 0.0
  %4840 = vmatpush2.msra.mxu0 0.0
  %4841 = vmatprep.subr.mxu0 0.0
  %4842 = vmatpush2.msra.mxu0 0.0
  %4843 = vmatprep.subr.mxu0 0.0
  %4844 = vmatpush2.msra.mxu0 0.0
  %4845 = vmatprep.subr.mxu0 0.0
  %4846 = vmatpush2.msra.mxu0 0.0
  %4847 = vmatprep.mubr.f32.mxu0 0.0
  %4848 = vmatmul.mubr.f32.gmra.mxu0 %v4775
  %v4849 = vpop.f32.mrf.mxu0
  %v4850 = vadd.f32 %v4772, %v4849
  %v4851 = vpop.f32.mrf.mxu0
  %4852 = vmatprep.mubr.f32.mxu0 0.0
  %4853 = vmatmul.mubr.f32.gmra.mxu0 %v4778
  %v4854 = vpop.f32.mrf.mxu0
  %v4855 = vadd.f32 %v4772, %v4854
  %v4856 = vpop.f32.mrf.mxu0
  %4857 = vmatprep.mubr.f32.mxu0 0.0
  %4858 = vmatmul.mubr.f32.gmra.mxu0 %v4781
  %v4859 = vpop.f32.mrf.mxu0
  %v4860 = vadd.f32 %v4772, %v4859
  %v4861 = vpop.f32.mrf.mxu0
  %4862 = vdwg.mxu0
  %4863 = vst [vmem:[%s63] sm:$0xff] %v4850
  %4864 = vst [vmem:[%s63 + $0x40] sm:$0xff] %v4855
  %4865 = vst [vmem:[%s63 + $0x80] sm:$0xff] %v4860
  %4866 = vmax.xlane.f32.xlu0 %v4850
  %v4867 = vpop.xlane.xlu0 %4866
  %4868 = vmax.xlane.f32.xlu0 %v4855
  %v4869 = vpop.xlane.xlu0 %4868
  %4870 = vmax.xlane.f32.xlu0 %v4860
  %v4871 = vpop.xlane.xlu0 %4870
  %vm4872 = vcmp.eq.f32.partialorder %v4850, %v4867
  %vm4873 = vcmp.eq.f32.partialorder %v4855, %v4869
  %vm4874 = vcmp.eq.f32.partialorder %v4860, %v4871
  %v4875 = vsel %vm4872, %v132, 128
  %v4876 = vsel %vm4873, %v132, 128
  %v4877 = vsel %vm4874, %v132, 128
  %v4878 = vand.u32 %v4875, 65535
  %v4879 = vshra.s32 %v4875, 16
  %v4880 = vcvt.s32.f32 %v4878
  %v4881 = vcvt.s32.f32 %v4879
  %4882 = vmin.xlane.f32.xlu0 %v4881
  %v4883 = vpop.xlane.xlu0 %4882
  %vm4884 = vcmp.eq.f32.partialorder %v4881, %v4883
  %v4885 = vsel %vm4884, %v4880, inf
  %4886 = vmin.xlane.f32.xlu0 %v4885
  %v4887 = vpop.xlane.xlu0 %4886
  %v4888 = vcvt.f32.s32 %v4887
  %v4889 = vcvt.f32.s32 %v4883
  %v4890 = vshll.u32 %v4889, 16
  %v4891 = vadd.s32 %v4890, %v4888
  %v4892 = vand.u32 %v4876, 65535
  %v4893 = vshra.s32 %v4876, 16
  %v4894 = vcvt.s32.f32 %v4892
  %v4895 = vcvt.s32.f32 %v4893
  %4896 = vmin.xlane.f32.xlu0 %v4895
  %v4897 = vpop.xlane.xlu0 %4896
  %vm4898 = vcmp.eq.f32.partialorder %v4895, %v4897
  %v4899 = vsel %vm4898, %v4894, inf
  %4900 = vmin.xlane.f32.xlu0 %v4899
  %v4901 = vpop.xlane.xlu0 %4900
  %v4902 = vcvt.f32.s32 %v4901
  %v4903 = vcvt.f32.s32 %v4897
  %v4904 = vshll.u32 %v4903, 16
  %v4905 = vadd.s32 %v4904, %v4902
  %v4906 = vand.u32 %v4877, 65535
  %v4907 = vshra.s32 %v4877, 16
  %v4908 = vcvt.s32.f32 %v4906
  %v4909 = vcvt.s32.f32 %v4907
  %4910 = vmin.xlane.f32.xlu0 %v4909
  %v4911 = vpop.xlane.xlu0 %4910
  %vm4912 = vcmp.eq.f32.partialorder %v4909, %v4911
  %v4913 = vsel %vm4912, %v4908, inf
  %4914 = vmin.xlane.f32.xlu0 %v4913
  %v4915 = vpop.xlane.xlu0 %4914
  %v4916 = vcvt.f32.s32 %v4915
  %v4917 = vcvt.f32.s32 %v4911
  %v4918 = vshll.u32 %v4917, 16
  %v4919 = vadd.s32 %v4918, %v4916
  %vm4920 = vcmp.eq.s32.totalorder %v132, %v4891
  %vm4921 = vcmp.eq.s32.totalorder %v132, %v4905
  %vm4922 = vcmp.eq.s32.totalorder %v132, %v4919
  %v4923 = vsel %vm4920, 1, 0
  %v4924 = vsel %vm4921, 1, 0
  %v4925 = vsel %vm4922, 1, 0
  %v4926 = vcvt.s32.f32 %v4923
  %v4927 = vcvt.s32.f32 %v4924
  %v4928 = vcvt.s32.f32 %v4925
  %4929 = vmatprep.subr.mxu0 0.0
  %4930 = vmatpush1.msra.mxu0 0.0
  %4931 = vmatprep.subr.mxu0 0.0
  %4932 = vmatpush1.msra.mxu0 0.0
  %4933 = vmatprep.subr.mxu0 0.0
  %4934 = vmatpush1.msra.mxu0 0.0
  %4935 = vmatprep.subr.mxu0 0.0
  %4936 = vmatpush1.msra.mxu0 0.0
  %4937 = vmatprep.subr.mxu0 0.0
  %4938 = vmatpush1.msra.mxu0 0.0
  %4939 = vmatprep.subr.mxu0 0.0
  %4940 = vmatpush1.msra.mxu0 0.0
  %4941 = vmatprep.subr.mxu0 0.0
  %4942 = vmatpush1.msra.mxu0 0.0
  %4943 = vmatprep.subr.mxu0 0.0
  %4944 = vmatpush1.msra.mxu0 0.0
  %4945 = vmatprep.subr.mxu0 0.0
  %4946 = vmatpush1.msra.mxu0 0.0
  %4947 = vmatprep.subr.mxu0 0.0
  %4948 = vmatpush1.msra.mxu0 0.0
  %4949 = vmatprep.subr.mxu0 0.0
  %4950 = vmatpush1.msra.mxu0 0.0
  %4951 = vmatprep.subr.mxu0 0.0
  %4952 = vmatpush1.msra.mxu0 0.0
  %4953 = vmatprep.subr.mxu0 0.0
  %4954 = vmatpush1.msra.mxu0 %v4268
  %4955 = vmatprep.subr.mxu0 0.0
  %4956 = vmatpush1.msra.mxu0 %v4267
  %4957 = vmatprep.subr.mxu0 0.0
  %4958 = vmatpush1.msra.mxu0 %v4266
  %4959 = vmatprep.subr.mxu0 0.0
  %4960 = vmatpush1.msra.mxu0 %v4265
  %4961 = vmatprep.subr.mxu0 0.0
  %4962 = vmatpush2.msra.mxu0 0.0
  %4963 = vmatprep.subr.mxu0 0.0
  %4964 = vmatpush2.msra.mxu0 0.0
  %4965 = vmatprep.subr.mxu0 0.0
  %4966 = vmatpush2.msra.mxu0 0.0
  %4967 = vmatprep.subr.mxu0 0.0
  %4968 = vmatpush2.msra.mxu0 0.0
  %4969 = vmatprep.subr.mxu0 0.0
  %4970 = vmatpush2.msra.mxu0 0.0
  %4971 = vmatprep.subr.mxu0 0.0
  %4972 = vmatpush2.msra.mxu0 0.0
  %4973 = vmatprep.subr.mxu0 0.0
  %4974 = vmatpush2.msra.mxu0 0.0
  %4975 = vmatprep.subr.mxu0 0.0
  %4976 = vmatpush2.msra.mxu0 0.0
  %4977 = vmatprep.subr.mxu0 0.0
  %4978 = vmatpush2.msra.mxu0 0.0
  %4979 = vmatprep.subr.mxu0 0.0
  %4980 = vmatpush2.msra.mxu0 0.0
  %4981 = vmatprep.subr.mxu0 0.0
  %4982 = vmatpush2.msra.mxu0 0.0
  %4983 = vmatprep.subr.mxu0 0.0
  %4984 = vmatpush2.msra.mxu0 0.0
  %4985 = vmatprep.subr.mxu0 0.0
  %4986 = vmatpush2.msra.mxu0 0.0
  %4987 = vmatprep.subr.mxu0 0.0
  %4988 = vmatpush2.msra.mxu0 0.0
  %4989 = vmatprep.subr.mxu0 0.0
  %4990 = vmatpush2.msra.mxu0 0.0
  %4991 = vmatprep.subr.mxu0 0.0
  %4992 = vmatpush2.msra.mxu0 0.0
  %4993 = vmatprep.mubr.f32.mxu0 0.0
  %4994 = vmatmul.mubr.f32.gmra.mxu0 %v4679
  %v4995 = vpop.f32.mrf.mxu0
  %v4996 = vadd.f32 0.0, %v4995
  %v4997 = vpop.f32.mrf.mxu0
  %4998 = vmatprep.mubr.f32.mxu0 0.0
  %4999 = vmatmul.mubr.f32.gmra.mxu0 %v4681
  %v5000 = vpop.f32.mrf.mxu0
  %v5001 = vadd.f32 0.0, %v5000
  %v5002 = vpop.f32.mrf.mxu0
  %5003 = vmatprep.mubr.f32.mxu0 0.0
  %5004 = vmatmul.mubr.f32.gmra.mxu0 %v4683
  %v5005 = vpop.f32.mrf.mxu0
  %v5006 = vadd.f32 0.0, %v5005
  %v5007 = vpop.f32.mrf.mxu0
  %5008 = vdwg.mxu0
  %5009 = vmatprep.subr.mxu0 0.0
  %5010 = vmatpush1.msra.mxu0 %v4496
  %5011 = vmatprep.subr.mxu0 0.0
  %5012 = vmatpush1.msra.mxu0 %v4491
  %5013 = vmatprep.subr.mxu0 0.0
  %5014 = vmatpush1.msra.mxu0 %v4486
  %5015 = vmatprep.subr.mxu0 0.0
  %5016 = vmatpush1.msra.mxu0 %v4481
  %5017 = vmatprep.subr.mxu0 0.0
  %5018 = vmatpush1.msra.mxu0 %v4476
  %5019 = vmatprep.subr.mxu0 0.0
  %5020 = vmatpush1.msra.mxu0 %v4471
  %5021 = vmatprep.subr.mxu0 0.0
  %5022 = vmatpush1.msra.mxu0 %v4466
  %5023 = vmatprep.subr.mxu0 0.0
  %5024 = vmatpush1.msra.mxu0 %v4461
  %5025 = vmatprep.subr.mxu0 0.0
  %5026 = vmatpush1.msra.mxu0 %v4456
  %5027 = vmatprep.subr.mxu0 0.0
  %5028 = vmatpush1.msra.mxu0 %v4451
  %5029 = vmatprep.subr.mxu0 0.0
  %5030 = vmatpush1.msra.mxu0 %v4446
  %5031 = vmatprep.subr.mxu0 0.0
  %5032 = vmatpush1.msra.mxu0 %v4441
  %5033 = vmatprep.subr.mxu0 0.0
  %5034 = vmatpush1.msra.mxu0 %v4436
  %5035 = vmatprep.subr.mxu0 0.0
  %5036 = vmatpush1.msra.mxu0 %v4431
  %5037 = vmatprep.subr.mxu0 0.0
  %5038 = vmatpush1.msra.mxu0 %v4426
  %5039 = vmatprep.subr.mxu0 0.0
  %5040 = vmatpush1.msra.mxu0 %v4421
  %5041 = vmatprep.subr.mxu0 0.0
  %5042 = vmatpush2.msra.mxu0 0.0
  %5043 = vmatprep.subr.mxu0 0.0
  %5044 = vmatpush2.msra.mxu0 0.0
  %5045 = vmatprep.subr.mxu0 0.0
  %5046 = vmatpush2.msra.mxu0 0.0
  %5047 = vmatprep.subr.mxu0 0.0
  %5048 = vmatpush2.msra.mxu0 0.0
  %5049 = vmatprep.subr.mxu0 0.0
  %5050 = vmatpush2.msra.mxu0 0.0
  %5051 = vmatprep.subr.mxu0 0.0
  %5052 = vmatpush2.msra.mxu0 0.0
  %5053 = vmatprep.subr.mxu0 0.0
  %5054 = vmatpush2.msra.mxu0 0.0
  %5055 = vmatprep.subr.mxu0 0.0
  %5056 = vmatpush2.msra.mxu0 0.0
  %5057 = vmatprep.subr.mxu0 0.0
  %5058 = vmatpush2.msra.mxu0 0.0
  %5059 = vmatprep.subr.mxu0 0.0
  %5060 = vmatpush2.msra.mxu0 0.0
  %5061 = vmatprep.subr.mxu0 0.0
  %5062 = vmatpush2.msra.mxu0 0.0
  %5063 = vmatprep.subr.mxu0 0.0
  %5064 = vmatpush2.msra.mxu0 0.0
  %5065 = vmatprep.subr.mxu0 0.0
  %5066 = vmatpush2.msra.mxu0 0.0
  %5067 = vmatprep.subr.mxu0 0.0
  %5068 = vmatpush2.msra.mxu0 0.0
  %5069 = vmatprep.subr.mxu0 0.0
  %5070 = vmatpush2.msra.mxu0 0.0
  %5071 = vmatprep.subr.mxu0 0.0
  %5072 = vmatpush2.msra.mxu0 0.0
  %5073 = vmatprep.mubr.f32.mxu0 0.0
  %5074 = vmatmul.mubr.f32.gmra.mxu0 %v4926
  %v5075 = vpop.f32.mrf.mxu0
  %v5076 = vadd.f32 %v4996, %v5075
  %v5077 = vpop.f32.mrf.mxu0
  %5078 = vmatprep.mubr.f32.mxu0 0.0
  %5079 = vmatmul.mubr.f32.gmra.mxu0 %v4927
  %v5080 = vpop.f32.mrf.mxu0
  %v5081 = vadd.f32 %v5001, %v5080
  %v5082 = vpop.f32.mrf.mxu0
  %5083 = vmatprep.mubr.f32.mxu0 0.0
  %5084 = vmatmul.mubr.f32.gmra.mxu0 %v4928
  %v5085 = vpop.f32.mrf.mxu0
  %v5086 = vadd.f32 %v5006, %v5085
  %v5087 = vpop.f32.mrf.mxu0
  %5088 = vdwg.mxu0
  %v5089 = vmul.f32 %v5076, %v136
  %v5090 = vmul.f32 %v5081, %v136
  %v5091 = vmul.f32 %v5086, %v136
  %v5092 = vtanh.pop %v5089
  %v5093 = vtanh.pop %v5090
  %v5094 = vtanh.pop %v5091
  %v5095 = vmul.f32 %v5092, 0.5
  %v5096 = vmul.f32 %v5093, 0.5
  %v5097 = vmul.f32 %v5094, 0.5
  %v5098 = vadd.f32 %v5095, 0.5
  %v5099 = vadd.f32 %v5096, 0.5
  %v5100 = vadd.f32 %v5097, 0.5
  %v5101 = vsel %vm135, %v5092, %v5098
  %v5102 = vsel %vm135, %v5093, %v5099
  %v5103 = vsel %vm135, %v5094, %v5100
  %v5104 = vmul.f32 %v5101, %v4643
  %v5105 = vmul.f32 %v5102, %v4644
  %v5106 = vmul.f32 %v5103, %v4645
  %5110 = vrot.lane.b32.xlu0 %v5101, 64
  %v5111 = vpop.permute.xlu0 %5110
  %5112 = vrot.lane.b32.xlu0 %v5102, 64
  %v5113 = vpop.permute.xlu0 %5112
  %5114 = vrot.lane.b32.xlu0 %v5103, 64
  %v5115 = vpop.permute.xlu0 %5114
  %v5119 = vmul.f32 %v5101, %v5111
  %v5120 = vmul.f32 %v5102, %v5113
  %v5121 = vmul.f32 %v5103, %v5115
  %5125 = vrot.lane.b32.xlu0 %v5119, 32
  %v5126 = vpop.permute.xlu0 %5125
  %5127 = vrot.lane.b32.xlu0 %v5120, 32
  %v5128 = vpop.permute.xlu0 %5127
  %5129 = vrot.lane.b32.xlu0 %v5121, 32
  %v5130 = vpop.permute.xlu0 %5129
  %v5134 = vadd.f32 %v5104, %v5126
  %v5135 = vadd.f32 %v5105, %v5128
  %v5136 = vadd.f32 %v5106, %v5130
  %v5137 = vtanh.pop %v5134
  %v5138 = vtanh.pop %v5135
  %v5139 = vtanh.pop %v5136
  %5143 = vrot.lane.b32.xlu0 %v5137, 64
  %v5144 = vpop.permute.xlu0 %5143
  %5145 = vrot.lane.b32.xlu0 %v5138, 64
  %v5146 = vpop.permute.xlu0 %5145
  %5147 = vrot.lane.b32.xlu0 %v5139, 64
  %v5148 = vpop.permute.xlu0 %5147
  %v5152 = vmul.f32 %v5101, %v5144
  %v5153 = vmul.f32 %v5102, %v5146
  %v5154 = vmul.f32 %v5103, %v5148
  %5158 = vrot.lane.b32.xlu0 %v5152, 32
  %v5159 = vpop.permute.xlu0 %5158
  %5160 = vrot.lane.b32.xlu0 %v5153, 32
  %v5161 = vpop.permute.xlu0 %5160
  %5162 = vrot.lane.b32.xlu0 %v5154, 32
  %v5163 = vpop.permute.xlu0 %5162
  %v5164 = vsel %vm186, %v5159, 0
  %v5166 = vsel %vm186, %v5161, 0
  %v5168 = vsel %vm186, %v5163, 0
  %5170 = vmatprep.subr.mxu0 0.0
  %5171 = vmatpush1.msra.mxu0 0.0
  %5172 = vmatprep.subr.mxu0 0.0
  %5173 = vmatpush1.msra.mxu0 0.0
  %5174 = vmatprep.subr.mxu0 0.0
  %5175 = vmatpush1.msra.mxu0 0.0
  %5176 = vmatprep.subr.mxu0 0.0
  %5177 = vmatpush1.msra.mxu0 0.0
  %5178 = vmatprep.subr.mxu0 0.0
  %5179 = vmatpush1.msra.mxu0 0.0
  %5180 = vmatprep.subr.mxu0 0.0
  %5181 = vmatpush1.msra.mxu0 0.0
  %5182 = vmatprep.subr.mxu0 0.0
  %5183 = vmatpush1.msra.mxu0 0.0
  %5184 = vmatprep.subr.mxu0 0.0
  %5185 = vmatpush1.msra.mxu0 0.0
  %5186 = vmatprep.subr.mxu0 0.0
  %5187 = vmatpush1.msra.mxu0 0.0
  %5188 = vmatprep.subr.mxu0 0.0
  %5189 = vmatpush1.msra.mxu0 0.0
  %5190 = vmatprep.subr.mxu0 0.0
  %5191 = vmatpush1.msra.mxu0 0.0
  %5192 = vmatprep.subr.mxu0 0.0
  %5193 = vmatpush1.msra.mxu0 0.0
  %5194 = vmatprep.subr.mxu0 0.0
  %5195 = vmatpush1.msra.mxu0 %v4272
  %5196 = vmatprep.subr.mxu0 0.0
  %5197 = vmatpush1.msra.mxu0 %v4271
  %5198 = vmatprep.subr.mxu0 0.0
  %5199 = vmatpush1.msra.mxu0 %v4270
  %5200 = vmatprep.subr.mxu0 0.0
  %5201 = vmatpush1.msra.mxu0 %v4269
  %5202 = vmatprep.subr.mxu0 0.0
  %5203 = vmatpush2.msra.mxu0 0.0
  %5204 = vmatprep.subr.mxu0 0.0
  %5205 = vmatpush2.msra.mxu0 0.0
  %5206 = vmatprep.subr.mxu0 0.0
  %5207 = vmatpush2.msra.mxu0 0.0
  %5208 = vmatprep.subr.mxu0 0.0
  %5209 = vmatpush2.msra.mxu0 0.0
  %5210 = vmatprep.subr.mxu0 0.0
  %5211 = vmatpush2.msra.mxu0 0.0
  %5212 = vmatprep.subr.mxu0 0.0
  %5213 = vmatpush2.msra.mxu0 0.0
  %5214 = vmatprep.subr.mxu0 0.0
  %5215 = vmatpush2.msra.mxu0 0.0
  %5216 = vmatprep.subr.mxu0 0.0
  %5217 = vmatpush2.msra.mxu0 0.0
  %5218 = vmatprep.subr.mxu0 0.0
  %5219 = vmatpush2.msra.mxu0 0.0
  %5220 = vmatprep.subr.mxu0 0.0
  %5221 = vmatpush2.msra.mxu0 0.0
  %5222 = vmatprep.subr.mxu0 0.0
  %5223 = vmatpush2.msra.mxu0 0.0
  %5224 = vmatprep.subr.mxu0 0.0
  %5225 = vmatpush2.msra.mxu0 0.0
  %5226 = vmatprep.subr.mxu0 0.0
  %5227 = vmatpush2.msra.mxu0 0.0
  %5228 = vmatprep.subr.mxu0 0.0
  %5229 = vmatpush2.msra.mxu0 0.0
  %5230 = vmatprep.subr.mxu0 0.0
  %5231 = vmatpush2.msra.mxu0 0.0
  %5232 = vmatprep.subr.mxu0 0.0
  %5233 = vmatpush2.msra.mxu0 0.0
  %5234 = vmatprep.mubr.f32.mxu0 0.0
  %5235 = vmatmul.mubr.f32.gmra.mxu0 %v5164
  %v5236 = vpop.f32.mrf.mxu0
  %v5237 = vadd.f32 %v4668, %v5236
  %v5238 = vpop.f32.mrf.mxu0
  %5239 = vmatprep.mubr.f32.mxu0 0.0
  %5240 = vmatmul.mubr.f32.gmra.mxu0 %v5166
  %v5241 = vpop.f32.mrf.mxu0
  %v5242 = vadd.f32 %v4668, %v5241
  %v5243 = vpop.f32.mrf.mxu0
  %5244 = vmatprep.mubr.f32.mxu0 0.0
  %5245 = vmatmul.mubr.f32.gmra.mxu0 %v5168
  %v5246 = vpop.f32.mrf.mxu0
  %v5247 = vadd.f32 %v4668, %v5246
  %v5248 = vpop.f32.mrf.mxu0
  %5249 = vdwg.mxu0
  %v5250 = vmax.f32 %v5237, 0.0
  %v5251 = vmax.f32 %v5242, 0.0
  %v5252 = vmax.f32 %v5247, 0.0
  %v5254 = vsel %vm186, %v5250, 0
  %v5257 = vsel %vm186, %v5251, 0
  %v5260 = vsel %vm186, %v5252, 0
  %5262 = vmatprep.subr.mxu0 0.0
  %5263 = vmatpush1.msra.mxu0 0.0
  %5264 = vmatprep.subr.mxu0 0.0
  %5265 = vmatpush1.msra.mxu0 0.0
  %5266 = vmatprep.subr.mxu0 0.0
  %5267 = vmatpush1.msra.mxu0 0.0
  %5268 = vmatprep.subr.mxu0 0.0
  %5269 = vmatpush1.msra.mxu0 0.0
  %5270 = vmatprep.subr.mxu0 0.0
  %5271 = vmatpush1.msra.mxu0 0.0
  %5272 = vmatprep.subr.mxu0 0.0
  %5273 = vmatpush1.msra.mxu0 0.0
  %5274 = vmatprep.subr.mxu0 0.0
  %5275 = vmatpush1.msra.mxu0 0.0
  %5276 = vmatprep.subr.mxu0 0.0
  %5277 = vmatpush1.msra.mxu0 0.0
  %5278 = vmatprep.subr.mxu0 0.0
  %5279 = vmatpush1.msra.mxu0 0.0
  %5280 = vmatprep.subr.mxu0 0.0
  %5281 = vmatpush1.msra.mxu0 0.0
  %5282 = vmatprep.subr.mxu0 0.0
  %5283 = vmatpush1.msra.mxu0 0.0
  %5284 = vmatprep.subr.mxu0 0.0
  %5285 = vmatpush1.msra.mxu0 0.0
  %5286 = vmatprep.subr.mxu0 0.0
  %5287 = vmatpush1.msra.mxu0 %v4277
  %5288 = vmatprep.subr.mxu0 0.0
  %5289 = vmatpush1.msra.mxu0 %v4276
  %5290 = vmatprep.subr.mxu0 0.0
  %5291 = vmatpush1.msra.mxu0 %v4275
  %5292 = vmatprep.subr.mxu0 0.0
  %5293 = vmatpush1.msra.mxu0 %v4274
  %5294 = vmatprep.subr.mxu0 0.0
  %5295 = vmatpush2.msra.mxu0 0.0
  %5296 = vmatprep.subr.mxu0 0.0
  %5297 = vmatpush2.msra.mxu0 0.0
  %5298 = vmatprep.subr.mxu0 0.0
  %5299 = vmatpush2.msra.mxu0 0.0
  %5300 = vmatprep.subr.mxu0 0.0
  %5301 = vmatpush2.msra.mxu0 0.0
  %5302 = vmatprep.subr.mxu0 0.0
  %5303 = vmatpush2.msra.mxu0 0.0
  %5304 = vmatprep.subr.mxu0 0.0
  %5305 = vmatpush2.msra.mxu0 0.0
  %5306 = vmatprep.subr.mxu0 0.0
  %5307 = vmatpush2.msra.mxu0 0.0
  %5308 = vmatprep.subr.mxu0 0.0
  %5309 = vmatpush2.msra.mxu0 0.0
  %5310 = vmatprep.subr.mxu0 0.0
  %5311 = vmatpush2.msra.mxu0 0.0
  %5312 = vmatprep.subr.mxu0 0.0
  %5313 = vmatpush2.msra.mxu0 0.0
  %5314 = vmatprep.subr.mxu0 0.0
  %5315 = vmatpush2.msra.mxu0 0.0
  %5316 = vmatprep.subr.mxu0 0.0
  %5317 = vmatpush2.msra.mxu0 0.0
  %5318 = vmatprep.subr.mxu0 0.0
  %5319 = vmatpush2.msra.mxu0 0.0
  %5320 = vmatprep.subr.mxu0 0.0
  %5321 = vmatpush2.msra.mxu0 0.0
  %5322 = vmatprep.subr.mxu0 0.0
  %5323 = vmatpush2.msra.mxu0 0.0
  %5324 = vmatprep.subr.mxu0 0.0
  %5325 = vmatpush2.msra.mxu0 0.0
  %5326 = vmatprep.mubr.f32.mxu0 0.0
  %5327 = vmatmul.mubr.f32.gmra.mxu0 %v5254
  %v5328 = vpop.f32.mrf.mxu0
  %v5329 = vadd.f32 %v4772, %v5328
  %v5330 = vpop.f32.mrf.mxu0
  %5331 = vmatprep.mubr.f32.mxu0 0.0
  %5332 = vmatmul.mubr.f32.gmra.mxu0 %v5257
  %v5333 = vpop.f32.mrf.mxu0
  %v5334 = vadd.f32 %v4772, %v5333
  %v5335 = vpop.f32.mrf.mxu0
  %5336 = vmatprep.mubr.f32.mxu0 0.0
  %5337 = vmatmul.mubr.f32.gmra.mxu0 %v5260
  %v5338 = vpop.f32.mrf.mxu0
  %v5339 = vadd.f32 %v4772, %v5338
  %v5340 = vpop.f32.mrf.mxu0
  %5341 = vdwg.mxu0
  %5342 = vst [vmem:[%s63 + $0x8] sm:$0xff] %v5329
  %5343 = vst [vmem:[%s63 + $0x48] sm:$0xff] %v5334
  %5344 = vst [vmem:[%s63 + $0x88] sm:$0xff] %v5339
  %5345 = vmax.xlane.f32.xlu0 %v5329
  %v5346 = vpop.xlane.xlu0 %5345
  %5347 = vmax.xlane.f32.xlu0 %v5334
  %v5348 = vpop.xlane.xlu0 %5347
  %5349 = vmax.xlane.f32.xlu0 %v5339
  %v5350 = vpop.xlane.xlu0 %5349
  %vm5351 = vcmp.eq.f32.partialorder %v5329, %v5346
  %vm5352 = vcmp.eq.f32.partialorder %v5334, %v5348
  %vm5353 = vcmp.eq.f32.partialorder %v5339, %v5350
  %v5354 = vsel %vm5351, %v132, 128
  %v5355 = vsel %vm5352, %v132, 128
  %v5356 = vsel %vm5353, %v132, 128
  %v5357 = vand.u32 %v5354, 65535
  %v5358 = vshra.s32 %v5354, 16
  %v5359 = vcvt.s32.f32 %v5357
  %v5360 = vcvt.s32.f32 %v5358
  %5361 = vmin.xlane.f32.xlu0 %v5360
  %v5362 = vpop.xlane.xlu0 %5361
  %vm5363 = vcmp.eq.f32.partialorder %v5360, %v5362
  %v5364 = vsel %vm5363, %v5359, inf
  %5365 = vmin.xlane.f32.xlu0 %v5364
  %v5366 = vpop.xlane.xlu0 %5365
  %v5367 = vcvt.f32.s32 %v5366
  %v5368 = vcvt.f32.s32 %v5362
  %v5369 = vshll.u32 %v5368, 16
  %v5370 = vadd.s32 %v5369, %v5367
  %v5371 = vand.u32 %v5355, 65535
  %v5372 = vshra.s32 %v5355, 16
  %v5373 = vcvt.s32.f32 %v5371
  %v5374 = vcvt.s32.f32 %v5372
  %5375 = vmin.xlane.f32.xlu0 %v5374
  %v5376 = vpop.xlane.xlu0 %5375
  %vm5377 = vcmp.eq.f32.partialorder %v5374, %v5376
  %v5378 = vsel %vm5377, %v5373, inf
  %5379 = vmin.xlane.f32.xlu0 %v5378
  %v5380 = vpop.xlane.xlu0 %5379
  %v5381 = vcvt.f32.s32 %v5380
  %v5382 = vcvt.f32.s32 %v5376
  %v5383 = vshll.u32 %v5382, 16
  %v5384 = vadd.s32 %v5383, %v5381
  %v5385 = vand.u32 %v5356, 65535
  %v5386 = vshra.s32 %v5356, 16
  %v5387 = vcvt.s32.f32 %v5385
  %v5388 = vcvt.s32.f32 %v5386
  %5389 = vmin.xlane.f32.xlu0 %v5388
  %v5390 = vpop.xlane.xlu0 %5389
  %vm5391 = vcmp.eq.f32.partialorder %v5388, %v5390
  %v5392 = vsel %vm5391, %v5387, inf
  %5393 = vmin.xlane.f32.xlu0 %v5392
  %v5394 = vpop.xlane.xlu0 %5393
  %v5395 = vcvt.f32.s32 %v5394
  %v5396 = vcvt.f32.s32 %v5390
  %v5397 = vshll.u32 %v5396, 16
  %v5398 = vadd.s32 %v5397, %v5395
  %vm5399 = vcmp.eq.s32.totalorder %v132, %v5370
  %vm5400 = vcmp.eq.s32.totalorder %v132, %v5384
  %vm5401 = vcmp.eq.s32.totalorder %v132, %v5398
  %v5402 = vsel %vm5399, 1, 0
  %v5403 = vsel %vm5400, 1, 0
  %v5404 = vsel %vm5401, 1, 0
  %v5405 = vcvt.s32.f32 %v5402
  %v5406 = vcvt.s32.f32 %v5403
  %v5407 = vcvt.s32.f32 %v5404
  %5408 = vmatprep.subr.mxu0 0.0
  %5409 = vmatpush1.msra.mxu0 0.0
  %5410 = vmatprep.subr.mxu0 0.0
  %5411 = vmatpush1.msra.mxu0 0.0
  %5412 = vmatprep.subr.mxu0 0.0
  %5413 = vmatpush1.msra.mxu0 0.0
  %5414 = vmatprep.subr.mxu0 0.0
  %5415 = vmatpush1.msra.mxu0 0.0
  %5416 = vmatprep.subr.mxu0 0.0
  %5417 = vmatpush1.msra.mxu0 0.0
  %5418 = vmatprep.subr.mxu0 0.0
  %5419 = vmatpush1.msra.mxu0 0.0
  %5420 = vmatprep.subr.mxu0 0.0
  %5421 = vmatpush1.msra.mxu0 0.0
  %5422 = vmatprep.subr.mxu0 0.0
  %5423 = vmatpush1.msra.mxu0 0.0
  %5424 = vmatprep.subr.mxu0 0.0
  %5425 = vmatpush1.msra.mxu0 0.0
  %5426 = vmatprep.subr.mxu0 0.0
  %5427 = vmatpush1.msra.mxu0 0.0
  %5428 = vmatprep.subr.mxu0 0.0
  %5429 = vmatpush1.msra.mxu0 0.0
  %5430 = vmatprep.subr.mxu0 0.0
  %5431 = vmatpush1.msra.mxu0 0.0
  %5432 = vmatprep.subr.mxu0 0.0
  %5433 = vmatpush1.msra.mxu0 %v4268
  %5434 = vmatprep.subr.mxu0 0.0
  %5435 = vmatpush1.msra.mxu0 %v4267
  %5436 = vmatprep.subr.mxu0 0.0
  %5437 = vmatpush1.msra.mxu0 %v4266
  %5438 = vmatprep.subr.mxu0 0.0
  %5439 = vmatpush1.msra.mxu0 %v4265
  %5440 = vmatprep.subr.mxu0 0.0
  %5441 = vmatpush2.msra.mxu0 0.0
  %5442 = vmatprep.subr.mxu0 0.0
  %5443 = vmatpush2.msra.mxu0 0.0
  %5444 = vmatprep.subr.mxu0 0.0
  %5445 = vmatpush2.msra.mxu0 0.0
  %5446 = vmatprep.subr.mxu0 0.0
  %5447 = vmatpush2.msra.mxu0 0.0
  %5448 = vmatprep.subr.mxu0 0.0
  %5449 = vmatpush2.msra.mxu0 0.0
  %5450 = vmatprep.subr.mxu0 0.0
  %5451 = vmatpush2.msra.mxu0 0.0
  %5452 = vmatprep.subr.mxu0 0.0
  %5453 = vmatpush2.msra.mxu0 0.0
  %5454 = vmatprep.subr.mxu0 0.0
  %5455 = vmatpush2.msra.mxu0 0.0
  %5456 = vmatprep.subr.mxu0 0.0
  %5457 = vmatpush2.msra.mxu0 0.0
  %5458 = vmatprep.subr.mxu0 0.0
  %5459 = vmatpush2.msra.mxu0 0.0
  %5460 = vmatprep.subr.mxu0 0.0
  %5461 = vmatpush2.msra.mxu0 0.0
  %5462 = vmatprep.subr.mxu0 0.0
  %5463 = vmatpush2.msra.mxu0 0.0
  %5464 = vmatprep.subr.mxu0 0.0
  %5465 = vmatpush2.msra.mxu0 0.0
  %5466 = vmatprep.subr.mxu0 0.0
  %5467 = vmatpush2.msra.mxu0 0.0
  %5468 = vmatprep.subr.mxu0 0.0
  %5469 = vmatpush2.msra.mxu0 0.0
  %5470 = vmatprep.subr.mxu0 0.0
  %5471 = vmatpush2.msra.mxu0 0.0
  %5472 = vmatprep.mubr.f32.mxu0 0.0
  %5473 = vmatmul.mubr.f32.gmra.mxu0 %v5164
  %v5474 = vpop.f32.mrf.mxu0
  %v5475 = vadd.f32 0.0, %v5474
  %v5476 = vpop.f32.mrf.mxu0
  %5477 = vmatprep.mubr.f32.mxu0 0.0
  %5478 = vmatmul.mubr.f32.gmra.mxu0 %v5166
  %v5479 = vpop.f32.mrf.mxu0
  %v5480 = vadd.f32 0.0, %v5479
  %v5481 = vpop.f32.mrf.mxu0
  %5482 = vmatprep.mubr.f32.mxu0 0.0
  %5483 = vmatmul.mubr.f32.gmra.mxu0 %v5168
  %v5484 = vpop.f32.mrf.mxu0
  %v5485 = vadd.f32 0.0, %v5484
  %v5486 = vpop.f32.mrf.mxu0
  %5487 = vdwg.mxu0
  %5488 = vmatprep.subr.mxu0 0.0
  %5489 = vmatpush1.msra.mxu0 %v4496
  %5490 = vmatprep.subr.mxu0 0.0
  %5491 = vmatpush1.msra.mxu0 %v4491
  %5492 = vmatprep.subr.mxu0 0.0
  %5493 = vmatpush1.msra.mxu0 %v4486
  %5494 = vmatprep.subr.mxu0 0.0
  %5495 = vmatpush1.msra.mxu0 %v4481
  %5496 = vmatprep.subr.mxu0 0.0
  %5497 = vmatpush1.msra.mxu0 %v4476
  %5498 = vmatprep.subr.mxu0 0.0
  %5499 = vmatpush1.msra.mxu0 %v4471
  %5500 = vmatprep.subr.mxu0 0.0
  %5501 = vmatpush1.msra.mxu0 %v4466
  %5502 = vmatprep.subr.mxu0 0.0
  %5503 = vmatpush1.msra.mxu0 %v4461
  %5504 = vmatprep.subr.mxu0 0.0
  %5505 = vmatpush1.msra.mxu0 %v4456
  %5506 = vmatprep.subr.mxu0 0.0
  %5507 = vmatpush1.msra.mxu0 %v4451
  %5508 = vmatprep.subr.mxu0 0.0
  %5509 = vmatpush1.msra.mxu0 %v4446
  %5510 = vmatprep.subr.mxu0 0.0
  %5511 = vmatpush1.msra.mxu0 %v4441
  %5512 = vmatprep.subr.mxu0 0.0
  %5513 = vmatpush1.msra.mxu0 %v4436
  %5514 = vmatprep.subr.mxu0 0.0
  %5515 = vmatpush1.msra.mxu0 %v4431
  %5516 = vmatprep.subr.mxu0 0.0
  %5517 = vmatpush1.msra.mxu0 %v4426
  %5518 = vmatprep.subr.mxu0 0.0
  %5519 = vmatpush1.msra.mxu0 %v4421
  %5520 = vmatprep.subr.mxu0 0.0
  %5521 = vmatpush2.msra.mxu0 0.0
  %5522 = vmatprep.subr.mxu0 0.0
  %5523 = vmatpush2.msra.mxu0 0.0
  %5524 = vmatprep.subr.mxu0 0.0
  %5525 = vmatpush2.msra.mxu0 0.0
  %5526 = vmatprep.subr.mxu0 0.0
  %5527 = vmatpush2.msra.mxu0 0.0
  %5528 = vmatprep.subr.mxu0 0.0
  %5529 = vmatpush2.msra.mxu0 0.0
  %5530 = vmatprep.subr.mxu0 0.0
  %5531 = vmatpush2.msra.mxu0 0.0
  %5532 = vmatprep.subr.mxu0 0.0
  %5533 = vmatpush2.msra.mxu0 0.0
  %5534 = vmatprep.subr.mxu0 0.0
  %5535 = vmatpush2.msra.mxu0 0.0
  %5536 = vmatprep.subr.mxu0 0.0
  %5537 = vmatpush2.msra.mxu0 0.0
  %5538 = vmatprep.subr.mxu0 0.0
  %5539 = vmatpush2.msra.mxu0 0.0
  %5540 = vmatprep.subr.mxu0 0.0
  %5541 = vmatpush2.msra.mxu0 0.0
  %5542 = vmatprep.subr.mxu0 0.0
  %5543 = vmatpush2.msra.mxu0 0.0
  %5544 = vmatprep.subr.mxu0 0.0
  %5545 = vmatpush2.msra.mxu0 0.0
  %5546 = vmatprep.subr.mxu0 0.0
  %5547 = vmatpush2.msra.mxu0 0.0
  %5548 = vmatprep.subr.mxu0 0.0
  %5549 = vmatpush2.msra.mxu0 0.0
  %5550 = vmatprep.subr.mxu0 0.0
  %5551 = vmatpush2.msra.mxu0 0.0
  %5552 = vmatprep.mubr.f32.mxu0 0.0
  %5553 = vmatmul.mubr.f32.gmra.mxu0 %v5405
  %v5554 = vpop.f32.mrf.mxu0
  %v5555 = vadd.f32 %v5475, %v5554
  %v5556 = vpop.f32.mrf.mxu0
  %5557 = vmatprep.mubr.f32.mxu0 0.0
  %5558 = vmatmul.mubr.f32.gmra.mxu0 %v5406
  %v5559 = vpop.f32.mrf.mxu0
  %v5560 = vadd.f32 %v5480, %v5559
  %v5561 = vpop.f32.mrf.mxu0
  %5562 = vmatprep.mubr.f32.mxu0 0.0
  %5563 = vmatmul.mubr.f32.gmra.mxu0 %v5407
  %v5564 = vpop.f32.mrf.mxu0
  %v5565 = vadd.f32 %v5485, %v5564
  %v5566 = vpop.f32.mrf.mxu0
  %5567 = vdwg.mxu0
  %v5568 = vmul.f32 %v5555, %v136
  %v5569 = vmul.f32 %v5560, %v136
  %v5570 = vmul.f32 %v5565, %v136
  %v5571 = vtanh.pop %v5568
  %v5572 = vtanh.pop %v5569
  %v5573 = vtanh.pop %v5570
  %v5574 = vmul.f32 %v5571, 0.5
  %v5575 = vmul.f32 %v5572, 0.5
  %v5576 = vmul.f32 %v5573, 0.5
  %v5577 = vadd.f32 %v5574, 0.5
  %v5578 = vadd.f32 %v5575, 0.5
  %v5579 = vadd.f32 %v5576, 0.5
  %v5580 = vsel %vm135, %v5571, %v5577
  %v5581 = vsel %vm135, %v5572, %v5578
  %v5582 = vsel %vm135, %v5573, %v5579
  %v5583 = vmul.f32 %v5580, %v5134
  %v5584 = vmul.f32 %v5581, %v5135
  %v5585 = vmul.f32 %v5582, %v5136
  %5589 = vrot.lane.b32.xlu0 %v5580, 64
  %v5590 = vpop.permute.xlu0 %5589
  %5591 = vrot.lane.b32.xlu0 %v5581, 64
  %v5592 = vpop.permute.xlu0 %5591
  %5593 = vrot.lane.b32.xlu0 %v5582, 64
  %v5594 = vpop.permute.xlu0 %5593
  %v5598 = vmul.f32 %v5580, %v5590
  %v5599 = vmul.f32 %v5581, %v5592
  %v5600 = vmul.f32 %v5582, %v5594
  %5604 = vrot.lane.b32.xlu0 %v5598, 32
  %v5605 = vpop.permute.xlu0 %5604
  %5606 = vrot.lane.b32.xlu0 %v5599, 32
  %v5607 = vpop.permute.xlu0 %5606
  %5608 = vrot.lane.b32.xlu0 %v5600, 32
  %v5609 = vpop.permute.xlu0 %5608
  %v5613 = vadd.f32 %v5583, %v5605
  %v5614 = vadd.f32 %v5584, %v5607
  %v5615 = vadd.f32 %v5585, %v5609
  %v5616 = vtanh.pop %v5613
  %v5617 = vtanh.pop %v5614
  %v5618 = vtanh.pop %v5615
  %5622 = vrot.lane.b32.xlu0 %v5616, 64
  %v5623 = vpop.permute.xlu0 %5622
  %5624 = vrot.lane.b32.xlu0 %v5617, 64
  %v5625 = vpop.permute.xlu0 %5624
  %5626 = vrot.lane.b32.xlu0 %v5618, 64
  %v5627 = vpop.permute.xlu0 %5626
  %v5631 = vmul.f32 %v5580, %v5623
  %v5632 = vmul.f32 %v5581, %v5625
  %v5633 = vmul.f32 %v5582, %v5627
  %5637 = vrot.lane.b32.xlu0 %v5631, 32
  %v5638 = vpop.permute.xlu0 %5637
  %5639 = vrot.lane.b32.xlu0 %v5632, 32
  %v5640 = vpop.permute.xlu0 %5639
  %5641 = vrot.lane.b32.xlu0 %v5633, 32
  %v5642 = vpop.permute.xlu0 %5641
  %v5643 = vsel %vm186, %v5638, 0
  %v5645 = vsel %vm186, %v5640, 0
  %v5647 = vsel %vm186, %v5642, 0
  %5649 = vmatprep.subr.mxu0 0.0
  %5650 = vmatpush1.msra.mxu0 0.0
  %5651 = vmatprep.subr.mxu0 0.0
  %5652 = vmatpush1.msra.mxu0 0.0
  %5653 = vmatprep.subr.mxu0 0.0
  %5654 = vmatpush1.msra.mxu0 0.0
  %5655 = vmatprep.subr.mxu0 0.0
  %5656 = vmatpush1.msra.mxu0 0.0
  %5657 = vmatprep.subr.mxu0 0.0
  %5658 = vmatpush1.msra.mxu0 0.0
  %5659 = vmatprep.subr.mxu0 0.0
  %5660 = vmatpush1.msra.mxu0 0.0
  %5661 = vmatprep.subr.mxu0 0.0
  %5662 = vmatpush1.msra.mxu0 0.0
  %5663 = vmatprep.subr.mxu0 0.0
  %5664 = vmatpush1.msra.mxu0 0.0
  %5665 = vmatprep.subr.mxu0 0.0
  %5666 = vmatpush1.msra.mxu0 0.0
  %5667 = vmatprep.subr.mxu0 0.0
  %5668 = vmatpush1.msra.mxu0 0.0
  %5669 = vmatprep.subr.mxu0 0.0
  %5670 = vmatpush1.msra.mxu0 0.0
  %5671 = vmatprep.subr.mxu0 0.0
  %5672 = vmatpush1.msra.mxu0 0.0
  %5673 = vmatprep.subr.mxu0 0.0
  %5674 = vmatpush1.msra.mxu0 %v4272
  %5675 = vmatprep.subr.mxu0 0.0
  %5676 = vmatpush1.msra.mxu0 %v4271
  %5677 = vmatprep.subr.mxu0 0.0
  %5678 = vmatpush1.msra.mxu0 %v4270
  %5679 = vmatprep.subr.mxu0 0.0
  %5680 = vmatpush1.msra.mxu0 %v4269
  %5681 = vmatprep.subr.mxu0 0.0
  %5682 = vmatpush2.msra.mxu0 0.0
  %5683 = vmatprep.subr.mxu0 0.0
  %5684 = vmatpush2.msra.mxu0 0.0
  %5685 = vmatprep.subr.mxu0 0.0
  %5686 = vmatpush2.msra.mxu0 0.0
  %5687 = vmatprep.subr.mxu0 0.0
  %5688 = vmatpush2.msra.mxu0 0.0
  %5689 = vmatprep.subr.mxu0 0.0
  %5690 = vmatpush2.msra.mxu0 0.0
  %5691 = vmatprep.subr.mxu0 0.0
  %5692 = vmatpush2.msra.mxu0 0.0
  %5693 = vmatprep.subr.mxu0 0.0
  %5694 = vmatpush2.msra.mxu0 0.0
  %5695 = vmatprep.subr.mxu0 0.0
  %5696 = vmatpush2.msra.mxu0 0.0
  %5697 = vmatprep.subr.mxu0 0.0
  %5698 = vmatpush2.msra.mxu0 0.0
  %5699 = vmatprep.subr.mxu0 0.0
  %5700 = vmatpush2.msra.mxu0 0.0
  %5701 = vmatprep.subr.mxu0 0.0
  %5702 = vmatpush2.msra.mxu0 0.0
  %5703 = vmatprep.subr.mxu0 0.0
  %5704 = vmatpush2.msra.mxu0 0.0
  %5705 = vmatprep.subr.mxu0 0.0
  %5706 = vmatpush2.msra.mxu0 0.0
  %5707 = vmatprep.subr.mxu0 0.0
  %5708 = vmatpush2.msra.mxu0 0.0
  %5709 = vmatprep.subr.mxu0 0.0
  %5710 = vmatpush2.msra.mxu0 0.0
  %5711 = vmatprep.subr.mxu0 0.0
  %5712 = vmatpush2.msra.mxu0 0.0
  %5713 = vmatprep.mubr.f32.mxu0 0.0
  %5714 = vmatmul.mubr.f32.gmra.mxu0 %v5643
  %v5715 = vpop.f32.mrf.mxu0
  %v5716 = vadd.f32 %v4668, %v5715
  %v5717 = vpop.f32.mrf.mxu0
  %5718 = vmatprep.mubr.f32.mxu0 0.0
  %5719 = vmatmul.mubr.f32.gmra.mxu0 %v5645
  %v5720 = vpop.f32.mrf.mxu0
  %v5721 = vadd.f32 %v4668, %v5720
  %v5722 = vpop.f32.mrf.mxu0
  %5723 = vmatprep.mubr.f32.mxu0 0.0
  %5724 = vmatmul.mubr.f32.gmra.mxu0 %v5647
  %v5725 = vpop.f32.mrf.mxu0
  %v5726 = vadd.f32 %v4668, %v5725
  %v5727 = vpop.f32.mrf.mxu0
  %5728 = vdwg.mxu0
  %v5729 = vmax.f32 %v5716, 0.0
  %v5730 = vmax.f32 %v5721, 0.0
  %v5731 = vmax.f32 %v5726, 0.0
  %v5733 = vsel %vm186, %v5729, 0
  %v5736 = vsel %vm186, %v5730, 0
  %v5739 = vsel %vm186, %v5731, 0
  %5741 = vmatprep.subr.mxu0 0.0
  %5742 = vmatpush1.msra.mxu0 0.0
  %5743 = vmatprep.subr.mxu0 0.0
  %5744 = vmatpush1.msra.mxu0 0.0
  %5745 = vmatprep.subr.mxu0 0.0
  %5746 = vmatpush1.msra.mxu0 0.0
  %5747 = vmatprep.subr.mxu0 0.0
  %5748 = vmatpush1.msra.mxu0 0.0
  %5749 = vmatprep.subr.mxu0 0.0
  %5750 = vmatpush1.msra.mxu0 0.0
  %5751 = vmatprep.subr.mxu0 0.0
  %5752 = vmatpush1.msra.mxu0 0.0
  %5753 = vmatprep.subr.mxu0 0.0
  %5754 = vmatpush1.msra.mxu0 0.0
  %5755 = vmatprep.subr.mxu0 0.0
  %5756 = vmatpush1.msra.mxu0 0.0
  %5757 = vmatprep.subr.mxu0 0.0
  %5758 = vmatpush1.msra.mxu0 0.0
  %5759 = vmatprep.subr.mxu0 0.0
  %5760 = vmatpush1.msra.mxu0 0.0
  %5761 = vmatprep.subr.mxu0 0.0
  %5762 = vmatpush1.msra.mxu0 0.0
  %5763 = vmatprep.subr.mxu0 0.0
  %5764 = vmatpush1.msra.mxu0 0.0
  %5765 = vmatprep.subr.mxu0 0.0
  %5766 = vmatpush1.msra.mxu0 %v4277
  %5767 = vmatprep.subr.mxu0 0.0
  %5768 = vmatpush1.msra.mxu0 %v4276
  %5769 = vmatprep.subr.mxu0 0.0
  %5770 = vmatpush1.msra.mxu0 %v4275
  %5771 = vmatprep.subr.mxu0 0.0
  %5772 = vmatpush1.msra.mxu0 %v4274
  %5773 = vmatprep.subr.mxu0 0.0
  %5774 = vmatpush2.msra.mxu0 0.0
  %5775 = vmatprep.subr.mxu0 0.0
  %5776 = vmatpush2.msra.mxu0 0.0
  %5777 = vmatprep.subr.mxu0 0.0
  %5778 = vmatpush2.msra.mxu0 0.0
  %5779 = vmatprep.subr.mxu0 0.0
  %5780 = vmatpush2.msra.mxu0 0.0
  %5781 = vmatprep.subr.mxu0 0.0
  %5782 = vmatpush2.msra.mxu0 0.0
  %5783 = vmatprep.subr.mxu0 0.0
  %5784 = vmatpush2.msra.mxu0 0.0
  %5785 = vmatprep.subr.mxu0 0.0
  %5786 = vmatpush2.msra.mxu0 0.0
  %5787 = vmatprep.subr.mxu0 0.0
  %5788 = vmatpush2.msra.mxu0 0.0
  %5789 = vmatprep.subr.mxu0 0.0
  %5790 = vmatpush2.msra.mxu0 0.0
  %5791 = vmatprep.subr.mxu0 0.0
  %5792 = vmatpush2.msra.mxu0 0.0
  %5793 = vmatprep.subr.mxu0 0.0
  %5794 = vmatpush2.msra.mxu0 0.0
  %5795 = vmatprep.subr.mxu0 0.0
  %5796 = vmatpush2.msra.mxu0 0.0
  %5797 = vmatprep.subr.mxu0 0.0
  %5798 = vmatpush2.msra.mxu0 0.0
  %5799 = vmatprep.subr.mxu0 0.0
  %5800 = vmatpush2.msra.mxu0 0.0
  %5801 = vmatprep.subr.mxu0 0.0
  %5802 = vmatpush2.msra.mxu0 0.0
  %5803 = vmatprep.subr.mxu0 0.0
  %5804 = vmatpush2.msra.mxu0 0.0
  %5805 = vmatprep.mubr.f32.mxu0 0.0
  %5806 = vmatmul.mubr.f32.gmra.mxu0 %v5733
  %v5807 = vpop.f32.mrf.mxu0
  %v5808 = vadd.f32 %v4772, %v5807
  %v5809 = vpop.f32.mrf.mxu0
  %5810 = vmatprep.mubr.f32.mxu0 0.0
  %5811 = vmatmul.mubr.f32.gmra.mxu0 %v5736
  %v5812 = vpop.f32.mrf.mxu0
  %v5813 = vadd.f32 %v4772, %v5812
  %v5814 = vpop.f32.mrf.mxu0
  %5815 = vmatprep.mubr.f32.mxu0 0.0
  %5816 = vmatmul.mubr.f32.gmra.mxu0 %v5739
  %v5817 = vpop.f32.mrf.mxu0
  %v5818 = vadd.f32 %v4772, %v5817
  %v5819 = vpop.f32.mrf.mxu0
  %5820 = vdwg.mxu0
  %5821 = vst [vmem:[%s63 + $0x10] sm:$0xff] %v5808
  %5822 = vst [vmem:[%s63 + $0x50] sm:$0xff] %v5813
  %5823 = vst [vmem:[%s63 + $0x90] sm:$0xff] %v5818
  %5824 = vmax.xlane.f32.xlu0 %v5808
  %v5825 = vpop.xlane.xlu0 %5824
  %5826 = vmax.xlane.f32.xlu0 %v5813
  %v5827 = vpop.xlane.xlu0 %5826
  %5828 = vmax.xlane.f32.xlu0 %v5818
  %v5829 = vpop.xlane.xlu0 %5828
  %vm5830 = vcmp.eq.f32.partialorder %v5808, %v5825
  %vm5831 = vcmp.eq.f32.partialorder %v5813, %v5827
  %vm5832 = vcmp.eq.f32.partialorder %v5818, %v5829
  %v5833 = vsel %vm5830, %v132, 128
  %v5834 = vsel %vm5831, %v132, 128
  %v5835 = vsel %vm5832, %v132, 128
  %v5836 = vand.u32 %v5833, 65535
  %v5837 = vshra.s32 %v5833, 16
  %v5838 = vcvt.s32.f32 %v5836
  %v5839 = vcvt.s32.f32 %v5837
  %5840 = vmin.xlane.f32.xlu0 %v5839
  %v5841 = vpop.xlane.xlu0 %5840
  %vm5842 = vcmp.eq.f32.partialorder %v5839, %v5841
  %v5843 = vsel %vm5842, %v5838, inf
  %5844 = vmin.xlane.f32.xlu0 %v5843
  %v5845 = vpop.xlane.xlu0 %5844
  %v5846 = vcvt.f32.s32 %v5845
  %v5847 = vcvt.f32.s32 %v5841
  %v5848 = vshll.u32 %v5847, 16
  %v5849 = vadd.s32 %v5848, %v5846
  %v5850 = vand.u32 %v5834, 65535
  %v5851 = vshra.s32 %v5834, 16
  %v5852 = vcvt.s32.f32 %v5850
  %v5853 = vcvt.s32.f32 %v5851
  %5854 = vmin.xlane.f32.xlu0 %v5853
  %v5855 = vpop.xlane.xlu0 %5854
  %vm5856 = vcmp.eq.f32.partialorder %v5853, %v5855
  %v5857 = vsel %vm5856, %v5852, inf
  %5858 = vmin.xlane.f32.xlu0 %v5857
  %v5859 = vpop.xlane.xlu0 %5858
  %v5860 = vcvt.f32.s32 %v5859
  %v5861 = vcvt.f32.s32 %v5855
  %v5862 = vshll.u32 %v5861, 16
  %v5863 = vadd.s32 %v5862, %v5860
  %v5864 = vand.u32 %v5835, 65535
  %v5865 = vshra.s32 %v5835, 16
  %v5866 = vcvt.s32.f32 %v5864
  %v5867 = vcvt.s32.f32 %v5865
  %5868 = vmin.xlane.f32.xlu0 %v5867
  %v5869 = vpop.xlane.xlu0 %5868
  %vm5870 = vcmp.eq.f32.partialorder %v5867, %v5869
  %v5871 = vsel %vm5870, %v5866, inf
  %5872 = vmin.xlane.f32.xlu0 %v5871
  %v5873 = vpop.xlane.xlu0 %5872
  %v5874 = vcvt.f32.s32 %v5873
  %v5875 = vcvt.f32.s32 %v5869
  %v5876 = vshll.u32 %v5875, 16
  %v5877 = vadd.s32 %v5876, %v5874
  %vm5878 = vcmp.eq.s32.totalorder %v132, %v5849
  %vm5879 = vcmp.eq.s32.totalorder %v132, %v5863
  %vm5880 = vcmp.eq.s32.totalorder %v132, %v5877
  %v5881 = vsel %vm5878, 1, 0
  %v5882 = vsel %vm5879, 1, 0
  %v5883 = vsel %vm5880, 1, 0
  %v5884 = vcvt.s32.f32 %v5881
  %v5885 = vcvt.s32.f32 %v5882
  %v5886 = vcvt.s32.f32 %v5883
  %5887 = vmatprep.subr.mxu0 0.0
  %5888 = vmatpush1.msra.mxu0 0.0
  %5889 = vmatprep.subr.mxu0 0.0
  %5890 = vmatpush1.msra.mxu0 0.0
  %5891 = vmatprep.subr.mxu0 0.0
  %5892 = vmatpush1.msra.mxu0 0.0
  %5893 = vmatprep.subr.mxu0 0.0
  %5894 = vmatpush1.msra.mxu0 0.0
  %5895 = vmatprep.subr.mxu0 0.0
  %5896 = vmatpush1.msra.mxu0 0.0
  %5897 = vmatprep.subr.mxu0 0.0
  %5898 = vmatpush1.msra.mxu0 0.0
  %5899 = vmatprep.subr.mxu0 0.0
  %5900 = vmatpush1.msra.mxu0 0.0
  %5901 = vmatprep.subr.mxu0 0.0
  %5902 = vmatpush1.msra.mxu0 0.0
  %5903 = vmatprep.subr.mxu0 0.0
  %5904 = vmatpush1.msra.mxu0 0.0
  %5905 = vmatprep.subr.mxu0 0.0
  %5906 = vmatpush1.msra.mxu0 0.0
  %5907 = vmatprep.subr.mxu0 0.0
  %5908 = vmatpush1.msra.mxu0 0.0
  %5909 = vmatprep.subr.mxu0 0.0
  %5910 = vmatpush1.msra.mxu0 0.0
  %5911 = vmatprep.subr.mxu0 0.0
  %5912 = vmatpush1.msra.mxu0 %v4268
  %5913 = vmatprep.subr.mxu0 0.0
  %5914 = vmatpush1.msra.mxu0 %v4267
  %5915 = vmatprep.subr.mxu0 0.0
  %5916 = vmatpush1.msra.mxu0 %v4266
  %5917 = vmatprep.subr.mxu0 0.0
  %5918 = vmatpush1.msra.mxu0 %v4265
  %5919 = vmatprep.subr.mxu0 0.0
  %5920 = vmatpush2.msra.mxu0 0.0
  %5921 = vmatprep.subr.mxu0 0.0
  %5922 = vmatpush2.msra.mxu0 0.0
  %5923 = vmatprep.subr.mxu0 0.0
  %5924 = vmatpush2.msra.mxu0 0.0
  %5925 = vmatprep.subr.mxu0 0.0
  %5926 = vmatpush2.msra.mxu0 0.0
  %5927 = vmatprep.subr.mxu0 0.0
  %5928 = vmatpush2.msra.mxu0 0.0
  %5929 = vmatprep.subr.mxu0 0.0
  %5930 = vmatpush2.msra.mxu0 0.0
  %5931 = vmatprep.subr.mxu0 0.0
  %5932 = vmatpush2.msra.mxu0 0.0
  %5933 = vmatprep.subr.mxu0 0.0
  %5934 = vmatpush2.msra.mxu0 0.0
  %5935 = vmatprep.subr.mxu0 0.0
  %5936 = vmatpush2.msra.mxu0 0.0
  %5937 = vmatprep.subr.mxu0 0.0
  %5938 = vmatpush2.msra.mxu0 0.0
  %5939 = vmatprep.subr.mxu0 0.0
  %5940 = vmatpush2.msra.mxu0 0.0
  %5941 = vmatprep.subr.mxu0 0.0
  %5942 = vmatpush2.msra.mxu0 0.0
  %5943 = vmatprep.subr.mxu0 0.0
  %5944 = vmatpush2.msra.mxu0 0.0
  %5945 = vmatprep.subr.mxu0 0.0
  %5946 = vmatpush2.msra.mxu0 0.0
  %5947 = vmatprep.subr.mxu0 0.0
  %5948 = vmatpush2.msra.mxu0 0.0
  %5949 = vmatprep.subr.mxu0 0.0
  %5950 = vmatpush2.msra.mxu0 0.0
  %5951 = vmatprep.mubr.f32.mxu0 0.0
  %5952 = vmatmul.mubr.f32.gmra.mxu0 %v5643
  %v5953 = vpop.f32.mrf.mxu0
  %v5954 = vadd.f32 0.0, %v5953
  %v5955 = vpop.f32.mrf.mxu0
  %5956 = vmatprep.mubr.f32.mxu0 0.0
  %5957 = vmatmul.mubr.f32.gmra.mxu0 %v5645
  %v5958 = vpop.f32.mrf.mxu0
  %v5959 = vadd.f32 0.0, %v5958
  %v5960 = vpop.f32.mrf.mxu0
  %5961 = vmatprep.mubr.f32.mxu0 0.0
  %5962 = vmatmul.mubr.f32.gmra.mxu0 %v5647
  %v5963 = vpop.f32.mrf.mxu0
  %v5964 = vadd.f32 0.0, %v5963
  %v5965 = vpop.f32.mrf.mxu0
  %5966 = vdwg.mxu0
  %5967 = vmatprep.subr.mxu0 0.0
  %5968 = vmatpush1.msra.mxu0 %v4496
  %5969 = vmatprep.subr.mxu0 0.0
  %5970 = vmatpush1.msra.mxu0 %v4491
  %5971 = vmatprep.subr.mxu0 0.0
  %5972 = vmatpush1.msra.mxu0 %v4486
  %5973 = vmatprep.subr.mxu0 0.0
  %5974 = vmatpush1.msra.mxu0 %v4481
  %5975 = vmatprep.subr.mxu0 0.0
  %5976 = vmatpush1.msra.mxu0 %v4476
  %5977 = vmatprep.subr.mxu0 0.0
  %5978 = vmatpush1.msra.mxu0 %v4471
  %5979 = vmatprep.subr.mxu0 0.0
  %5980 = vmatpush1.msra.mxu0 %v4466
  %5981 = vmatprep.subr.mxu0 0.0
  %5982 = vmatpush1.msra.mxu0 %v4461
  %5983 = vmatprep.subr.mxu0 0.0
  %5984 = vmatpush1.msra.mxu0 %v4456
  %5985 = vmatprep.subr.mxu0 0.0
  %5986 = vmatpush1.msra.mxu0 %v4451
  %5987 = vmatprep.subr.mxu0 0.0
  %5988 = vmatpush1.msra.mxu0 %v4446
  %5989 = vmatprep.subr.mxu0 0.0
  %5990 = vmatpush1.msra.mxu0 %v4441
  %5991 = vmatprep.subr.mxu0 0.0
  %5992 = vmatpush1.msra.mxu0 %v4436
  %5993 = vmatprep.subr.mxu0 0.0
  %5994 = vmatpush1.msra.mxu0 %v4431
  %5995 = vmatprep.subr.mxu0 0.0
  %5996 = vmatpush1.msra.mxu0 %v4426
  %5997 = vmatprep.subr.mxu0 0.0
  %5998 = vmatpush1.msra.mxu0 %v4421
  %5999 = vmatprep.subr.mxu0 0.0
  %6000 = vmatpush2.msra.mxu0 0.0
  %6001 = vmatprep.subr.mxu0 0.0
  %6002 = vmatpush2.msra.mxu0 0.0
  %6003 = vmatprep.subr.mxu0 0.0
  %6004 = vmatpush2.msra.mxu0 0.0
  %6005 = vmatprep.subr.mxu0 0.0
  %6006 = vmatpush2.msra.mxu0 0.0
  %6007 = vmatprep.subr.mxu0 0.0
  %6008 = vmatpush2.msra.mxu0 0.0
  %6009 = vmatprep.subr.mxu0 0.0
  %6010 = vmatpush2.msra.mxu0 0.0
  %6011 = vmatprep.subr.mxu0 0.0
  %6012 = vmatpush2.msra.mxu0 0.0
  %6013 = vmatprep.subr.mxu0 0.0
  %6014 = vmatpush2.msra.mxu0 0.0
  %6015 = vmatprep.subr.mxu0 0.0
  %6016 = vmatpush2.msra.mxu0 0.0
  %6017 = vmatprep.subr.mxu0 0.0
  %6018 = vmatpush2.msra.mxu0 0.0
  %6019 = vmatprep.subr.mxu0 0.0
  %6020 = vmatpush2.msra.mxu0 0.0
  %6021 = vmatprep.subr.mxu0 0.0
  %6022 = vmatpush2.msra.mxu0 0.0
  %6023 = vmatprep.subr.mxu0 0.0
  %6024 = vmatpush2.msra.mxu0 0.0
  %6025 = vmatprep.subr.mxu0 0.0
  %6026 = vmatpush2.msra.mxu0 0.0
  %6027 = vmatprep.subr.mxu0 0.0
  %6028 = vmatpush2.msra.mxu0 0.0
  %6029 = vmatprep.subr.mxu0 0.0
  %6030 = vmatpush2.msra.mxu0 0.0
  %6031 = vmatprep.mubr.f32.mxu0 0.0
  %6032 = vmatmul.mubr.f32.gmra.mxu0 %v5884
  %v6033 = vpop.f32.mrf.mxu0
  %v6034 = vadd.f32 %v5954, %v6033
  %v6035 = vpop.f32.mrf.mxu0
  %6036 = vmatprep.mubr.f32.mxu0 0.0
  %6037 = vmatmul.mubr.f32.gmra.mxu0 %v5885
  %v6038 = vpop.f32.mrf.mxu0
  %v6039 = vadd.f32 %v5959, %v6038
  %v6040 = vpop.f32.mrf.mxu0
  %6041 = vmatprep.mubr.f32.mxu0 0.0
  %6042 = vmatmul.mubr.f32.gmra.mxu0 %v5886
  %v6043 = vpop.f32.mrf.mxu0
  %v6044 = vadd.f32 %v5964, %v6043
  %v6045 = vpop.f32.mrf.mxu0
  %6046 = vdwg.mxu0
  %v6047 = vmul.f32 %v6034, %v136
  %v6048 = vmul.f32 %v6039, %v136
  %v6049 = vmul.f32 %v6044, %v136
  %v6050 = vtanh.pop %v6047
  %v6051 = vtanh.pop %v6048
  %v6052 = vtanh.pop %v6049
  %v6053 = vmul.f32 %v6050, 0.5
  %v6054 = vmul.f32 %v6051, 0.5
  %v6055 = vmul.f32 %v6052, 0.5
  %v6056 = vadd.f32 %v6053, 0.5
  %v6057 = vadd.f32 %v6054, 0.5
  %v6058 = vadd.f32 %v6055, 0.5
  %v6059 = vsel %vm135, %v6050, %v6056
  %v6060 = vsel %vm135, %v6051, %v6057
  %v6061 = vsel %vm135, %v6052, %v6058
  %v6062 = vmul.f32 %v6059, %v5613
  %v6063 = vmul.f32 %v6060, %v5614
  %v6064 = vmul.f32 %v6061, %v5615
  %6068 = vrot.lane.b32.xlu0 %v6059, 64
  %v6069 = vpop.permute.xlu0 %6068
  %6070 = vrot.lane.b32.xlu0 %v6060, 64
  %v6071 = vpop.permute.xlu0 %6070
  %6072 = vrot.lane.b32.xlu0 %v6061, 64
  %v6073 = vpop.permute.xlu0 %6072
  %v6077 = vmul.f32 %v6059, %v6069
  %v6078 = vmul.f32 %v6060, %v6071
  %v6079 = vmul.f32 %v6061, %v6073
  %6083 = vrot.lane.b32.xlu0 %v6077, 32
  %v6084 = vpop.permute.xlu0 %6083
  %6085 = vrot.lane.b32.xlu0 %v6078, 32
  %v6086 = vpop.permute.xlu0 %6085
  %6087 = vrot.lane.b32.xlu0 %v6079, 32
  %v6088 = vpop.permute.xlu0 %6087
  %v6092 = vadd.f32 %v6062, %v6084
  %v6093 = vadd.f32 %v6063, %v6086
  %v6094 = vadd.f32 %v6064, %v6088
  %v6095 = vtanh.pop %v6092
  %v6096 = vtanh.pop %v6093
  %v6097 = vtanh.pop %v6094
  %6101 = vrot.lane.b32.xlu0 %v6095, 64
  %v6102 = vpop.permute.xlu0 %6101
  %6103 = vrot.lane.b32.xlu0 %v6096, 64
  %v6104 = vpop.permute.xlu0 %6103
  %6105 = vrot.lane.b32.xlu0 %v6097, 64
  %v6106 = vpop.permute.xlu0 %6105
  %v6110 = vmul.f32 %v6059, %v6102
  %v6111 = vmul.f32 %v6060, %v6104
  %v6112 = vmul.f32 %v6061, %v6106
  %6116 = vrot.lane.b32.xlu0 %v6110, 32
  %v6117 = vpop.permute.xlu0 %6116
  %6118 = vrot.lane.b32.xlu0 %v6111, 32
  %v6119 = vpop.permute.xlu0 %6118
  %6120 = vrot.lane.b32.xlu0 %v6112, 32
  %v6121 = vpop.permute.xlu0 %6120
  %v6122 = vsel %vm186, %v6117, 0
  %v6124 = vsel %vm186, %v6119, 0
  %v6126 = vsel %vm186, %v6121, 0
  %6128 = vmatprep.subr.mxu0 0.0
  %6129 = vmatpush1.msra.mxu0 0.0
  %6130 = vmatprep.subr.mxu0 0.0
  %6131 = vmatpush1.msra.mxu0 0.0
  %6132 = vmatprep.subr.mxu0 0.0
  %6133 = vmatpush1.msra.mxu0 0.0
  %6134 = vmatprep.subr.mxu0 0.0
  %6135 = vmatpush1.msra.mxu0 0.0
  %6136 = vmatprep.subr.mxu0 0.0
  %6137 = vmatpush1.msra.mxu0 0.0
  %6138 = vmatprep.subr.mxu0 0.0
  %6139 = vmatpush1.msra.mxu0 0.0
  %6140 = vmatprep.subr.mxu0 0.0
  %6141 = vmatpush1.msra.mxu0 0.0
  %6142 = vmatprep.subr.mxu0 0.0
  %6143 = vmatpush1.msra.mxu0 0.0
  %6144 = vmatprep.subr.mxu0 0.0
  %6145 = vmatpush1.msra.mxu0 0.0
  %6146 = vmatprep.subr.mxu0 0.0
  %6147 = vmatpush1.msra.mxu0 0.0
  %6148 = vmatprep.subr.mxu0 0.0
  %6149 = vmatpush1.msra.mxu0 0.0
  %6150 = vmatprep.subr.mxu0 0.0
  %6151 = vmatpush1.msra.mxu0 0.0
  %6152 = vmatprep.subr.mxu0 0.0
  %6153 = vmatpush1.msra.mxu0 %v4272
  %6154 = vmatprep.subr.mxu0 0.0
  %6155 = vmatpush1.msra.mxu0 %v4271
  %6156 = vmatprep.subr.mxu0 0.0
  %6157 = vmatpush1.msra.mxu0 %v4270
  %6158 = vmatprep.subr.mxu0 0.0
  %6159 = vmatpush1.msra.mxu0 %v4269
  %6160 = vmatprep.subr.mxu0 0.0
  %6161 = vmatpush2.msra.mxu0 0.0
  %6162 = vmatprep.subr.mxu0 0.0
  %6163 = vmatpush2.msra.mxu0 0.0
  %6164 = vmatprep.subr.mxu0 0.0
  %6165 = vmatpush2.msra.mxu0 0.0
  %6166 = vmatprep.subr.mxu0 0.0
  %6167 = vmatpush2.msra.mxu0 0.0
  %6168 = vmatprep.subr.mxu0 0.0
  %6169 = vmatpush2.msra.mxu0 0.0
  %6170 = vmatprep.subr.mxu0 0.0
  %6171 = vmatpush2.msra.mxu0 0.0
  %6172 = vmatprep.subr.mxu0 0.0
  %6173 = vmatpush2.msra.mxu0 0.0
  %6174 = vmatprep.subr.mxu0 0.0
  %6175 = vmatpush2.msra.mxu0 0.0
  %6176 = vmatprep.subr.mxu0 0.0
  %6177 = vmatpush2.msra.mxu0 0.0
  %6178 = vmatprep.subr.mxu0 0.0
  %6179 = vmatpush2.msra.mxu0 0.0
  %6180 = vmatprep.subr.mxu0 0.0
  %6181 = vmatpush2.msra.mxu0 0.0
  %6182 = vmatprep.subr.mxu0 0.0
  %6183 = vmatpush2.msra.mxu0 0.0
  %6184 = vmatprep.subr.mxu0 0.0
  %6185 = vmatpush2.msra.mxu0 0.0
  %6186 = vmatprep.subr.mxu0 0.0
  %6187 = vmatpush2.msra.mxu0 0.0
  %6188 = vmatprep.subr.mxu0 0.0
  %6189 = vmatpush2.msra.mxu0 0.0
  %6190 = vmatprep.subr.mxu0 0.0
  %6191 = vmatpush2.msra.mxu0 0.0
  %6192 = vmatprep.mubr.f32.mxu0 0.0
  %6193 = vmatmul.mubr.f32.gmra.mxu0 %v6122
  %v6194 = vpop.f32.mrf.mxu0
  %v6195 = vadd.f32 %v4668, %v6194
  %v6196 = vpop.f32.mrf.mxu0
  %6197 = vmatprep.mubr.f32.mxu0 0.0
  %6198 = vmatmul.mubr.f32.gmra.mxu0 %v6124
  %v6199 = vpop.f32.mrf.mxu0
  %v6200 = vadd.f32 %v4668, %v6199
  %v6201 = vpop.f32.mrf.mxu0
  %6202 = vmatprep.mubr.f32.mxu0 0.0
  %6203 = vmatmul.mubr.f32.gmra.mxu0 %v6126
  %v6204 = vpop.f32.mrf.mxu0
  %v6205 = vadd.f32 %v4668, %v6204
  %v6206 = vpop.f32.mrf.mxu0
  %6207 = vdwg.mxu0
  %v6208 = vmax.f32 %v6195, 0.0
  %v6209 = vmax.f32 %v6200, 0.0
  %v6210 = vmax.f32 %v6205, 0.0
  %v6212 = vsel %vm186, %v6208, 0
  %v6215 = vsel %vm186, %v6209, 0
  %v6218 = vsel %vm186, %v6210, 0
  %6220 = vmatprep.subr.mxu0 0.0
  %6221 = vmatpush1.msra.mxu0 0.0
  %6222 = vmatprep.subr.mxu0 0.0
  %6223 = vmatpush1.msra.mxu0 0.0
  %6224 = vmatprep.subr.mxu0 0.0
  %6225 = vmatpush1.msra.mxu0 0.0
  %6226 = vmatprep.subr.mxu0 0.0
  %6227 = vmatpush1.msra.mxu0 0.0
  %6228 = vmatprep.subr.mxu0 0.0
  %6229 = vmatpush1.msra.mxu0 0.0
  %6230 = vmatprep.subr.mxu0 0.0
  %6231 = vmatpush1.msra.mxu0 0.0
  %6232 = vmatprep.subr.mxu0 0.0
  %6233 = vmatpush1.msra.mxu0 0.0
  %6234 = vmatprep.subr.mxu0 0.0
  %6235 = vmatpush1.msra.mxu0 0.0
  %6236 = vmatprep.subr.mxu0 0.0
  %6237 = vmatpush1.msra.mxu0 0.0
  %6238 = vmatprep.subr.mxu0 0.0
  %6239 = vmatpush1.msra.mxu0 0.0
  %6240 = vmatprep.subr.mxu0 0.0
  %6241 = vmatpush1.msra.mxu0 0.0
  %6242 = vmatprep.subr.mxu0 0.0
  %6243 = vmatpush1.msra.mxu0 0.0
  %6244 = vmatprep.subr.mxu0 0.0
  %6245 = vmatpush1.msra.mxu0 %v4277
  %6246 = vmatprep.subr.mxu0 0.0
  %6247 = vmatpush1.msra.mxu0 %v4276
  %6248 = vmatprep.subr.mxu0 0.0
  %6249 = vmatpush1.msra.mxu0 %v4275
  %6250 = vmatprep.subr.mxu0 0.0
  %6251 = vmatpush1.msra.mxu0 %v4274
  %6252 = vmatprep.subr.mxu0 0.0
  %6253 = vmatpush2.msra.mxu0 0.0
  %6254 = vmatprep.subr.mxu0 0.0
  %6255 = vmatpush2.msra.mxu0 0.0
  %6256 = vmatprep.subr.mxu0 0.0
  %6257 = vmatpush2.msra.mxu0 0.0
  %6258 = vmatprep.subr.mxu0 0.0
  %6259 = vmatpush2.msra.mxu0 0.0
  %6260 = vmatprep.subr.mxu0 0.0
  %6261 = vmatpush2.msra.mxu0 0.0
  %6262 = vmatprep.subr.mxu0 0.0
  %6263 = vmatpush2.msra.mxu0 0.0
  %6264 = vmatprep.subr.mxu0 0.0
  %6265 = vmatpush2.msra.mxu0 0.0
  %6266 = vmatprep.subr.mxu0 0.0
  %6267 = vmatpush2.msra.mxu0 0.0
  %6268 = vmatprep.subr.mxu0 0.0
  %6269 = vmatpush2.msra.mxu0 0.0
  %6270 = vmatprep.subr.mxu0 0.0
  %6271 = vmatpush2.msra.mxu0 0.0
  %6272 = vmatprep.subr.mxu0 0.0
  %6273 = vmatpush2.msra.mxu0 0.0
  %6274 = vmatprep.subr.mxu0 0.0
  %6275 = vmatpush2.msra.mxu0 0.0
  %6276 = vmatprep.subr.mxu0 0.0
  %6277 = vmatpush2.msra.mxu0 0.0
  %6278 = vmatprep.subr.mxu0 0.0
  %6279 = vmatpush2.msra.mxu0 0.0
  %6280 = vmatprep.subr.mxu0 0.0
  %6281 = vmatpush2.msra.mxu0 0.0
  %6282 = vmatprep.subr.mxu0 0.0
  %6283 = vmatpush2.msra.mxu0 0.0
  %6284 = vmatprep.mubr.f32.mxu0 0.0
  %6285 = vmatmul.mubr.f32.gmra.mxu0 %v6212
  %v6286 = vpop.f32.mrf.mxu0
  %v6287 = vadd.f32 %v4772, %v6286
  %v6288 = vpop.f32.mrf.mxu0
  %6289 = vmatprep.mubr.f32.mxu0 0.0
  %6290 = vmatmul.mubr.f32.gmra.mxu0 %v6215
  %v6291 = vpop.f32.mrf.mxu0
  %v6292 = vadd.f32 %v4772, %v6291
  %v6293 = vpop.f32.mrf.mxu0
  %6294 = vmatprep.mubr.f32.mxu0 0.0
  %6295 = vmatmul.mubr.f32.gmra.mxu0 %v6218
  %v6296 = vpop.f32.mrf.mxu0
  %v6297 = vadd.f32 %v4772, %v6296
  %v6298 = vpop.f32.mrf.mxu0
  %6299 = vdwg.mxu0
  %6300 = vst [vmem:[%s63 + $0x18] sm:$0xff] %v6287
  %6301 = vst [vmem:[%s63 + $0x58] sm:$0xff] %v6292
  %6302 = vst [vmem:[%s63 + $0x98] sm:$0xff] %v6297
  %6303 = vmax.xlane.f32.xlu0 %v6287
  %v6304 = vpop.xlane.xlu0 %6303
  %6305 = vmax.xlane.f32.xlu0 %v6292
  %v6306 = vpop.xlane.xlu0 %6305
  %6307 = vmax.xlane.f32.xlu0 %v6297
  %v6308 = vpop.xlane.xlu0 %6307
  %vm6309 = vcmp.eq.f32.partialorder %v6287, %v6304
  %vm6310 = vcmp.eq.f32.partialorder %v6292, %v6306
  %vm6311 = vcmp.eq.f32.partialorder %v6297, %v6308
  %v6312 = vsel %vm6309, %v132, 128
  %v6313 = vsel %vm6310, %v132, 128
  %v6314 = vsel %vm6311, %v132, 128
  %v6315 = vand.u32 %v6312, 65535
  %v6316 = vshra.s32 %v6312, 16
  %v6317 = vcvt.s32.f32 %v6315
  %v6318 = vcvt.s32.f32 %v6316
  %6319 = vmin.xlane.f32.xlu0 %v6318
  %v6320 = vpop.xlane.xlu0 %6319
  %vm6321 = vcmp.eq.f32.partialorder %v6318, %v6320
  %v6322 = vsel %vm6321, %v6317, inf
  %6323 = vmin.xlane.f32.xlu0 %v6322
  %v6324 = vpop.xlane.xlu0 %6323
  %v6325 = vcvt.f32.s32 %v6324
  %v6326 = vcvt.f32.s32 %v6320
  %v6327 = vshll.u32 %v6326, 16
  %v6328 = vadd.s32 %v6327, %v6325
  %v6329 = vand.u32 %v6313, 65535
  %v6330 = vshra.s32 %v6313, 16
  %v6331 = vcvt.s32.f32 %v6329
  %v6332 = vcvt.s32.f32 %v6330
  %6333 = vmin.xlane.f32.xlu0 %v6332
  %v6334 = vpop.xlane.xlu0 %6333
  %vm6335 = vcmp.eq.f32.partialorder %v6332, %v6334
  %v6336 = vsel %vm6335, %v6331, inf
  %6337 = vmin.xlane.f32.xlu0 %v6336
  %v6338 = vpop.xlane.xlu0 %6337
  %v6339 = vcvt.f32.s32 %v6338
  %v6340 = vcvt.f32.s32 %v6334
  %v6341 = vshll.u32 %v6340, 16
  %v6342 = vadd.s32 %v6341, %v6339
  %v6343 = vand.u32 %v6314, 65535
  %v6344 = vshra.s32 %v6314, 16
  %v6345 = vcvt.s32.f32 %v6343
  %v6346 = vcvt.s32.f32 %v6344
  %6347 = vmin.xlane.f32.xlu0 %v6346
  %v6348 = vpop.xlane.xlu0 %6347
  %vm6349 = vcmp.eq.f32.partialorder %v6346, %v6348
  %v6350 = vsel %vm6349, %v6345, inf
  %6351 = vmin.xlane.f32.xlu0 %v6350
  %v6352 = vpop.xlane.xlu0 %6351
  %v6353 = vcvt.f32.s32 %v6352
  %v6354 = vcvt.f32.s32 %v6348
  %v6355 = vshll.u32 %v6354, 16
  %v6356 = vadd.s32 %v6355, %v6353
  %vm6357 = vcmp.eq.s32.totalorder %v132, %v6328
  %vm6358 = vcmp.eq.s32.totalorder %v132, %v6342
  %vm6359 = vcmp.eq.s32.totalorder %v132, %v6356
  %v6360 = vsel %vm6357, 1, 0
  %v6361 = vsel %vm6358, 1, 0
  %v6362 = vsel %vm6359, 1, 0
  %v6363 = vcvt.s32.f32 %v6360
  %v6364 = vcvt.s32.f32 %v6361
  %v6365 = vcvt.s32.f32 %v6362
  %6366 = vmatprep.subr.mxu0 0.0
  %6367 = vmatpush1.msra.mxu0 0.0
  %6368 = vmatprep.subr.mxu0 0.0
  %6369 = vmatpush1.msra.mxu0 0.0
  %6370 = vmatprep.subr.mxu0 0.0
  %6371 = vmatpush1.msra.mxu0 0.0
  %6372 = vmatprep.subr.mxu0 0.0
  %6373 = vmatpush1.msra.mxu0 0.0
  %6374 = vmatprep.subr.mxu0 0.0
  %6375 = vmatpush1.msra.mxu0 0.0
  %6376 = vmatprep.subr.mxu0 0.0
  %6377 = vmatpush1.msra.mxu0 0.0
  %6378 = vmatprep.subr.mxu0 0.0
  %6379 = vmatpush1.msra.mxu0 0.0
  %6380 = vmatprep.subr.mxu0 0.0
  %6381 = vmatpush1.msra.mxu0 0.0
  %6382 = vmatprep.subr.mxu0 0.0
  %6383 = vmatpush1.msra.mxu0 0.0
  %6384 = vmatprep.subr.mxu0 0.0
  %6385 = vmatpush1.msra.mxu0 0.0
  %6386 = vmatprep.subr.mxu0 0.0
  %6387 = vmatpush1.msra.mxu0 0.0
  %6388 = vmatprep.subr.mxu0 0.0
  %6389 = vmatpush1.msra.mxu0 0.0
  %6390 = vmatprep.subr.mxu0 0.0
  %6391 = vmatpush1.msra.mxu0 %v4268
  %6392 = vmatprep.subr.mxu0 0.0
  %6393 = vmatpush1.msra.mxu0 %v4267
  %6394 = vmatprep.subr.mxu0 0.0
  %6395 = vmatpush1.msra.mxu0 %v4266
  %6396 = vmatprep.subr.mxu0 0.0
  %6397 = vmatpush1.msra.mxu0 %v4265
  %6398 = vmatprep.subr.mxu0 0.0
  %6399 = vmatpush2.msra.mxu0 0.0
  %6400 = vmatprep.subr.mxu0 0.0
  %6401 = vmatpush2.msra.mxu0 0.0
  %6402 = vmatprep.subr.mxu0 0.0
  %6403 = vmatpush2.msra.mxu0 0.0
  %6404 = vmatprep.subr.mxu0 0.0
  %6405 = vmatpush2.msra.mxu0 0.0
  %6406 = vmatprep.subr.mxu0 0.0
  %6407 = vmatpush2.msra.mxu0 0.0
  %6408 = vmatprep.subr.mxu0 0.0
  %6409 = vmatpush2.msra.mxu0 0.0
  %6410 = vmatprep.subr.mxu0 0.0
  %6411 = vmatpush2.msra.mxu0 0.0
  %6412 = vmatprep.subr.mxu0 0.0
  %6413 = vmatpush2.msra.mxu0 0.0
  %6414 = vmatprep.subr.mxu0 0.0
  %6415 = vmatpush2.msra.mxu0 0.0
  %6416 = vmatprep.subr.mxu0 0.0
  %6417 = vmatpush2.msra.mxu0 0.0
  %6418 = vmatprep.subr.mxu0 0.0
  %6419 = vmatpush2.msra.mxu0 0.0
  %6420 = vmatprep.subr.mxu0 0.0
  %6421 = vmatpush2.msra.mxu0 0.0
  %6422 = vmatprep.subr.mxu0 0.0
  %6423 = vmatpush2.msra.mxu0 0.0
  %6424 = vmatprep.subr.mxu0 0.0
  %6425 = vmatpush2.msra.mxu0 0.0
  %6426 = vmatprep.subr.mxu0 0.0
  %6427 = vmatpush2.msra.mxu0 0.0
  %6428 = vmatprep.subr.mxu0 0.0
  %6429 = vmatpush2.msra.mxu0 0.0
  %6430 = vmatprep.mubr.f32.mxu0 0.0
  %6431 = vmatmul.mubr.f32.gmra.mxu0 %v6122
  %v6432 = vpop.f32.mrf.mxu0
  %v6433 = vadd.f32 0.0, %v6432
  %v6434 = vpop.f32.mrf.mxu0
  %6435 = vmatprep.mubr.f32.mxu0 0.0
  %6436 = vmatmul.mubr.f32.gmra.mxu0 %v6124
  %v6437 = vpop.f32.mrf.mxu0
  %v6438 = vadd.f32 0.0, %v6437
  %v6439 = vpop.f32.mrf.mxu0
  %6440 = vmatprep.mubr.f32.mxu0 0.0
  %6441 = vmatmul.mubr.f32.gmra.mxu0 %v6126
  %v6442 = vpop.f32.mrf.mxu0
  %v6443 = vadd.f32 0.0, %v6442
  %v6444 = vpop.f32.mrf.mxu0
  %6445 = vdwg.mxu0
  %6446 = vmatprep.subr.mxu0 0.0
  %6447 = vmatpush1.msra.mxu0 %v4496
  %6448 = vmatprep.subr.mxu0 0.0
  %6449 = vmatpush1.msra.mxu0 %v4491
  %6450 = vmatprep.subr.mxu0 0.0
  %6451 = vmatpush1.msra.mxu0 %v4486
  %6452 = vmatprep.subr.mxu0 0.0
  %6453 = vmatpush1.msra.mxu0 %v4481
  %6454 = vmatprep.subr.mxu0 0.0
  %6455 = vmatpush1.msra.mxu0 %v4476
  %6456 = vmatprep.subr.mxu0 0.0
  %6457 = vmatpush1.msra.mxu0 %v4471
  %6458 = vmatprep.subr.mxu0 0.0
  %6459 = vmatpush1.msra.mxu0 %v4466
  %6460 = vmatprep.subr.mxu0 0.0
  %6461 = vmatpush1.msra.mxu0 %v4461
  %6462 = vmatprep.subr.mxu0 0.0
  %6463 = vmatpush1.msra.mxu0 %v4456
  %6464 = vmatprep.subr.mxu0 0.0
  %6465 = vmatpush1.msra.mxu0 %v4451
  %6466 = vmatprep.subr.mxu0 0.0
  %6467 = vmatpush1.msra.mxu0 %v4446
  %6468 = vmatprep.subr.mxu0 0.0
  %6469 = vmatpush1.msra.mxu0 %v4441
  %6470 = vmatprep.subr.mxu0 0.0
  %6471 = vmatpush1.msra.mxu0 %v4436
  %6472 = vmatprep.subr.mxu0 0.0
  %6473 = vmatpush1.msra.mxu0 %v4431
  %6474 = vmatprep.subr.mxu0 0.0
  %6475 = vmatpush1.msra.mxu0 %v4426
  %6476 = vmatprep.subr.mxu0 0.0
  %6477 = vmatpush1.msra.mxu0 %v4421
  %6478 = vmatprep.subr.mxu0 0.0
  %6479 = vmatpush2.msra.mxu0 0.0
  %6480 = vmatprep.subr.mxu0 0.0
  %6481 = vmatpush2.msra.mxu0 0.0
  %6482 = vmatprep.subr.mxu0 0.0
  %6483 = vmatpush2.msra.mxu0 0.0
  %6484 = vmatprep.subr.mxu0 0.0
  %6485 = vmatpush2.msra.mxu0 0.0
  %6486 = vmatprep.subr.mxu0 0.0
  %6487 = vmatpush2.msra.mxu0 0.0
  %6488 = vmatprep.subr.mxu0 0.0
  %6489 = vmatpush2.msra.mxu0 0.0
  %6490 = vmatprep.subr.mxu0 0.0
  %6491 = vmatpush2.msra.mxu0 0.0
  %6492 = vmatprep.subr.mxu0 0.0
  %6493 = vmatpush2.msra.mxu0 0.0
  %6494 = vmatprep.subr.mxu0 0.0
  %6495 = vmatpush2.msra.mxu0 0.0
  %6496 = vmatprep.subr.mxu0 0.0
  %6497 = vmatpush2.msra.mxu0 0.0
  %6498 = vmatprep.subr.mxu0 0.0
  %6499 = vmatpush2.msra.mxu0 0.0
  %6500 = vmatprep.subr.mxu0 0.0
  %6501 = vmatpush2.msra.mxu0 0.0
  %6502 = vmatprep.subr.mxu0 0.0
  %6503 = vmatpush2.msra.mxu0 0.0
  %6504 = vmatprep.subr.mxu0 0.0
  %6505 = vmatpush2.msra.mxu0 0.0
  %6506 = vmatprep.subr.mxu0 0.0
  %6507 = vmatpush2.msra.mxu0 0.0
  %6508 = vmatprep.subr.mxu0 0.0
  %6509 = vmatpush2.msra.mxu0 0.0
  %6510 = vmatprep.mubr.f32.mxu0 0.0
  %6511 = vmatmul.mubr.f32.gmra.mxu0 %v6363
  %v6512 = vpop.f32.mrf.mxu0
  %v6513 = vadd.f32 %v6433, %v6512
  %v6514 = vpop.f32.mrf.mxu0
  %6515 = vmatprep.mubr.f32.mxu0 0.0
  %6516 = vmatmul.mubr.f32.gmra.mxu0 %v6364
  %v6517 = vpop.f32.mrf.mxu0
  %v6518 = vadd.f32 %v6438, %v6517
  %v6519 = vpop.f32.mrf.mxu0
  %6520 = vmatprep.mubr.f32.mxu0 0.0
  %6521 = vmatmul.mubr.f32.gmra.mxu0 %v6365
  %v6522 = vpop.f32.mrf.mxu0
  %v6523 = vadd.f32 %v6443, %v6522
  %v6524 = vpop.f32.mrf.mxu0
  %6525 = vdwg.mxu0
  %v6526 = vmul.f32 %v6513, %v136
  %v6527 = vmul.f32 %v6518, %v136
  %v6528 = vmul.f32 %v6523, %v136
  %v6529 = vtanh.pop %v6526
  %v6530 = vtanh.pop %v6527
  %v6531 = vtanh.pop %v6528
  %v6532 = vmul.f32 %v6529, 0.5
  %v6533 = vmul.f32 %v6530, 0.5
  %v6534 = vmul.f32 %v6531, 0.5
  %v6535 = vadd.f32 %v6532, 0.5
  %v6536 = vadd.f32 %v6533, 0.5
  %v6537 = vadd.f32 %v6534, 0.5
  %v6538 = vsel %vm135, %v6529, %v6535
  %v6539 = vsel %vm135, %v6530, %v6536
  %v6540 = vsel %vm135, %v6531, %v6537
  %v6541 = vmul.f32 %v6538, %v6092
  %v6542 = vmul.f32 %v6539, %v6093
  %v6543 = vmul.f32 %v6540, %v6094
  %6547 = vrot.lane.b32.xlu0 %v6538, 64
  %v6548 = vpop.permute.xlu0 %6547
  %6549 = vrot.lane.b32.xlu0 %v6539, 64
  %v6550 = vpop.permute.xlu0 %6549
  %6551 = vrot.lane.b32.xlu0 %v6540, 64
  %v6552 = vpop.permute.xlu0 %6551
  %v6556 = vmul.f32 %v6538, %v6548
  %v6557 = vmul.f32 %v6539, %v6550
  %v6558 = vmul.f32 %v6540, %v6552
  %6562 = vrot.lane.b32.xlu0 %v6556, 32
  %v6563 = vpop.permute.xlu0 %6562
  %6564 = vrot.lane.b32.xlu0 %v6557, 32
  %v6565 = vpop.permute.xlu0 %6564
  %6566 = vrot.lane.b32.xlu0 %v6558, 32
  %v6567 = vpop.permute.xlu0 %6566
  %v6571 = vadd.f32 %v6541, %v6563
  %v6572 = vadd.f32 %v6542, %v6565
  %v6573 = vadd.f32 %v6543, %v6567
  %v6574 = vtanh.pop %v6571
  %v6575 = vtanh.pop %v6572
  %v6576 = vtanh.pop %v6573
  %6580 = vrot.lane.b32.xlu0 %v6574, 64
  %v6581 = vpop.permute.xlu0 %6580
  %6582 = vrot.lane.b32.xlu0 %v6575, 64
  %v6583 = vpop.permute.xlu0 %6582
  %6584 = vrot.lane.b32.xlu0 %v6576, 64
  %v6585 = vpop.permute.xlu0 %6584
  %v6589 = vmul.f32 %v6538, %v6581
  %v6590 = vmul.f32 %v6539, %v6583
  %v6591 = vmul.f32 %v6540, %v6585
  %6595 = vrot.lane.b32.xlu0 %v6589, 32
  %v6596 = vpop.permute.xlu0 %6595
  %6597 = vrot.lane.b32.xlu0 %v6590, 32
  %v6598 = vpop.permute.xlu0 %6597
  %6599 = vrot.lane.b32.xlu0 %v6591, 32
  %v6600 = vpop.permute.xlu0 %6599
  %v6601 = vsel %vm186, %v6596, 0
  %v6603 = vsel %vm186, %v6598, 0
  %v6605 = vsel %vm186, %v6600, 0
  %6607 = vmatprep.subr.mxu0 0.0
  %6608 = vmatpush1.msra.mxu0 0.0
  %6609 = vmatprep.subr.mxu0 0.0
  %6610 = vmatpush1.msra.mxu0 0.0
  %6611 = vmatprep.subr.mxu0 0.0
  %6612 = vmatpush1.msra.mxu0 0.0
  %6613 = vmatprep.subr.mxu0 0.0
  %6614 = vmatpush1.msra.mxu0 0.0
  %6615 = vmatprep.subr.mxu0 0.0
  %6616 = vmatpush1.msra.mxu0 0.0
  %6617 = vmatprep.subr.mxu0 0.0
  %6618 = vmatpush1.msra.mxu0 0.0
  %6619 = vmatprep.subr.mxu0 0.0
  %6620 = vmatpush1.msra.mxu0 0.0
  %6621 = vmatprep.subr.mxu0 0.0
  %6622 = vmatpush1.msra.mxu0 0.0
  %6623 = vmatprep.subr.mxu0 0.0
  %6624 = vmatpush1.msra.mxu0 0.0
  %6625 = vmatprep.subr.mxu0 0.0
  %6626 = vmatpush1.msra.mxu0 0.0
  %6627 = vmatprep.subr.mxu0 0.0
  %6628 = vmatpush1.msra.mxu0 0.0
  %6629 = vmatprep.subr.mxu0 0.0
  %6630 = vmatpush1.msra.mxu0 0.0
  %6631 = vmatprep.subr.mxu0 0.0
  %6632 = vmatpush1.msra.mxu0 %v4272
  %6633 = vmatprep.subr.mxu0 0.0
  %6634 = vmatpush1.msra.mxu0 %v4271
  %6635 = vmatprep.subr.mxu0 0.0
  %6636 = vmatpush1.msra.mxu0 %v4270
  %6637 = vmatprep.subr.mxu0 0.0
  %6638 = vmatpush1.msra.mxu0 %v4269
  %6639 = vmatprep.subr.mxu0 0.0
  %6640 = vmatpush2.msra.mxu0 0.0
  %6641 = vmatprep.subr.mxu0 0.0
  %6642 = vmatpush2.msra.mxu0 0.0
  %6643 = vmatprep.subr.mxu0 0.0
  %6644 = vmatpush2.msra.mxu0 0.0
  %6645 = vmatprep.subr.mxu0 0.0
  %6646 = vmatpush2.msra.mxu0 0.0
  %6647 = vmatprep.subr.mxu0 0.0
  %6648 = vmatpush2.msra.mxu0 0.0
  %6649 = vmatprep.subr.mxu0 0.0
  %6650 = vmatpush2.msra.mxu0 0.0
  %6651 = vmatprep.subr.mxu0 0.0
  %6652 = vmatpush2.msra.mxu0 0.0
  %6653 = vmatprep.subr.mxu0 0.0
  %6654 = vmatpush2.msra.mxu0 0.0
  %6655 = vmatprep.subr.mxu0 0.0
  %6656 = vmatpush2.msra.mxu0 0.0
  %6657 = vmatprep.subr.mxu0 0.0
  %6658 = vmatpush2.msra.mxu0 0.0
  %6659 = vmatprep.subr.mxu0 0.0
  %6660 = vmatpush2.msra.mxu0 0.0
  %6661 = vmatprep.subr.mxu0 0.0
  %6662 = vmatpush2.msra.mxu0 0.0
  %6663 = vmatprep.subr.mxu0 0.0
  %6664 = vmatpush2.msra.mxu0 0.0
  %6665 = vmatprep.subr.mxu0 0.0
  %6666 = vmatpush2.msra.mxu0 0.0
  %6667 = vmatprep.subr.mxu0 0.0
  %6668 = vmatpush2.msra.mxu0 0.0
  %6669 = vmatprep.subr.mxu0 0.0
  %6670 = vmatpush2.msra.mxu0 0.0
  %6671 = vmatprep.mubr.f32.mxu0 0.0
  %6672 = vmatmul.mubr.f32.gmra.mxu0 %v6601
  %v6673 = vpop.f32.mrf.mxu0
  %v6674 = vadd.f32 %v4668, %v6673
  %v6675 = vpop.f32.mrf.mxu0
  %6676 = vmatprep.mubr.f32.mxu0 0.0
  %6677 = vmatmul.mubr.f32.gmra.mxu0 %v6603
  %v6678 = vpop.f32.mrf.mxu0
  %v6679 = vadd.f32 %v4668, %v6678
  %v6680 = vpop.f32.mrf.mxu0
  %6681 = vmatprep.mubr.f32.mxu0 0.0
  %6682 = vmatmul.mubr.f32.gmra.mxu0 %v6605
  %v6683 = vpop.f32.mrf.mxu0
  %v6684 = vadd.f32 %v4668, %v6683
  %v6685 = vpop.f32.mrf.mxu0
  %6686 = vdwg.mxu0
  %v6687 = vmax.f32 %v6674, 0.0
  %v6688 = vmax.f32 %v6679, 0.0
  %v6689 = vmax.f32 %v6684, 0.0
  %v6691 = vsel %vm186, %v6687, 0
  %v6694 = vsel %vm186, %v6688, 0
  %v6697 = vsel %vm186, %v6689, 0
  %6699 = vmatprep.subr.mxu0 0.0
  %6700 = vmatpush1.msra.mxu0 0.0
  %6701 = vmatprep.subr.mxu0 0.0
  %6702 = vmatpush1.msra.mxu0 0.0
  %6703 = vmatprep.subr.mxu0 0.0
  %6704 = vmatpush1.msra.mxu0 0.0
  %6705 = vmatprep.subr.mxu0 0.0
  %6706 = vmatpush1.msra.mxu0 0.0
  %6707 = vmatprep.subr.mxu0 0.0
  %6708 = vmatpush1.msra.mxu0 0.0
  %6709 = vmatprep.subr.mxu0 0.0
  %6710 = vmatpush1.msra.mxu0 0.0
  %6711 = vmatprep.subr.mxu0 0.0
  %6712 = vmatpush1.msra.mxu0 0.0
  %6713 = vmatprep.subr.mxu0 0.0
  %6714 = vmatpush1.msra.mxu0 0.0
  %6715 = vmatprep.subr.mxu0 0.0
  %6716 = vmatpush1.msra.mxu0 0.0
  %6717 = vmatprep.subr.mxu0 0.0
  %6718 = vmatpush1.msra.mxu0 0.0
  %6719 = vmatprep.subr.mxu0 0.0
  %6720 = vmatpush1.msra.mxu0 0.0
  %6721 = vmatprep.subr.mxu0 0.0
  %6722 = vmatpush1.msra.mxu0 0.0
  %6723 = vmatprep.subr.mxu0 0.0
  %6724 = vmatpush1.msra.mxu0 %v4277
  %6725 = vmatprep.subr.mxu0 0.0
  %6726 = vmatpush1.msra.mxu0 %v4276
  %6727 = vmatprep.subr.mxu0 0.0
  %6728 = vmatpush1.msra.mxu0 %v4275
  %6729 = vmatprep.subr.mxu0 0.0
  %6730 = vmatpush1.msra.mxu0 %v4274
  %6731 = vmatprep.subr.mxu0 0.0
  %6732 = vmatpush2.msra.mxu0 0.0
  %6733 = vmatprep.subr.mxu0 0.0
  %6734 = vmatpush2.msra.mxu0 0.0
  %6735 = vmatprep.subr.mxu0 0.0
  %6736 = vmatpush2.msra.mxu0 0.0
  %6737 = vmatprep.subr.mxu0 0.0
  %6738 = vmatpush2.msra.mxu0 0.0
  %6739 = vmatprep.subr.mxu0 0.0
  %6740 = vmatpush2.msra.mxu0 0.0
  %6741 = vmatprep.subr.mxu0 0.0
  %6742 = vmatpush2.msra.mxu0 0.0
  %6743 = vmatprep.subr.mxu0 0.0
  %6744 = vmatpush2.msra.mxu0 0.0
  %6745 = vmatprep.subr.mxu0 0.0
  %6746 = vmatpush2.msra.mxu0 0.0
  %6747 = vmatprep.subr.mxu0 0.0
  %6748 = vmatpush2.msra.mxu0 0.0
  %6749 = vmatprep.subr.mxu0 0.0
  %6750 = vmatpush2.msra.mxu0 0.0
  %6751 = vmatprep.subr.mxu0 0.0
  %6752 = vmatpush2.msra.mxu0 0.0
  %6753 = vmatprep.subr.mxu0 0.0
  %6754 = vmatpush2.msra.mxu0 0.0
  %6755 = vmatprep.subr.mxu0 0.0
  %6756 = vmatpush2.msra.mxu0 0.0
  %6757 = vmatprep.subr.mxu0 0.0
  %6758 = vmatpush2.msra.mxu0 0.0
  %6759 = vmatprep.subr.mxu0 0.0
  %6760 = vmatpush2.msra.mxu0 0.0
  %6761 = vmatprep.subr.mxu0 0.0
  %6762 = vmatpush2.msra.mxu0 0.0
  %6763 = vmatprep.mubr.f32.mxu0 0.0
  %6764 = vmatmul.mubr.f32.gmra.mxu0 %v6691
  %v6765 = vpop.f32.mrf.mxu0
  %v6766 = vadd.f32 %v4772, %v6765
  %v6767 = vpop.f32.mrf.mxu0
  %6768 = vmatprep.mubr.f32.mxu0 0.0
  %6769 = vmatmul.mubr.f32.gmra.mxu0 %v6694
  %v6770 = vpop.f32.mrf.mxu0
  %v6771 = vadd.f32 %v4772, %v6770
  %v6772 = vpop.f32.mrf.mxu0
  %6773 = vmatprep.mubr.f32.mxu0 0.0
  %6774 = vmatmul.mubr.f32.gmra.mxu0 %v6697
  %v6775 = vpop.f32.mrf.mxu0
  %v6776 = vadd.f32 %v4772, %v6775
  %v6777 = vpop.f32.mrf.mxu0
  %6778 = vdwg.mxu0
  %6779 = vst [vmem:[%s63 + $0x20] sm:$0xff] %v6766
  %6780 = vst [vmem:[%s63 + $0x60] sm:$0xff] %v6771
  %6781 = vst [vmem:[%s63 + $0xa0] sm:$0xff] %v6776
  %6782 = vmax.xlane.f32.xlu0 %v6766
  %v6783 = vpop.xlane.xlu0 %6782
  %6784 = vmax.xlane.f32.xlu0 %v6771
  %v6785 = vpop.xlane.xlu0 %6784
  %6786 = vmax.xlane.f32.xlu0 %v6776
  %v6787 = vpop.xlane.xlu0 %6786
  %vm6788 = vcmp.eq.f32.partialorder %v6766, %v6783
  %vm6789 = vcmp.eq.f32.partialorder %v6771, %v6785
  %vm6790 = vcmp.eq.f32.partialorder %v6776, %v6787
  %v6791 = vsel %vm6788, %v132, 128
  %v6792 = vsel %vm6789, %v132, 128
  %v6793 = vsel %vm6790, %v132, 128
  %v6794 = vand.u32 %v6791, 65535
  %v6795 = vshra.s32 %v6791, 16
  %v6796 = vcvt.s32.f32 %v6794
  %v6797 = vcvt.s32.f32 %v6795
  %6798 = vmin.xlane.f32.xlu0 %v6797
  %v6799 = vpop.xlane.xlu0 %6798
  %vm6800 = vcmp.eq.f32.partialorder %v6797, %v6799
  %v6801 = vsel %vm6800, %v6796, inf
  %6802 = vmin.xlane.f32.xlu0 %v6801
  %v6803 = vpop.xlane.xlu0 %6802
  %v6804 = vcvt.f32.s32 %v6803
  %v6805 = vcvt.f32.s32 %v6799
  %v6806 = vshll.u32 %v6805, 16
  %v6807 = vadd.s32 %v6806, %v6804
  %v6808 = vand.u32 %v6792, 65535
  %v6809 = vshra.s32 %v6792, 16
  %v6810 = vcvt.s32.f32 %v6808
  %v6811 = vcvt.s32.f32 %v6809
  %6812 = vmin.xlane.f32.xlu0 %v6811
  %v6813 = vpop.xlane.xlu0 %6812
  %vm6814 = vcmp.eq.f32.partialorder %v6811, %v6813
  %v6815 = vsel %vm6814, %v6810, inf
  %6816 = vmin.xlane.f32.xlu0 %v6815
  %v6817 = vpop.xlane.xlu0 %6816
  %v6818 = vcvt.f32.s32 %v6817
  %v6819 = vcvt.f32.s32 %v6813
  %v6820 = vshll.u32 %v6819, 16
  %v6821 = vadd.s32 %v6820, %v6818
  %v6822 = vand.u32 %v6793, 65535
  %v6823 = vshra.s32 %v6793, 16
  %v6824 = vcvt.s32.f32 %v6822
  %v6825 = vcvt.s32.f32 %v6823
  %6826 = vmin.xlane.f32.xlu0 %v6825
  %v6827 = vpop.xlane.xlu0 %6826
  %vm6828 = vcmp.eq.f32.partialorder %v6825, %v6827
  %v6829 = vsel %vm6828, %v6824, inf
  %6830 = vmin.xlane.f32.xlu0 %v6829
  %v6831 = vpop.xlane.xlu0 %6830
  %v6832 = vcvt.f32.s32 %v6831
  %v6833 = vcvt.f32.s32 %v6827
  %v6834 = vshll.u32 %v6833, 16
  %v6835 = vadd.s32 %v6834, %v6832
  %vm6836 = vcmp.eq.s32.totalorder %v132, %v6807
  %vm6837 = vcmp.eq.s32.totalorder %v132, %v6821
  %vm6838 = vcmp.eq.s32.totalorder %v132, %v6835
  %v6839 = vsel %vm6836, 1, 0
  %v6840 = vsel %vm6837, 1, 0
  %v6841 = vsel %vm6838, 1, 0
  %v6842 = vcvt.s32.f32 %v6839
  %v6843 = vcvt.s32.f32 %v6840
  %v6844 = vcvt.s32.f32 %v6841
  %6845 = vmatprep.subr.mxu0 0.0
  %6846 = vmatpush1.msra.mxu0 0.0
  %6847 = vmatprep.subr.mxu0 0.0
  %6848 = vmatpush1.msra.mxu0 0.0
  %6849 = vmatprep.subr.mxu0 0.0
  %6850 = vmatpush1.msra.mxu0 0.0
  %6851 = vmatprep.subr.mxu0 0.0
  %6852 = vmatpush1.msra.mxu0 0.0
  %6853 = vmatprep.subr.mxu0 0.0
  %6854 = vmatpush1.msra.mxu0 0.0
  %6855 = vmatprep.subr.mxu0 0.0
  %6856 = vmatpush1.msra.mxu0 0.0
  %6857 = vmatprep.subr.mxu0 0.0
  %6858 = vmatpush1.msra.mxu0 0.0
  %6859 = vmatprep.subr.mxu0 0.0
  %6860 = vmatpush1.msra.mxu0 0.0
  %6861 = vmatprep.subr.mxu0 0.0
  %6862 = vmatpush1.msra.mxu0 0.0
  %6863 = vmatprep.subr.mxu0 0.0
  %6864 = vmatpush1.msra.mxu0 0.0
  %6865 = vmatprep.subr.mxu0 0.0
  %6866 = vmatpush1.msra.mxu0 0.0
  %6867 = vmatprep.subr.mxu0 0.0
  %6868 = vmatpush1.msra.mxu0 0.0
  %6869 = vmatprep.subr.mxu0 0.0
  %6870 = vmatpush1.msra.mxu0 %v4268
  %6871 = vmatprep.subr.mxu0 0.0
  %6872 = vmatpush1.msra.mxu0 %v4267
  %6873 = vmatprep.subr.mxu0 0.0
  %6874 = vmatpush1.msra.mxu0 %v4266
  %6875 = vmatprep.subr.mxu0 0.0
  %6876 = vmatpush1.msra.mxu0 %v4265
  %6877 = vmatprep.subr.mxu0 0.0
  %6878 = vmatpush2.msra.mxu0 0.0
  %6879 = vmatprep.subr.mxu0 0.0
  %6880 = vmatpush2.msra.mxu0 0.0
  %6881 = vmatprep.subr.mxu0 0.0
  %6882 = vmatpush2.msra.mxu0 0.0
  %6883 = vmatprep.subr.mxu0 0.0
  %6884 = vmatpush2.msra.mxu0 0.0
  %6885 = vmatprep.subr.mxu0 0.0
  %6886 = vmatpush2.msra.mxu0 0.0
  %6887 = vmatprep.subr.mxu0 0.0
  %6888 = vmatpush2.msra.mxu0 0.0
  %6889 = vmatprep.subr.mxu0 0.0
  %6890 = vmatpush2.msra.mxu0 0.0
  %6891 = vmatprep.subr.mxu0 0.0
  %6892 = vmatpush2.msra.mxu0 0.0
  %6893 = vmatprep.subr.mxu0 0.0
  %6894 = vmatpush2.msra.mxu0 0.0
  %6895 = vmatprep.subr.mxu0 0.0
  %6896 = vmatpush2.msra.mxu0 0.0
  %6897 = vmatprep.subr.mxu0 0.0
  %6898 = vmatpush2.msra.mxu0 0.0
  %6899 = vmatprep.subr.mxu0 0.0
  %6900 = vmatpush2.msra.mxu0 0.0
  %6901 = vmatprep.subr.mxu0 0.0
  %6902 = vmatpush2.msra.mxu0 0.0
  %6903 = vmatprep.subr.mxu0 0.0
  %6904 = vmatpush2.msra.mxu0 0.0
  %6905 = vmatprep.subr.mxu0 0.0
  %6906 = vmatpush2.msra.mxu0 0.0
  %6907 = vmatprep.subr.mxu0 0.0
  %6908 = vmatpush2.msra.mxu0 0.0
  %6909 = vmatprep.mubr.f32.mxu0 0.0
  %6910 = vmatmul.mubr.f32.gmra.mxu0 %v6601
  %v6911 = vpop.f32.mrf.mxu0
  %v6912 = vadd.f32 0.0, %v6911
  %v6913 = vpop.f32.mrf.mxu0
  %6914 = vmatprep.mubr.f32.mxu0 0.0
  %6915 = vmatmul.mubr.f32.gmra.mxu0 %v6603
  %v6916 = vpop.f32.mrf.mxu0
  %v6917 = vadd.f32 0.0, %v6916
  %v6918 = vpop.f32.mrf.mxu0
  %6919 = vmatprep.mubr.f32.mxu0 0.0
  %6920 = vmatmul.mubr.f32.gmra.mxu0 %v6605
  %v6921 = vpop.f32.mrf.mxu0
  %v6922 = vadd.f32 0.0, %v6921
  %v6923 = vpop.f32.mrf.mxu0
  %6924 = vdwg.mxu0
  %6925 = vmatprep.subr.mxu0 0.0
  %6926 = vmatpush1.msra.mxu0 %v4496
  %6927 = vmatprep.subr.mxu0 0.0
  %6928 = vmatpush1.msra.mxu0 %v4491
  %6929 = vmatprep.subr.mxu0 0.0
  %6930 = vmatpush1.msra.mxu0 %v4486
  %6931 = vmatprep.subr.mxu0 0.0
  %6932 = vmatpush1.msra.mxu0 %v4481
  %6933 = vmatprep.subr.mxu0 0.0
  %6934 = vmatpush1.msra.mxu0 %v4476
  %6935 = vmatprep.subr.mxu0 0.0
  %6936 = vmatpush1.msra.mxu0 %v4471
  %6937 = vmatprep.subr.mxu0 0.0
  %6938 = vmatpush1.msra.mxu0 %v4466
  %6939 = vmatprep.subr.mxu0 0.0
  %6940 = vmatpush1.msra.mxu0 %v4461
  %6941 = vmatprep.subr.mxu0 0.0
  %6942 = vmatpush1.msra.mxu0 %v4456
  %6943 = vmatprep.subr.mxu0 0.0
  %6944 = vmatpush1.msra.mxu0 %v4451
  %6945 = vmatprep.subr.mxu0 0.0
  %6946 = vmatpush1.msra.mxu0 %v4446
  %6947 = vmatprep.subr.mxu0 0.0
  %6948 = vmatpush1.msra.mxu0 %v4441
  %6949 = vmatprep.subr.mxu0 0.0
  %6950 = vmatpush1.msra.mxu0 %v4436
  %6951 = vmatprep.subr.mxu0 0.0
  %6952 = vmatpush1.msra.mxu0 %v4431
  %6953 = vmatprep.subr.mxu0 0.0
  %6954 = vmatpush1.msra.mxu0 %v4426
  %6955 = vmatprep.subr.mxu0 0.0
  %6956 = vmatpush1.msra.mxu0 %v4421
  %6957 = vmatprep.subr.mxu0 0.0
  %6958 = vmatpush2.msra.mxu0 0.0
  %6959 = vmatprep.subr.mxu0 0.0
  %6960 = vmatpush2.msra.mxu0 0.0
  %6961 = vmatprep.subr.mxu0 0.0
  %6962 = vmatpush2.msra.mxu0 0.0
  %6963 = vmatprep.subr.mxu0 0.0
  %6964 = vmatpush2.msra.mxu0 0.0
  %6965 = vmatprep.subr.mxu0 0.0
  %6966 = vmatpush2.msra.mxu0 0.0
  %6967 = vmatprep.subr.mxu0 0.0
  %6968 = vmatpush2.msra.mxu0 0.0
  %6969 = vmatprep.subr.mxu0 0.0
  %6970 = vmatpush2.msra.mxu0 0.0
  %6971 = vmatprep.subr.mxu0 0.0
  %6972 = vmatpush2.msra.mxu0 0.0
  %6973 = vmatprep.subr.mxu0 0.0
  %6974 = vmatpush2.msra.mxu0 0.0
  %6975 = vmatprep.subr.mxu0 0.0
  %6976 = vmatpush2.msra.mxu0 0.0
  %6977 = vmatprep.subr.mxu0 0.0
  %6978 = vmatpush2.msra.mxu0 0.0
  %6979 = vmatprep.subr.mxu0 0.0
  %6980 = vmatpush2.msra.mxu0 0.0
  %6981 = vmatprep.subr.mxu0 0.0
  %6982 = vmatpush2.msra.mxu0 0.0
  %6983 = vmatprep.subr.mxu0 0.0
  %6984 = vmatpush2.msra.mxu0 0.0
  %6985 = vmatprep.subr.mxu0 0.0
  %6986 = vmatpush2.msra.mxu0 0.0
  %6987 = vmatprep.subr.mxu0 0.0
  %6988 = vmatpush2.msra.mxu0 0.0
  %6989 = vmatprep.mubr.f32.mxu0 0.0
  %6990 = vmatmul.mubr.f32.gmra.mxu0 %v6842
  %v6991 = vpop.f32.mrf.mxu0
  %v6992 = vadd.f32 %v6912, %v6991
  %v6993 = vpop.f32.mrf.mxu0
  %6994 = vmatprep.mubr.f32.mxu0 0.0
  %6995 = vmatmul.mubr.f32.gmra.mxu0 %v6843
  %v6996 = vpop.f32.mrf.mxu0
  %v6997 = vadd.f32 %v6917, %v6996
  %v6998 = vpop.f32.mrf.mxu0
  %6999 = vmatprep.mubr.f32.mxu0 0.0
  %7000 = vmatmul.mubr.f32.gmra.mxu0 %v6844
  %v7001 = vpop.f32.mrf.mxu0
  %v7002 = vadd.f32 %v6922, %v7001
  %v7003 = vpop.f32.mrf.mxu0
  %7004 = vdwg.mxu0
  %v7005 = vmul.f32 %v6992, %v136
  %v7006 = vmul.f32 %v6997, %v136
  %v7007 = vmul.f32 %v7002, %v136
  %v7008 = vtanh.pop %v7005
  %v7009 = vtanh.pop %v7006
  %v7010 = vtanh.pop %v7007
  %v7011 = vmul.f32 %v7008, 0.5
  %v7012 = vmul.f32 %v7009, 0.5
  %v7013 = vmul.f32 %v7010, 0.5
  %v7014 = vadd.f32 %v7011, 0.5
  %v7015 = vadd.f32 %v7012, 0.5
  %v7016 = vadd.f32 %v7013, 0.5
  %v7017 = vsel %vm135, %v7008, %v7014
  %v7018 = vsel %vm135, %v7009, %v7015
  %v7019 = vsel %vm135, %v7010, %v7016
  %v7020 = vmul.f32 %v7017, %v6571
  %v7021 = vmul.f32 %v7018, %v6572
  %v7022 = vmul.f32 %v7019, %v6573
  %7026 = vrot.lane.b32.xlu0 %v7017, 64
  %v7027 = vpop.permute.xlu0 %7026
  %7028 = vrot.lane.b32.xlu0 %v7018, 64
  %v7029 = vpop.permute.xlu0 %7028
  %7030 = vrot.lane.b32.xlu0 %v7019, 64
  %v7031 = vpop.permute.xlu0 %7030
  %v7035 = vmul.f32 %v7017, %v7027
  %v7036 = vmul.f32 %v7018, %v7029
  %v7037 = vmul.f32 %v7019, %v7031
  %7041 = vrot.lane.b32.xlu0 %v7035, 32
  %v7042 = vpop.permute.xlu0 %7041
  %7043 = vrot.lane.b32.xlu0 %v7036, 32
  %v7044 = vpop.permute.xlu0 %7043
  %7045 = vrot.lane.b32.xlu0 %v7037, 32
  %v7046 = vpop.permute.xlu0 %7045
  %v7050 = vadd.f32 %v7020, %v7042
  %v7051 = vadd.f32 %v7021, %v7044
  %v7052 = vadd.f32 %v7022, %v7046
  %v7053 = vtanh.pop %v7050
  %v7054 = vtanh.pop %v7051
  %v7055 = vtanh.pop %v7052
  %7059 = vrot.lane.b32.xlu0 %v7053, 64
  %v7060 = vpop.permute.xlu0 %7059
  %7061 = vrot.lane.b32.xlu0 %v7054, 64
  %v7062 = vpop.permute.xlu0 %7061
  %7063 = vrot.lane.b32.xlu0 %v7055, 64
  %v7064 = vpop.permute.xlu0 %7063
  %v7068 = vmul.f32 %v7017, %v7060
  %v7069 = vmul.f32 %v7018, %v7062
  %v7070 = vmul.f32 %v7019, %v7064
  %7074 = vrot.lane.b32.xlu0 %v7068, 32
  %v7075 = vpop.permute.xlu0 %7074
  %7076 = vrot.lane.b32.xlu0 %v7069, 32
  %v7077 = vpop.permute.xlu0 %7076
  %7078 = vrot.lane.b32.xlu0 %v7070, 32
  %v7079 = vpop.permute.xlu0 %7078
  %v7080 = vsel %vm186, %v7075, 0
  %v7082 = vsel %vm186, %v7077, 0
  %v7084 = vsel %vm186, %v7079, 0
  %7086 = vmatprep.subr.mxu0 0.0
  %7087 = vmatpush1.msra.mxu0 0.0
  %7088 = vmatprep.subr.mxu0 0.0
  %7089 = vmatpush1.msra.mxu0 0.0
  %7090 = vmatprep.subr.mxu0 0.0
  %7091 = vmatpush1.msra.mxu0 0.0
  %7092 = vmatprep.subr.mxu0 0.0
  %7093 = vmatpush1.msra.mxu0 0.0
  %7094 = vmatprep.subr.mxu0 0.0
  %7095 = vmatpush1.msra.mxu0 0.0
  %7096 = vmatprep.subr.mxu0 0.0
  %7097 = vmatpush1.msra.mxu0 0.0
  %7098 = vmatprep.subr.mxu0 0.0
  %7099 = vmatpush1.msra.mxu0 0.0
  %7100 = vmatprep.subr.mxu0 0.0
  %7101 = vmatpush1.msra.mxu0 0.0
  %7102 = vmatprep.subr.mxu0 0.0
  %7103 = vmatpush1.msra.mxu0 0.0
  %7104 = vmatprep.subr.mxu0 0.0
  %7105 = vmatpush1.msra.mxu0 0.0
  %7106 = vmatprep.subr.mxu0 0.0
  %7107 = vmatpush1.msra.mxu0 0.0
  %7108 = vmatprep.subr.mxu0 0.0
  %7109 = vmatpush1.msra.mxu0 0.0
  %7110 = vmatprep.subr.mxu0 0.0
  %7111 = vmatpush1.msra.mxu0 %v4272
  %7112 = vmatprep.subr.mxu0 0.0
  %7113 = vmatpush1.msra.mxu0 %v4271
  %7114 = vmatprep.subr.mxu0 0.0
  %7115 = vmatpush1.msra.mxu0 %v4270
  %7116 = vmatprep.subr.mxu0 0.0
  %7117 = vmatpush1.msra.mxu0 %v4269
  %7118 = vmatprep.subr.mxu0 0.0
  %7119 = vmatpush2.msra.mxu0 0.0
  %7120 = vmatprep.subr.mxu0 0.0
  %7121 = vmatpush2.msra.mxu0 0.0
  %7122 = vmatprep.subr.mxu0 0.0
  %7123 = vmatpush2.msra.mxu0 0.0
  %7124 = vmatprep.subr.mxu0 0.0
  %7125 = vmatpush2.msra.mxu0 0.0
  %7126 = vmatprep.subr.mxu0 0.0
  %7127 = vmatpush2.msra.mxu0 0.0
  %7128 = vmatprep.subr.mxu0 0.0
  %7129 = vmatpush2.msra.mxu0 0.0
  %7130 = vmatprep.subr.mxu0 0.0
  %7131 = vmatpush2.msra.mxu0 0.0
  %7132 = vmatprep.subr.mxu0 0.0
  %7133 = vmatpush2.msra.mxu0 0.0
  %7134 = vmatprep.subr.mxu0 0.0
  %7135 = vmatpush2.msra.mxu0 0.0
  %7136 = vmatprep.subr.mxu0 0.0
  %7137 = vmatpush2.msra.mxu0 0.0
  %7138 = vmatprep.subr.mxu0 0.0
  %7139 = vmatpush2.msra.mxu0 0.0
  %7140 = vmatprep.subr.mxu0 0.0
  %7141 = vmatpush2.msra.mxu0 0.0
  %7142 = vmatprep.subr.mxu0 0.0
  %7143 = vmatpush2.msra.mxu0 0.0
  %7144 = vmatprep.subr.mxu0 0.0
  %7145 = vmatpush2.msra.mxu0 0.0
  %7146 = vmatprep.subr.mxu0 0.0
  %7147 = vmatpush2.msra.mxu0 0.0
  %7148 = vmatprep.subr.mxu0 0.0
  %7149 = vmatpush2.msra.mxu0 0.0
  %7150 = vmatprep.mubr.f32.mxu0 0.0
  %7151 = vmatmul.mubr.f32.gmra.mxu0 %v7080
  %v7152 = vpop.f32.mrf.mxu0
  %v7153 = vadd.f32 %v4668, %v7152
  %v7154 = vpop.f32.mrf.mxu0
  %7155 = vmatprep.mubr.f32.mxu0 0.0
  %7156 = vmatmul.mubr.f32.gmra.mxu0 %v7082
  %v7157 = vpop.f32.mrf.mxu0
  %v7158 = vadd.f32 %v4668, %v7157
  %v7159 = vpop.f32.mrf.mxu0
  %7160 = vmatprep.mubr.f32.mxu0 0.0
  %7161 = vmatmul.mubr.f32.gmra.mxu0 %v7084
  %v7162 = vpop.f32.mrf.mxu0
  %v7163 = vadd.f32 %v4668, %v7162
  %v7164 = vpop.f32.mrf.mxu0
  %7165 = vdwg.mxu0
  %v7166 = vmax.f32 %v7153, 0.0
  %v7167 = vmax.f32 %v7158, 0.0
  %v7168 = vmax.f32 %v7163, 0.0
  %v7170 = vsel %vm186, %v7166, 0
  %v7173 = vsel %vm186, %v7167, 0
  %v7176 = vsel %vm186, %v7168, 0
  %7178 = vmatprep.subr.mxu0 0.0
  %7179 = vmatpush1.msra.mxu0 0.0
  %7180 = vmatprep.subr.mxu0 0.0
  %7181 = vmatpush1.msra.mxu0 0.0
  %7182 = vmatprep.subr.mxu0 0.0
  %7183 = vmatpush1.msra.mxu0 0.0
  %7184 = vmatprep.subr.mxu0 0.0
  %7185 = vmatpush1.msra.mxu0 0.0
  %7186 = vmatprep.subr.mxu0 0.0
  %7187 = vmatpush1.msra.mxu0 0.0
  %7188 = vmatprep.subr.mxu0 0.0
  %7189 = vmatpush1.msra.mxu0 0.0
  %7190 = vmatprep.subr.mxu0 0.0
  %7191 = vmatpush1.msra.mxu0 0.0
  %7192 = vmatprep.subr.mxu0 0.0
  %7193 = vmatpush1.msra.mxu0 0.0
  %7194 = vmatprep.subr.mxu0 0.0
  %7195 = vmatpush1.msra.mxu0 0.0
  %7196 = vmatprep.subr.mxu0 0.0
  %7197 = vmatpush1.msra.mxu0 0.0
  %7198 = vmatprep.subr.mxu0 0.0
  %7199 = vmatpush1.msra.mxu0 0.0
  %7200 = vmatprep.subr.mxu0 0.0
  %7201 = vmatpush1.msra.mxu0 0.0
  %7202 = vmatprep.subr.mxu0 0.0
  %7203 = vmatpush1.msra.mxu0 %v4277
  %7204 = vmatprep.subr.mxu0 0.0
  %7205 = vmatpush1.msra.mxu0 %v4276
  %7206 = vmatprep.subr.mxu0 0.0
  %7207 = vmatpush1.msra.mxu0 %v4275
  %7208 = vmatprep.subr.mxu0 0.0
  %7209 = vmatpush1.msra.mxu0 %v4274
  %7210 = vmatprep.subr.mxu0 0.0
  %7211 = vmatpush2.msra.mxu0 0.0
  %7212 = vmatprep.subr.mxu0 0.0
  %7213 = vmatpush2.msra.mxu0 0.0
  %7214 = vmatprep.subr.mxu0 0.0
  %7215 = vmatpush2.msra.mxu0 0.0
  %7216 = vmatprep.subr.mxu0 0.0
  %7217 = vmatpush2.msra.mxu0 0.0
  %7218 = vmatprep.subr.mxu0 0.0
  %7219 = vmatpush2.msra.mxu0 0.0
  %7220 = vmatprep.subr.mxu0 0.0
  %7221 = vmatpush2.msra.mxu0 0.0
  %7222 = vmatprep.subr.mxu0 0.0
  %7223 = vmatpush2.msra.mxu0 0.0
  %7224 = vmatprep.subr.mxu0 0.0
  %7225 = vmatpush2.msra.mxu0 0.0
  %7226 = vmatprep.subr.mxu0 0.0
  %7227 = vmatpush2.msra.mxu0 0.0
  %7228 = vmatprep.subr.mxu0 0.0
  %7229 = vmatpush2.msra.mxu0 0.0
  %7230 = vmatprep.subr.mxu0 0.0
  %7231 = vmatpush2.msra.mxu0 0.0
  %7232 = vmatprep.subr.mxu0 0.0
  %7233 = vmatpush2.msra.mxu0 0.0
  %7234 = vmatprep.subr.mxu0 0.0
  %7235 = vmatpush2.msra.mxu0 0.0
  %7236 = vmatprep.subr.mxu0 0.0
  %7237 = vmatpush2.msra.mxu0 0.0
  %7238 = vmatprep.subr.mxu0 0.0
  %7239 = vmatpush2.msra.mxu0 0.0
  %7240 = vmatprep.subr.mxu0 0.0
  %7241 = vmatpush2.msra.mxu0 0.0
  %7242 = vmatprep.mubr.f32.mxu0 0.0
  %7243 = vmatmul.mubr.f32.gmra.mxu0 %v7170
  %v7244 = vpop.f32.mrf.mxu0
  %v7245 = vadd.f32 %v4772, %v7244
  %v7246 = vpop.f32.mrf.mxu0
  %7247 = vmatprep.mubr.f32.mxu0 0.0
  %7248 = vmatmul.mubr.f32.gmra.mxu0 %v7173
  %v7249 = vpop.f32.mrf.mxu0
  %v7250 = vadd.f32 %v4772, %v7249
  %v7251 = vpop.f32.mrf.mxu0
  %7252 = vmatprep.mubr.f32.mxu0 0.0
  %7253 = vmatmul.mubr.f32.gmra.mxu0 %v7176
  %v7254 = vpop.f32.mrf.mxu0
  %v7255 = vadd.f32 %v4772, %v7254
  %v7256 = vpop.f32.mrf.mxu0
  %7257 = vdwg.mxu0
  %7258 = vst [vmem:[%s63 + $0x28] sm:$0xff] %v7245
  %7259 = vst [vmem:[%s63 + $0x68] sm:$0xff] %v7250
  %7260 = vst [vmem:[%s63 + $0xa8] sm:$0xff] %v7255
  %7261 = vmax.xlane.f32.xlu0 %v7245
  %v7262 = vpop.xlane.xlu0 %7261
  %7263 = vmax.xlane.f32.xlu0 %v7250
  %v7264 = vpop.xlane.xlu0 %7263
  %7265 = vmax.xlane.f32.xlu0 %v7255
  %v7266 = vpop.xlane.xlu0 %7265
  %vm7267 = vcmp.eq.f32.partialorder %v7245, %v7262
  %vm7268 = vcmp.eq.f32.partialorder %v7250, %v7264
  %vm7269 = vcmp.eq.f32.partialorder %v7255, %v7266
  %v7270 = vsel %vm7267, %v132, 128
  %v7271 = vsel %vm7268, %v132, 128
  %v7272 = vsel %vm7269, %v132, 128
  %v7273 = vand.u32 %v7270, 65535
  %v7274 = vshra.s32 %v7270, 16
  %v7275 = vcvt.s32.f32 %v7273
  %v7276 = vcvt.s32.f32 %v7274
  %7277 = vmin.xlane.f32.xlu0 %v7276
  %v7278 = vpop.xlane.xlu0 %7277
  %vm7279 = vcmp.eq.f32.partialorder %v7276, %v7278
  %v7280 = vsel %vm7279, %v7275, inf
  %7281 = vmin.xlane.f32.xlu0 %v7280
  %v7282 = vpop.xlane.xlu0 %7281
  %v7283 = vcvt.f32.s32 %v7282
  %v7284 = vcvt.f32.s32 %v7278
  %v7285 = vshll.u32 %v7284, 16
  %v7286 = vadd.s32 %v7285, %v7283
  %v7287 = vand.u32 %v7271, 65535
  %v7288 = vshra.s32 %v7271, 16
  %v7289 = vcvt.s32.f32 %v7287
  %v7290 = vcvt.s32.f32 %v7288
  %7291 = vmin.xlane.f32.xlu0 %v7290
  %v7292 = vpop.xlane.xlu0 %7291
  %vm7293 = vcmp.eq.f32.partialorder %v7290, %v7292
  %v7294 = vsel %vm7293, %v7289, inf
  %7295 = vmin.xlane.f32.xlu0 %v7294
  %v7296 = vpop.xlane.xlu0 %7295
  %v7297 = vcvt.f32.s32 %v7296
  %v7298 = vcvt.f32.s32 %v7292
  %v7299 = vshll.u32 %v7298, 16
  %v7300 = vadd.s32 %v7299, %v7297
  %v7301 = vand.u32 %v7272, 65535
  %v7302 = vshra.s32 %v7272, 16
  %v7303 = vcvt.s32.f32 %v7301
  %v7304 = vcvt.s32.f32 %v7302
  %7305 = vmin.xlane.f32.xlu0 %v7304
  %v7306 = vpop.xlane.xlu0 %7305
  %vm7307 = vcmp.eq.f32.partialorder %v7304, %v7306
  %v7308 = vsel %vm7307, %v7303, inf
  %7309 = vmin.xlane.f32.xlu0 %v7308
  %v7310 = vpop.xlane.xlu0 %7309
  %v7311 = vcvt.f32.s32 %v7310
  %v7312 = vcvt.f32.s32 %v7306
  %v7313 = vshll.u32 %v7312, 16
  %v7314 = vadd.s32 %v7313, %v7311
  %vm7315 = vcmp.eq.s32.totalorder %v132, %v7286
  %vm7316 = vcmp.eq.s32.totalorder %v132, %v7300
  %vm7317 = vcmp.eq.s32.totalorder %v132, %v7314
  %v7318 = vsel %vm7315, 1, 0
  %v7319 = vsel %vm7316, 1, 0
  %v7320 = vsel %vm7317, 1, 0
  %v7321 = vcvt.s32.f32 %v7318
  %v7322 = vcvt.s32.f32 %v7319
  %v7323 = vcvt.s32.f32 %v7320
  %7324 = vmatprep.subr.mxu0 0.0
  %7325 = vmatpush1.msra.mxu0 0.0
  %7326 = vmatprep.subr.mxu0 0.0
  %7327 = vmatpush1.msra.mxu0 0.0
  %7328 = vmatprep.subr.mxu0 0.0
  %7329 = vmatpush1.msra.mxu0 0.0
  %7330 = vmatprep.subr.mxu0 0.0
  %7331 = vmatpush1.msra.mxu0 0.0
  %7332 = vmatprep.subr.mxu0 0.0
  %7333 = vmatpush1.msra.mxu0 0.0
  %7334 = vmatprep.subr.mxu0 0.0
  %7335 = vmatpush1.msra.mxu0 0.0
  %7336 = vmatprep.subr.mxu0 0.0
  %7337 = vmatpush1.msra.mxu0 0.0
  %7338 = vmatprep.subr.mxu0 0.0
  %7339 = vmatpush1.msra.mxu0 0.0
  %7340 = vmatprep.subr.mxu0 0.0
  %7341 = vmatpush1.msra.mxu0 0.0
  %7342 = vmatprep.subr.mxu0 0.0
  %7343 = vmatpush1.msra.mxu0 0.0
  %7344 = vmatprep.subr.mxu0 0.0
  %7345 = vmatpush1.msra.mxu0 0.0
  %7346 = vmatprep.subr.mxu0 0.0
  %7347 = vmatpush1.msra.mxu0 0.0
  %7348 = vmatprep.subr.mxu0 0.0
  %7349 = vmatpush1.msra.mxu0 %v4268
  %7350 = vmatprep.subr.mxu0 0.0
  %7351 = vmatpush1.msra.mxu0 %v4267
  %7352 = vmatprep.subr.mxu0 0.0
  %7353 = vmatpush1.msra.mxu0 %v4266
  %7354 = vmatprep.subr.mxu0 0.0
  %7355 = vmatpush1.msra.mxu0 %v4265
  %7356 = vmatprep.subr.mxu0 0.0
  %7357 = vmatpush2.msra.mxu0 0.0
  %7358 = vmatprep.subr.mxu0 0.0
  %7359 = vmatpush2.msra.mxu0 0.0
  %7360 = vmatprep.subr.mxu0 0.0
  %7361 = vmatpush2.msra.mxu0 0.0
  %7362 = vmatprep.subr.mxu0 0.0
  %7363 = vmatpush2.msra.mxu0 0.0
  %7364 = vmatprep.subr.mxu0 0.0
  %7365 = vmatpush2.msra.mxu0 0.0
  %7366 = vmatprep.subr.mxu0 0.0
  %7367 = vmatpush2.msra.mxu0 0.0
  %7368 = vmatprep.subr.mxu0 0.0
  %7369 = vmatpush2.msra.mxu0 0.0
  %7370 = vmatprep.subr.mxu0 0.0
  %7371 = vmatpush2.msra.mxu0 0.0
  %7372 = vmatprep.subr.mxu0 0.0
  %7373 = vmatpush2.msra.mxu0 0.0
  %7374 = vmatprep.subr.mxu0 0.0
  %7375 = vmatpush2.msra.mxu0 0.0
  %7376 = vmatprep.subr.mxu0 0.0
  %7377 = vmatpush2.msra.mxu0 0.0
  %7378 = vmatprep.subr.mxu0 0.0
  %7379 = vmatpush2.msra.mxu0 0.0
  %7380 = vmatprep.subr.mxu0 0.0
  %7381 = vmatpush2.msra.mxu0 0.0
  %7382 = vmatprep.subr.mxu0 0.0
  %7383 = vmatpush2.msra.mxu0 0.0
  %7384 = vmatprep.subr.mxu0 0.0
  %7385 = vmatpush2.msra.mxu0 0.0
  %7386 = vmatprep.subr.mxu0 0.0
  %7387 = vmatpush2.msra.mxu0 0.0
  %7388 = vmatprep.mubr.f32.mxu0 0.0
  %7389 = vmatmul.mubr.f32.gmra.mxu0 %v7080
  %v7390 = vpop.f32.mrf.mxu0
  %v7391 = vadd.f32 0.0, %v7390
  %v7392 = vpop.f32.mrf.mxu0
  %7393 = vmatprep.mubr.f32.mxu0 0.0
  %7394 = vmatmul.mubr.f32.gmra.mxu0 %v7082
  %v7395 = vpop.f32.mrf.mxu0
  %v7396 = vadd.f32 0.0, %v7395
  %v7397 = vpop.f32.mrf.mxu0
  %7398 = vmatprep.mubr.f32.mxu0 0.0
  %7399 = vmatmul.mubr.f32.gmra.mxu0 %v7084
  %v7400 = vpop.f32.mrf.mxu0
  %v7401 = vadd.f32 0.0, %v7400
  %v7402 = vpop.f32.mrf.mxu0
  %7403 = vdwg.mxu0
  %7404 = vmatprep.subr.mxu0 0.0
  %7405 = vmatpush1.msra.mxu0 %v4496
  %7406 = vmatprep.subr.mxu0 0.0
  %7407 = vmatpush1.msra.mxu0 %v4491
  %7408 = vmatprep.subr.mxu0 0.0
  %7409 = vmatpush1.msra.mxu0 %v4486
  %7410 = vmatprep.subr.mxu0 0.0
  %7411 = vmatpush1.msra.mxu0 %v4481
  %7412 = vmatprep.subr.mxu0 0.0
  %7413 = vmatpush1.msra.mxu0 %v4476
  %7414 = vmatprep.subr.mxu0 0.0
  %7415 = vmatpush1.msra.mxu0 %v4471
  %7416 = vmatprep.subr.mxu0 0.0
  %7417 = vmatpush1.msra.mxu0 %v4466
  %7418 = vmatprep.subr.mxu0 0.0
  %7419 = vmatpush1.msra.mxu0 %v4461
  %7420 = vmatprep.subr.mxu0 0.0
  %7421 = vmatpush1.msra.mxu0 %v4456
  %7422 = vmatprep.subr.mxu0 0.0
  %7423 = vmatpush1.msra.mxu0 %v4451
  %7424 = vmatprep.subr.mxu0 0.0
  %7425 = vmatpush1.msra.mxu0 %v4446
  %7426 = vmatprep.subr.mxu0 0.0
  %7427 = vmatpush1.msra.mxu0 %v4441
  %7428 = vmatprep.subr.mxu0 0.0
  %7429 = vmatpush1.msra.mxu0 %v4436
  %7430 = vmatprep.subr.mxu0 0.0
  %7431 = vmatpush1.msra.mxu0 %v4431
  %7432 = vmatprep.subr.mxu0 0.0
  %7433 = vmatpush1.msra.mxu0 %v4426
  %7434 = vmatprep.subr.mxu0 0.0
  %7435 = vmatpush1.msra.mxu0 %v4421
  %7436 = vmatprep.subr.mxu0 0.0
  %7437 = vmatpush2.msra.mxu0 0.0
  %7438 = vmatprep.subr.mxu0 0.0
  %7439 = vmatpush2.msra.mxu0 0.0
  %7440 = vmatprep.subr.mxu0 0.0
  %7441 = vmatpush2.msra.mxu0 0.0
  %7442 = vmatprep.subr.mxu0 0.0
  %7443 = vmatpush2.msra.mxu0 0.0
  %7444 = vmatprep.subr.mxu0 0.0
  %7445 = vmatpush2.msra.mxu0 0.0
  %7446 = vmatprep.subr.mxu0 0.0
  %7447 = vmatpush2.msra.mxu0 0.0
  %7448 = vmatprep.subr.mxu0 0.0
  %7449 = vmatpush2.msra.mxu0 0.0
  %7450 = vmatprep.subr.mxu0 0.0
  %7451 = vmatpush2.msra.mxu0 0.0
  %7452 = vmatprep.subr.mxu0 0.0
  %7453 = vmatpush2.msra.mxu0 0.0
  %7454 = vmatprep.subr.mxu0 0.0
  %7455 = vmatpush2.msra.mxu0 0.0
  %7456 = vmatprep.subr.mxu0 0.0
  %7457 = vmatpush2.msra.mxu0 0.0
  %7458 = vmatprep.subr.mxu0 0.0
  %7459 = vmatpush2.msra.mxu0 0.0
  %7460 = vmatprep.subr.mxu0 0.0
  %7461 = vmatpush2.msra.mxu0 0.0
  %7462 = vmatprep.subr.mxu0 0.0
  %7463 = vmatpush2.msra.mxu0 0.0
  %7464 = vmatprep.subr.mxu0 0.0
  %7465 = vmatpush2.msra.mxu0 0.0
  %7466 = vmatprep.subr.mxu0 0.0
  %7467 = vmatpush2.msra.mxu0 0.0
  %7468 = vmatprep.mubr.f32.mxu0 0.0
  %7469 = vmatmul.mubr.f32.gmra.mxu0 %v7321
  %v7470 = vpop.f32.mrf.mxu0
  %v7471 = vadd.f32 %v7391, %v7470
  %v7472 = vpop.f32.mrf.mxu0
  %7473 = vmatprep.mubr.f32.mxu0 0.0
  %7474 = vmatmul.mubr.f32.gmra.mxu0 %v7322
  %v7475 = vpop.f32.mrf.mxu0
  %v7476 = vadd.f32 %v7396, %v7475
  %v7477 = vpop.f32.mrf.mxu0
  %7478 = vmatprep.mubr.f32.mxu0 0.0
  %7479 = vmatmul.mubr.f32.gmra.mxu0 %v7323
  %v7480 = vpop.f32.mrf.mxu0
  %v7481 = vadd.f32 %v7401, %v7480
  %v7482 = vpop.f32.mrf.mxu0
  %7483 = vdwg.mxu0
  %v7484 = vmul.f32 %v7471, %v136
  %v7485 = vmul.f32 %v7476, %v136
  %v7486 = vmul.f32 %v7481, %v136
  %v7487 = vtanh.pop %v7484
  %v7488 = vtanh.pop %v7485
  %v7489 = vtanh.pop %v7486
  %v7490 = vmul.f32 %v7487, 0.5
  %v7491 = vmul.f32 %v7488, 0.5
  %v7492 = vmul.f32 %v7489, 0.5
  %v7493 = vadd.f32 %v7490, 0.5
  %v7494 = vadd.f32 %v7491, 0.5
  %v7495 = vadd.f32 %v7492, 0.5
  %v7496 = vsel %vm135, %v7487, %v7493
  %v7497 = vsel %vm135, %v7488, %v7494
  %v7498 = vsel %vm135, %v7489, %v7495
  %v7499 = vmul.f32 %v7496, %v7050
  %v7500 = vmul.f32 %v7497, %v7051
  %v7501 = vmul.f32 %v7498, %v7052
  %7505 = vrot.lane.b32.xlu0 %v7496, 64
  %v7506 = vpop.permute.xlu0 %7505
  %7507 = vrot.lane.b32.xlu0 %v7497, 64
  %v7508 = vpop.permute.xlu0 %7507
  %7509 = vrot.lane.b32.xlu0 %v7498, 64
  %v7510 = vpop.permute.xlu0 %7509
  %v7514 = vmul.f32 %v7496, %v7506
  %v7515 = vmul.f32 %v7497, %v7508
  %v7516 = vmul.f32 %v7498, %v7510
  %7520 = vrot.lane.b32.xlu0 %v7514, 32
  %v7521 = vpop.permute.xlu0 %7520
  %7522 = vrot.lane.b32.xlu0 %v7515, 32
  %v7523 = vpop.permute.xlu0 %7522
  %7524 = vrot.lane.b32.xlu0 %v7516, 32
  %v7525 = vpop.permute.xlu0 %7524
  %v7529 = vadd.f32 %v7499, %v7521
  %v7530 = vadd.f32 %v7500, %v7523
  %v7531 = vadd.f32 %v7501, %v7525
  %v7532 = vtanh.pop %v7529
  %v7533 = vtanh.pop %v7530
  %v7534 = vtanh.pop %v7531
  %7538 = vrot.lane.b32.xlu0 %v7532, 64
  %v7539 = vpop.permute.xlu0 %7538
  %7540 = vrot.lane.b32.xlu0 %v7533, 64
  %v7541 = vpop.permute.xlu0 %7540
  %7542 = vrot.lane.b32.xlu0 %v7534, 64
  %v7543 = vpop.permute.xlu0 %7542
  %v7547 = vmul.f32 %v7496, %v7539
  %v7548 = vmul.f32 %v7497, %v7541
  %v7549 = vmul.f32 %v7498, %v7543
  %7553 = vrot.lane.b32.xlu0 %v7547, 32
  %v7554 = vpop.permute.xlu0 %7553
  %7555 = vrot.lane.b32.xlu0 %v7548, 32
  %v7556 = vpop.permute.xlu0 %7555
  %7557 = vrot.lane.b32.xlu0 %v7549, 32
  %v7558 = vpop.permute.xlu0 %7557
  %v7559 = vsel %vm186, %v7554, 0
  %v7561 = vsel %vm186, %v7556, 0
  %v7563 = vsel %vm186, %v7558, 0
  %7565 = vmatprep.subr.mxu0 0.0
  %7566 = vmatpush1.msra.mxu0 0.0
  %7567 = vmatprep.subr.mxu0 0.0
  %7568 = vmatpush1.msra.mxu0 0.0
  %7569 = vmatprep.subr.mxu0 0.0
  %7570 = vmatpush1.msra.mxu0 0.0
  %7571 = vmatprep.subr.mxu0 0.0
  %7572 = vmatpush1.msra.mxu0 0.0
  %7573 = vmatprep.subr.mxu0 0.0
  %7574 = vmatpush1.msra.mxu0 0.0
  %7575 = vmatprep.subr.mxu0 0.0
  %7576 = vmatpush1.msra.mxu0 0.0
  %7577 = vmatprep.subr.mxu0 0.0
  %7578 = vmatpush1.msra.mxu0 0.0
  %7579 = vmatprep.subr.mxu0 0.0
  %7580 = vmatpush1.msra.mxu0 0.0
  %7581 = vmatprep.subr.mxu0 0.0
  %7582 = vmatpush1.msra.mxu0 0.0
  %7583 = vmatprep.subr.mxu0 0.0
  %7584 = vmatpush1.msra.mxu0 0.0
  %7585 = vmatprep.subr.mxu0 0.0
  %7586 = vmatpush1.msra.mxu0 0.0
  %7587 = vmatprep.subr.mxu0 0.0
  %7588 = vmatpush1.msra.mxu0 0.0
  %7589 = vmatprep.subr.mxu0 0.0
  %7590 = vmatpush1.msra.mxu0 %v4272
  %7591 = vmatprep.subr.mxu0 0.0
  %7592 = vmatpush1.msra.mxu0 %v4271
  %7593 = vmatprep.subr.mxu0 0.0
  %7594 = vmatpush1.msra.mxu0 %v4270
  %7595 = vmatprep.subr.mxu0 0.0
  %7596 = vmatpush1.msra.mxu0 %v4269
  %7597 = vmatprep.subr.mxu0 0.0
  %7598 = vmatpush2.msra.mxu0 0.0
  %7599 = vmatprep.subr.mxu0 0.0
  %7600 = vmatpush2.msra.mxu0 0.0
  %7601 = vmatprep.subr.mxu0 0.0
  %7602 = vmatpush2.msra.mxu0 0.0
  %7603 = vmatprep.subr.mxu0 0.0
  %7604 = vmatpush2.msra.mxu0 0.0
  %7605 = vmatprep.subr.mxu0 0.0
  %7606 = vmatpush2.msra.mxu0 0.0
  %7607 = vmatprep.subr.mxu0 0.0
  %7608 = vmatpush2.msra.mxu0 0.0
  %7609 = vmatprep.subr.mxu0 0.0
  %7610 = vmatpush2.msra.mxu0 0.0
  %7611 = vmatprep.subr.mxu0 0.0
  %7612 = vmatpush2.msra.mxu0 0.0
  %7613 = vmatprep.subr.mxu0 0.0
  %7614 = vmatpush2.msra.mxu0 0.0
  %7615 = vmatprep.subr.mxu0 0.0
  %7616 = vmatpush2.msra.mxu0 0.0
  %7617 = vmatprep.subr.mxu0 0.0
  %7618 = vmatpush2.msra.mxu0 0.0
  %7619 = vmatprep.subr.mxu0 0.0
  %7620 = vmatpush2.msra.mxu0 0.0
  %7621 = vmatprep.subr.mxu0 0.0
  %7622 = vmatpush2.msra.mxu0 0.0
  %7623 = vmatprep.subr.mxu0 0.0
  %7624 = vmatpush2.msra.mxu0 0.0
  %7625 = vmatprep.subr.mxu0 0.0
  %7626 = vmatpush2.msra.mxu0 0.0
  %7627 = vmatprep.subr.mxu0 0.0
  %7628 = vmatpush2.msra.mxu0 0.0
  %7629 = vmatprep.mubr.f32.mxu0 0.0
  %7630 = vmatmul.mubr.f32.gmra.mxu0 %v7559
  %v7631 = vpop.f32.mrf.mxu0
  %v7632 = vadd.f32 %v4668, %v7631
  %v7633 = vpop.f32.mrf.mxu0
  %7634 = vmatprep.mubr.f32.mxu0 0.0
  %7635 = vmatmul.mubr.f32.gmra.mxu0 %v7561
  %v7636 = vpop.f32.mrf.mxu0
  %v7637 = vadd.f32 %v4668, %v7636
  %v7638 = vpop.f32.mrf.mxu0
  %7639 = vmatprep.mubr.f32.mxu0 0.0
  %7640 = vmatmul.mubr.f32.gmra.mxu0 %v7563
  %v7641 = vpop.f32.mrf.mxu0
  %v7642 = vadd.f32 %v4668, %v7641
  %v7643 = vpop.f32.mrf.mxu0
  %7644 = vdwg.mxu0
  %v7645 = vmax.f32 %v7632, 0.0
  %v7646 = vmax.f32 %v7637, 0.0
  %v7647 = vmax.f32 %v7642, 0.0
  %v7649 = vsel %vm186, %v7645, 0
  %v7652 = vsel %vm186, %v7646, 0
  %v7655 = vsel %vm186, %v7647, 0
  %7657 = vmatprep.subr.mxu0 0.0
  %7658 = vmatpush1.msra.mxu0 0.0
  %7659 = vmatprep.subr.mxu0 0.0
  %7660 = vmatpush1.msra.mxu0 0.0
  %7661 = vmatprep.subr.mxu0 0.0
  %7662 = vmatpush1.msra.mxu0 0.0
  %7663 = vmatprep.subr.mxu0 0.0
  %7664 = vmatpush1.msra.mxu0 0.0
  %7665 = vmatprep.subr.mxu0 0.0
  %7666 = vmatpush1.msra.mxu0 0.0
  %7667 = vmatprep.subr.mxu0 0.0
  %7668 = vmatpush1.msra.mxu0 0.0
  %7669 = vmatprep.subr.mxu0 0.0
  %7670 = vmatpush1.msra.mxu0 0.0
  %7671 = vmatprep.subr.mxu0 0.0
  %7672 = vmatpush1.msra.mxu0 0.0
  %7673 = vmatprep.subr.mxu0 0.0
  %7674 = vmatpush1.msra.mxu0 0.0
  %7675 = vmatprep.subr.mxu0 0.0
  %7676 = vmatpush1.msra.mxu0 0.0
  %7677 = vmatprep.subr.mxu0 0.0
  %7678 = vmatpush1.msra.mxu0 0.0
  %7679 = vmatprep.subr.mxu0 0.0
  %7680 = vmatpush1.msra.mxu0 0.0
  %7681 = vmatprep.subr.mxu0 0.0
  %7682 = vmatpush1.msra.mxu0 %v4277
  %7683 = vmatprep.subr.mxu0 0.0
  %7684 = vmatpush1.msra.mxu0 %v4276
  %7685 = vmatprep.subr.mxu0 0.0
  %7686 = vmatpush1.msra.mxu0 %v4275
  %7687 = vmatprep.subr.mxu0 0.0
  %7688 = vmatpush1.msra.mxu0 %v4274
  %7689 = vmatprep.subr.mxu0 0.0
  %7690 = vmatpush2.msra.mxu0 0.0
  %7691 = vmatprep.subr.mxu0 0.0
  %7692 = vmatpush2.msra.mxu0 0.0
  %7693 = vmatprep.subr.mxu0 0.0
  %7694 = vmatpush2.msra.mxu0 0.0
  %7695 = vmatprep.subr.mxu0 0.0
  %7696 = vmatpush2.msra.mxu0 0.0
  %7697 = vmatprep.subr.mxu0 0.0
  %7698 = vmatpush2.msra.mxu0 0.0
  %7699 = vmatprep.subr.mxu0 0.0
  %7700 = vmatpush2.msra.mxu0 0.0
  %7701 = vmatprep.subr.mxu0 0.0
  %7702 = vmatpush2.msra.mxu0 0.0
  %7703 = vmatprep.subr.mxu0 0.0
  %7704 = vmatpush2.msra.mxu0 0.0
  %7705 = vmatprep.subr.mxu0 0.0
  %7706 = vmatpush2.msra.mxu0 0.0
  %7707 = vmatprep.subr.mxu0 0.0
  %7708 = vmatpush2.msra.mxu0 0.0
  %7709 = vmatprep.subr.mxu0 0.0
  %7710 = vmatpush2.msra.mxu0 0.0
  %7711 = vmatprep.subr.mxu0 0.0
  %7712 = vmatpush2.msra.mxu0 0.0
  %7713 = vmatprep.subr.mxu0 0.0
  %7714 = vmatpush2.msra.mxu0 0.0
  %7715 = vmatprep.subr.mxu0 0.0
  %7716 = vmatpush2.msra.mxu0 0.0
  %7717 = vmatprep.subr.mxu0 0.0
  %7718 = vmatpush2.msra.mxu0 0.0
  %7719 = vmatprep.subr.mxu0 0.0
  %7720 = vmatpush2.msra.mxu0 0.0
  %7721 = vmatprep.mubr.f32.mxu0 0.0
  %7722 = vmatmul.mubr.f32.gmra.mxu0 %v7649
  %v7723 = vpop.f32.mrf.mxu0
  %v7724 = vadd.f32 %v4772, %v7723
  %v7725 = vpop.f32.mrf.mxu0
  %7726 = vmatprep.mubr.f32.mxu0 0.0
  %7727 = vmatmul.mubr.f32.gmra.mxu0 %v7652
  %v7728 = vpop.f32.mrf.mxu0
  %v7729 = vadd.f32 %v4772, %v7728
  %v7730 = vpop.f32.mrf.mxu0
  %7731 = vmatprep.mubr.f32.mxu0 0.0
  %7732 = vmatmul.mubr.f32.gmra.mxu0 %v7655
  %v7733 = vpop.f32.mrf.mxu0
  %v7734 = vadd.f32 %v4772, %v7733
  %v7735 = vpop.f32.mrf.mxu0
  %7736 = vdwg.mxu0
  %7737 = vst [vmem:[%s63 + $0x30] sm:$0xff] %v7724
  %7738 = vst [vmem:[%s63 + $0x70] sm:$0xff] %v7729
  %7739 = vst [vmem:[%s63 + $0xb0] sm:$0xff] %v7734
  %7740 = vmax.xlane.f32.xlu0 %v7724
  %v7741 = vpop.xlane.xlu0 %7740
  %7742 = vmax.xlane.f32.xlu0 %v7729
  %v7743 = vpop.xlane.xlu0 %7742
  %7744 = vmax.xlane.f32.xlu0 %v7734
  %v7745 = vpop.xlane.xlu0 %7744
  %vm7746 = vcmp.eq.f32.partialorder %v7724, %v7741
  %vm7747 = vcmp.eq.f32.partialorder %v7729, %v7743
  %vm7748 = vcmp.eq.f32.partialorder %v7734, %v7745
  %v7749 = vsel %vm7746, %v132, 128
  %v7750 = vsel %vm7747, %v132, 128
  %v7751 = vsel %vm7748, %v132, 128
  %v7752 = vand.u32 %v7749, 65535
  %v7753 = vshra.s32 %v7749, 16
  %v7754 = vcvt.s32.f32 %v7752
  %v7755 = vcvt.s32.f32 %v7753
  %7756 = vmin.xlane.f32.xlu0 %v7755
  %v7757 = vpop.xlane.xlu0 %7756
  %vm7758 = vcmp.eq.f32.partialorder %v7755, %v7757
  %v7759 = vsel %vm7758, %v7754, inf
  %7760 = vmin.xlane.f32.xlu0 %v7759
  %v7761 = vpop.xlane.xlu0 %7760
  %v7762 = vcvt.f32.s32 %v7761
  %v7763 = vcvt.f32.s32 %v7757
  %v7764 = vshll.u32 %v7763, 16
  %v7765 = vadd.s32 %v7764, %v7762
  %v7766 = vand.u32 %v7750, 65535
  %v7767 = vshra.s32 %v7750, 16
  %v7768 = vcvt.s32.f32 %v7766
  %v7769 = vcvt.s32.f32 %v7767
  %7770 = vmin.xlane.f32.xlu0 %v7769
  %v7771 = vpop.xlane.xlu0 %7770
  %vm7772 = vcmp.eq.f32.partialorder %v7769, %v7771
  %v7773 = vsel %vm7772, %v7768, inf
  %7774 = vmin.xlane.f32.xlu0 %v7773
  %v7775 = vpop.xlane.xlu0 %7774
  %v7776 = vcvt.f32.s32 %v7775
  %v7777 = vcvt.f32.s32 %v7771
  %v7778 = vshll.u32 %v7777, 16
  %v7779 = vadd.s32 %v7778, %v7776
  %v7780 = vand.u32 %v7751, 65535
  %v7781 = vshra.s32 %v7751, 16
  %v7782 = vcvt.s32.f32 %v7780
  %v7783 = vcvt.s32.f32 %v7781
  %7784 = vmin.xlane.f32.xlu0 %v7783
  %v7785 = vpop.xlane.xlu0 %7784
  %vm7786 = vcmp.eq.f32.partialorder %v7783, %v7785
  %v7787 = vsel %vm7786, %v7782, inf
  %7788 = vmin.xlane.f32.xlu0 %v7787
  %v7789 = vpop.xlane.xlu0 %7788
  %v7790 = vcvt.f32.s32 %v7789
  %v7791 = vcvt.f32.s32 %v7785
  %v7792 = vshll.u32 %v7791, 16
  %v7793 = vadd.s32 %v7792, %v7790
  %vm7794 = vcmp.eq.s32.totalorder %v132, %v7765
  %vm7795 = vcmp.eq.s32.totalorder %v132, %v7779
  %vm7796 = vcmp.eq.s32.totalorder %v132, %v7793
  %v7797 = vsel %vm7794, 1, 0
  %v7798 = vsel %vm7795, 1, 0
  %v7799 = vsel %vm7796, 1, 0
  %v7800 = vcvt.s32.f32 %v7797
  %v7801 = vcvt.s32.f32 %v7798
  %v7802 = vcvt.s32.f32 %v7799
  %7803 = vmatprep.subr.mxu0 0.0
  %7804 = vmatpush1.msra.mxu0 0.0
  %7805 = vmatprep.subr.mxu0 0.0
  %7806 = vmatpush1.msra.mxu0 0.0
  %7807 = vmatprep.subr.mxu0 0.0
  %7808 = vmatpush1.msra.mxu0 0.0
  %7809 = vmatprep.subr.mxu0 0.0
  %7810 = vmatpush1.msra.mxu0 0.0
  %7811 = vmatprep.subr.mxu0 0.0
  %7812 = vmatpush1.msra.mxu0 0.0
  %7813 = vmatprep.subr.mxu0 0.0
  %7814 = vmatpush1.msra.mxu0 0.0
  %7815 = vmatprep.subr.mxu0 0.0
  %7816 = vmatpush1.msra.mxu0 0.0
  %7817 = vmatprep.subr.mxu0 0.0
  %7818 = vmatpush1.msra.mxu0 0.0
  %7819 = vmatprep.subr.mxu0 0.0
  %7820 = vmatpush1.msra.mxu0 0.0
  %7821 = vmatprep.subr.mxu0 0.0
  %7822 = vmatpush1.msra.mxu0 0.0
  %7823 = vmatprep.subr.mxu0 0.0
  %7824 = vmatpush1.msra.mxu0 0.0
  %7825 = vmatprep.subr.mxu0 0.0
  %7826 = vmatpush1.msra.mxu0 0.0
  %7827 = vmatprep.subr.mxu0 0.0
  %7828 = vmatpush1.msra.mxu0 %v4268
  %7829 = vmatprep.subr.mxu0 0.0
  %7830 = vmatpush1.msra.mxu0 %v4267
  %7831 = vmatprep.subr.mxu0 0.0
  %7832 = vmatpush1.msra.mxu0 %v4266
  %7833 = vmatprep.subr.mxu0 0.0
  %7834 = vmatpush1.msra.mxu0 %v4265
  %7835 = vmatprep.subr.mxu0 0.0
  %7836 = vmatpush2.msra.mxu0 0.0
  %7837 = vmatprep.subr.mxu0 0.0
  %7838 = vmatpush2.msra.mxu0 0.0
  %7839 = vmatprep.subr.mxu0 0.0
  %7840 = vmatpush2.msra.mxu0 0.0
  %7841 = vmatprep.subr.mxu0 0.0
  %7842 = vmatpush2.msra.mxu0 0.0
  %7843 = vmatprep.subr.mxu0 0.0
  %7844 = vmatpush2.msra.mxu0 0.0
  %7845 = vmatprep.subr.mxu0 0.0
  %7846 = vmatpush2.msra.mxu0 0.0
  %7847 = vmatprep.subr.mxu0 0.0
  %7848 = vmatpush2.msra.mxu0 0.0
  %7849 = vmatprep.subr.mxu0 0.0
  %7850 = vmatpush2.msra.mxu0 0.0
  %7851 = vmatprep.subr.mxu0 0.0
  %7852 = vmatpush2.msra.mxu0 0.0
  %7853 = vmatprep.subr.mxu0 0.0
  %7854 = vmatpush2.msra.mxu0 0.0
  %7855 = vmatprep.subr.mxu0 0.0
  %7856 = vmatpush2.msra.mxu0 0.0
  %7857 = vmatprep.subr.mxu0 0.0
  %7858 = vmatpush2.msra.mxu0 0.0
  %7859 = vmatprep.subr.mxu0 0.0
  %7860 = vmatpush2.msra.mxu0 0.0
  %7861 = vmatprep.subr.mxu0 0.0
  %7862 = vmatpush2.msra.mxu0 0.0
  %7863 = vmatprep.subr.mxu0 0.0
  %7864 = vmatpush2.msra.mxu0 0.0
  %7865 = vmatprep.subr.mxu0 0.0
  %7866 = vmatpush2.msra.mxu0 0.0
  %7867 = vmatprep.mubr.f32.mxu0 0.0
  %7868 = vmatmul.mubr.f32.gmra.mxu0 %v7559
  %v7869 = vpop.f32.mrf.mxu0
  %v7870 = vadd.f32 0.0, %v7869
  %v7871 = vpop.f32.mrf.mxu0
  %7872 = vmatprep.mubr.f32.mxu0 0.0
  %7873 = vmatmul.mubr.f32.gmra.mxu0 %v7561
  %v7874 = vpop.f32.mrf.mxu0
  %v7875 = vadd.f32 0.0, %v7874
  %v7876 = vpop.f32.mrf.mxu0
  %7877 = vmatprep.mubr.f32.mxu0 0.0
  %7878 = vmatmul.mubr.f32.gmra.mxu0 %v7563
  %v7879 = vpop.f32.mrf.mxu0
  %v7880 = vadd.f32 0.0, %v7879
  %v7881 = vpop.f32.mrf.mxu0
  %7882 = vdwg.mxu0
  %7883 = vmatprep.subr.mxu0 0.0
  %7884 = vmatpush1.msra.mxu0 %v4496
  %7885 = vmatprep.subr.mxu0 0.0
  %7886 = vmatpush1.msra.mxu0 %v4491
  %7887 = vmatprep.subr.mxu0 0.0
  %7888 = vmatpush1.msra.mxu0 %v4486
  %7889 = vmatprep.subr.mxu0 0.0
  %7890 = vmatpush1.msra.mxu0 %v4481
  %7891 = vmatprep.subr.mxu0 0.0
  %7892 = vmatpush1.msra.mxu0 %v4476
  %7893 = vmatprep.subr.mxu0 0.0
  %7894 = vmatpush1.msra.mxu0 %v4471
  %7895 = vmatprep.subr.mxu0 0.0
  %7896 = vmatpush1.msra.mxu0 %v4466
  %7897 = vmatprep.subr.mxu0 0.0
  %7898 = vmatpush1.msra.mxu0 %v4461
  %7899 = vmatprep.subr.mxu0 0.0
  %7900 = vmatpush1.msra.mxu0 %v4456
  %7901 = vmatprep.subr.mxu0 0.0
  %7902 = vmatpush1.msra.mxu0 %v4451
  %7903 = vmatprep.subr.mxu0 0.0
  %7904 = vmatpush1.msra.mxu0 %v4446
  %7905 = vmatprep.subr.mxu0 0.0
  %7906 = vmatpush1.msra.mxu0 %v4441
  %7907 = vmatprep.subr.mxu0 0.0
  %7908 = vmatpush1.msra.mxu0 %v4436
  %7909 = vmatprep.subr.mxu0 0.0
  %7910 = vmatpush1.msra.mxu0 %v4431
  %7911 = vmatprep.subr.mxu0 0.0
  %7912 = vmatpush1.msra.mxu0 %v4426
  %7913 = vmatprep.subr.mxu0 0.0
  %7914 = vmatpush1.msra.mxu0 %v4421
  %7915 = vmatprep.subr.mxu0 0.0
  %7916 = vmatpush2.msra.mxu0 0.0
  %7917 = vmatprep.subr.mxu0 0.0
  %7918 = vmatpush2.msra.mxu0 0.0
  %7919 = vmatprep.subr.mxu0 0.0
  %7920 = vmatpush2.msra.mxu0 0.0
  %7921 = vmatprep.subr.mxu0 0.0
  %7922 = vmatpush2.msra.mxu0 0.0
  %7923 = vmatprep.subr.mxu0 0.0
  %7924 = vmatpush2.msra.mxu0 0.0
  %7925 = vmatprep.subr.mxu0 0.0
  %7926 = vmatpush2.msra.mxu0 0.0
  %7927 = vmatprep.subr.mxu0 0.0
  %7928 = vmatpush2.msra.mxu0 0.0
  %7929 = vmatprep.subr.mxu0 0.0
  %7930 = vmatpush2.msra.mxu0 0.0
  %7931 = vmatprep.subr.mxu0 0.0
  %7932 = vmatpush2.msra.mxu0 0.0
  %7933 = vmatprep.subr.mxu0 0.0
  %7934 = vmatpush2.msra.mxu0 0.0
  %7935 = vmatprep.subr.mxu0 0.0
  %7936 = vmatpush2.msra.mxu0 0.0
  %7937 = vmatprep.subr.mxu0 0.0
  %7938 = vmatpush2.msra.mxu0 0.0
  %7939 = vmatprep.subr.mxu0 0.0
  %7940 = vmatpush2.msra.mxu0 0.0
  %7941 = vmatprep.subr.mxu0 0.0
  %7942 = vmatpush2.msra.mxu0 0.0
  %7943 = vmatprep.subr.mxu0 0.0
  %7944 = vmatpush2.msra.mxu0 0.0
  %7945 = vmatprep.subr.mxu0 0.0
  %7946 = vmatpush2.msra.mxu0 0.0
  %7947 = vmatprep.mubr.f32.mxu0 0.0
  %7948 = vmatmul.mubr.f32.gmra.mxu0 %v7800
  %v7949 = vpop.f32.mrf.mxu0
  %v7950 = vadd.f32 %v7870, %v7949
  %v7951 = vpop.f32.mrf.mxu0
  %7952 = vmatprep.mubr.f32.mxu0 0.0
  %7953 = vmatmul.mubr.f32.gmra.mxu0 %v7801
  %v7954 = vpop.f32.mrf.mxu0
  %v7955 = vadd.f32 %v7875, %v7954
  %v7956 = vpop.f32.mrf.mxu0
  %7957 = vmatprep.mubr.f32.mxu0 0.0
  %7958 = vmatmul.mubr.f32.gmra.mxu0 %v7802
  %v7959 = vpop.f32.mrf.mxu0
  %v7960 = vadd.f32 %v7880, %v7959
  %v7961 = vpop.f32.mrf.mxu0
  %7962 = vdwg.mxu0
  %v7963 = vmul.f32 %v7950, %v136
  %v7964 = vmul.f32 %v7955, %v136
  %v7965 = vmul.f32 %v7960, %v136
  %v7966 = vtanh.pop %v7963
  %v7967 = vtanh.pop %v7964
  %v7968 = vtanh.pop %v7965
  %v7969 = vmul.f32 %v7966, 0.5
  %v7970 = vmul.f32 %v7967, 0.5
  %v7971 = vmul.f32 %v7968, 0.5
  %v7972 = vadd.f32 %v7969, 0.5
  %v7973 = vadd.f32 %v7970, 0.5
  %v7974 = vadd.f32 %v7971, 0.5
  %v7975 = vsel %vm135, %v7966, %v7972
  %v7976 = vsel %vm135, %v7967, %v7973
  %v7977 = vsel %vm135, %v7968, %v7974
  %v7978 = vmul.f32 %v7975, %v7529
  %v7979 = vmul.f32 %v7976, %v7530
  %v7980 = vmul.f32 %v7977, %v7531
  %7984 = vrot.lane.b32.xlu0 %v7975, 64
  %v7985 = vpop.permute.xlu0 %7984
  %7986 = vrot.lane.b32.xlu0 %v7976, 64
  %v7987 = vpop.permute.xlu0 %7986
  %7988 = vrot.lane.b32.xlu0 %v7977, 64
  %v7989 = vpop.permute.xlu0 %7988
  %v7993 = vmul.f32 %v7975, %v7985
  %v7994 = vmul.f32 %v7976, %v7987
  %v7995 = vmul.f32 %v7977, %v7989
  %7999 = vrot.lane.b32.xlu0 %v7993, 32
  %v8000 = vpop.permute.xlu0 %7999
  %8001 = vrot.lane.b32.xlu0 %v7994, 32
  %v8002 = vpop.permute.xlu0 %8001
  %8003 = vrot.lane.b32.xlu0 %v7995, 32
  %v8004 = vpop.permute.xlu0 %8003
  %v8008 = vadd.f32 %v7978, %v8000
  %v8009 = vadd.f32 %v7979, %v8002
  %v8010 = vadd.f32 %v7980, %v8004
  %v8011 = vtanh.pop %v8008
  %v8012 = vtanh.pop %v8009
  %v8013 = vtanh.pop %v8010
  %8017 = vrot.lane.b32.xlu0 %v8011, 64
  %v8018 = vpop.permute.xlu0 %8017
  %8019 = vrot.lane.b32.xlu0 %v8012, 64
  %v8020 = vpop.permute.xlu0 %8019
  %8021 = vrot.lane.b32.xlu0 %v8013, 64
  %v8022 = vpop.permute.xlu0 %8021
  %v8026 = vmul.f32 %v7975, %v8018
  %v8027 = vmul.f32 %v7976, %v8020
  %v8028 = vmul.f32 %v7977, %v8022
  %8032 = vrot.lane.b32.xlu0 %v8026, 32
  %v8033 = vpop.permute.xlu0 %8032
  %8034 = vrot.lane.b32.xlu0 %v8027, 32
  %v8035 = vpop.permute.xlu0 %8034
  %8036 = vrot.lane.b32.xlu0 %v8028, 32
  %v8037 = vpop.permute.xlu0 %8036
  %v8038 = vsel %vm186, %v8033, 0
  %v8040 = vsel %vm186, %v8035, 0
  %v8042 = vsel %vm186, %v8037, 0
  %8044 = vmatprep.subr.mxu0 0.0
  %8045 = vmatpush1.msra.mxu0 0.0
  %8046 = vmatprep.subr.mxu0 0.0
  %8047 = vmatpush1.msra.mxu0 0.0
  %8048 = vmatprep.subr.mxu0 0.0
  %8049 = vmatpush1.msra.mxu0 0.0
  %8050 = vmatprep.subr.mxu0 0.0
  %8051 = vmatpush1.msra.mxu0 0.0
  %8052 = vmatprep.subr.mxu0 0.0
  %8053 = vmatpush1.msra.mxu0 0.0
  %8054 = vmatprep.subr.mxu0 0.0
  %8055 = vmatpush1.msra.mxu0 0.0
  %8056 = vmatprep.subr.mxu0 0.0
  %8057 = vmatpush1.msra.mxu0 0.0
  %8058 = vmatprep.subr.mxu0 0.0
  %8059 = vmatpush1.msra.mxu0 0.0
  %8060 = vmatprep.subr.mxu0 0.0
  %8061 = vmatpush1.msra.mxu0 0.0
  %8062 = vmatprep.subr.mxu0 0.0
  %8063 = vmatpush1.msra.mxu0 0.0
  %8064 = vmatprep.subr.mxu0 0.0
  %8065 = vmatpush1.msra.mxu0 0.0
  %8066 = vmatprep.subr.mxu0 0.0
  %8067 = vmatpush1.msra.mxu0 0.0
  %8068 = vmatprep.subr.mxu0 0.0
  %8069 = vmatpush1.msra.mxu0 %v4272
  %8070 = vmatprep.subr.mxu0 0.0
  %8071 = vmatpush1.msra.mxu0 %v4271
  %8072 = vmatprep.subr.mxu0 0.0
  %8073 = vmatpush1.msra.mxu0 %v4270
  %8074 = vmatprep.subr.mxu0 0.0
  %8075 = vmatpush1.msra.mxu0 %v4269
  %8076 = vmatprep.subr.mxu0 0.0
  %8077 = vmatpush2.msra.mxu0 0.0
  %8078 = vmatprep.subr.mxu0 0.0
  %8079 = vmatpush2.msra.mxu0 0.0
  %8080 = vmatprep.subr.mxu0 0.0
  %8081 = vmatpush2.msra.mxu0 0.0
  %8082 = vmatprep.subr.mxu0 0.0
  %8083 = vmatpush2.msra.mxu0 0.0
  %8084 = vmatprep.subr.mxu0 0.0
  %8085 = vmatpush2.msra.mxu0 0.0
  %8086 = vmatprep.subr.mxu0 0.0
  %8087 = vmatpush2.msra.mxu0 0.0
  %8088 = vmatprep.subr.mxu0 0.0
  %8089 = vmatpush2.msra.mxu0 0.0
  %8090 = vmatprep.subr.mxu0 0.0
  %8091 = vmatpush2.msra.mxu0 0.0
  %8092 = vmatprep.subr.mxu0 0.0
  %8093 = vmatpush2.msra.mxu0 0.0
  %8094 = vmatprep.subr.mxu0 0.0
  %8095 = vmatpush2.msra.mxu0 0.0
  %8096 = vmatprep.subr.mxu0 0.0
  %8097 = vmatpush2.msra.mxu0 0.0
  %8098 = vmatprep.subr.mxu0 0.0
  %8099 = vmatpush2.msra.mxu0 0.0
  %8100 = vmatprep.subr.mxu0 0.0
  %8101 = vmatpush2.msra.mxu0 0.0
  %8102 = vmatprep.subr.mxu0 0.0
  %8103 = vmatpush2.msra.mxu0 0.0
  %8104 = vmatprep.subr.mxu0 0.0
  %8105 = vmatpush2.msra.mxu0 0.0
  %8106 = vmatprep.subr.mxu0 0.0
  %8107 = vmatpush2.msra.mxu0 0.0
  %8108 = vmatprep.mubr.f32.mxu0 0.0
  %8109 = vmatmul.mubr.f32.gmra.mxu0 %v8038
  %v8110 = vpop.f32.mrf.mxu0
  %v8111 = vadd.f32 %v4668, %v8110
  %v8112 = vpop.f32.mrf.mxu0
  %8113 = vmatprep.mubr.f32.mxu0 0.0
  %8114 = vmatmul.mubr.f32.gmra.mxu0 %v8040
  %v8115 = vpop.f32.mrf.mxu0
  %v8116 = vadd.f32 %v4668, %v8115
  %v8117 = vpop.f32.mrf.mxu0
  %8118 = vmatprep.mubr.f32.mxu0 0.0
  %8119 = vmatmul.mubr.f32.gmra.mxu0 %v8042
  %v8120 = vpop.f32.mrf.mxu0
  %v8121 = vadd.f32 %v4668, %v8120
  %v8122 = vpop.f32.mrf.mxu0
  %8123 = vdwg.mxu0
  %v8124 = vmax.f32 %v8111, 0.0
  %v8125 = vmax.f32 %v8116, 0.0
  %v8126 = vmax.f32 %v8121, 0.0
  %v8128 = vsel %vm186, %v8124, 0
  %v8131 = vsel %vm186, %v8125, 0
  %v8134 = vsel %vm186, %v8126, 0
  %8136 = vmatprep.subr.mxu0 0.0
  %8137 = vmatpush1.msra.mxu0 0.0
  %8138 = vmatprep.subr.mxu0 0.0
  %8139 = vmatpush1.msra.mxu0 0.0
  %8140 = vmatprep.subr.mxu0 0.0
  %8141 = vmatpush1.msra.mxu0 0.0
  %8142 = vmatprep.subr.mxu0 0.0
  %8143 = vmatpush1.msra.mxu0 0.0
  %8144 = vmatprep.subr.mxu0 0.0
  %8145 = vmatpush1.msra.mxu0 0.0
  %8146 = vmatprep.subr.mxu0 0.0
  %8147 = vmatpush1.msra.mxu0 0.0
  %8148 = vmatprep.subr.mxu0 0.0
  %8149 = vmatpush1.msra.mxu0 0.0
  %8150 = vmatprep.subr.mxu0 0.0
  %8151 = vmatpush1.msra.mxu0 0.0
  %8152 = vmatprep.subr.mxu0 0.0
  %8153 = vmatpush1.msra.mxu0 0.0
  %8154 = vmatprep.subr.mxu0 0.0
  %8155 = vmatpush1.msra.mxu0 0.0
  %8156 = vmatprep.subr.mxu0 0.0
  %8157 = vmatpush1.msra.mxu0 0.0
  %8158 = vmatprep.subr.mxu0 0.0
  %8159 = vmatpush1.msra.mxu0 0.0
  %8160 = vmatprep.subr.mxu0 0.0
  %8161 = vmatpush1.msra.mxu0 %v4277
  %8162 = vmatprep.subr.mxu0 0.0
  %8163 = vmatpush1.msra.mxu0 %v4276
  %8164 = vmatprep.subr.mxu0 0.0
  %8165 = vmatpush1.msra.mxu0 %v4275
  %8166 = vmatprep.subr.mxu0 0.0
  %8167 = vmatpush1.msra.mxu0 %v4274
  %8168 = vmatprep.subr.mxu0 0.0
  %8169 = vmatpush2.msra.mxu0 0.0
  %8170 = vmatprep.subr.mxu0 0.0
  %8171 = vmatpush2.msra.mxu0 0.0
  %8172 = vmatprep.subr.mxu0 0.0
  %8173 = vmatpush2.msra.mxu0 0.0
  %8174 = vmatprep.subr.mxu0 0.0
  %8175 = vmatpush2.msra.mxu0 0.0
  %8176 = vmatprep.subr.mxu0 0.0
  %8177 = vmatpush2.msra.mxu0 0.0
  %8178 = vmatprep.subr.mxu0 0.0
  %8179 = vmatpush2.msra.mxu0 0.0
  %8180 = vmatprep.subr.mxu0 0.0
  %8181 = vmatpush2.msra.mxu0 0.0
  %8182 = vmatprep.subr.mxu0 0.0
  %8183 = vmatpush2.msra.mxu0 0.0
  %8184 = vmatprep.subr.mxu0 0.0
  %8185 = vmatpush2.msra.mxu0 0.0
  %8186 = vmatprep.subr.mxu0 0.0
  %8187 = vmatpush2.msra.mxu0 0.0
  %8188 = vmatprep.subr.mxu0 0.0
  %8189 = vmatpush2.msra.mxu0 0.0
  %8190 = vmatprep.subr.mxu0 0.0
  %8191 = vmatpush2.msra.mxu0 0.0
  %8192 = vmatprep.subr.mxu0 0.0
  %8193 = vmatpush2.msra.mxu0 0.0
  %8194 = vmatprep.subr.mxu0 0.0
  %8195 = vmatpush2.msra.mxu0 0.0
  %8196 = vmatprep.subr.mxu0 0.0
  %8197 = vmatpush2.msra.mxu0 0.0
  %8198 = vmatprep.subr.mxu0 0.0
  %8199 = vmatpush2.msra.mxu0 0.0
  %8200 = vmatprep.mubr.f32.mxu0 0.0
  %8201 = vmatmul.mubr.f32.gmra.mxu0 %v8128
  %v8202 = vpop.f32.mrf.mxu0
  %v8203 = vadd.f32 %v4772, %v8202
  %v8204 = vpop.f32.mrf.mxu0
  %8205 = vmatprep.mubr.f32.mxu0 0.0
  %8206 = vmatmul.mubr.f32.gmra.mxu0 %v8131
  %v8207 = vpop.f32.mrf.mxu0
  %v8208 = vadd.f32 %v4772, %v8207
  %v8209 = vpop.f32.mrf.mxu0
  %8210 = vmatprep.mubr.f32.mxu0 0.0
  %8211 = vmatmul.mubr.f32.gmra.mxu0 %v8134
  %v8212 = vpop.f32.mrf.mxu0
  %v8213 = vadd.f32 %v4772, %v8212
  %v8214 = vpop.f32.mrf.mxu0
  %8215 = vdwg.mxu0
  %8216 = vst [vmem:[%s63 + $0x38] sm:$0xff] %v8203
  %8217 = vst [vmem:[%s63 + $0x78] sm:$0xff] %v8208
  %8218 = vst [vmem:[%s63 + $0xb8] sm:$0xff] %v8213
  // Predicated region
  $region118: #{run.1} parent=0 // pred_check
    _
  $region119: #{run.1} parent=0 // pred_check_branch
    %8220 = sbr.rel (0) target = $region121
  $region120: #{run.1} parent=0 // pred_region
    _
  $region121: #{run.1} parent=0 // pred_fallthru
    _
  // Predicated region
  $region122: #{run.1} parent=0 // pred_check
    _
  $region123: #{run.1} parent=0 // pred_check_branch
    %8222 = sbr.rel (0) target = $region125
  $region124: #{run.1} parent=0 // pred_region
    _
  $region125: #{run.1} parent=0 // pred_fallthru
    _
  // Predicated region
  $region126: #{run.1} parent=0 // pred_check
    _
  $region127: #{run.1} parent=0 // pred_check_branch
    %8224 = sbr.rel (0) target = $region129
  $region128: #{run.1} parent=0 // pred_region
    _
  $region129: #{run.1} parent=0 // pred_fallthru
    _
  // Predicated region
  $region130: #{run.1} parent=0 // pred_check
    _
  $region131: #{run.1} parent=0 // pred_check_branch
    %8226 = sbr.rel (0) target = $region133
  $region132: #{run.1} parent=0 // pred_region
    _
  $region133: #{run.1} parent=0 // pred_fallthru
    _
  // Predicated region
  $region134: #{run.1} parent=0 // pred_check
    _
  $region135: #{run.1} parent=0 // pred_check_branch
    %8228 = sbr.rel (0) target = $region137
  $region136: #{run.1} parent=0 // pred_region
    _
  $region137: #{run.1} parent=0 // pred_fallthru
    _
  // Predicated region
  $region138: #{run.1} parent=0 // pred_check
    _
  $region139: #{run.1} parent=0 // pred_check_branch
    %8230 = sbr.rel (0) target = $region141
  $region140: #{run.1} parent=0 // pred_region
    _
  $region141: #{run.1} parent=0 // pred_fallthru
    _

</llo_original>
